<compile_context>
chip_gen: v6e
topology: v6e:2x2x1
jax: 0.10.0
libtpu: 0.0.40
codegen_flags: <defaults>
</compile_context>

<pallas_src>
import functools

import jax
import jax.numpy as jnp
from jax.experimental import pallas as pl
from jax.experimental.pallas import tpu as pltpu


# -----------------------------------------------------------------------------
# Kernel 1/2: GEMM + bias + LeakyReLU (used for both strided convs via im2col)
# -----------------------------------------------------------------------------
def _gemm_bias_lrelu_kernel(a_ref, b_ref, bias_ref, o_ref, *, slope):
    acc = jnp.dot(a_ref[...], b_ref[...], preferred_element_type=jnp.float32)
    acc = acc + bias_ref[...]
    acc = jnp.maximum(acc, slope * acc)            # LeakyReLU(slope), 0 < slope < 1
    o_ref[...] = acc.astype(o_ref.dtype)


def gemm_bias_lrelu(a, b, bias, *, slope=0.2, out_dtype=jnp.bfloat16):
    """out = LeakyReLU(a @ b + bias). a:(M,K) bf16, b:(K,N) bf16, bias:(1,N) f32."""
    M, K = a.shape
    K2, N = b.shape
    assert K == K2 and bias.shape == (1, N)
    tm = 256 if M % 256 == 0 else (128 if M % 128 == 0 else M)
    bytes_acc = (a.size * a.dtype.itemsize + b.size * b.dtype.itemsize
                 + bias.size * 4 + M * N * jnp.dtype(out_dtype).itemsize)
    return pl.pallas_call(
        functools.partial(_gemm_bias_lrelu_kernel, slope=slope),
        out_shape=jax.ShapeDtypeStruct((M, N), out_dtype),
        grid_spec=pltpu.PrefetchScalarGridSpec(
            num_scalar_prefetch=0,
            grid=(M // tm,),
            in_specs=[
                pl.BlockSpec((tm, K), lambda i: (i, 0)),
                pl.BlockSpec((K, N), lambda i: (0, 0)),
                pl.BlockSpec((1, N), lambda i: (0, 0)),
            ],
            out_specs=pl.BlockSpec((tm, N), lambda i: (i, 0)),
        ),
        compiler_params=pltpu.CompilerParams(dimension_semantics=("parallel",)),
        cost_estimate=pl.CostEstimate(flops=2 * M * N * K, transcendentals=0,
                                      bytes_accessed=bytes_acc),
    )(a, b, bias)


# -----------------------------------------------------------------------------
# Kernel 3: fused VIB head
#   max-pool(2x2) -> st_layer GEMM (K-tiled, f32 acc) -> softplus -> mu+std*eps
#   -> classifier GEMM.  Grid iterates the st_layer K dimension ("arbitrary").
# -----------------------------------------------------------------------------
def _vib_head_kernel(p00_ref, p01_ref, p10_ref, p11_ref,
                     wst_ref, bst_ref, eps_ref, wcls_ref, bcls_ref,
                     out_ref, mu_ref, std_ref, acc_ref):
    k = pl.program_id(0)

    @pl.when(k == 0)
    def _():
        acc_ref[...] = jnp.zeros_like(acc_ref)

    # Fused 2x2 max-pool on this K-slice of the flattened conv2 activation.
    feat = jnp.maximum(jnp.maximum(p00_ref[...], p01_ref[...]),
                       jnp.maximum(p10_ref[...], p11_ref[...]))     # (B, tk) bf16
    acc_ref[...] += jnp.dot(feat, wst_ref[...],
                            preferred_element_type=jnp.float32)

    @pl.when(k == pl.num_programs(0) - 1)
    def _():
        statis = acc_ref[...] + bst_ref[...]                        # (B, 2*khalf) f32
        khalf = statis.shape[1] // 2
        mu = statis[:, :khalf]
        y = statis[:, khalf:] - 5.0
        # numerically-stable softplus(y) = max(y,0) + log(1 + exp(-|y|))
        std = jnp.maximum(y, 0.0) + jnp.log(1.0 + jnp.exp(-jnp.abs(y)))
        res = mu + std * eps_ref[...]
        logits = jnp.dot(res.astype(jnp.bfloat16), wcls_ref[...],
                         preferred_element_type=jnp.float32) + bcls_ref[...]
        out_ref[...] = logits
        mu_ref[...] = mu
        std_ref[...] = std


def vib_head(p00, p01, p10, p11, w_st, b_st, eps, w_cls, b_cls, *, tk=512):
    B, K_in = p00.shape                 # (batch, 2048)
    _, N_st = w_st.shape                # (2048, 2048)
    khalf = N_st // 2                   # 1024
    Ncls = w_cls.shape[1]               # 128 (lane-padded n_classes)
    assert K_in % tk == 0
    nk = K_in // tk
    bytes_acc = (4 * p00.size * p00.dtype.itemsize
                 + w_st.size * w_st.dtype.itemsize
                 + w_cls.size * w_cls.dtype.itemsize
                 + (B * Ncls + 2 * B * khalf + B * khalf) * 4)
    return pl.pallas_call(
        _vib_head_kernel,
        out_shape=(jax.ShapeDtypeStruct((B, Ncls), jnp.float32),
                   jax.ShapeDtypeStruct((B, khalf), jnp.float32),
                   jax.ShapeDtypeStruct((B, khalf), jnp.float32)),
        grid_spec=pltpu.PrefetchScalarGridSpec(
            num_scalar_prefetch=0,
            grid=(nk,),
            in_specs=[
                pl.BlockSpec((B, tk), lambda k: (0, k)),
                pl.BlockSpec((B, tk), lambda k: (0, k)),
                pl.BlockSpec((B, tk), lambda k: (0, k)),
                pl.BlockSpec((B, tk), lambda k: (0, k)),
                pl.BlockSpec((tk, N_st), lambda k: (k, 0)),
                pl.BlockSpec((1, N_st), lambda k: (0, 0)),
                pl.BlockSpec((B, khalf), lambda k: (0, 0)),
                pl.BlockSpec((khalf, Ncls), lambda k: (0, 0)),
                pl.BlockSpec((1, Ncls), lambda k: (0, 0)),
            ],
            out_specs=(
                pl.BlockSpec((B, Ncls), lambda k: (0, 0)),
                pl.BlockSpec((B, khalf), lambda k: (0, 0)),
                pl.BlockSpec((B, khalf), lambda k: (0, 0)),
            ),
            scratch_shapes=[pltpu.VMEM((B, N_st), jnp.float32)],
        ),
        compiler_params=pltpu.CompilerParams(dimension_semantics=("arbitrary",)),
        cost_estimate=pl.CostEstimate(
            flops=2 * B * K_in * N_st + 2 * B * khalf * Ncls,
            transcendentals=2 * B * khalf,
            bytes_accessed=bytes_acc),
    )(p00, p01, p10, p11, w_st, b_st, eps, w_cls, b_cls)


# -----------------------------------------------------------------------------
# JAX glue: im2col for stride-2 3x3/pad-1 conv (tiny arrays; XLA fuses these
# slices/concat into the copies feeding the Pallas kernels)
# -----------------------------------------------------------------------------
def _im2col_s2(x_nhwc, k_pad_to=None):
    n, h, w, c = x_nhwc.shape
    ho, wo = h // 2, w // 2
    xp = jnp.pad(x_nhwc, ((0, 0), (1, 1), (1, 1), (0, 0)))
    # tap ordering: k = (dh*3 + dw)*c + cin  (matches weight prep below)
    taps = [xp[:, dh:dh + 2 * ho:2, dw:dw + 2 * wo:2, :]
            for dh in range(3) for dw in range(3)]
    patches = jnp.concatenate(taps, axis=-1)            # (n, ho, wo, 9c)
    k = 9 * c
    if k_pad_to is not None and k_pad_to > k:
        patches = jnp.pad(patches, ((0, 0), (0, 0), (0, 0), (0, k_pad_to - k)))
        k = k_pad_to
    return patches.reshape(n * ho * wo, k), (n, ho, wo)


# -----------------------------------------------------------------------------
# Parameters (PyTorch-layout random init, layout transforms hoisted to init)
# -----------------------------------------------------------------------------
def init_params(key, n_classes=10):
    k1, k2, k3, k4 = jax.random.split(key, 4)
    lane = 128
    c1_out, c2_out = 64, 128
    k_half = 128 * 4 * 4 // 2          # 1024

    # Conv1: PyTorch (64, 3, 3, 3) -> (K=27->128, N=64->128) matrix, bf16
    w1 = jax.random.normal(k1, (c1_out, 3, 3, 3), jnp.float32) * jnp.sqrt(2.0 / 27.0)
    b1 = jnp.zeros((c1_out,), jnp.float32)
    wm1 = jnp.transpose(w1, (2, 3, 1, 0)).reshape(27, c1_out)
    wm1 = jnp.pad(wm1, ((0, lane - 27), (0, lane - c1_out))).astype(jnp.bfloat16)
    bm1 = jnp.pad(b1, (0, lane - c1_out)).reshape(1, lane)

    # Conv2: PyTorch (128, 64, 3, 3); input-channel dim zero-padded 64->128 to
    # match conv1's lane-padded output -> (K=1152, N=128) matrix, bf16
    w2 = jax.random.normal(k2, (c2_out, c1_out, 3, 3), jnp.float32) * jnp.sqrt(2.0 / (c1_out * 9))
    b2 = jnp.zeros((c2_out,), jnp.float32)
    wm2 = jnp.transpose(w2, (2, 3, 1, 0))                           # (3,3,64,128)
    wm2 = jnp.pad(wm2, ((0, 0), (0, 0), (0, lane - c1_out), (0, 0)))
    wm2 = wm2.reshape(9 * lane, c2_out).astype(jnp.bfloat16)        # (1152, 128)
    bm2 = b2.reshape(1, c2_out)

    # st_layer: Linear(2048, 2048).  Permute its input dim from PyTorch's
    # NCHW-flatten order (c*16 + h*4 + w) to our NHWC-flatten order (h*512+w*128+c)
    # so semantics match; done once here, not per forward.
    w_st = jax.random.normal(k3, (2 * k_half, 2 * k_half), jnp.float32) / jnp.sqrt(2.0 * k_half)
    b_st = jnp.zeros((2 * k_half,), jnp.float32)
    idx = jnp.arange(2 * k_half)
    hh, ww, cc = idx // (4 * 128), (idx // 128) % 4, idx % 128
    perm = cc * 16 + hh * 4 + ww
    wm_st = w_st.T[perm, :].astype(jnp.bfloat16)                    # (2048, 2048)
    bm_st = b_st.reshape(1, 2 * k_half)

    # classifier: Linear(1024, n_classes), N zero-padded to 128 lanes
    w_cls = jax.random.normal(k4, (n_classes, k_half), jnp.float32) / jnp.sqrt(1.0 * k_half)
    b_cls = jnp.zeros((n_classes,), jnp.float32)
    wm_cls = jnp.pad(w_cls.T, ((0, 0), (0, lane - n_classes))).astype(jnp.bfloat16)
    bm_cls = jnp.pad(b_cls, (0, lane - n_classes)).reshape(1, lane)

    return {"w1": wm1, "b1": bm1, "w2": wm2, "b2": bm2,
            "w_st": wm_st, "b_st": bm_st, "w_cls": wm_cls, "b_cls": bm_cls}


# -----------------------------------------------------------------------------
# Forward pass: returns [out, mu, std] like the PyTorch module
# -----------------------------------------------------------------------------
def simple_cnn_vib_forward(params, x_nchw, eps, *, n_classes):
    x = jnp.transpose(x_nchw, (0, 2, 3, 1)).astype(jnp.bfloat16)    # NCHW -> NHWC
    # Conv1 (stride 2) + LeakyReLU
    a1, (n, h1, w1) = _im2col_s2(x, k_pad_to=params["w1"].shape[0])
    y1 = gemm_bias_lrelu(a1, params["w1"], params["b1"], slope=0.2)
    y1 = y1.reshape(n, h1, w1, -1)                                  # (N,16,16,128)
    # Conv2 (stride 2) + LeakyReLU
    a2, (_, h2, w2) = _im2col_s2(y1)
    y2 = gemm_bias_lrelu(a2, params["w2"], params["b2"], slope=0.2)
    y2 = y2.reshape(n, h2, w2, -1)                                  # (N,8,8,128)
    # The four 2x2-window views, NHWC-flattened; max-pool happens inside vib_head
    pool_views = [y2[:, i::2, j::2, :].reshape(n, -1) for i in (0, 1) for j in (0, 1)]
    logits_pad, mu, std = vib_head(pool_views[0], pool_views[1],
                                   pool_views[2], pool_views[3],
                                   params["w_st"], params["b_st"], eps,
                                   params["w_cls"], params["b_cls"])
    return [logits_pad[:, :n_classes], mu, std]


# -----------------------------------------------------------------------------
if __name__ == "__main__":
    key = jax.random.PRNGKey(0)
    k_params, k_x, k_eps = jax.random.split(key, 3)

    n_classes = 10
    batch = 2
    params = init_params(k_params, n_classes=n_classes)

    # 32x32 RGB input -> feat_dim 128*4*4 = 2048, k = 1024 (as the module implies)
    x = jax.random.normal(k_x, (batch, 3, 32, 32), jnp.float32)
    eps = jax.random.normal(k_eps, (batch, 1024), jnp.float32)

    fwd = jax.jit(functools.partial(simple_cnn_vib_forward, n_classes=n_classes))
    out = jax.block_until_ready(fwd(params, x, eps))

    logits, mu, std = out
    assert isinstance(out, list) and len(out) == 3
    assert logits.shape == (batch, n_classes), logits.shape
    assert mu.shape == (batch, 1024) and std.shape == (batch, 1024)
    assert bool(jnp.all(jnp.isfinite(logits)))
    assert bool(jnp.all(jnp.isfinite(mu)))
    assert bool(jnp.all(jnp.isfinite(std))) and bool(jnp.all(std >= 0))
    print("KERNEL_OK")
</pallas_src>

<mosaic_0001>
module attributes {stable_mosaic.version = 11 : i64} {
  func.func @_gemm_bias_lrelu_kernel(%arg0: i32, %arg1: memref<256x128xbf16, #tpu.memory_space<vmem>>, %arg2: memref<128x128xbf16, #tpu.memory_space<vmem>>, %arg3: memref<1x128xf32, #tpu.memory_space<vmem>>, %arg4: memref<256x128xbf16, #tpu.memory_space<vmem>>) attributes {dimension_semantics = [#tpu.dimension_semantics<parallel>], iteration_bounds = array<i64: 2>, scalar_prefetch = 0 : i64, scratch_operands = 0 : i64, tpu.core_type = #tpu.core_type<tc>, window_params = [{transform_indices = @transform_0, window_bounds = array<i64: 256, 128>}, {pipeline_mode = #tpu.pipeline_mode<synchronous>, transform_indices = @transform_1, window_bounds = array<i64: 128, 128>}, {pipeline_mode = #tpu.pipeline_mode<synchronous>, transform_indices = @transform_2, window_bounds = array<i64: 1, 128>}, {transform_indices = @transform_3, window_bounds = array<i64: 256, 128>}]} {
    %c0 = arith.constant 0 : index
    %c0_0 = arith.constant 0 : index
    %0 = vector.load %arg1[%c0, %c0_0] : memref<256x128xbf16, #tpu.memory_space<vmem>>, vector<256x128xbf16>
    %c0_1 = arith.constant 0 : index
    %c0_2 = arith.constant 0 : index
    %1 = vector.load %arg2[%c0_1, %c0_2] : memref<128x128xbf16, #tpu.memory_space<vmem>>, vector<128x128xbf16>
    %cst = arith.constant dense<0.000000e+00> : vector<256x128xf32>
    %2 = tpu.matmul %0, %1, %cst {dimension_numbers = #tpu.dot_dimension_numbers<[1], [0], [0], [1], [0, 0, 1, 1], [], []>} : vector<256x128xbf16>, vector<128x128xbf16>, vector<256x128xf32> -> vector<256x128xf32>
    %c0_3 = arith.constant 0 : index
    %c0_4 = arith.constant 0 : index
    %3 = vector.load %arg3[%c0_3, %c0_4] : memref<1x128xf32, #tpu.memory_space<vmem>>, vector<1x128xf32>
    %4 = vector.broadcast %3 : vector<1x128xf32> to vector<256x128xf32>
    %5 = arith.addf %2, %4 : vector<256x128xf32>
    %cst_5 = arith.constant 2.000000e-01 : f32
    %6 = vector.broadcast %cst_5 : f32 to vector<256x128xf32>
    %7 = arith.mulf %6, %5 : vector<256x128xf32>
    %8 = arith.maximumf %5, %7 : vector<256x128xf32>
    %9 = arith.truncf %8 : vector<256x128xf32> to vector<256x128xbf16>
    %c0_6 = arith.constant 0 : index
    %c0_7 = arith.constant 0 : index
    %10 = vector.load %arg4[%c0_6, %c0_7] : memref<256x128xbf16, #tpu.memory_space<vmem>>, vector<256x128xbf16>
    tpu.vector_store %arg4[%c0_6, %c0_7], %9 {strides = array<i32>} : memref<256x128xbf16, #tpu.memory_space<vmem>>, vector<256x128xbf16>,
    return
  }
  func.func @transform_0(%arg0: i32) -> (i32, i32) {
    %c0_i32 = arith.constant 0 : i32
    %c0_i32_0 = arith.constant 0 : i32
    return %arg0, %c0_i32 : i32, i32
  }
  func.func @transform_1(%arg0: i32) -> (i32, i32) {
    %c0_i32 = arith.constant 0 : i32
    %c0_i32_0 = arith.constant 0 : i32
    %c0_i32_1 = arith.constant 0 : i32
    return %c0_i32, %c0_i32_0 : i32, i32
  }
  func.func @transform_2(%arg0: i32) -> (i32, i32) {
    %c0_i32 = arith.constant 0 : i32
    %c0_i32_0 = arith.constant 0 : i32
    %c0_i32_1 = arith.constant 0 : i32
    return %c0_i32, %c0_i32_0 : i32, i32
  }
  func.func @transform_3(%arg0: i32) -> (i32, i32) {
    %c0_i32 = arith.constant 0 : i32
    %c0_i32_0 = arith.constant 0 : i32
    return %arg0, %c0_i32 : i32, i32
  }
}

module attributes {stable_mosaic.version = 11 : i64} {
  func.func @_gemm_bias_lrelu_kernel(%arg0: i32, %arg1: memref<128x1152xbf16, #tpu.memory_space<vmem>>, %arg2: memref<1152x128xbf16, #tpu.memory_space<vmem>>, %arg3: memref<1x128xf32, #tpu.memory_space<vmem>>, %arg4: memref<128x128xbf16, #tpu.memory_space<vmem>>) attributes {dimension_semantics = [#tpu.dimension_semantics<parallel>], iteration_bounds = array<i64: 1>, scalar_prefetch = 0 : i64, scratch_operands = 0 : i64, tpu.core_type = #tpu.core_type<tc>, window_params = [{transform_indices = @transform_0, window_bounds = array<i64: 128, 1152>}, {pipeline_mode = #tpu.pipeline_mode<synchronous>, transform_indices = @transform_1, window_bounds = array<i64: 1152, 128>}, {pipeline_mode = #tpu.pipeline_mode<synchronous>, transform_indices = @transform_2, window_bounds = array<i64: 1, 128>}, {transform_indices = @transform_3, window_bounds = array<i64: 128, 128>}]} {
    %c0 = arith.constant 0 : index
    %c0_0 = arith.constant 0 : index
    %0 = vector.load %arg1[%c0, %c0_0] : memref<128x1152xbf16, #tpu.memory_space<vmem>>, vector<128x1152xbf16>
    %c0_1 = arith.constant 0 : index
    %c0_2 = arith.constant 0 : index
    %1 = vector.load %arg2[%c0_1, %c0_2] : memref<1152x128xbf16, #tpu.memory_space<vmem>>, vector<1152x128xbf16>
    %cst = arith.constant dense<0.000000e+00> : vector<128x128xf32>
    %2 = tpu.matmul %0, %1, %cst {dimension_numbers = #tpu.dot_dimension_numbers<[1], [0], [0], [1], [0, 0, 1, 1], [], []>} : vector<128x1152xbf16>, vector<1152x128xbf16>, vector<128x128xf32> -> vector<128x128xf32>
    %c0_3 = arith.constant 0 : index
    %c0_4 = arith.constant 0 : index
    %3 = vector.load %arg3[%c0_3, %c0_4] : memref<1x128xf32, #tpu.memory_space<vmem>>, vector<1x128xf32>
    %4 = vector.broadcast %3 : vector<1x128xf32> to vector<128x128xf32>
    %5 = arith.addf %2, %4 : vector<128x128xf32>
    %cst_5 = arith.constant 2.000000e-01 : f32
    %6 = vector.broadcast %cst_5 : f32 to vector<128x128xf32>
    %7 = arith.mulf %6, %5 : vector<128x128xf32>
    %8 = arith.maximumf %5, %7 : vector<128x128xf32>
    %9 = arith.truncf %8 : vector<128x128xf32> to vector<128x128xbf16>
    %c0_6 = arith.constant 0 : index
    %c0_7 = arith.constant 0 : index
    %10 = vector.load %arg4[%c0_6, %c0_7] : memref<128x128xbf16, #tpu.memory_space<vmem>>, vector<128x128xbf16>
    tpu.vector_store %arg4[%c0_6, %c0_7], %9 {strides = array<i32>} : memref<128x128xbf16, #tpu.memory_space<vmem>>, vector<128x128xbf16>,
    return
  }
  func.func @transform_0(%arg0: i32) -> (i32, i32) {
    %c0_i32 = arith.constant 0 : i32
    %c0_i32_0 = arith.constant 0 : i32
    return %arg0, %c0_i32 : i32, i32
  }
  func.func @transform_1(%arg0: i32) -> (i32, i32) {
    %c0_i32 = arith.constant 0 : i32
    %c0_i32_0 = arith.constant 0 : i32
    %c0_i32_1 = arith.constant 0 : i32
    return %c0_i32, %c0_i32_0 : i32, i32
  }
  func.func @transform_2(%arg0: i32) -> (i32, i32) {
    %c0_i32 = arith.constant 0 : i32
    %c0_i32_0 = arith.constant 0 : i32
    %c0_i32_1 = arith.constant 0 : i32
    return %c0_i32, %c0_i32_0 : i32, i32
  }
  func.func @transform_3(%arg0: i32) -> (i32, i32) {
    %c0_i32 = arith.constant 0 : i32
    %c0_i32_0 = arith.constant 0 : i32
    return %arg0, %c0_i32 : i32, i32
  }
}

module attributes {stable_mosaic.version = 11 : i64} {
  func.func @_vib_head_kernel(%arg0: i32, %arg1: memref<2x512xbf16, #tpu.memory_space<vmem>>, %arg2: memref<2x512xbf16, #tpu.memory_space<vmem>>, %arg3: memref<2x512xbf16, #tpu.memory_space<vmem>>, %arg4: memref<2x512xbf16, #tpu.memory_space<vmem>>, %arg5: memref<512x2048xbf16, #tpu.memory_space<vmem>>, %arg6: memref<1x2048xf32, #tpu.memory_space<vmem>>, %arg7: memref<2x1024xf32, #tpu.memory_space<vmem>>, %arg8: memref<1024x128xbf16, #tpu.memory_space<vmem>>, %arg9: memref<1x128xf32, #tpu.memory_space<vmem>>, %arg10: memref<2x128xf32, #tpu.memory_space<vmem>>, %arg11: memref<2x1024xf32, #tpu.memory_space<vmem>>, %arg12: memref<2x1024xf32, #tpu.memory_space<vmem>>, %arg13: memref<2x2048xf32, #tpu.memory_space<vmem>>) attributes {dimension_semantics = [#tpu.dimension_semantics<arbitrary>], iteration_bounds = array<i64: 4>, scalar_prefetch = 0 : i64, scratch_operands = 1 : i64, tpu.core_type = #tpu.core_type<tc>, window_params = [{transform_indices = @transform_0, window_bounds = array<i64: 2, 512>}, {transform_indices = @transform_1, window_bounds = array<i64: 2, 512>}, {transform_indices = @transform_2, window_bounds = array<i64: 2, 512>}, {transform_indices = @transform_3, window_bounds = array<i64: 2, 512>}, {transform_indices = @transform_4, window_bounds = array<i64: 512, 2048>}, {pipeline_mode = #tpu.pipeline_mode<synchronous>, transform_indices = @transform_5, window_bounds = array<i64: 1, 2048>}, {pipeline_mode = #tpu.pipeline_mode<synchronous>, transform_indices = @transform_6, window_bounds = array<i64: 2, 1024>}, {pipeline_mode = #tpu.pipeline_mode<synchronous>, transform_indices = @transform_7, window_bounds = array<i64: 1024, 128>}, {pipeline_mode = #tpu.pipeline_mode<synchronous>, transform_indices = @transform_8, window_bounds = array<i64: 1, 128>}, {pipeline_mode = #tpu.pipeline_mode<synchronous>, transform_indices = @transform_9, window_bounds = array<i64: 2, 128>}, {pipeline_mode = #tpu.pipeline_mode<synchronous>, transform_indices = @transform_10, window_bounds = array<i64: 2, 1024>}, {pipeline_mode = #tpu.pipeline_mode<synchronous>, transform_indices = @transform_11, window_bounds = array<i64: 2, 1024>}]} {
    %c0_i32 = arith.constant 0 : i32
    %0 = arith.cmpi eq, %arg0, %c0_i32 : i32
    %1 = arith.extui %0 : i1 to i32
    %c0_i32_0 = arith.constant 0 : i32
    %2 = arith.cmpi ne, %1, %c0_i32_0 : i32
    scf.if %2 {
      %cst_15 = arith.constant 0.000000e+00 : f32
      %18 = vector.broadcast %cst_15 : f32 to vector<2x2048xf32>
      %c0_16 = arith.constant 0 : index
      %c0_17 = arith.constant 0 : index
      %19 = vector.load %arg13[%c0_16, %c0_17] : memref<2x2048xf32, #tpu.memory_space<vmem>>, vector<2x2048xf32>
      tpu.vector_store %arg13[%c0_16, %c0_17], %18 {strides = array<i32>} : memref<2x2048xf32, #tpu.memory_space<vmem>>, vector<2x2048xf32>,
    } else {
    }
    %c0 = arith.constant 0 : index
    %c0_1 = arith.constant 0 : index
    %3 = vector.load %arg1[%c0, %c0_1] : memref<2x512xbf16, #tpu.memory_space<vmem>>, vector<2x512xbf16>
    %c0_2 = arith.constant 0 : index
    %c0_3 = arith.constant 0 : index
    %4 = vector.load %arg2[%c0_2, %c0_3] : memref<2x512xbf16, #tpu.memory_space<vmem>>, vector<2x512xbf16>
    %5 = arith.maximumf %3, %4 : vector<2x512xbf16>
    %c0_4 = arith.constant 0 : index
    %c0_5 = arith.constant 0 : index
    %6 = vector.load %arg3[%c0_4, %c0_5] : memref<2x512xbf16, #tpu.memory_space<vmem>>, vector<2x512xbf16>
    %c0_6 = arith.constant 0 : index
    %c0_7 = arith.constant 0 : index
    %7 = vector.load %arg4[%c0_6, %c0_7] : memref<2x512xbf16, #tpu.memory_space<vmem>>, vector<2x512xbf16>
    %8 = arith.maximumf %6, %7 : vector<2x512xbf16>
    %9 = arith.maximumf %5, %8 : vector<2x512xbf16>
    %c0_8 = arith.constant 0 : index
    %c0_9 = arith.constant 0 : index
    %10 = vector.load %arg13[%c0_8, %c0_9] : memref<2x2048xf32, #tpu.memory_space<vmem>>, vector<2x2048xf32>
    %c0_10 = arith.constant 0 : index
    %c0_11 = arith.constant 0 : index
    %11 = vector.load %arg5[%c0_10, %c0_11] : memref<512x2048xbf16, #tpu.memory_space<vmem>>, vector<512x2048xbf16>
    %cst = arith.constant dense<0.000000e+00> : vector<2x2048xf32>
    %12 = tpu.matmul %9, %11, %cst {dimension_numbers = #tpu.dot_dimension_numbers<[1], [0], [0], [1], [0, 0, 1, 1], [], []>} : vector<2x512xbf16>, vector<512x2048xbf16>, vector<2x2048xf32> -> vector<2x2048xf32>
    %13 = arith.addf %10, %12 : vector<2x2048xf32>
    %c0_12 = arith.constant 0 : index
    %c0_13 = arith.constant 0 : index
    %14 = vector.load %arg13[%c0_12, %c0_13] : memref<2x2048xf32, #tpu.memory_space<vmem>>, vector<2x2048xf32>
    tpu.vector_store %arg13[%c0_12, %c0_13], %13 {strides = array<i32>} : memref<2x2048xf32, #tpu.memory_space<vmem>>, vector<2x2048xf32>,
    %c3_i32 = arith.constant 3 : i32
    %15 = arith.cmpi eq, %arg0, %c3_i32 : i32
    %16 = arith.extui %15 : i1 to i32
    %c0_i32_14 = arith.constant 0 : i32
    %17 = arith.cmpi ne, %16, %c0_i32_14 : i32
    scf.if %17 {
      %c0_15 = arith.constant 0 : index
      %c0_16 = arith.constant 0 : index
      %18 = vector.load %arg13[%c0_15, %c0_16] : memref<2x2048xf32, #tpu.memory_space<vmem>>, vector<2x2048xf32>
      %c0_17 = arith.constant 0 : index
      %c0_18 = arith.constant 0 : index
      %19 = vector.load %arg6[%c0_17, %c0_18] : memref<1x2048xf32, #tpu.memory_space<vmem>>, vector<1x2048xf32>
      %20 = vector.broadcast %19 : vector<1x2048xf32> to vector<2x2048xf32>
      %21 = arith.addf %18, %20 : vector<2x2048xf32>
      %22 = vector.extract_strided_slice %21 {offsets = [0, 0], sizes = [2, 1024], strides = [1, 1]} : vector<2x2048xf32> to vector<2x1024xf32>
      %23 = vector.extract_strided_slice %21 {offsets = [0, 1024], sizes = [2, 1024], strides = [1, 1]} : vector<2x2048xf32> to vector<2x1024xf32>
      %cst_19 = arith.constant 5.000000e+00 : f32
      %24 = vector.broadcast %cst_19 : f32 to vector<2x1024xf32>
      %25 = arith.subf %23, %24 : vector<2x1024xf32>
      %cst_20 = arith.constant 0.000000e+00 : f32
      %26 = vector.broadcast %cst_20 : f32 to vector<2x1024xf32>
      %27 = arith.maximumf %25, %26 : vector<2x1024xf32>
      %28 = math.absf %25 : vector<2x1024xf32>
      %cst_21 = arith.constant 0.000000e+00 : f32
      %29 = vector.broadcast %cst_21 : f32 to vector<2x1024xf32>
      %30 = arith.subf %29, %28 : vector<2x1024xf32>
      %31 = math.exp %30 : vector<2x1024xf32>
      %cst_22 = arith.constant 1.000000e+00 : f32
      %32 = vector.broadcast %cst_22 : f32 to vector<2x1024xf32>
      %33 = arith.addf %32, %31 : vector<2x1024xf32>
      %34 = math.log %33 : vector<2x1024xf32>
      %35 = arith.addf %27, %34 : vector<2x1024xf32>
      %c0_23 = arith.constant 0 : index
      %c0_24 = arith.constant 0 : index
      %36 = vector.load %arg7[%c0_23, %c0_24] : memref<2x1024xf32, #tpu.memory_space<vmem>>, vector<2x1024xf32>
      %37 = arith.mulf %35, %36 : vector<2x1024xf32>
      %38 = arith.addf %22, %37 : vector<2x1024xf32>
      %39 = arith.truncf %38 : vector<2x1024xf32> to vector<2x1024xbf16>
      %c0_25 = arith.constant 0 : index
      %c0_26 = arith.constant 0 : index
      %40 = vector.load %arg8[%c0_25, %c0_26] : memref<1024x128xbf16, #tpu.memory_space<vmem>>, vector<1024x128xbf16>
      %cst_27 = arith.constant dense<0.000000e+00> : vector<2x128xf32>
      %41 = tpu.matmul %39, %40, %cst_27 {dimension_numbers = #tpu.dot_dimension_numbers<[1], [0], [0], [1], [0, 0, 1, 1], [], []>} : vector<2x1024xbf16>, vector<1024x128xbf16>, vector<2x128xf32> -> vector<2x128xf32>
      %c0_28 = arith.constant 0 : index
      %c0_29 = arith.constant 0 : index
      %42 = vector.load %arg9[%c0_28, %c0_29] : memref<1x128xf32, #tpu.memory_space<vmem>>, vector<1x128xf32>
      %43 = vector.broadcast %42 : vector<1x128xf32> to vector<2x128xf32>
      %44 = arith.addf %41, %43 : vector<2x128xf32>
      %c0_30 = arith.constant 0 : index
      %c0_31 = arith.constant 0 : index
      %45 = vector.load %arg10[%c0_30, %c0_31] : memref<2x128xf32, #tpu.memory_space<vmem>>, vector<2x128xf32>
      tpu.vector_store %arg10[%c0_30, %c0_31], %44 {strides = array<i32>} : memref<2x128xf32, #tpu.memory_space<vmem>>, vector<2x128xf32>,
      %c0_32 = arith.constant 0 : index
      %c0_33 = arith.constant 0 : index
      %46 = vector.load %arg11[%c0_32, %c0_33] : memref<2x1024xf32, #tpu.memory_space<vmem>>, vector<2x1024xf32>
      tpu.vector_store %arg11[%c0_32, %c0_33], %22 {strides = array<i32>} : memref<2x1024xf32, #tpu.memory_space<vmem>>, vector<2x1024xf32>,
      %c0_34 = arith.constant 0 : index
      %c0_35 = arith.constant 0 : index
      %47 = vector.load %arg12[%c0_34, %c0_35] : memref<2x1024xf32, #tpu.memory_space<vmem>>, vector<2x1024xf32>
      tpu.vector_store %arg12[%c0_34, %c0_35], %35 {strides = array<i32>} : memref<2x1024xf32, #tpu.memory_space<vmem>>, vector<2x1024xf32>,
    } else {
    }
    return
  }
  func.func @transform_0(%arg0: i32) -> (i32, i32) {
    %c0_i32 = arith.constant 0 : i32
    %c0_i32_0 = arith.constant 0 : i32
    return %c0_i32, %arg0 : i32, i32
  }
  func.func @transform_1(%arg0: i32) -> (i32, i32) {
    %c0_i32 = arith.constant 0 : i32
    %c0_i32_0 = arith.constant 0 : i32
    return %c0_i32, %arg0 : i32, i32
  }
  func.func @transform_2(%arg0: i32) -> (i32, i32) {
    %c0_i32 = arith.constant 0 : i32
    %c0_i32_0 = arith.constant 0 : i32
    return %c0_i32, %arg0 : i32, i32
  }
  func.func @transform_3(%arg0: i32) -> (i32, i32) {
    %c0_i32 = arith.constant 0 : i32
    %c0_i32_0 = arith.constant 0 : i32
    return %c0_i32, %arg0 : i32, i32
  }
  func.func @transform_4(%arg0: i32) -> (i32, i32) {
    %c0_i32 = arith.constant 0 : i32
    %c0_i32_0 = arith.constant 0 : i32
    return %arg0, %c0_i32 : i32, i32
  }
  func.func @transform_5(%arg0: i32) -> (i32, i32) {
    %c0_i32 = arith.constant 0 : i32
    %c0_i32_0 = arith.constant 0 : i32
    %c0_i32_1 = arith.constant 0 : i32
    return %c0_i32, %c0_i32_0 : i32, i32
  }
  func.func @transform_6(%arg0: i32) -> (i32, i32) {
    %c0_i32 = arith.constant 0 : i32
    %c0_i32_0 = arith.constant 0 : i32
    %c0_i32_1 = arith.constant 0 : i32
    return %c0_i32, %c0_i32_0 : i32, i32
  }
  func.func @transform_7(%arg0: i32) -> (i32, i32) {
    %c0_i32 = arith.constant 0 : i32
    %c0_i32_0 = arith.constant 0 : i32
    %c0_i32_1 = arith.constant 0 : i32
    return %c0_i32, %c0_i32_0 : i32, i32
  }
  func.func @transform_8(%arg0: i32) -> (i32, i32) {
    %c0_i32 = arith.constant 0 : i32
    %c0_i32_0 = arith.constant 0 : i32
    %c0_i32_1 = arith.constant 0 : i32
    return %c0_i32, %c0_i32_0 : i32, i32
  }
  func.func @transform_9(%arg0: i32) -> (i32, i32) {
    %c0_i32 = arith.constant 0 : i32
    %c0_i32_0 = arith.constant 0 : i32
    %c0_i32_1 = arith.constant 0 : i32
    return %c0_i32, %c0_i32_0 : i32, i32
  }
  func.func @transform_10(%arg0: i32) -> (i32, i32) {
    %c0_i32 = arith.constant 0 : i32
    %c0_i32_0 = arith.constant 0 : i32
    %c0_i32_1 = arith.constant 0 : i32
    return %c0_i32, %c0_i32_0 : i32, i32
  }
  func.func @transform_11(%arg0: i32) -> (i32, i32) {
    %c0_i32 = arith.constant 0 : i32
    %c0_i32_0 = arith.constant 0 : i32
    %c0_i32_1 = arith.constant 0 : i32
    return %c0_i32, %c0_i32_0 : i32, i32
  }
}

</mosaic_0001>

<llo_original>
// kernel: simple_cnn_vib_forward.3
$region0: #{simple_cnn_vib_forward.3}
  #allocation0 [shape = 'u32[]', space=smem, size = 0x4, offset = 0x4, fixed_abs, tag = 'smem constant byte address 0x4 - core index']
  #allocation1 [shape = 'u32[144,128]{1,0:T(1,128)}', space=vmem, size = 0x12000, scoped, tag = 'internal scratch']
  %s0 = inlined_call_operand.vmem [shape: bf16[512,128], index: 0, kind: input, shape index: {}]
  %s1 = inlined_call_operand.hbm [shape: bf16[128,128], index: 1, kind: input, shape index: {}]
  %s2 = inlined_call_operand.hbm [shape: f32[1,128], index: 2, kind: input, shape index: {}]
  %s3 = inlined_call_operand.vmem [shape: bf16[512,128], index: 3, kind: output, shape index: {}]
  %s4 = sld [smem:[#allocation0]]
  $region53: #{simple_cnn_vib_forward.3} parent=0
    _
  %s6 = ssub.s32 1, %s4
  %s7 = scalar_select 0, %s6, %s4
  $region1: #{simple_cnn_vib_forward.3} parent=0
    #allocation2 [shape = 'u8[32768]{0}', space=vmem, size = 0x8000, scoped, tag = 'input window, operand 1, single buffered']
    #allocation3 [shape = 's32[2]{0}', space=sflag, size = 0x8, scoped, tag = 'scoped memory for simple_cnn_vib_forward.3']
    #allocation4 [shape = 'u8[512]{0}', space=vmem, size = 0x400, scoped, tag = 'input window, operand 2, single buffered']
    #allocation5 [shape = 's32[1]{0}', space=sflag, size = 0x4, scoped, tag = 'scoped memory for simple_cnn_vib_forward.3']
    %8 = vsyncpa [#allocation3], 0
    %9 = vsyncpa [#allocation5], 0
    loop: start=0, step=1, limit=4
    $region2: #{simple_cnn_vib_forward.3} parent=1 // loop_pre_header
      _
    $region3: #{simple_cnn_vib_forward.3} parent=1 // loop_header
      %s11 = sphi 0, %s15
      %p12 = scmp.ge.s32.totalorder %s11, 4
      %s21 = sphi 0, %s23
      %s24 = sphi 0, %s21
      %s25 = sphi 0, %s24
      %s41 = sphi 0, %s25
      %s45 = sphi 0, %s45
      %s47 = sphi 0, %s45
      %s48 = sphi 0, %s47
      %s62 = sphi 0, %s48
      %s66 = sphi 0, %s66
      %s68 = sphi 0, %s66
      %s69 = sphi 0, %s68
      %s83 = sphi 0, %s69
      %s89 = sphi 0, %s91
      %s92 = sphi 0, %s89
      %s93 = sphi 0, %s92
      %s109 = sphi 0, %s93
    $region4: #{simple_cnn_vib_forward.3} parent=1 // loop_header_branch
      %14 = sbr.rel (%p12) target = $region8
    $region5: #{simple_cnn_vib_forward.3} parent=1 // loop_body
      %s16 = ssub.s32 %s11, 1
      %s17 = ssub.s32 %s11, 2
      %s18 = sadd.s32 %s11, 1
      %s19 = ssub.s32 %s11, %s18
      %p20 = scmp.eq.s32.totalorder %s19, 0
      %s22 = sadd.s32 %s21, 1
      %s23 = scalar_select %p20, %s21, %s22
      %p26 = pneg %p20
      %p27 = scmp.eq.s32.totalorder %s11, 1
      %p28 = por %p26, %p27
      %p29 = scmp.ne.s32.totalorder %s21, %s24
      %p30 = scmp.eq.s32.totalorder %s11, 0
      %p31 = por %p29, %p30
      %p32 = scmp.ne.s32.totalorder %s21, %s24
      %p33 = scmp.eq.s32.totalorder %s16, 1
      %p34 = por %p32, %p33
      %p35 = scmp.ne.s32.totalorder %s24, %s25
      %p36 = scmp.eq.s32.totalorder %s16, 0
      %p37 = por %p35, %p36
      %p38 = scmp.ne.s32.totalorder %s24, %s25
      %p39 = scmp.eq.s32.totalorder %s17, 1
      %p40 = por %p38, %p39
      %p42 = scmp.ne.s32.totalorder %s25, %s41
      %p43 = scmp.eq.s32.totalorder %s17, 0
      %p44 = por %p42, %p43
      %s46 = sadd.s32 %s45, 1
      %p49 = scmp.eq.s32.totalorder %s11, 1
      %p50 = scmp.ne.s32.totalorder %s45, %s47
      %p51 = scmp.eq.s32.totalorder %s11, 0
      %p52 = por %p50, %p51
      %p53 = scmp.ne.s32.totalorder %s45, %s47
      %p54 = scmp.eq.s32.totalorder %s16, 1
      %p55 = por %p53, %p54
      %p56 = scmp.ne.s32.totalorder %s47, %s48
      %p57 = scmp.eq.s32.totalorder %s16, 0
      %p58 = por %p56, %p57
      %p59 = scmp.ne.s32.totalorder %s47, %s48
      %p60 = scmp.eq.s32.totalorder %s17, 1
      %p61 = por %p59, %p60
      %p63 = scmp.ne.s32.totalorder %s48, %s62
      %p64 = scmp.eq.s32.totalorder %s17, 0
      %p65 = por %p63, %p64
      %s67 = sadd.s32 %s66, 1
      %p70 = scmp.eq.s32.totalorder %s11, 1
      %p71 = scmp.ne.s32.totalorder %s66, %s68
      %p72 = scmp.eq.s32.totalorder %s11, 0
      %p73 = por %p71, %p72
      %p74 = scmp.ne.s32.totalorder %s66, %s68
      %p75 = scmp.eq.s32.totalorder %s16, 1
      %p76 = por %p74, %p75
      %p77 = scmp.ne.s32.totalorder %s68, %s69
      %p78 = scmp.eq.s32.totalorder %s16, 0
      %p79 = por %p77, %p78
      %p80 = scmp.ne.s32.totalorder %s68, %s69
      %p81 = scmp.eq.s32.totalorder %s17, 1
      %p82 = por %p80, %p81
      %p84 = scmp.ne.s32.totalorder %s69, %s83
      %p85 = scmp.eq.s32.totalorder %s17, 0
      %p86 = por %p84, %p85
      %s87 = ssub.s32 %s11, %s18
      %p88 = scmp.eq.s32.totalorder %s87, 0
      %s90 = sadd.s32 %s89, 1
      %s91 = scalar_select %p88, %s89, %s90
      %p94 = pneg %p88
      %p95 = scmp.eq.s32.totalorder %s11, 1
      %p96 = por %p94, %p95
      %p97 = scmp.ne.s32.totalorder %s89, %s92
      %p98 = scmp.eq.s32.totalorder %s11, 0
      %p99 = por %p97, %p98
      %p100 = scmp.ne.s32.totalorder %s89, %s92
      %p101 = scmp.eq.s32.totalorder %s16, 1
      %p102 = por %p100, %p101
      %p103 = scmp.ne.s32.totalorder %s92, %s93
      %p104 = scmp.eq.s32.totalorder %s16, 0
      %p105 = por %p103, %p104
      %p106 = scmp.ne.s32.totalorder %s92, %s93
      %p107 = scmp.eq.s32.totalorder %s17, 1
      %p108 = por %p106, %p107
      %p110 = scmp.ne.s32.totalorder %s93, %s109
      %p111 = scmp.eq.s32.totalorder %s17, 0
      %p112 = por %p110, %p111
      %p113 = scmp.le.s32.totalorder 1, %s11
      %p114 = scmp.lt.s32.totalorder %s11, 3
      %p115 = pnand %p113, %p114
      %p116 = pneg %p115
      // Predicated region
      $region9: #{simple_cnn_vib_forward.3} parent=5 // pred_check
        _
      $region10: #{simple_cnn_vib_forward.3} parent=5 // pred_check_branch
        %118 = sbr.rel (%p115) target = $region12
      $region11: #{simple_cnn_vib_forward.3} parent=5 // pred_region
        %s119 = ssub.s32 %s11, 1
        // Predicated region
        $region13: #{simple_cnn_vib_forward.3} parent=11 // pred_check
          %p120 = pneg %p58
        $region14: #{simple_cnn_vib_forward.3} parent=11 // pred_check_branch
          %122 = sbr.rel (%p120) target = $region16
        $region15: #{simple_cnn_vib_forward.3} parent=11 // pred_region
          %s124 = ssub.s32 1024, 1024
          %125 = vsyncadd [#allocation3], %s124
          %s126 = sshll.u32 [#allocation2], 4
          %s127 = int_to_ptr.vmem [resolvable:$true] %s126
          %132 = dma.hbm_to_vmem [thread:$0]  %s1, 1024, %s127, [#allocation3], 64, 64, 4
        $region16: #{simple_cnn_vib_forward.3} parent=11 // pred_fallthru
          _
        // Predicated region
        $region17: #{simple_cnn_vib_forward.3} parent=11 // pred_check
          %p133 = pneg %p79
        $region18: #{simple_cnn_vib_forward.3} parent=11 // pred_check_branch
          %135 = sbr.rel (%p133) target = $region20
        $region19: #{simple_cnn_vib_forward.3} parent=11 // pred_region
          %s137 = ssub.s32 16, 16
          %138 = vsyncadd [#allocation5], %s137
          %s140 = sshll.u32 [#allocation4], 4
          %s141 = int_to_ptr.vmem [resolvable:$true] %s140
          %143 = dma.hbm_to_vmem [thread:$0]  %s2, 16, %s141, [#allocation5]
        $region20: #{simple_cnn_vib_forward.3} parent=11 // pred_fallthru
          _
      $region12: #{simple_cnn_vib_forward.3} parent=5 // pred_fallthru
        _
      %p144 = scmp.lt.s32.totalorder %s11, 2
      // Predicated region
      $region21: #{simple_cnn_vib_forward.3} parent=5 // pred_check
        %p145 = pneg %p144
      $region22: #{simple_cnn_vib_forward.3} parent=5 // pred_check_branch
        %147 = sbr.rel (%p145) target = $region24
      $region23: #{simple_cnn_vib_forward.3} parent=5 // pred_region
        // Predicated region
        $region25: #{simple_cnn_vib_forward.3} parent=23 // pred_check
          %p148 = pneg %p31
        $region26: #{simple_cnn_vib_forward.3} parent=23 // pred_check_branch
          %150 = sbr.rel (%p148) target = $region28
        $region27: #{simple_cnn_vib_forward.3} parent=23 // pred_region
          %s151 = smul.u32 32, %s11
          %p152 = scmp.lt.s32.totalorder %s151, 63
          %s153 = scalar_select %p152, %s151, 63
          %s154 = smul.addr %s153, 4
          %s155 = scalar_lea.vmem %s0, %s154
          %s156 = smul.u32 32, %s11
        $region28: #{simple_cnn_vib_forward.3} parent=23 // pred_fallthru
          _
      $region24: #{simple_cnn_vib_forward.3} parent=5 // pred_fallthru
        _
      %p157 = scmp.le.s32.totalorder 1, %s11
      %p158 = scmp.lt.s32.totalorder %s11, 3
      %p159 = pnand %p157, %p158
      %p160 = pneg %p159
      // Predicated region
      $region29: #{simple_cnn_vib_forward.3} parent=5 // pred_check
        _
      $region30: #{simple_cnn_vib_forward.3} parent=5 // pred_check_branch
        %162 = sbr.rel (%p159) target = $region32
      $region31: #{simple_cnn_vib_forward.3} parent=5 // pred_region
        %s163 = ssub.s32 %s11, 1
        // Predicated region
        $region33: #{simple_cnn_vib_forward.3} parent=31 // pred_check
          %p164 = pneg %p58
        $region34: #{simple_cnn_vib_forward.3} parent=31 // pred_check_branch
          %166 = sbr.rel (%p164) target = $region36
        $region35: #{simple_cnn_vib_forward.3} parent=31 // pred_region
          %167 = dma.done [#allocation3], 1024
        $region36: #{simple_cnn_vib_forward.3} parent=31 // pred_fallthru
          _
        // Predicated region
        $region37: #{simple_cnn_vib_forward.3} parent=31 // pred_check
          %p168 = pneg %p79
        $region38: #{simple_cnn_vib_forward.3} parent=31 // pred_check_branch
          %170 = sbr.rel (%p168) target = $region40
        $region39: #{simple_cnn_vib_forward.3} parent=31 // pred_region
          %171 = dma.done [#allocation5], 16
        $region40: #{simple_cnn_vib_forward.3} parent=31 // pred_fallthru
          _
        %s172 = smul.u32 32, %s16
        %p173 = scmp.lt.s32.totalorder %s172, 63
        %s174 = scalar_select %p173, %s172, 63
        %s175 = smul.addr %s174, 4
        %s176 = scalar_lea.vmem %s0, %s175
        %p177 = pneg %p37
        %p178 = pneg %p34
        %p179 = pneg %p58
        %p180 = pneg %p55
        %p181 = pneg %p79
        %p182 = pneg %p76
        %p183 = pneg %p105
        %p184 = pneg %p102
        %s185 = smul.u32 32, %s16
        %p186 = scmp.lt.s32.totalorder %s185, 63
        %s187 = scalar_select %p186, %s185, 63
        %s188 = smul.addr %s187, 4
        %s189 = scalar_lea.vmem %s3, %s188
        %s190 = smul.u32 32, %s16
        %p191 = scmp.lt.s32.totalorder %s190, 63
        %s192 = scalar_select %p191, %s190, 63
        %s193 = smul.addr %s192, 4
        %s194 = scalar_lea.vmem %s0, %s193
        %s195 = smul.u32 32, %s16
        %s196 = smul.u32 32, %s16
        %p197 = scmp.lt.s32.totalorder %s196, 63
        %s198 = scalar_select %p197, %s196, 63
        %s199 = smul.addr %s198, 4
        %s200 = scalar_lea.vmem %s3, %s199
        %s201 = smul.u32 32, %s16
        %v203 = vld [vmem:[%s194] sm:$0xf]
        %v204 = vld [vmem:[%s194 + $0x4] sm:$0xf]
        %v205 = vld [vmem:[%s194 + $0x8] sm:$0xf]
        %v206 = vld [vmem:[%s194 + $0xc] sm:$0xf]
        %v207 = vld [vmem:[%s194 + $0x10] sm:$0xf]
        %v208 = vld [vmem:[%s194 + $0x14] sm:$0xf]
        %v209 = vld [vmem:[%s194 + $0x18] sm:$0xf]
        %v210 = vld [vmem:[%s194 + $0x1c] sm:$0xf]
        %v211 = vld [vmem:[%s194 + $0x20] sm:$0xf]
        %v212 = vld [vmem:[%s194 + $0x24] sm:$0xf]
        %v213 = vld [vmem:[%s194 + $0x28] sm:$0xf]
        %v214 = vld [vmem:[%s194 + $0x2c] sm:$0xf]
        %v215 = vld [vmem:[%s194 + $0x30] sm:$0xf]
        %v216 = vld [vmem:[%s194 + $0x34] sm:$0xf]
        %v217 = vld [vmem:[%s194 + $0x38] sm:$0xf]
        %v218 = vld [vmem:[%s194 + $0x3c] sm:$0xf]
        %v219 = vld [vmem:[%s194 + $0x40] sm:$0xf]
        %v220 = vld [vmem:[%s194 + $0x44] sm:$0xf]
        %v221 = vld [vmem:[%s194 + $0x48] sm:$0xf]
        %v222 = vld [vmem:[%s194 + $0x4c] sm:$0xf]
        %v223 = vld [vmem:[%s194 + $0x50] sm:$0xf]
        %v224 = vld [vmem:[%s194 + $0x54] sm:$0xf]
        %v225 = vld [vmem:[%s194 + $0x58] sm:$0xf]
        %v226 = vld [vmem:[%s194 + $0x5c] sm:$0xf]
        %v227 = vld [vmem:[%s194 + $0x60] sm:$0xf]
        %v228 = vld [vmem:[%s194 + $0x64] sm:$0xf]
        %v229 = vld [vmem:[%s194 + $0x68] sm:$0xf]
        %v230 = vld [vmem:[%s194 + $0x6c] sm:$0xf]
        %v231 = vld [vmem:[%s194 + $0x70] sm:$0xf]
        %v232 = vld [vmem:[%s194 + $0x74] sm:$0xf]
        %v233 = vld [vmem:[%s194 + $0x78] sm:$0xf]
        %v234 = vld [vmem:[%s194 + $0x7c] sm:$0xf]
        %v235 = vld [vmem:[#allocation2] sm:$0xf]
        %v236 = vld [vmem:[#allocation2 + $0x4] sm:$0xf]
        %v237 = vld [vmem:[#allocation2 + $0x8] sm:$0xf]
        %v238 = vld [vmem:[#allocation2 + $0xc] sm:$0xf]
        %v239 = vld [vmem:[#allocation2 + $0x10] sm:$0xf]
        %v240 = vld [vmem:[#allocation2 + $0x14] sm:$0xf]
        %v241 = vld [vmem:[#allocation2 + $0x18] sm:$0xf]
        %v242 = vld [vmem:[#allocation2 + $0x1c] sm:$0xf]
        %v243 = vld [vmem:[#allocation2 + $0x20] sm:$0xf]
        %v244 = vld [vmem:[#allocation2 + $0x24] sm:$0xf]
        %v245 = vld [vmem:[#allocation2 + $0x28] sm:$0xf]
        %v246 = vld [vmem:[#allocation2 + $0x2c] sm:$0xf]
        %v247 = vld [vmem:[#allocation2 + $0x30] sm:$0xf]
        %v248 = vld [vmem:[#allocation2 + $0x34] sm:$0xf]
        %v249 = vld [vmem:[#allocation2 + $0x38] sm:$0xf]
        %v250 = vld [vmem:[#allocation2 + $0x3c] sm:$0xf]
        %v251 = vld [vmem:[#allocation4] sm:$0x1]
        %v253 = vlaneseq
        %v254 = vshrl.u32 %v253, 7
        %v255 = vsub.s32 0, %v254
        %v256 = vrot.slane %v251, %v255
        %v290 = vunpack.c.l.b16 %v203
        %v291 = vunpack.c.l.b16 %v204
        %v292 = vunpack.c.l.b16 %v205
        %v293 = vunpack.c.l.b16 %v206
        %v294 = vunpack.c.l.b16 %v207
        %v295 = vunpack.c.l.b16 %v208
        %v296 = vunpack.c.l.b16 %v209
        %v297 = vunpack.c.l.b16 %v210
        %v298 = vunpack.c.l.b16 %v211
        %v299 = vunpack.c.l.b16 %v212
        %v300 = vunpack.c.l.b16 %v213
        %v301 = vunpack.c.l.b16 %v214
        %v302 = vunpack.c.l.b16 %v215
        %v303 = vunpack.c.l.b16 %v216
        %v304 = vunpack.c.l.b16 %v217
        %v305 = vunpack.c.l.b16 %v218
        %v306 = vunpack.c.l.b16 %v219
        %v307 = vunpack.c.l.b16 %v220
        %v308 = vunpack.c.l.b16 %v221
        %v309 = vunpack.c.l.b16 %v222
        %v310 = vunpack.c.l.b16 %v223
        %v311 = vunpack.c.l.b16 %v224
        %v312 = vunpack.c.l.b16 %v225
        %v313 = vunpack.c.l.b16 %v226
        %v314 = vunpack.c.l.b16 %v227
        %v315 = vunpack.c.l.b16 %v228
        %v316 = vunpack.c.l.b16 %v229
        %v317 = vunpack.c.l.b16 %v230
        %v318 = vunpack.c.l.b16 %v231
        %v319 = vunpack.c.l.b16 %v232
        %v320 = vunpack.c.l.b16 %v233
        %v321 = vunpack.c.l.b16 %v234
        %v322 = vpack.c.b16 %v291, %v290
        %v323 = vpack.c.b16 %v293, %v292
        %v324 = vpack.c.b16 %v295, %v294
        %v325 = vpack.c.b16 %v297, %v296
        %v326 = vpack.c.b16 %v299, %v298
        %v327 = vpack.c.b16 %v301, %v300
        %v328 = vpack.c.b16 %v303, %v302
        %v329 = vpack.c.b16 %v305, %v304
        %v330 = vpack.c.b16 %v307, %v306
        %v331 = vpack.c.b16 %v309, %v308
        %v332 = vpack.c.b16 %v311, %v310
        %v333 = vpack.c.b16 %v313, %v312
        %v334 = vpack.c.b16 %v315, %v314
        %v335 = vpack.c.b16 %v317, %v316
        %v336 = vpack.c.b16 %v319, %v318
        %v337 = vpack.c.b16 %v321, %v320
        %v370 = vunpack.c.l.b16 %v235
        %v371 = vunpack.c.l.b16 %v236
        %v372 = vunpack.c.l.b16 %v237
        %v373 = vunpack.c.l.b16 %v238
        %v374 = vunpack.c.l.b16 %v239
        %v375 = vunpack.c.l.b16 %v240
        %v376 = vunpack.c.l.b16 %v241
        %v377 = vunpack.c.l.b16 %v242
        %v378 = vunpack.c.l.b16 %v243
        %v379 = vunpack.c.l.b16 %v244
        %v380 = vunpack.c.l.b16 %v245
        %v381 = vunpack.c.l.b16 %v246
        %v382 = vunpack.c.l.b16 %v247
        %v383 = vunpack.c.l.b16 %v248
        %v384 = vunpack.c.l.b16 %v249
        %v385 = vunpack.c.l.b16 %v250
        %v386 = vpack.c.b16 %v371, %v370
        %v387 = vpack.c.b16 %v373, %v372
        %v388 = vpack.c.b16 %v375, %v374
        %v389 = vpack.c.b16 %v377, %v376
        %v390 = vpack.c.b16 %v379, %v378
        %v391 = vpack.c.b16 %v381, %v380
        %v392 = vpack.c.b16 %v383, %v382
        %v393 = vpack.c.b16 %v385, %v384
        %402 = vmatprep.subr.bf16.mxu0 0
        %403 = vmatpush1.bf16.msra.mxu0 %v393
        %404 = vmatprep.subr.bf16.mxu0 0
        %405 = vmatpush1.bf16.msra.mxu0 %v392
        %406 = vmatprep.subr.bf16.mxu0 0
        %407 = vmatpush1.bf16.msra.mxu0 %v391
        %408 = vmatprep.subr.bf16.mxu0 0
        %409 = vmatpush1.bf16.msra.mxu0 %v390
        %410 = vmatprep.subr.bf16.mxu0 0
        %411 = vmatpush1.bf16.msra.mxu0 %v389
        %412 = vmatprep.subr.bf16.mxu0 0
        %413 = vmatpush1.bf16.msra.mxu0 %v388
        %414 = vmatprep.subr.bf16.mxu0 0
        %415 = vmatpush1.bf16.msra.mxu0 %v387
        %416 = vmatprep.subr.bf16.mxu0 0
        %417 = vmatpush1.bf16.msra.mxu0 %v386
        %418 = vmatprep.subr.bf16.mxu0 0
        %419 = vmatpush2.bf16.msra.mxu0 0
        %420 = vmatprep.subr.bf16.mxu0 0
        %421 = vmatpush2.bf16.msra.mxu0 0
        %422 = vmatprep.subr.bf16.mxu0 0
        %423 = vmatpush2.bf16.msra.mxu0 0
        %424 = vmatprep.subr.bf16.mxu0 0
        %425 = vmatpush2.bf16.msra.mxu0 0
        %426 = vmatprep.subr.bf16.mxu0 0
        %427 = vmatpush2.bf16.msra.mxu0 0
        %428 = vmatprep.subr.bf16.mxu0 0
        %429 = vmatpush2.bf16.msra.mxu0 0
        %430 = vmatprep.subr.bf16.mxu0 0
        %431 = vmatpush2.bf16.msra.mxu0 0
        %432 = vmatprep.subr.bf16.mxu0 0
        %433 = vmatpush2.bf16.msra.mxu0 0
        %434 = vmatprep.mubr.bf16.mxu0 0
        %435 = vmatmul.mubr.bf16.gmra.mxu0 %v322
        %v436 = vpop.f32.mrf.mxu0
        %v437 = vadd.f32 %v256, %v436
        %v438 = vpop.f32.mrf.mxu0
        %v439 = vpop.f32.mrf.mxu0
        %v440 = vadd.f32 %v256, %v439
        %v441 = vpop.f32.mrf.mxu0
        %442 = vmatprep.mubr.bf16.mxu0 0
        %443 = vmatmul.mubr.bf16.gmra.mxu0 %v323
        %v444 = vpop.f32.mrf.mxu0
        %v445 = vadd.f32 %v256, %v444
        %v446 = vpop.f32.mrf.mxu0
        %v447 = vpop.f32.mrf.mxu0
        %v448 = vadd.f32 %v256, %v447
        %v449 = vpop.f32.mrf.mxu0
        %450 = vmatprep.mubr.bf16.mxu0 0
        %451 = vmatmul.mubr.bf16.gmra.mxu0 %v324
        %v452 = vpop.f32.mrf.mxu0
        %v453 = vadd.f32 %v256, %v452
        %v454 = vpop.f32.mrf.mxu0
        %v455 = vpop.f32.mrf.mxu0
        %v456 = vadd.f32 %v256, %v455
        %v457 = vpop.f32.mrf.mxu0
        %458 = vmatprep.mubr.bf16.mxu0 0
        %459 = vmatmul.mubr.bf16.gmra.mxu0 %v325
        %v460 = vpop.f32.mrf.mxu0
        %v461 = vadd.f32 %v256, %v460
        %v462 = vpop.f32.mrf.mxu0
        %v463 = vpop.f32.mrf.mxu0
        %v464 = vadd.f32 %v256, %v463
        %v465 = vpop.f32.mrf.mxu0
        %466 = vmatprep.mubr.bf16.mxu0 0
        %467 = vmatmul.mubr.bf16.gmra.mxu0 %v326
        %v468 = vpop.f32.mrf.mxu0
        %v469 = vadd.f32 %v256, %v468
        %v470 = vpop.f32.mrf.mxu0
        %v471 = vpop.f32.mrf.mxu0
        %v472 = vadd.f32 %v256, %v471
        %v473 = vpop.f32.mrf.mxu0
        %474 = vmatprep.mubr.bf16.mxu0 0
        %475 = vmatmul.mubr.bf16.gmra.mxu0 %v327
        %v476 = vpop.f32.mrf.mxu0
        %v477 = vadd.f32 %v256, %v476
        %v478 = vpop.f32.mrf.mxu0
        %v479 = vpop.f32.mrf.mxu0
        %v480 = vadd.f32 %v256, %v479
        %v481 = vpop.f32.mrf.mxu0
        %482 = vmatprep.mubr.bf16.mxu0 0
        %483 = vmatmul.mubr.bf16.gmra.mxu0 %v328
        %v484 = vpop.f32.mrf.mxu0
        %v485 = vadd.f32 %v256, %v484
        %v486 = vpop.f32.mrf.mxu0
        %v487 = vpop.f32.mrf.mxu0
        %v488 = vadd.f32 %v256, %v487
        %v489 = vpop.f32.mrf.mxu0
        %490 = vmatprep.mubr.bf16.mxu0 0
        %491 = vmatmul.mubr.bf16.gmra.mxu0 %v329
        %v492 = vpop.f32.mrf.mxu0
        %v493 = vadd.f32 %v256, %v492
        %v494 = vpop.f32.mrf.mxu0
        %v495 = vpop.f32.mrf.mxu0
        %v496 = vadd.f32 %v256, %v495
        %v497 = vpop.f32.mrf.mxu0
        %498 = vmatprep.mubr.bf16.mxu0 0
        %499 = vmatmul.mubr.bf16.gmra.mxu0 %v330
        %v500 = vpop.f32.mrf.mxu0
        %v501 = vadd.f32 %v256, %v500
        %v502 = vpop.f32.mrf.mxu0
        %v503 = vpop.f32.mrf.mxu0
        %v504 = vadd.f32 %v256, %v503
        %v505 = vpop.f32.mrf.mxu0
        %506 = vmatprep.mubr.bf16.mxu0 0
        %507 = vmatmul.mubr.bf16.gmra.mxu0 %v331
        %v508 = vpop.f32.mrf.mxu0
        %v509 = vadd.f32 %v256, %v508
        %v510 = vpop.f32.mrf.mxu0
        %v511 = vpop.f32.mrf.mxu0
        %v512 = vadd.f32 %v256, %v511
        %v513 = vpop.f32.mrf.mxu0
        %514 = vmatprep.mubr.bf16.mxu0 0
        %515 = vmatmul.mubr.bf16.gmra.mxu0 %v332
        %v516 = vpop.f32.mrf.mxu0
        %v517 = vadd.f32 %v256, %v516
        %v518 = vpop.f32.mrf.mxu0
        %v519 = vpop.f32.mrf.mxu0
        %v520 = vadd.f32 %v256, %v519
        %v521 = vpop.f32.mrf.mxu0
        %522 = vmatprep.mubr.bf16.mxu0 0
        %523 = vmatmul.mubr.bf16.gmra.mxu0 %v333
        %v524 = vpop.f32.mrf.mxu0
        %v525 = vadd.f32 %v256, %v524
        %v526 = vpop.f32.mrf.mxu0
        %v527 = vpop.f32.mrf.mxu0
        %v528 = vadd.f32 %v256, %v527
        %v529 = vpop.f32.mrf.mxu0
        %530 = vmatprep.mubr.bf16.mxu0 0
        %531 = vmatmul.mubr.bf16.gmra.mxu0 %v334
        %v532 = vpop.f32.mrf.mxu0
        %v533 = vadd.f32 %v256, %v532
        %v534 = vpop.f32.mrf.mxu0
        %v535 = vpop.f32.mrf.mxu0
        %v536 = vadd.f32 %v256, %v535
        %v537 = vpop.f32.mrf.mxu0
        %538 = vmatprep.mubr.bf16.mxu0 0
        %539 = vmatmul.mubr.bf16.gmra.mxu0 %v335
        %v540 = vpop.f32.mrf.mxu0
        %v541 = vadd.f32 %v256, %v540
        %v542 = vpop.f32.mrf.mxu0
        %v543 = vpop.f32.mrf.mxu0
        %v544 = vadd.f32 %v256, %v543
        %v545 = vpop.f32.mrf.mxu0
        %546 = vmatprep.mubr.bf16.mxu0 0
        %547 = vmatmul.mubr.bf16.gmra.mxu0 %v336
        %v548 = vpop.f32.mrf.mxu0
        %v549 = vadd.f32 %v256, %v548
        %v550 = vpop.f32.mrf.mxu0
        %v551 = vpop.f32.mrf.mxu0
        %v552 = vadd.f32 %v256, %v551
        %v553 = vpop.f32.mrf.mxu0
        %554 = vmatprep.mubr.bf16.mxu0 0
        %555 = vmatmul.mubr.bf16.gmra.mxu0 %v337
        %v556 = vpop.f32.mrf.mxu0
        %v557 = vadd.f32 %v256, %v556
        %v558 = vpop.f32.mrf.mxu0
        %v559 = vpop.f32.mrf.mxu0
        %v560 = vadd.f32 %v256, %v559
        %v561 = vpop.f32.mrf.mxu0
        %562 = vdwg.mxu0
        %v563 = vmul.f32 %v437, 0.2
        %v564 = vmul.f32 %v440, 0.2
        %v565 = vmul.f32 %v445, 0.2
        %v566 = vmul.f32 %v448, 0.2
        %v567 = vmul.f32 %v453, 0.2
        %v568 = vmul.f32 %v456, 0.2
        %v569 = vmul.f32 %v461, 0.2
        %v570 = vmul.f32 %v464, 0.2
        %v571 = vmul.f32 %v469, 0.2
        %v572 = vmul.f32 %v472, 0.2
        %v573 = vmul.f32 %v477, 0.2
        %v574 = vmul.f32 %v480, 0.2
        %v575 = vmul.f32 %v485, 0.2
        %v576 = vmul.f32 %v488, 0.2
        %v577 = vmul.f32 %v493, 0.2
        %v578 = vmul.f32 %v496, 0.2
        %v579 = vmul.f32 %v501, 0.2
        %v580 = vmul.f32 %v504, 0.2
        %v581 = vmul.f32 %v509, 0.2
        %v582 = vmul.f32 %v512, 0.2
        %v583 = vmul.f32 %v517, 0.2
        %v584 = vmul.f32 %v520, 0.2
        %v585 = vmul.f32 %v525, 0.2
        %v586 = vmul.f32 %v528, 0.2
        %v587 = vmul.f32 %v533, 0.2
        %v588 = vmul.f32 %v536, 0.2
        %v589 = vmul.f32 %v541, 0.2
        %v590 = vmul.f32 %v544, 0.2
        %v591 = vmul.f32 %v549, 0.2
        %v592 = vmul.f32 %v552, 0.2
        %v593 = vmul.f32 %v557, 0.2
        %v594 = vmul.f32 %v560, 0.2
        %v595 = vmax.f32 %v437, %v563
        %v596 = vmax.f32 %v440, %v564
        %v597 = vmax.f32 %v445, %v565
        %v598 = vmax.f32 %v448, %v566
        %v599 = vmax.f32 %v453, %v567
        %v600 = vmax.f32 %v456, %v568
        %v601 = vmax.f32 %v461, %v569
        %v602 = vmax.f32 %v464, %v570
        %v603 = vmax.f32 %v469, %v571
        %v604 = vmax.f32 %v472, %v572
        %v605 = vmax.f32 %v477, %v573
        %v606 = vmax.f32 %v480, %v574
        %v607 = vmax.f32 %v485, %v575
        %v608 = vmax.f32 %v488, %v576
        %v609 = vmax.f32 %v493, %v577
        %v610 = vmax.f32 %v496, %v578
        %v611 = vmax.f32 %v501, %v579
        %v612 = vmax.f32 %v504, %v580
        %v613 = vmax.f32 %v509, %v581
        %v614 = vmax.f32 %v512, %v582
        %v615 = vmax.f32 %v517, %v583
        %v616 = vmax.f32 %v520, %v584
        %v617 = vmax.f32 %v525, %v585
        %v618 = vmax.f32 %v528, %v586
        %v619 = vmax.f32 %v533, %v587
        %v620 = vmax.f32 %v536, %v588
        %v621 = vmax.f32 %v541, %v589
        %v622 = vmax.f32 %v544, %v590
        %v623 = vmax.f32 %v549, %v591
        %v624 = vmax.f32 %v552, %v592
        %v625 = vmax.f32 %v557, %v593
        %v626 = vmax.f32 %v560, %v594
        %v627 = vpack.c.bf16 %v596, %v595
        %v628 = vpack.c.bf16 %v598, %v597
        %v629 = vpack.c.bf16 %v600, %v599
        %v630 = vpack.c.bf16 %v602, %v601
        %v631 = vpack.c.bf16 %v604, %v603
        %v632 = vpack.c.bf16 %v606, %v605
        %v633 = vpack.c.bf16 %v608, %v607
        %v634 = vpack.c.bf16 %v610, %v609
        %v635 = vpack.c.bf16 %v612, %v611
        %v636 = vpack.c.bf16 %v614, %v613
        %v637 = vpack.c.bf16 %v616, %v615
        %v638 = vpack.c.bf16 %v618, %v617
        %v639 = vpack.c.bf16 %v620, %v619
        %v640 = vpack.c.bf16 %v622, %v621
        %v641 = vpack.c.bf16 %v624, %v623
        %v642 = vpack.c.bf16 %v626, %v625
        %v659 = vunpack.c.l.b16 %v627
        %v660 = vunpack.c.h.b16 %v627
        %v661 = vunpack.c.l.b16 %v628
        %v662 = vunpack.c.h.b16 %v628
        %v663 = vunpack.c.l.b16 %v629
        %v664 = vunpack.c.h.b16 %v629
        %v665 = vunpack.c.l.b16 %v630
        %v666 = vunpack.c.h.b16 %v630
        %v667 = vunpack.c.l.b16 %v631
        %v668 = vunpack.c.h.b16 %v631
        %v669 = vunpack.c.l.b16 %v632
        %v670 = vunpack.c.h.b16 %v632
        %v671 = vunpack.c.l.b16 %v633
        %v672 = vunpack.c.h.b16 %v633
        %v673 = vunpack.c.l.b16 %v634
        %v674 = vunpack.c.h.b16 %v634
        %v675 = vunpack.c.l.b16 %v635
        %v676 = vunpack.c.h.b16 %v635
        %v677 = vunpack.c.l.b16 %v636
        %v678 = vunpack.c.h.b16 %v636
        %v679 = vunpack.c.l.b16 %v637
        %v680 = vunpack.c.h.b16 %v637
        %v681 = vunpack.c.l.b16 %v638
        %v682 = vunpack.c.h.b16 %v638
        %v683 = vunpack.c.l.b16 %v639
        %v684 = vunpack.c.h.b16 %v639
        %v685 = vunpack.c.l.b16 %v640
        %v686 = vunpack.c.h.b16 %v640
        %v687 = vunpack.c.l.b16 %v641
        %v688 = vunpack.c.h.b16 %v641
        %v689 = vunpack.c.l.b16 %v642
        %v690 = vunpack.c.h.b16 %v642
        %v691 = vpack.c.b16 %v659, %v659
        %v692 = vpack.c.b16 %v660, %v660
        %v693 = vpack.c.b16 %v661, %v661
        %v694 = vpack.c.b16 %v662, %v662
        %v695 = vpack.c.b16 %v663, %v663
        %v696 = vpack.c.b16 %v664, %v664
        %v697 = vpack.c.b16 %v665, %v665
        %v698 = vpack.c.b16 %v666, %v666
        %v699 = vpack.c.b16 %v667, %v667
        %v700 = vpack.c.b16 %v668, %v668
        %v701 = vpack.c.b16 %v669, %v669
        %v702 = vpack.c.b16 %v670, %v670
        %v703 = vpack.c.b16 %v671, %v671
        %v704 = vpack.c.b16 %v672, %v672
        %v705 = vpack.c.b16 %v673, %v673
        %v706 = vpack.c.b16 %v674, %v674
        %v707 = vpack.c.b16 %v675, %v675
        %v708 = vpack.c.b16 %v676, %v676
        %v709 = vpack.c.b16 %v677, %v677
        %v710 = vpack.c.b16 %v678, %v678
        %v711 = vpack.c.b16 %v679, %v679
        %v712 = vpack.c.b16 %v680, %v680
        %v713 = vpack.c.b16 %v681, %v681
        %v714 = vpack.c.b16 %v682, %v682
        %v715 = vpack.c.b16 %v683, %v683
        %v716 = vpack.c.b16 %v684, %v684
        %v717 = vpack.c.b16 %v685, %v685
        %v718 = vpack.c.b16 %v686, %v686
        %v719 = vpack.c.b16 %v687, %v687
        %v720 = vpack.c.b16 %v688, %v688
        %v721 = vpack.c.b16 %v689, %v689
        %v722 = vpack.c.b16 %v690, %v690
        %755 = vst [vmem:[%s200] sm:$0xf] %v691
        %756 = vst [vmem:[%s200 + $0x4] sm:$0xf] %v692
        %757 = vst [vmem:[%s200 + $0x8] sm:$0xf] %v693
        %758 = vst [vmem:[%s200 + $0xc] sm:$0xf] %v694
        %759 = vst [vmem:[%s200 + $0x10] sm:$0xf] %v695
        %760 = vst [vmem:[%s200 + $0x14] sm:$0xf] %v696
        %761 = vst [vmem:[%s200 + $0x18] sm:$0xf] %v697
        %762 = vst [vmem:[%s200 + $0x1c] sm:$0xf] %v698
        %763 = vst [vmem:[%s200 + $0x20] sm:$0xf] %v699
        %764 = vst [vmem:[%s200 + $0x24] sm:$0xf] %v700
        %765 = vst [vmem:[%s200 + $0x28] sm:$0xf] %v701
        %766 = vst [vmem:[%s200 + $0x2c] sm:$0xf] %v702
        %767 = vst [vmem:[%s200 + $0x30] sm:$0xf] %v703
        %768 = vst [vmem:[%s200 + $0x34] sm:$0xf] %v704
        %769 = vst [vmem:[%s200 + $0x38] sm:$0xf] %v705
        %770 = vst [vmem:[%s200 + $0x3c] sm:$0xf] %v706
        %771 = vst [vmem:[%s200 + $0x40] sm:$0xf] %v707
        %772 = vst [vmem:[%s200 + $0x44] sm:$0xf] %v708
        %773 = vst [vmem:[%s200 + $0x48] sm:$0xf] %v709
        %774 = vst [vmem:[%s200 + $0x4c] sm:$0xf] %v710
        %775 = vst [vmem:[%s200 + $0x50] sm:$0xf] %v711
        %776 = vst [vmem:[%s200 + $0x54] sm:$0xf] %v712
        %777 = vst [vmem:[%s200 + $0x58] sm:$0xf] %v713
        %778 = vst [vmem:[%s200 + $0x5c] sm:$0xf] %v714
        %779 = vst [vmem:[%s200 + $0x60] sm:$0xf] %v715
        %780 = vst [vmem:[%s200 + $0x64] sm:$0xf] %v716
        %781 = vst [vmem:[%s200 + $0x68] sm:$0xf] %v717
        %782 = vst [vmem:[%s200 + $0x6c] sm:$0xf] %v718
        %783 = vst [vmem:[%s200 + $0x70] sm:$0xf] %v719
        %784 = vst [vmem:[%s200 + $0x74] sm:$0xf] %v720
        %785 = vst [vmem:[%s200 + $0x78] sm:$0xf] %v721
        %786 = vst [vmem:[%s200 + $0x7c] sm:$0xf] %v722
        %s787 = smul.u32 32, %s16
        %p788 = scmp.lt.s32.totalorder %s787, 63
        %s789 = scalar_select %p788, %s787, 63
        %s790 = smul.addr %s789, 4
        %s791 = scalar_lea.vmem %s3, %s790
        // Predicated region
        $region41: #{simple_cnn_vib_forward.3} parent=31 // pred_check
          %p792 = pneg %p102
        $region42: #{simple_cnn_vib_forward.3} parent=31 // pred_check_branch
          %794 = sbr.rel (%p792) target = $region44
        $region43: #{simple_cnn_vib_forward.3} parent=31 // pred_region
          %s795 = smul.u32 32, %s16
        $region44: #{simple_cnn_vib_forward.3} parent=31 // pred_fallthru
          _
      $region32: #{simple_cnn_vib_forward.3} parent=5 // pred_fallthru
        _
      %p796 = scmp.le.s32.totalorder 2, %s11
      // Predicated region
      $region45: #{simple_cnn_vib_forward.3} parent=5 // pred_check
        %p797 = pneg %p796
      $region46: #{simple_cnn_vib_forward.3} parent=5 // pred_check_branch
        %799 = sbr.rel (%p797) target = $region48
      $region47: #{simple_cnn_vib_forward.3} parent=5 // pred_region
        %s800 = ssub.s32 %s11, 2
        // Predicated region
        $region49: #{simple_cnn_vib_forward.3} parent=47 // pred_check
          %p801 = pneg %p108
        $region50: #{simple_cnn_vib_forward.3} parent=47 // pred_check_branch
          %803 = sbr.rel (%p801) target = $region52
        $region51: #{simple_cnn_vib_forward.3} parent=47 // pred_region
          %s804 = smul.u32 32, %s17
          %p805 = scmp.lt.s32.totalorder %s804, 63
          %s806 = scalar_select %p805, %s804, 63
          %s807 = smul.addr %s806, 4
          %s808 = scalar_lea.vmem %s3, %s807
        $region52: #{simple_cnn_vib_forward.3} parent=47 // pred_fallthru
          _
      $region48: #{simple_cnn_vib_forward.3} parent=5 // pred_fallthru
        _
    $region6: #{simple_cnn_vib_forward.3} parent=1 // loop_footer
      %s15 = sadd.s32 1, %s11
    $region7: #{simple_cnn_vib_forward.3} parent=1 // loop_footer_branch
      %10 = sbr.rel target = $region3
    $region8: #{simple_cnn_vib_forward.3} parent=1 // loop_exit
      _
    %809 = vsyncpa [#allocation3], 1
    %s810 = scalar_lea.sflag [#allocation3], 1
    %811 = vsyncpa %s810, 1
    %812 = vsyncpa [#allocation5], 1

// kernel: simple_cnn_vib_forward.4
$region0: #{simple_cnn_vib_forward.4}
  #allocation0 [shape = 'u32[]', space=smem, size = 0x4, offset = 0x4, fixed_abs, tag = 'smem constant byte address 0x4 - core index']
  #allocation1 [shape = 'u32[144,128]{1,0:T(1,128)}', space=vmem, size = 0x12000, scoped, tag = 'internal scratch']
  %s0 = inlined_call_operand.vmem [shape: bf16[128,1152], index: 0, kind: input, shape index: {}]
  %s1 = inlined_call_operand.hbm [shape: bf16[1152,128], index: 1, kind: input, shape index: {}]
  %s2 = inlined_call_operand.hbm [shape: f32[1,128], index: 2, kind: input, shape index: {}]
  %s3 = inlined_call_operand.vmem [shape: bf16[128,128], index: 3, kind: output, shape index: {}]
  %s4 = sld [smem:[#allocation0]]
  $region30: #{simple_cnn_vib_forward.4} parent=0
    _
  %s6 = ssub.s32 1, %s4
  %s7 = scalar_select 0, %s6, %s4
  $region1: #{simple_cnn_vib_forward.4} parent=0
    #allocation2 [shape = 'u8[294912]{0}', space=vmem, size = 0x48000, scoped, tag = 'input window, operand 1, single buffered']
    #allocation3 [shape = 's32[1]{0}', space=sflag, size = 0x4, scoped, tag = 'scoped memory for simple_cnn_vib_forward.4']
    #allocation4 [shape = 'u8[512]{0}', space=vmem, size = 0x400, scoped, tag = 'input window, operand 2, single buffered']
    #allocation5 [shape = 's32[1]{0}', space=sflag, size = 0x4, scoped, tag = 'scoped memory for simple_cnn_vib_forward.4']
    %8 = vsyncpa [#allocation3], 0
    %9 = vsyncpa [#allocation5], 0
    // Predicated region
    $region2: #{simple_cnn_vib_forward.4} parent=1 // pred_check
      _
    $region3: #{simple_cnn_vib_forward.4} parent=1 // pred_check_branch
      %11 = sbr.rel (0) target = $region5
    $region4: #{simple_cnn_vib_forward.4} parent=1 // pred_region
      _
    $region5: #{simple_cnn_vib_forward.4} parent=1 // pred_fallthru
      _
    // Predicated region
    $region6: #{simple_cnn_vib_forward.4} parent=1 // pred_check
      _
    $region7: #{simple_cnn_vib_forward.4} parent=1 // pred_check_branch
      %13 = sbr.rel (0) target = $region9
    $region8: #{simple_cnn_vib_forward.4} parent=1 // pred_region
      %s15 = ssub.s32 9216, 9216
      %16 = vsyncadd [#allocation3], %s15
      %s17 = sshll.u32 [#allocation2], 4
      %s18 = int_to_ptr.vmem [resolvable:$true] %s17
      %23 = dma.hbm_to_vmem [thread:$0]  %s1, 9216, %s18, [#allocation3], 64, 64, 4
    $region9: #{simple_cnn_vib_forward.4} parent=1 // pred_fallthru
      _
    // Predicated region
    $region10: #{simple_cnn_vib_forward.4} parent=1 // pred_check
      _
    $region11: #{simple_cnn_vib_forward.4} parent=1 // pred_check_branch
      %25 = sbr.rel (0) target = $region13
    $region12: #{simple_cnn_vib_forward.4} parent=1 // pred_region
      %s27 = ssub.s32 16, 16
      %28 = vsyncadd [#allocation5], %s27
      %s30 = sshll.u32 [#allocation4], 4
      %s31 = int_to_ptr.vmem [resolvable:$true] %s30
      %33 = dma.hbm_to_vmem [thread:$0]  %s2, 16, %s31, [#allocation5]
    $region13: #{simple_cnn_vib_forward.4} parent=1 // pred_fallthru
      _
    // Predicated region
    $region14: #{simple_cnn_vib_forward.4} parent=1 // pred_check
      _
    $region15: #{simple_cnn_vib_forward.4} parent=1 // pred_check_branch
      %35 = sbr.rel (0) target = $region17
    $region16: #{simple_cnn_vib_forward.4} parent=1 // pred_region
      %36 = dma.done [#allocation3], 9216
    $region17: #{simple_cnn_vib_forward.4} parent=1 // pred_fallthru
      _
    // Predicated region
    $region18: #{simple_cnn_vib_forward.4} parent=1 // pred_check
      _
    $region19: #{simple_cnn_vib_forward.4} parent=1 // pred_check_branch
      %38 = sbr.rel (0) target = $region21
    $region20: #{simple_cnn_vib_forward.4} parent=1 // pred_region
      %39 = dma.done [#allocation5], 16
    $region21: #{simple_cnn_vib_forward.4} parent=1 // pred_fallthru
      _
    %v41 = vld [vmem:[%s0] sm:$0xff]
    %v42 = vld [vmem:[%s0 + $0x8] sm:$0xff]
    %v43 = vld [vmem:[%s0 + $0x10] sm:$0xff]
    %v44 = vld [vmem:[%s0 + $0x18] sm:$0xff]
    %v45 = vld [vmem:[%s0 + $0x20] sm:$0xf]
    %v46 = vld [vmem:[%s0 + $0x24] sm:$0xff]
    %v47 = vld [vmem:[%s0 + $0x2c] sm:$0xff]
    %v48 = vld [vmem:[%s0 + $0x34] sm:$0xff]
    %v49 = vld [vmem:[%s0 + $0x3c] sm:$0xff]
    %v50 = vld [vmem:[%s0 + $0x44] sm:$0xf]
    %v51 = vld [vmem:[%s0 + $0x48] sm:$0xff]
    %v52 = vld [vmem:[%s0 + $0x50] sm:$0xff]
    %v53 = vld [vmem:[%s0 + $0x58] sm:$0xff]
    %v54 = vld [vmem:[%s0 + $0x60] sm:$0xff]
    %v55 = vld [vmem:[%s0 + $0x68] sm:$0xf]
    %v56 = vld [vmem:[%s0 + $0x6c] sm:$0xff]
    %v57 = vld [vmem:[%s0 + $0x74] sm:$0xff]
    %v58 = vld [vmem:[%s0 + $0x7c] sm:$0xff]
    %v59 = vld [vmem:[%s0 + $0x84] sm:$0xff]
    %v60 = vld [vmem:[%s0 + $0x8c] sm:$0xf]
    %v61 = vld [vmem:[%s0 + $0x90] sm:$0xff]
    %v62 = vld [vmem:[%s0 + $0x98] sm:$0xff]
    %v63 = vld [vmem:[%s0 + $0xa0] sm:$0xff]
    %v64 = vld [vmem:[%s0 + $0xa8] sm:$0xff]
    %v65 = vld [vmem:[%s0 + $0xb0] sm:$0xf]
    %v66 = vld [vmem:[%s0 + $0xb4] sm:$0xff]
    %v67 = vld [vmem:[%s0 + $0xbc] sm:$0xff]
    %v68 = vld [vmem:[%s0 + $0xc4] sm:$0xff]
    %v69 = vld [vmem:[%s0 + $0xcc] sm:$0xff]
    %v70 = vld [vmem:[%s0 + $0xd4] sm:$0xf]
    %v71 = vld [vmem:[%s0 + $0xd8] sm:$0xff]
    %v72 = vld [vmem:[%s0 + $0xe0] sm:$0xff]
    %v73 = vld [vmem:[%s0 + $0xe8] sm:$0xff]
    %v74 = vld [vmem:[%s0 + $0xf0] sm:$0xff]
    %v75 = vld [vmem:[%s0 + $0xf8] sm:$0xf]
    %v76 = vld [vmem:[%s0 + $0xfc] sm:$0xff]
    %v77 = vld [vmem:[%s0 + $0x104] sm:$0xff]
    %v78 = vld [vmem:[%s0 + $0x10c] sm:$0xff]
    %v79 = vld [vmem:[%s0 + $0x114] sm:$0xff]
    %v80 = vld [vmem:[%s0 + $0x11c] sm:$0xf]
    %v81 = vld [vmem:[%s0 + $0x120] sm:$0xff]
    %v82 = vld [vmem:[%s0 + $0x128] sm:$0xff]
    %v83 = vld [vmem:[%s0 + $0x130] sm:$0xff]
    %v84 = vld [vmem:[%s0 + $0x138] sm:$0xff]
    %v85 = vld [vmem:[%s0 + $0x140] sm:$0xf]
    %v86 = vld [vmem:[%s0 + $0x144] sm:$0xff]
    %v87 = vld [vmem:[%s0 + $0x14c] sm:$0xff]
    %v88 = vld [vmem:[%s0 + $0x154] sm:$0xff]
    %v89 = vld [vmem:[%s0 + $0x15c] sm:$0xff]
    %v90 = vld [vmem:[%s0 + $0x164] sm:$0xf]
    %v91 = vld [vmem:[%s0 + $0x168] sm:$0xff]
    %v92 = vld [vmem:[%s0 + $0x170] sm:$0xff]
    %v93 = vld [vmem:[%s0 + $0x178] sm:$0xff]
    %v94 = vld [vmem:[%s0 + $0x180] sm:$0xff]
    %v95 = vld [vmem:[%s0 + $0x188] sm:$0xf]
    %v96 = vld [vmem:[%s0 + $0x18c] sm:$0xff]
    %v97 = vld [vmem:[%s0 + $0x194] sm:$0xff]
    %v98 = vld [vmem:[%s0 + $0x19c] sm:$0xff]
    %v99 = vld [vmem:[%s0 + $0x1a4] sm:$0xff]
    %v100 = vld [vmem:[%s0 + $0x1ac] sm:$0xf]
    %v101 = vld [vmem:[%s0 + $0x1b0] sm:$0xff]
    %v102 = vld [vmem:[%s0 + $0x1b8] sm:$0xff]
    %v103 = vld [vmem:[%s0 + $0x1c0] sm:$0xff]
    %v104 = vld [vmem:[%s0 + $0x1c8] sm:$0xff]
    %v105 = vld [vmem:[%s0 + $0x1d0] sm:$0xf]
    %v106 = vld [vmem:[%s0 + $0x1d4] sm:$0xff]
    %v107 = vld [vmem:[%s0 + $0x1dc] sm:$0xff]
    %v108 = vld [vmem:[%s0 + $0x1e4] sm:$0xff]
    %v109 = vld [vmem:[%s0 + $0x1ec] sm:$0xff]
    %v110 = vld [vmem:[%s0 + $0x1f4] sm:$0xf]
    %v111 = vld [vmem:[%s0 + $0x1f8] sm:$0xff]
    %v112 = vld [vmem:[%s0 + $0x200] sm:$0xff]
    %v113 = vld [vmem:[%s0 + $0x208] sm:$0xff]
    %v114 = vld [vmem:[%s0 + $0x210] sm:$0xff]
    %v115 = vld [vmem:[%s0 + $0x218] sm:$0xf]
    %v116 = vld [vmem:[%s0 + $0x21c] sm:$0xff]
    %v117 = vld [vmem:[%s0 + $0x224] sm:$0xff]
    %v118 = vld [vmem:[%s0 + $0x22c] sm:$0xff]
    %v119 = vld [vmem:[%s0 + $0x234] sm:$0xff]
    %v120 = vld [vmem:[%s0 + $0x23c] sm:$0xf]
    %v121 = vld [vmem:[#allocation2] sm:$0xf]
    %v122 = vld [vmem:[#allocation2 + $0x4] sm:$0xf]
    %v123 = vld [vmem:[#allocation2 + $0x8] sm:$0xf]
    %v124 = vld [vmem:[#allocation2 + $0xc] sm:$0xf]
    %v125 = vld [vmem:[#allocation2 + $0x10] sm:$0xf]
    %v126 = vld [vmem:[#allocation2 + $0x14] sm:$0xf]
    %v127 = vld [vmem:[#allocation2 + $0x18] sm:$0xf]
    %v128 = vld [vmem:[#allocation2 + $0x1c] sm:$0xf]
    %v129 = vld [vmem:[#allocation2 + $0x20] sm:$0xf]
    %v130 = vld [vmem:[#allocation2 + $0x24] sm:$0xf]
    %v131 = vld [vmem:[#allocation2 + $0x28] sm:$0xf]
    %v132 = vld [vmem:[#allocation2 + $0x2c] sm:$0xf]
    %v133 = vld [vmem:[#allocation2 + $0x30] sm:$0xf]
    %v134 = vld [vmem:[#allocation2 + $0x34] sm:$0xf]
    %v135 = vld [vmem:[#allocation2 + $0x38] sm:$0xf]
    %v136 = vld [vmem:[#allocation2 + $0x3c] sm:$0xf]
    %v137 = vld [vmem:[#allocation2 + $0x40] sm:$0xf]
    %v138 = vld [vmem:[#allocation2 + $0x44] sm:$0xf]
    %v139 = vld [vmem:[#allocation2 + $0x48] sm:$0xf]
    %v140 = vld [vmem:[#allocation2 + $0x4c] sm:$0xf]
    %v141 = vld [vmem:[#allocation2 + $0x50] sm:$0xf]
    %v142 = vld [vmem:[#allocation2 + $0x54] sm:$0xf]
    %v143 = vld [vmem:[#allocation2 + $0x58] sm:$0xf]
    %v144 = vld [vmem:[#allocation2 + $0x5c] sm:$0xf]
    %v145 = vld [vmem:[#allocation2 + $0x60] sm:$0xf]
    %v146 = vld [vmem:[#allocation2 + $0x64] sm:$0xf]
    %v147 = vld [vmem:[#allocation2 + $0x68] sm:$0xf]
    %v148 = vld [vmem:[#allocation2 + $0x6c] sm:$0xf]
    %v149 = vld [vmem:[#allocation2 + $0x70] sm:$0xf]
    %v150 = vld [vmem:[#allocation2 + $0x74] sm:$0xf]
    %v151 = vld [vmem:[#allocation2 + $0x78] sm:$0xf]
    %v152 = vld [vmem:[#allocation2 + $0x7c] sm:$0xf]
    %v153 = vld [vmem:[#allocation2 + $0x80] sm:$0xf]
    %v154 = vld [vmem:[#allocation2 + $0x84] sm:$0xf]
    %v155 = vld [vmem:[#allocation2 + $0x88] sm:$0xf]
    %v156 = vld [vmem:[#allocation2 + $0x8c] sm:$0xf]
    %v157 = vld [vmem:[#allocation2 + $0x90] sm:$0xf]
    %v158 = vld [vmem:[#allocation2 + $0x94] sm:$0xf]
    %v159 = vld [vmem:[#allocation2 + $0x98] sm:$0xf]
    %v160 = vld [vmem:[#allocation2 + $0x9c] sm:$0xf]
    %v161 = vld [vmem:[#allocation2 + $0xa0] sm:$0xf]
    %v162 = vld [vmem:[#allocation2 + $0xa4] sm:$0xf]
    %v163 = vld [vmem:[#allocation2 + $0xa8] sm:$0xf]
    %v164 = vld [vmem:[#allocation2 + $0xac] sm:$0xf]
    %v165 = vld [vmem:[#allocation2 + $0xb0] sm:$0xf]
    %v166 = vld [vmem:[#allocation2 + $0xb4] sm:$0xf]
    %v167 = vld [vmem:[#allocation2 + $0xb8] sm:$0xf]
    %v168 = vld [vmem:[#allocation2 + $0xbc] sm:$0xf]
    %v169 = vld [vmem:[#allocation2 + $0xc0] sm:$0xf]
    %v170 = vld [vmem:[#allocation2 + $0xc4] sm:$0xf]
    %v171 = vld [vmem:[#allocation2 + $0xc8] sm:$0xf]
    %v172 = vld [vmem:[#allocation2 + $0xcc] sm:$0xf]
    %v173 = vld [vmem:[#allocation2 + $0xd0] sm:$0xf]
    %v174 = vld [vmem:[#allocation2 + $0xd4] sm:$0xf]
    %v175 = vld [vmem:[#allocation2 + $0xd8] sm:$0xf]
    %v176 = vld [vmem:[#allocation2 + $0xdc] sm:$0xf]
    %v177 = vld [vmem:[#allocation2 + $0xe0] sm:$0xf]
    %v178 = vld [vmem:[#allocation2 + $0xe4] sm:$0xf]
    %v179 = vld [vmem:[#allocation2 + $0xe8] sm:$0xf]
    %v180 = vld [vmem:[#allocation2 + $0xec] sm:$0xf]
    %v181 = vld [vmem:[#allocation2 + $0xf0] sm:$0xf]
    %v182 = vld [vmem:[#allocation2 + $0xf4] sm:$0xf]
    %v183 = vld [vmem:[#allocation2 + $0xf8] sm:$0xf]
    %v184 = vld [vmem:[#allocation2 + $0xfc] sm:$0xf]
    %v185 = vld [vmem:[#allocation2 + $0x100] sm:$0xf]
    %v186 = vld [vmem:[#allocation2 + $0x104] sm:$0xf]
    %v187 = vld [vmem:[#allocation2 + $0x108] sm:$0xf]
    %v188 = vld [vmem:[#allocation2 + $0x10c] sm:$0xf]
    %v189 = vld [vmem:[#allocation2 + $0x110] sm:$0xf]
    %v190 = vld [vmem:[#allocation2 + $0x114] sm:$0xf]
    %v191 = vld [vmem:[#allocation2 + $0x118] sm:$0xf]
    %v192 = vld [vmem:[#allocation2 + $0x11c] sm:$0xf]
    %v193 = vld [vmem:[#allocation2 + $0x120] sm:$0xf]
    %v194 = vld [vmem:[#allocation2 + $0x124] sm:$0xf]
    %v195 = vld [vmem:[#allocation2 + $0x128] sm:$0xf]
    %v196 = vld [vmem:[#allocation2 + $0x12c] sm:$0xf]
    %v197 = vld [vmem:[#allocation2 + $0x130] sm:$0xf]
    %v198 = vld [vmem:[#allocation2 + $0x134] sm:$0xf]
    %v199 = vld [vmem:[#allocation2 + $0x138] sm:$0xf]
    %v200 = vld [vmem:[#allocation2 + $0x13c] sm:$0xf]
    %v201 = vld [vmem:[#allocation2 + $0x140] sm:$0xf]
    %v202 = vld [vmem:[#allocation2 + $0x144] sm:$0xf]
    %v203 = vld [vmem:[#allocation2 + $0x148] sm:$0xf]
    %v204 = vld [vmem:[#allocation2 + $0x14c] sm:$0xf]
    %v205 = vld [vmem:[#allocation2 + $0x150] sm:$0xf]
    %v206 = vld [vmem:[#allocation2 + $0x154] sm:$0xf]
    %v207 = vld [vmem:[#allocation2 + $0x158] sm:$0xf]
    %v208 = vld [vmem:[#allocation2 + $0x15c] sm:$0xf]
    %v209 = vld [vmem:[#allocation2 + $0x160] sm:$0xf]
    %v210 = vld [vmem:[#allocation2 + $0x164] sm:$0xf]
    %v211 = vld [vmem:[#allocation2 + $0x168] sm:$0xf]
    %v212 = vld [vmem:[#allocation2 + $0x16c] sm:$0xf]
    %v213 = vld [vmem:[#allocation2 + $0x170] sm:$0xf]
    %v214 = vld [vmem:[#allocation2 + $0x174] sm:$0xf]
    %v215 = vld [vmem:[#allocation2 + $0x178] sm:$0xf]
    %v216 = vld [vmem:[#allocation2 + $0x17c] sm:$0xf]
    %v217 = vld [vmem:[#allocation2 + $0x180] sm:$0xf]
    %v218 = vld [vmem:[#allocation2 + $0x184] sm:$0xf]
    %v219 = vld [vmem:[#allocation2 + $0x188] sm:$0xf]
    %v220 = vld [vmem:[#allocation2 + $0x18c] sm:$0xf]
    %v221 = vld [vmem:[#allocation2 + $0x190] sm:$0xf]
    %v222 = vld [vmem:[#allocation2 + $0x194] sm:$0xf]
    %v223 = vld [vmem:[#allocation2 + $0x198] sm:$0xf]
    %v224 = vld [vmem:[#allocation2 + $0x19c] sm:$0xf]
    %v225 = vld [vmem:[#allocation2 + $0x1a0] sm:$0xf]
    %v226 = vld [vmem:[#allocation2 + $0x1a4] sm:$0xf]
    %v227 = vld [vmem:[#allocation2 + $0x1a8] sm:$0xf]
    %v228 = vld [vmem:[#allocation2 + $0x1ac] sm:$0xf]
    %v229 = vld [vmem:[#allocation2 + $0x1b0] sm:$0xf]
    %v230 = vld [vmem:[#allocation2 + $0x1b4] sm:$0xf]
    %v231 = vld [vmem:[#allocation2 + $0x1b8] sm:$0xf]
    %v232 = vld [vmem:[#allocation2 + $0x1bc] sm:$0xf]
    %v233 = vld [vmem:[#allocation2 + $0x1c0] sm:$0xf]
    %v234 = vld [vmem:[#allocation2 + $0x1c4] sm:$0xf]
    %v235 = vld [vmem:[#allocation2 + $0x1c8] sm:$0xf]
    %v236 = vld [vmem:[#allocation2 + $0x1cc] sm:$0xf]
    %v237 = vld [vmem:[#allocation2 + $0x1d0] sm:$0xf]
    %v238 = vld [vmem:[#allocation2 + $0x1d4] sm:$0xf]
    %v239 = vld [vmem:[#allocation2 + $0x1d8] sm:$0xf]
    %v240 = vld [vmem:[#allocation2 + $0x1dc] sm:$0xf]
    %v241 = vld [vmem:[#allocation2 + $0x1e0] sm:$0xf]
    %v242 = vld [vmem:[#allocation2 + $0x1e4] sm:$0xf]
    %v243 = vld [vmem:[#allocation2 + $0x1e8] sm:$0xf]
    %v244 = vld [vmem:[#allocation2 + $0x1ec] sm:$0xf]
    %v245 = vld [vmem:[#allocation2 + $0x1f0] sm:$0xf]
    %v246 = vld [vmem:[#allocation2 + $0x1f4] sm:$0xf]
    %v247 = vld [vmem:[#allocation2 + $0x1f8] sm:$0xf]
    %v248 = vld [vmem:[#allocation2 + $0x1fc] sm:$0xf]
    %v249 = vld [vmem:[#allocation2 + $0x200] sm:$0xf]
    %v250 = vld [vmem:[#allocation2 + $0x204] sm:$0xf]
    %v251 = vld [vmem:[#allocation2 + $0x208] sm:$0xf]
    %v252 = vld [vmem:[#allocation2 + $0x20c] sm:$0xf]
    %v253 = vld [vmem:[#allocation2 + $0x210] sm:$0xf]
    %v254 = vld [vmem:[#allocation2 + $0x214] sm:$0xf]
    %v255 = vld [vmem:[#allocation2 + $0x218] sm:$0xf]
    %v256 = vld [vmem:[#allocation2 + $0x21c] sm:$0xf]
    %v257 = vld [vmem:[#allocation2 + $0x220] sm:$0xf]
    %v258 = vld [vmem:[#allocation2 + $0x224] sm:$0xf]
    %v259 = vld [vmem:[#allocation2 + $0x228] sm:$0xf]
    %v260 = vld [vmem:[#allocation2 + $0x22c] sm:$0xf]
    %v261 = vld [vmem:[#allocation2 + $0x230] sm:$0xf]
    %v262 = vld [vmem:[#allocation2 + $0x234] sm:$0xf]
    %v263 = vld [vmem:[#allocation2 + $0x238] sm:$0xf]
    %v264 = vld [vmem:[#allocation2 + $0x23c] sm:$0xf]
    %v265 = vld [vmem:[#allocation4] sm:$0x1]
    %v267 = vlaneseq
    %v268 = vshrl.u32 %v267, 7
    %v269 = vsub.s32 0, %v268
    %v270 = vrot.slane %v265, %v269
    %v352 = vunpack.c.l.b16 %v41
    %v353 = vunpack.c.h.b16 %v41
    %v354 = vunpack.c.l.b16 %v42
    %v355 = vunpack.c.h.b16 %v42
    %v356 = vunpack.c.l.b16 %v43
    %v357 = vunpack.c.h.b16 %v43
    %v358 = vunpack.c.l.b16 %v44
    %v359 = vunpack.c.h.b16 %v44
    %v360 = vunpack.c.l.b16 %v45
    %v361 = vunpack.c.l.b16 %v46
    %v362 = vunpack.c.h.b16 %v46
    %v363 = vunpack.c.l.b16 %v47
    %v364 = vunpack.c.h.b16 %v47
    %v365 = vunpack.c.l.b16 %v48
    %v366 = vunpack.c.h.b16 %v48
    %v367 = vunpack.c.l.b16 %v49
    %v368 = vunpack.c.h.b16 %v49
    %v369 = vunpack.c.l.b16 %v50
    %v370 = vunpack.c.l.b16 %v51
    %v371 = vunpack.c.h.b16 %v51
    %v372 = vunpack.c.l.b16 %v52
    %v373 = vunpack.c.h.b16 %v52
    %v374 = vunpack.c.l.b16 %v53
    %v375 = vunpack.c.h.b16 %v53
    %v376 = vunpack.c.l.b16 %v54
    %v377 = vunpack.c.h.b16 %v54
    %v378 = vunpack.c.l.b16 %v55
    %v379 = vunpack.c.l.b16 %v56
    %v380 = vunpack.c.h.b16 %v56
    %v381 = vunpack.c.l.b16 %v57
    %v382 = vunpack.c.h.b16 %v57
    %v383 = vunpack.c.l.b16 %v58
    %v384 = vunpack.c.h.b16 %v58
    %v385 = vunpack.c.l.b16 %v59
    %v386 = vunpack.c.h.b16 %v59
    %v387 = vunpack.c.l.b16 %v60
    %v388 = vunpack.c.l.b16 %v61
    %v389 = vunpack.c.h.b16 %v61
    %v390 = vunpack.c.l.b16 %v62
    %v391 = vunpack.c.h.b16 %v62
    %v392 = vunpack.c.l.b16 %v63
    %v393 = vunpack.c.h.b16 %v63
    %v394 = vunpack.c.l.b16 %v64
    %v395 = vunpack.c.h.b16 %v64
    %v396 = vunpack.c.l.b16 %v65
    %v397 = vunpack.c.l.b16 %v66
    %v398 = vunpack.c.h.b16 %v66
    %v399 = vunpack.c.l.b16 %v67
    %v400 = vunpack.c.h.b16 %v67
    %v401 = vunpack.c.l.b16 %v68
    %v402 = vunpack.c.h.b16 %v68
    %v403 = vunpack.c.l.b16 %v69
    %v404 = vunpack.c.h.b16 %v69
    %v405 = vunpack.c.l.b16 %v70
    %v406 = vunpack.c.l.b16 %v71
    %v407 = vunpack.c.h.b16 %v71
    %v408 = vunpack.c.l.b16 %v72
    %v409 = vunpack.c.h.b16 %v72
    %v410 = vunpack.c.l.b16 %v73
    %v411 = vunpack.c.h.b16 %v73
    %v412 = vunpack.c.l.b16 %v74
    %v413 = vunpack.c.h.b16 %v74
    %v414 = vunpack.c.l.b16 %v75
    %v415 = vunpack.c.l.b16 %v76
    %v416 = vunpack.c.h.b16 %v76
    %v417 = vunpack.c.l.b16 %v77
    %v418 = vunpack.c.h.b16 %v77
    %v419 = vunpack.c.l.b16 %v78
    %v420 = vunpack.c.h.b16 %v78
    %v421 = vunpack.c.l.b16 %v79
    %v422 = vunpack.c.h.b16 %v79
    %v423 = vunpack.c.l.b16 %v80
    %v424 = vunpack.c.l.b16 %v81
    %v425 = vunpack.c.h.b16 %v81
    %v426 = vunpack.c.l.b16 %v82
    %v427 = vunpack.c.h.b16 %v82
    %v428 = vunpack.c.l.b16 %v83
    %v429 = vunpack.c.h.b16 %v83
    %v430 = vunpack.c.l.b16 %v84
    %v431 = vunpack.c.h.b16 %v84
    %v432 = vunpack.c.l.b16 %v85
    %v433 = vunpack.c.l.b16 %v86
    %v434 = vunpack.c.h.b16 %v86
    %v435 = vunpack.c.l.b16 %v87
    %v436 = vunpack.c.h.b16 %v87
    %v437 = vunpack.c.l.b16 %v88
    %v438 = vunpack.c.h.b16 %v88
    %v439 = vunpack.c.l.b16 %v89
    %v440 = vunpack.c.h.b16 %v89
    %v441 = vunpack.c.l.b16 %v90
    %v442 = vunpack.c.l.b16 %v91
    %v443 = vunpack.c.h.b16 %v91
    %v444 = vunpack.c.l.b16 %v92
    %v445 = vunpack.c.h.b16 %v92
    %v446 = vunpack.c.l.b16 %v93
    %v447 = vunpack.c.h.b16 %v93
    %v448 = vunpack.c.l.b16 %v94
    %v449 = vunpack.c.h.b16 %v94
    %v450 = vunpack.c.l.b16 %v95
    %v451 = vunpack.c.l.b16 %v96
    %v452 = vunpack.c.h.b16 %v96
    %v453 = vunpack.c.l.b16 %v97
    %v454 = vunpack.c.h.b16 %v97
    %v455 = vunpack.c.l.b16 %v98
    %v456 = vunpack.c.h.b16 %v98
    %v457 = vunpack.c.l.b16 %v99
    %v458 = vunpack.c.h.b16 %v99
    %v459 = vunpack.c.l.b16 %v100
    %v460 = vunpack.c.l.b16 %v101
    %v461 = vunpack.c.h.b16 %v101
    %v462 = vunpack.c.l.b16 %v102
    %v463 = vunpack.c.h.b16 %v102
    %v464 = vunpack.c.l.b16 %v103
    %v465 = vunpack.c.h.b16 %v103
    %v466 = vunpack.c.l.b16 %v104
    %v467 = vunpack.c.h.b16 %v104
    %v468 = vunpack.c.l.b16 %v105
    %v469 = vunpack.c.l.b16 %v106
    %v470 = vunpack.c.h.b16 %v106
    %v471 = vunpack.c.l.b16 %v107
    %v472 = vunpack.c.h.b16 %v107
    %v473 = vunpack.c.l.b16 %v108
    %v474 = vunpack.c.h.b16 %v108
    %v475 = vunpack.c.l.b16 %v109
    %v476 = vunpack.c.h.b16 %v109
    %v477 = vunpack.c.l.b16 %v110
    %v478 = vunpack.c.l.b16 %v111
    %v479 = vunpack.c.h.b16 %v111
    %v480 = vunpack.c.l.b16 %v112
    %v481 = vunpack.c.h.b16 %v112
    %v482 = vunpack.c.l.b16 %v113
    %v483 = vunpack.c.h.b16 %v113
    %v484 = vunpack.c.l.b16 %v114
    %v485 = vunpack.c.h.b16 %v114
    %v486 = vunpack.c.l.b16 %v115
    %v487 = vunpack.c.l.b16 %v116
    %v488 = vunpack.c.h.b16 %v116
    %v489 = vunpack.c.l.b16 %v117
    %v490 = vunpack.c.h.b16 %v117
    %v491 = vunpack.c.l.b16 %v118
    %v492 = vunpack.c.h.b16 %v118
    %v493 = vunpack.c.l.b16 %v119
    %v494 = vunpack.c.h.b16 %v119
    %v495 = vunpack.c.l.b16 %v120
    %v496 = vpack.c.b16 %v361, %v352
    %v497 = vpack.c.b16 %v362, %v353
    %v498 = vpack.c.b16 %v363, %v354
    %v499 = vpack.c.b16 %v364, %v355
    %v500 = vpack.c.b16 %v365, %v356
    %v501 = vpack.c.b16 %v366, %v357
    %v502 = vpack.c.b16 %v367, %v358
    %v503 = vpack.c.b16 %v368, %v359
    %v504 = vpack.c.b16 %v369, %v360
    %v505 = vpack.c.b16 %v379, %v370
    %v506 = vpack.c.b16 %v380, %v371
    %v507 = vpack.c.b16 %v381, %v372
    %v508 = vpack.c.b16 %v382, %v373
    %v509 = vpack.c.b16 %v383, %v374
    %v510 = vpack.c.b16 %v384, %v375
    %v511 = vpack.c.b16 %v385, %v376
    %v512 = vpack.c.b16 %v386, %v377
    %v513 = vpack.c.b16 %v387, %v378
    %v514 = vpack.c.b16 %v397, %v388
    %v515 = vpack.c.b16 %v398, %v389
    %v516 = vpack.c.b16 %v399, %v390
    %v517 = vpack.c.b16 %v400, %v391
    %v518 = vpack.c.b16 %v401, %v392
    %v519 = vpack.c.b16 %v402, %v393
    %v520 = vpack.c.b16 %v403, %v394
    %v521 = vpack.c.b16 %v404, %v395
    %v522 = vpack.c.b16 %v405, %v396
    %v523 = vpack.c.b16 %v415, %v406
    %v524 = vpack.c.b16 %v416, %v407
    %v525 = vpack.c.b16 %v417, %v408
    %v526 = vpack.c.b16 %v418, %v409
    %v527 = vpack.c.b16 %v419, %v410
    %v528 = vpack.c.b16 %v420, %v411
    %v529 = vpack.c.b16 %v421, %v412
    %v530 = vpack.c.b16 %v422, %v413
    %v531 = vpack.c.b16 %v423, %v414
    %v532 = vpack.c.b16 %v433, %v424
    %v533 = vpack.c.b16 %v434, %v425
    %v534 = vpack.c.b16 %v435, %v426
    %v535 = vpack.c.b16 %v436, %v427
    %v536 = vpack.c.b16 %v437, %v428
    %v537 = vpack.c.b16 %v438, %v429
    %v538 = vpack.c.b16 %v439, %v430
    %v539 = vpack.c.b16 %v440, %v431
    %v540 = vpack.c.b16 %v441, %v432
    %v541 = vpack.c.b16 %v451, %v442
    %v542 = vpack.c.b16 %v452, %v443
    %v543 = vpack.c.b16 %v453, %v444
    %v544 = vpack.c.b16 %v454, %v445
    %v545 = vpack.c.b16 %v455, %v446
    %v546 = vpack.c.b16 %v456, %v447
    %v547 = vpack.c.b16 %v457, %v448
    %v548 = vpack.c.b16 %v458, %v449
    %v549 = vpack.c.b16 %v459, %v450
    %v550 = vpack.c.b16 %v469, %v460
    %v551 = vpack.c.b16 %v470, %v461
    %v552 = vpack.c.b16 %v471, %v462
    %v553 = vpack.c.b16 %v472, %v463
    %v554 = vpack.c.b16 %v473, %v464
    %v555 = vpack.c.b16 %v474, %v465
    %v556 = vpack.c.b16 %v475, %v466
    %v557 = vpack.c.b16 %v476, %v467
    %v558 = vpack.c.b16 %v477, %v468
    %v559 = vpack.c.b16 %v487, %v478
    %v560 = vpack.c.b16 %v488, %v479
    %v561 = vpack.c.b16 %v489, %v480
    %v562 = vpack.c.b16 %v490, %v481
    %v563 = vpack.c.b16 %v491, %v482
    %v564 = vpack.c.b16 %v492, %v483
    %v565 = vpack.c.b16 %v493, %v484
    %v566 = vpack.c.b16 %v494, %v485
    %v567 = vpack.c.b16 %v495, %v486
    %v784 = vunpack.c.l.b16 %v121
    %v785 = vunpack.c.l.b16 %v122
    %v786 = vunpack.c.l.b16 %v123
    %v787 = vunpack.c.l.b16 %v124
    %v788 = vunpack.c.l.b16 %v125
    %v789 = vunpack.c.l.b16 %v126
    %v790 = vunpack.c.l.b16 %v127
    %v791 = vunpack.c.l.b16 %v128
    %v792 = vunpack.c.l.b16 %v129
    %v793 = vunpack.c.l.b16 %v130
    %v794 = vunpack.c.l.b16 %v131
    %v795 = vunpack.c.l.b16 %v132
    %v796 = vunpack.c.l.b16 %v133
    %v797 = vunpack.c.l.b16 %v134
    %v798 = vunpack.c.l.b16 %v135
    %v799 = vunpack.c.l.b16 %v136
    %v800 = vunpack.c.l.b16 %v137
    %v801 = vunpack.c.l.b16 %v138
    %v802 = vunpack.c.l.b16 %v139
    %v803 = vunpack.c.l.b16 %v140
    %v804 = vunpack.c.l.b16 %v141
    %v805 = vunpack.c.l.b16 %v142
    %v806 = vunpack.c.l.b16 %v143
    %v807 = vunpack.c.l.b16 %v144
    %v808 = vunpack.c.l.b16 %v145
    %v809 = vunpack.c.l.b16 %v146
    %v810 = vunpack.c.l.b16 %v147
    %v811 = vunpack.c.l.b16 %v148
    %v812 = vunpack.c.l.b16 %v149
    %v813 = vunpack.c.l.b16 %v150
    %v814 = vunpack.c.l.b16 %v151
    %v815 = vunpack.c.l.b16 %v152
    %v816 = vunpack.c.l.b16 %v153
    %v817 = vunpack.c.l.b16 %v154
    %v818 = vunpack.c.l.b16 %v155
    %v819 = vunpack.c.l.b16 %v156
    %v820 = vunpack.c.l.b16 %v157
    %v821 = vunpack.c.l.b16 %v158
    %v822 = vunpack.c.l.b16 %v159
    %v823 = vunpack.c.l.b16 %v160
    %v824 = vunpack.c.l.b16 %v161
    %v825 = vunpack.c.l.b16 %v162
    %v826 = vunpack.c.l.b16 %v163
    %v827 = vunpack.c.l.b16 %v164
    %v828 = vunpack.c.l.b16 %v165
    %v829 = vunpack.c.l.b16 %v166
    %v830 = vunpack.c.l.b16 %v167
    %v831 = vunpack.c.l.b16 %v168
    %v832 = vunpack.c.l.b16 %v169
    %v833 = vunpack.c.l.b16 %v170
    %v834 = vunpack.c.l.b16 %v171
    %v835 = vunpack.c.l.b16 %v172
    %v836 = vunpack.c.l.b16 %v173
    %v837 = vunpack.c.l.b16 %v174
    %v838 = vunpack.c.l.b16 %v175
    %v839 = vunpack.c.l.b16 %v176
    %v840 = vunpack.c.l.b16 %v177
    %v841 = vunpack.c.l.b16 %v178
    %v842 = vunpack.c.l.b16 %v179
    %v843 = vunpack.c.l.b16 %v180
    %v844 = vunpack.c.l.b16 %v181
    %v845 = vunpack.c.l.b16 %v182
    %v846 = vunpack.c.l.b16 %v183
    %v847 = vunpack.c.l.b16 %v184
    %v848 = vunpack.c.l.b16 %v185
    %v849 = vunpack.c.l.b16 %v186
    %v850 = vunpack.c.l.b16 %v187
    %v851 = vunpack.c.l.b16 %v188
    %v852 = vunpack.c.l.b16 %v189
    %v853 = vunpack.c.l.b16 %v190
    %v854 = vunpack.c.l.b16 %v191
    %v855 = vunpack.c.l.b16 %v192
    %v856 = vunpack.c.l.b16 %v193
    %v857 = vunpack.c.l.b16 %v194
    %v858 = vunpack.c.l.b16 %v195
    %v859 = vunpack.c.l.b16 %v196
    %v860 = vunpack.c.l.b16 %v197
    %v861 = vunpack.c.l.b16 %v198
    %v862 = vunpack.c.l.b16 %v199
    %v863 = vunpack.c.l.b16 %v200
    %v864 = vunpack.c.l.b16 %v201
    %v865 = vunpack.c.l.b16 %v202
    %v866 = vunpack.c.l.b16 %v203
    %v867 = vunpack.c.l.b16 %v204
    %v868 = vunpack.c.l.b16 %v205
    %v869 = vunpack.c.l.b16 %v206
    %v870 = vunpack.c.l.b16 %v207
    %v871 = vunpack.c.l.b16 %v208
    %v872 = vunpack.c.l.b16 %v209
    %v873 = vunpack.c.l.b16 %v210
    %v874 = vunpack.c.l.b16 %v211
    %v875 = vunpack.c.l.b16 %v212
    %v876 = vunpack.c.l.b16 %v213
    %v877 = vunpack.c.l.b16 %v214
    %v878 = vunpack.c.l.b16 %v215
    %v879 = vunpack.c.l.b16 %v216
    %v880 = vunpack.c.l.b16 %v217
    %v881 = vunpack.c.l.b16 %v218
    %v882 = vunpack.c.l.b16 %v219
    %v883 = vunpack.c.l.b16 %v220
    %v884 = vunpack.c.l.b16 %v221
    %v885 = vunpack.c.l.b16 %v222
    %v886 = vunpack.c.l.b16 %v223
    %v887 = vunpack.c.l.b16 %v224
    %v888 = vunpack.c.l.b16 %v225
    %v889 = vunpack.c.l.b16 %v226
    %v890 = vunpack.c.l.b16 %v227
    %v891 = vunpack.c.l.b16 %v228
    %v892 = vunpack.c.l.b16 %v229
    %v893 = vunpack.c.l.b16 %v230
    %v894 = vunpack.c.l.b16 %v231
    %v895 = vunpack.c.l.b16 %v232
    %v896 = vunpack.c.l.b16 %v233
    %v897 = vunpack.c.l.b16 %v234
    %v898 = vunpack.c.l.b16 %v235
    %v899 = vunpack.c.l.b16 %v236
    %v900 = vunpack.c.l.b16 %v237
    %v901 = vunpack.c.l.b16 %v238
    %v902 = vunpack.c.l.b16 %v239
    %v903 = vunpack.c.l.b16 %v240
    %v904 = vunpack.c.l.b16 %v241
    %v905 = vunpack.c.l.b16 %v242
    %v906 = vunpack.c.l.b16 %v243
    %v907 = vunpack.c.l.b16 %v244
    %v908 = vunpack.c.l.b16 %v245
    %v909 = vunpack.c.l.b16 %v246
    %v910 = vunpack.c.l.b16 %v247
    %v911 = vunpack.c.l.b16 %v248
    %v912 = vunpack.c.l.b16 %v249
    %v913 = vunpack.c.l.b16 %v250
    %v914 = vunpack.c.l.b16 %v251
    %v915 = vunpack.c.l.b16 %v252
    %v916 = vunpack.c.l.b16 %v253
    %v917 = vunpack.c.l.b16 %v254
    %v918 = vunpack.c.l.b16 %v255
    %v919 = vunpack.c.l.b16 %v256
    %v920 = vunpack.c.l.b16 %v257
    %v921 = vunpack.c.l.b16 %v258
    %v922 = vunpack.c.l.b16 %v259
    %v923 = vunpack.c.l.b16 %v260
    %v924 = vunpack.c.l.b16 %v261
    %v925 = vunpack.c.l.b16 %v262
    %v926 = vunpack.c.l.b16 %v263
    %v927 = vunpack.c.l.b16 %v264
    %v928 = vpack.c.b16 %v785, %v784
    %v929 = vpack.c.b16 %v787, %v786
    %v930 = vpack.c.b16 %v789, %v788
    %v931 = vpack.c.b16 %v791, %v790
    %v932 = vpack.c.b16 %v793, %v792
    %v933 = vpack.c.b16 %v795, %v794
    %v934 = vpack.c.b16 %v797, %v796
    %v935 = vpack.c.b16 %v799, %v798
    %v936 = vpack.c.b16 %v801, %v800
    %v937 = vpack.c.b16 %v803, %v802
    %v938 = vpack.c.b16 %v805, %v804
    %v939 = vpack.c.b16 %v807, %v806
    %v940 = vpack.c.b16 %v809, %v808
    %v941 = vpack.c.b16 %v811, %v810
    %v942 = vpack.c.b16 %v813, %v812
    %v943 = vpack.c.b16 %v815, %v814
    %v944 = vpack.c.b16 %v817, %v816
    %v945 = vpack.c.b16 %v819, %v818
    %v946 = vpack.c.b16 %v821, %v820
    %v947 = vpack.c.b16 %v823, %v822
    %v948 = vpack.c.b16 %v825, %v824
    %v949 = vpack.c.b16 %v827, %v826
    %v950 = vpack.c.b16 %v829, %v828
    %v951 = vpack.c.b16 %v831, %v830
    %v952 = vpack.c.b16 %v833, %v832
    %v953 = vpack.c.b16 %v835, %v834
    %v954 = vpack.c.b16 %v837, %v836
    %v955 = vpack.c.b16 %v839, %v838
    %v956 = vpack.c.b16 %v841, %v840
    %v957 = vpack.c.b16 %v843, %v842
    %v958 = vpack.c.b16 %v845, %v844
    %v959 = vpack.c.b16 %v847, %v846
    %v960 = vpack.c.b16 %v849, %v848
    %v961 = vpack.c.b16 %v851, %v850
    %v962 = vpack.c.b16 %v853, %v852
    %v963 = vpack.c.b16 %v855, %v854
    %v964 = vpack.c.b16 %v857, %v856
    %v965 = vpack.c.b16 %v859, %v858
    %v966 = vpack.c.b16 %v861, %v860
    %v967 = vpack.c.b16 %v863, %v862
    %v968 = vpack.c.b16 %v865, %v864
    %v969 = vpack.c.b16 %v867, %v866
    %v970 = vpack.c.b16 %v869, %v868
    %v971 = vpack.c.b16 %v871, %v870
    %v972 = vpack.c.b16 %v873, %v872
    %v973 = vpack.c.b16 %v875, %v874
    %v974 = vpack.c.b16 %v877, %v876
    %v975 = vpack.c.b16 %v879, %v878
    %v976 = vpack.c.b16 %v881, %v880
    %v977 = vpack.c.b16 %v883, %v882
    %v978 = vpack.c.b16 %v885, %v884
    %v979 = vpack.c.b16 %v887, %v886
    %v980 = vpack.c.b16 %v889, %v888
    %v981 = vpack.c.b16 %v891, %v890
    %v982 = vpack.c.b16 %v893, %v892
    %v983 = vpack.c.b16 %v895, %v894
    %v984 = vpack.c.b16 %v897, %v896
    %v985 = vpack.c.b16 %v899, %v898
    %v986 = vpack.c.b16 %v901, %v900
    %v987 = vpack.c.b16 %v903, %v902
    %v988 = vpack.c.b16 %v905, %v904
    %v989 = vpack.c.b16 %v907, %v906
    %v990 = vpack.c.b16 %v909, %v908
    %v991 = vpack.c.b16 %v911, %v910
    %v992 = vpack.c.b16 %v913, %v912
    %v993 = vpack.c.b16 %v915, %v914
    %v994 = vpack.c.b16 %v917, %v916
    %v995 = vpack.c.b16 %v919, %v918
    %v996 = vpack.c.b16 %v921, %v920
    %v997 = vpack.c.b16 %v923, %v922
    %v998 = vpack.c.b16 %v925, %v924
    %v999 = vpack.c.b16 %v927, %v926
    %1072 = vmatprep.subr.bf16.mxu0 0
    %1073 = vmatpush1.bf16.msra.mxu0 %v935
    %1074 = vmatprep.subr.bf16.mxu0 0
    %1075 = vmatpush1.bf16.msra.mxu0 %v934
    %1076 = vmatprep.subr.bf16.mxu0 0
    %1077 = vmatpush1.bf16.msra.mxu0 %v933
    %1078 = vmatprep.subr.bf16.mxu0 0
    %1079 = vmatpush1.bf16.msra.mxu0 %v932
    %1080 = vmatprep.subr.bf16.mxu0 0
    %1081 = vmatpush1.bf16.msra.mxu0 %v931
    %1082 = vmatprep.subr.bf16.mxu0 0
    %1083 = vmatpush1.bf16.msra.mxu0 %v930
    %1084 = vmatprep.subr.bf16.mxu0 0
    %1085 = vmatpush1.bf16.msra.mxu0 %v929
    %1086 = vmatprep.subr.bf16.mxu0 0
    %1087 = vmatpush1.bf16.msra.mxu0 %v928
    %1088 = vmatprep.subr.bf16.mxu0 0
    %1089 = vmatpush2.bf16.msra.mxu0 %v943
    %1090 = vmatprep.subr.bf16.mxu0 0
    %1091 = vmatpush2.bf16.msra.mxu0 %v942
    %1092 = vmatprep.subr.bf16.mxu0 0
    %1093 = vmatpush2.bf16.msra.mxu0 %v941
    %1094 = vmatprep.subr.bf16.mxu0 0
    %1095 = vmatpush2.bf16.msra.mxu0 %v940
    %1096 = vmatprep.subr.bf16.mxu0 0
    %1097 = vmatpush2.bf16.msra.mxu0 %v939
    %1098 = vmatprep.subr.bf16.mxu0 0
    %1099 = vmatpush2.bf16.msra.mxu0 %v938
    %1100 = vmatprep.subr.bf16.mxu0 0
    %1101 = vmatpush2.bf16.msra.mxu0 %v937
    %1102 = vmatprep.subr.bf16.mxu0 0
    %1103 = vmatpush2.bf16.msra.mxu0 %v936
    %1104 = vmatprep.mubr.bf16.mxu0 %v497
    %1105 = vmatmul.mubr.bf16.gmra.mxu0 %v496
    %v1106 = vpop.f32.mrf.mxu0
    %v1107 = vadd.f32 %v270, %v1106
    %v1108 = vpop.f32.mrf.mxu0
    %v1109 = vpop.f32.mrf.mxu0
    %v1110 = vadd.f32 %v270, %v1109
    %v1111 = vpop.f32.mrf.mxu0
    %1112 = vmatprep.mubr.bf16.mxu0 %v506
    %1113 = vmatmul.mubr.bf16.gmra.mxu0 %v505
    %v1114 = vpop.f32.mrf.mxu0
    %v1115 = vadd.f32 %v270, %v1114
    %v1116 = vpop.f32.mrf.mxu0
    %v1117 = vpop.f32.mrf.mxu0
    %v1118 = vadd.f32 %v270, %v1117
    %v1119 = vpop.f32.mrf.mxu0
    %1120 = vmatprep.mubr.bf16.mxu0 %v515
    %1121 = vmatmul.mubr.bf16.gmra.mxu0 %v514
    %v1122 = vpop.f32.mrf.mxu0
    %v1123 = vadd.f32 %v270, %v1122
    %v1124 = vpop.f32.mrf.mxu0
    %v1125 = vpop.f32.mrf.mxu0
    %v1126 = vadd.f32 %v270, %v1125
    %v1127 = vpop.f32.mrf.mxu0
    %1128 = vmatprep.mubr.bf16.mxu0 %v524
    %1129 = vmatmul.mubr.bf16.gmra.mxu0 %v523
    %v1130 = vpop.f32.mrf.mxu0
    %v1131 = vadd.f32 %v270, %v1130
    %v1132 = vpop.f32.mrf.mxu0
    %v1133 = vpop.f32.mrf.mxu0
    %v1134 = vadd.f32 %v270, %v1133
    %v1135 = vpop.f32.mrf.mxu0
    %1136 = vmatprep.mubr.bf16.mxu0 %v533
    %1137 = vmatmul.mubr.bf16.gmra.mxu0 %v532
    %v1138 = vpop.f32.mrf.mxu0
    %v1139 = vadd.f32 %v270, %v1138
    %v1140 = vpop.f32.mrf.mxu0
    %v1141 = vpop.f32.mrf.mxu0
    %v1142 = vadd.f32 %v270, %v1141
    %v1143 = vpop.f32.mrf.mxu0
    %1144 = vmatprep.mubr.bf16.mxu0 %v542
    %1145 = vmatmul.mubr.bf16.gmra.mxu0 %v541
    %v1146 = vpop.f32.mrf.mxu0
    %v1147 = vadd.f32 %v270, %v1146
    %v1148 = vpop.f32.mrf.mxu0
    %v1149 = vpop.f32.mrf.mxu0
    %v1150 = vadd.f32 %v270, %v1149
    %v1151 = vpop.f32.mrf.mxu0
    %1152 = vmatprep.mubr.bf16.mxu0 %v551
    %1153 = vmatmul.mubr.bf16.gmra.mxu0 %v550
    %v1154 = vpop.f32.mrf.mxu0
    %v1155 = vadd.f32 %v270, %v1154
    %v1156 = vpop.f32.mrf.mxu0
    %v1157 = vpop.f32.mrf.mxu0
    %v1158 = vadd.f32 %v270, %v1157
    %v1159 = vpop.f32.mrf.mxu0
    %1160 = vmatprep.mubr.bf16.mxu0 %v560
    %1161 = vmatmul.mubr.bf16.gmra.mxu0 %v559
    %v1162 = vpop.f32.mrf.mxu0
    %v1163 = vadd.f32 %v270, %v1162
    %v1164 = vpop.f32.mrf.mxu0
    %v1165 = vpop.f32.mrf.mxu0
    %v1166 = vadd.f32 %v270, %v1165
    %v1167 = vpop.f32.mrf.mxu0
    %1168 = vdwg.mxu0
    %1169 = vmatprep.subr.bf16.mxu0 0
    %1170 = vmatpush1.bf16.msra.mxu0 %v951
    %1171 = vmatprep.subr.bf16.mxu0 0
    %1172 = vmatpush1.bf16.msra.mxu0 %v950
    %1173 = vmatprep.subr.bf16.mxu0 0
    %1174 = vmatpush1.bf16.msra.mxu0 %v949
    %1175 = vmatprep.subr.bf16.mxu0 0
    %1176 = vmatpush1.bf16.msra.mxu0 %v948
    %1177 = vmatprep.subr.bf16.mxu0 0
    %1178 = vmatpush1.bf16.msra.mxu0 %v947
    %1179 = vmatprep.subr.bf16.mxu0 0
    %1180 = vmatpush1.bf16.msra.mxu0 %v946
    %1181 = vmatprep.subr.bf16.mxu0 0
    %1182 = vmatpush1.bf16.msra.mxu0 %v945
    %1183 = vmatprep.subr.bf16.mxu0 0
    %1184 = vmatpush1.bf16.msra.mxu0 %v944
    %1185 = vmatprep.subr.bf16.mxu0 0
    %1186 = vmatpush2.bf16.msra.mxu0 %v959
    %1187 = vmatprep.subr.bf16.mxu0 0
    %1188 = vmatpush2.bf16.msra.mxu0 %v958
    %1189 = vmatprep.subr.bf16.mxu0 0
    %1190 = vmatpush2.bf16.msra.mxu0 %v957
    %1191 = vmatprep.subr.bf16.mxu0 0
    %1192 = vmatpush2.bf16.msra.mxu0 %v956
    %1193 = vmatprep.subr.bf16.mxu0 0
    %1194 = vmatpush2.bf16.msra.mxu0 %v955
    %1195 = vmatprep.subr.bf16.mxu0 0
    %1196 = vmatpush2.bf16.msra.mxu0 %v954
    %1197 = vmatprep.subr.bf16.mxu0 0
    %1198 = vmatpush2.bf16.msra.mxu0 %v953
    %1199 = vmatprep.subr.bf16.mxu0 0
    %1200 = vmatpush2.bf16.msra.mxu0 %v952
    %1201 = vmatprep.mubr.bf16.mxu0 %v499
    %1202 = vmatmul.mubr.bf16.gmra.mxu0 %v498
    %v1203 = vpop.f32.mrf.mxu0
    %v1204 = vadd.f32 %v1107, %v1203
    %v1205 = vpop.f32.mrf.mxu0
    %v1206 = vpop.f32.mrf.mxu0
    %v1207 = vadd.f32 %v1110, %v1206
    %v1208 = vpop.f32.mrf.mxu0
    %1209 = vmatprep.mubr.bf16.mxu0 %v508
    %1210 = vmatmul.mubr.bf16.gmra.mxu0 %v507
    %v1211 = vpop.f32.mrf.mxu0
    %v1212 = vadd.f32 %v1115, %v1211
    %v1213 = vpop.f32.mrf.mxu0
    %v1214 = vpop.f32.mrf.mxu0
    %v1215 = vadd.f32 %v1118, %v1214
    %v1216 = vpop.f32.mrf.mxu0
    %1217 = vmatprep.mubr.bf16.mxu0 %v517
    %1218 = vmatmul.mubr.bf16.gmra.mxu0 %v516
    %v1219 = vpop.f32.mrf.mxu0
    %v1220 = vadd.f32 %v1123, %v1219
    %v1221 = vpop.f32.mrf.mxu0
    %v1222 = vpop.f32.mrf.mxu0
    %v1223 = vadd.f32 %v1126, %v1222
    %v1224 = vpop.f32.mrf.mxu0
    %1225 = vmatprep.mubr.bf16.mxu0 %v526
    %1226 = vmatmul.mubr.bf16.gmra.mxu0 %v525
    %v1227 = vpop.f32.mrf.mxu0
    %v1228 = vadd.f32 %v1131, %v1227
    %v1229 = vpop.f32.mrf.mxu0
    %v1230 = vpop.f32.mrf.mxu0
    %v1231 = vadd.f32 %v1134, %v1230
    %v1232 = vpop.f32.mrf.mxu0
    %1233 = vmatprep.mubr.bf16.mxu0 %v535
    %1234 = vmatmul.mubr.bf16.gmra.mxu0 %v534
    %v1235 = vpop.f32.mrf.mxu0
    %v1236 = vadd.f32 %v1139, %v1235
    %v1237 = vpop.f32.mrf.mxu0
    %v1238 = vpop.f32.mrf.mxu0
    %v1239 = vadd.f32 %v1142, %v1238
    %v1240 = vpop.f32.mrf.mxu0
    %1241 = vmatprep.mubr.bf16.mxu0 %v544
    %1242 = vmatmul.mubr.bf16.gmra.mxu0 %v543
    %v1243 = vpop.f32.mrf.mxu0
    %v1244 = vadd.f32 %v1147, %v1243
    %v1245 = vpop.f32.mrf.mxu0
    %v1246 = vpop.f32.mrf.mxu0
    %v1247 = vadd.f32 %v1150, %v1246
    %v1248 = vpop.f32.mrf.mxu0
    %1249 = vmatprep.mubr.bf16.mxu0 %v553
    %1250 = vmatmul.mubr.bf16.gmra.mxu0 %v552
    %v1251 = vpop.f32.mrf.mxu0
    %v1252 = vadd.f32 %v1155, %v1251
    %v1253 = vpop.f32.mrf.mxu0
    %v1254 = vpop.f32.mrf.mxu0
    %v1255 = vadd.f32 %v1158, %v1254
    %v1256 = vpop.f32.mrf.mxu0
    %1257 = vmatprep.mubr.bf16.mxu0 %v562
    %1258 = vmatmul.mubr.bf16.gmra.mxu0 %v561
    %v1259 = vpop.f32.mrf.mxu0
    %v1260 = vadd.f32 %v1163, %v1259
    %v1261 = vpop.f32.mrf.mxu0
    %v1262 = vpop.f32.mrf.mxu0
    %v1263 = vadd.f32 %v1166, %v1262
    %v1264 = vpop.f32.mrf.mxu0
    %1265 = vdwg.mxu0
    %1266 = vmatprep.subr.bf16.mxu0 0
    %1267 = vmatpush1.bf16.msra.mxu0 %v967
    %1268 = vmatprep.subr.bf16.mxu0 0
    %1269 = vmatpush1.bf16.msra.mxu0 %v966
    %1270 = vmatprep.subr.bf16.mxu0 0
    %1271 = vmatpush1.bf16.msra.mxu0 %v965
    %1272 = vmatprep.subr.bf16.mxu0 0
    %1273 = vmatpush1.bf16.msra.mxu0 %v964
    %1274 = vmatprep.subr.bf16.mxu0 0
    %1275 = vmatpush1.bf16.msra.mxu0 %v963
    %1276 = vmatprep.subr.bf16.mxu0 0
    %1277 = vmatpush1.bf16.msra.mxu0 %v962
    %1278 = vmatprep.subr.bf16.mxu0 0
    %1279 = vmatpush1.bf16.msra.mxu0 %v961
    %1280 = vmatprep.subr.bf16.mxu0 0
    %1281 = vmatpush1.bf16.msra.mxu0 %v960
    %1282 = vmatprep.subr.bf16.mxu0 0
    %1283 = vmatpush2.bf16.msra.mxu0 %v975
    %1284 = vmatprep.subr.bf16.mxu0 0
    %1285 = vmatpush2.bf16.msra.mxu0 %v974
    %1286 = vmatprep.subr.bf16.mxu0 0
    %1287 = vmatpush2.bf16.msra.mxu0 %v973
    %1288 = vmatprep.subr.bf16.mxu0 0
    %1289 = vmatpush2.bf16.msra.mxu0 %v972
    %1290 = vmatprep.subr.bf16.mxu0 0
    %1291 = vmatpush2.bf16.msra.mxu0 %v971
    %1292 = vmatprep.subr.bf16.mxu0 0
    %1293 = vmatpush2.bf16.msra.mxu0 %v970
    %1294 = vmatprep.subr.bf16.mxu0 0
    %1295 = vmatpush2.bf16.msra.mxu0 %v969
    %1296 = vmatprep.subr.bf16.mxu0 0
    %1297 = vmatpush2.bf16.msra.mxu0 %v968
    %1298 = vmatprep.mubr.bf16.mxu0 %v501
    %1299 = vmatmul.mubr.bf16.gmra.mxu0 %v500
    %v1300 = vpop.f32.mrf.mxu0
    %v1301 = vadd.f32 %v1204, %v1300
    %v1302 = vpop.f32.mrf.mxu0
    %v1303 = vpop.f32.mrf.mxu0
    %v1304 = vadd.f32 %v1207, %v1303
    %v1305 = vpop.f32.mrf.mxu0
    %1306 = vmatprep.mubr.bf16.mxu0 %v510
    %1307 = vmatmul.mubr.bf16.gmra.mxu0 %v509
    %v1308 = vpop.f32.mrf.mxu0
    %v1309 = vadd.f32 %v1212, %v1308
    %v1310 = vpop.f32.mrf.mxu0
    %v1311 = vpop.f32.mrf.mxu0
    %v1312 = vadd.f32 %v1215, %v1311
    %v1313 = vpop.f32.mrf.mxu0
    %1314 = vmatprep.mubr.bf16.mxu0 %v519
    %1315 = vmatmul.mubr.bf16.gmra.mxu0 %v518
    %v1316 = vpop.f32.mrf.mxu0
    %v1317 = vadd.f32 %v1220, %v1316
    %v1318 = vpop.f32.mrf.mxu0
    %v1319 = vpop.f32.mrf.mxu0
    %v1320 = vadd.f32 %v1223, %v1319
    %v1321 = vpop.f32.mrf.mxu0
    %1322 = vmatprep.mubr.bf16.mxu0 %v528
    %1323 = vmatmul.mubr.bf16.gmra.mxu0 %v527
    %v1324 = vpop.f32.mrf.mxu0
    %v1325 = vadd.f32 %v1228, %v1324
    %v1326 = vpop.f32.mrf.mxu0
    %v1327 = vpop.f32.mrf.mxu0
    %v1328 = vadd.f32 %v1231, %v1327
    %v1329 = vpop.f32.mrf.mxu0
    %1330 = vmatprep.mubr.bf16.mxu0 %v537
    %1331 = vmatmul.mubr.bf16.gmra.mxu0 %v536
    %v1332 = vpop.f32.mrf.mxu0
    %v1333 = vadd.f32 %v1236, %v1332
    %v1334 = vpop.f32.mrf.mxu0
    %v1335 = vpop.f32.mrf.mxu0
    %v1336 = vadd.f32 %v1239, %v1335
    %v1337 = vpop.f32.mrf.mxu0
    %1338 = vmatprep.mubr.bf16.mxu0 %v546
    %1339 = vmatmul.mubr.bf16.gmra.mxu0 %v545
    %v1340 = vpop.f32.mrf.mxu0
    %v1341 = vadd.f32 %v1244, %v1340
    %v1342 = vpop.f32.mrf.mxu0
    %v1343 = vpop.f32.mrf.mxu0
    %v1344 = vadd.f32 %v1247, %v1343
    %v1345 = vpop.f32.mrf.mxu0
    %1346 = vmatprep.mubr.bf16.mxu0 %v555
    %1347 = vmatmul.mubr.bf16.gmra.mxu0 %v554
    %v1348 = vpop.f32.mrf.mxu0
    %v1349 = vadd.f32 %v1252, %v1348
    %v1350 = vpop.f32.mrf.mxu0
    %v1351 = vpop.f32.mrf.mxu0
    %v1352 = vadd.f32 %v1255, %v1351
    %v1353 = vpop.f32.mrf.mxu0
    %1354 = vmatprep.mubr.bf16.mxu0 %v564
    %1355 = vmatmul.mubr.bf16.gmra.mxu0 %v563
    %v1356 = vpop.f32.mrf.mxu0
    %v1357 = vadd.f32 %v1260, %v1356
    %v1358 = vpop.f32.mrf.mxu0
    %v1359 = vpop.f32.mrf.mxu0
    %v1360 = vadd.f32 %v1263, %v1359
    %v1361 = vpop.f32.mrf.mxu0
    %1362 = vdwg.mxu0
    %1363 = vmatprep.subr.bf16.mxu0 0
    %1364 = vmatpush1.bf16.msra.mxu0 %v983
    %1365 = vmatprep.subr.bf16.mxu0 0
    %1366 = vmatpush1.bf16.msra.mxu0 %v982
    %1367 = vmatprep.subr.bf16.mxu0 0
    %1368 = vmatpush1.bf16.msra.mxu0 %v981
    %1369 = vmatprep.subr.bf16.mxu0 0
    %1370 = vmatpush1.bf16.msra.mxu0 %v980
    %1371 = vmatprep.subr.bf16.mxu0 0
    %1372 = vmatpush1.bf16.msra.mxu0 %v979
    %1373 = vmatprep.subr.bf16.mxu0 0
    %1374 = vmatpush1.bf16.msra.mxu0 %v978
    %1375 = vmatprep.subr.bf16.mxu0 0
    %1376 = vmatpush1.bf16.msra.mxu0 %v977
    %1377 = vmatprep.subr.bf16.mxu0 0
    %1378 = vmatpush1.bf16.msra.mxu0 %v976
    %1379 = vmatprep.subr.bf16.mxu0 0
    %1380 = vmatpush2.bf16.msra.mxu0 %v991
    %1381 = vmatprep.subr.bf16.mxu0 0
    %1382 = vmatpush2.bf16.msra.mxu0 %v990
    %1383 = vmatprep.subr.bf16.mxu0 0
    %1384 = vmatpush2.bf16.msra.mxu0 %v989
    %1385 = vmatprep.subr.bf16.mxu0 0
    %1386 = vmatpush2.bf16.msra.mxu0 %v988
    %1387 = vmatprep.subr.bf16.mxu0 0
    %1388 = vmatpush2.bf16.msra.mxu0 %v987
    %1389 = vmatprep.subr.bf16.mxu0 0
    %1390 = vmatpush2.bf16.msra.mxu0 %v986
    %1391 = vmatprep.subr.bf16.mxu0 0
    %1392 = vmatpush2.bf16.msra.mxu0 %v985
    %1393 = vmatprep.subr.bf16.mxu0 0
    %1394 = vmatpush2.bf16.msra.mxu0 %v984
    %1395 = vmatprep.mubr.bf16.mxu0 %v503
    %1396 = vmatmul.mubr.bf16.gmra.mxu0 %v502
    %v1397 = vpop.f32.mrf.mxu0
    %v1398 = vadd.f32 %v1301, %v1397
    %v1399 = vpop.f32.mrf.mxu0
    %v1400 = vpop.f32.mrf.mxu0
    %v1401 = vadd.f32 %v1304, %v1400
    %v1402 = vpop.f32.mrf.mxu0
    %1403 = vmatprep.mubr.bf16.mxu0 %v512
    %1404 = vmatmul.mubr.bf16.gmra.mxu0 %v511
    %v1405 = vpop.f32.mrf.mxu0
    %v1406 = vadd.f32 %v1309, %v1405
    %v1407 = vpop.f32.mrf.mxu0
    %v1408 = vpop.f32.mrf.mxu0
    %v1409 = vadd.f32 %v1312, %v1408
    %v1410 = vpop.f32.mrf.mxu0
    %1411 = vmatprep.mubr.bf16.mxu0 %v521
    %1412 = vmatmul.mubr.bf16.gmra.mxu0 %v520
    %v1413 = vpop.f32.mrf.mxu0
    %v1414 = vadd.f32 %v1317, %v1413
    %v1415 = vpop.f32.mrf.mxu0
    %v1416 = vpop.f32.mrf.mxu0
    %v1417 = vadd.f32 %v1320, %v1416
    %v1418 = vpop.f32.mrf.mxu0
    %1419 = vmatprep.mubr.bf16.mxu0 %v530
    %1420 = vmatmul.mubr.bf16.gmra.mxu0 %v529
    %v1421 = vpop.f32.mrf.mxu0
    %v1422 = vadd.f32 %v1325, %v1421
    %v1423 = vpop.f32.mrf.mxu0
    %v1424 = vpop.f32.mrf.mxu0
    %v1425 = vadd.f32 %v1328, %v1424
    %v1426 = vpop.f32.mrf.mxu0
    %1427 = vmatprep.mubr.bf16.mxu0 %v539
    %1428 = vmatmul.mubr.bf16.gmra.mxu0 %v538
    %v1429 = vpop.f32.mrf.mxu0
    %v1430 = vadd.f32 %v1333, %v1429
    %v1431 = vpop.f32.mrf.mxu0
    %v1432 = vpop.f32.mrf.mxu0
    %v1433 = vadd.f32 %v1336, %v1432
    %v1434 = vpop.f32.mrf.mxu0
    %1435 = vmatprep.mubr.bf16.mxu0 %v548
    %1436 = vmatmul.mubr.bf16.gmra.mxu0 %v547
    %v1437 = vpop.f32.mrf.mxu0
    %v1438 = vadd.f32 %v1341, %v1437
    %v1439 = vpop.f32.mrf.mxu0
    %v1440 = vpop.f32.mrf.mxu0
    %v1441 = vadd.f32 %v1344, %v1440
    %v1442 = vpop.f32.mrf.mxu0
    %1443 = vmatprep.mubr.bf16.mxu0 %v557
    %1444 = vmatmul.mubr.bf16.gmra.mxu0 %v556
    %v1445 = vpop.f32.mrf.mxu0
    %v1446 = vadd.f32 %v1349, %v1445
    %v1447 = vpop.f32.mrf.mxu0
    %v1448 = vpop.f32.mrf.mxu0
    %v1449 = vadd.f32 %v1352, %v1448
    %v1450 = vpop.f32.mrf.mxu0
    %1451 = vmatprep.mubr.bf16.mxu0 %v566
    %1452 = vmatmul.mubr.bf16.gmra.mxu0 %v565
    %v1453 = vpop.f32.mrf.mxu0
    %v1454 = vadd.f32 %v1357, %v1453
    %v1455 = vpop.f32.mrf.mxu0
    %v1456 = vpop.f32.mrf.mxu0
    %v1457 = vadd.f32 %v1360, %v1456
    %v1458 = vpop.f32.mrf.mxu0
    %1459 = vdwg.mxu0
    %1460 = vmatprep.subr.bf16.mxu0 0
    %1461 = vmatpush1.bf16.msra.mxu0 %v999
    %1462 = vmatprep.subr.bf16.mxu0 0
    %1463 = vmatpush1.bf16.msra.mxu0 %v998
    %1464 = vmatprep.subr.bf16.mxu0 0
    %1465 = vmatpush1.bf16.msra.mxu0 %v997
    %1466 = vmatprep.subr.bf16.mxu0 0
    %1467 = vmatpush1.bf16.msra.mxu0 %v996
    %1468 = vmatprep.subr.bf16.mxu0 0
    %1469 = vmatpush1.bf16.msra.mxu0 %v995
    %1470 = vmatprep.subr.bf16.mxu0 0
    %1471 = vmatpush1.bf16.msra.mxu0 %v994
    %1472 = vmatprep.subr.bf16.mxu0 0
    %1473 = vmatpush1.bf16.msra.mxu0 %v993
    %1474 = vmatprep.subr.bf16.mxu0 0
    %1475 = vmatpush1.bf16.msra.mxu0 %v992
    %1476 = vmatprep.subr.bf16.mxu0 0
    %1477 = vmatpush2.bf16.msra.mxu0 0
    %1478 = vmatprep.subr.bf16.mxu0 0
    %1479 = vmatpush2.bf16.msra.mxu0 0
    %1480 = vmatprep.subr.bf16.mxu0 0
    %1481 = vmatpush2.bf16.msra.mxu0 0
    %1482 = vmatprep.subr.bf16.mxu0 0
    %1483 = vmatpush2.bf16.msra.mxu0 0
    %1484 = vmatprep.subr.bf16.mxu0 0
    %1485 = vmatpush2.bf16.msra.mxu0 0
    %1486 = vmatprep.subr.bf16.mxu0 0
    %1487 = vmatpush2.bf16.msra.mxu0 0
    %1488 = vmatprep.subr.bf16.mxu0 0
    %1489 = vmatpush2.bf16.msra.mxu0 0
    %1490 = vmatprep.subr.bf16.mxu0 0
    %1491 = vmatpush2.bf16.msra.mxu0 0
    %1492 = vmatprep.mubr.bf16.mxu0 0
    %1493 = vmatmul.mubr.bf16.gmra.mxu0 %v504
    %v1494 = vpop.f32.mrf.mxu0
    %v1495 = vadd.f32 %v1398, %v1494
    %v1496 = vpop.f32.mrf.mxu0
    %v1497 = vpop.f32.mrf.mxu0
    %v1498 = vadd.f32 %v1401, %v1497
    %v1499 = vpop.f32.mrf.mxu0
    %1500 = vmatprep.mubr.bf16.mxu0 0
    %1501 = vmatmul.mubr.bf16.gmra.mxu0 %v513
    %v1502 = vpop.f32.mrf.mxu0
    %v1503 = vadd.f32 %v1406, %v1502
    %v1504 = vpop.f32.mrf.mxu0
    %v1505 = vpop.f32.mrf.mxu0
    %v1506 = vadd.f32 %v1409, %v1505
    %v1507 = vpop.f32.mrf.mxu0
    %1508 = vmatprep.mubr.bf16.mxu0 0
    %1509 = vmatmul.mubr.bf16.gmra.mxu0 %v522
    %v1510 = vpop.f32.mrf.mxu0
    %v1511 = vadd.f32 %v1414, %v1510
    %v1512 = vpop.f32.mrf.mxu0
    %v1513 = vpop.f32.mrf.mxu0
    %v1514 = vadd.f32 %v1417, %v1513
    %v1515 = vpop.f32.mrf.mxu0
    %1516 = vmatprep.mubr.bf16.mxu0 0
    %1517 = vmatmul.mubr.bf16.gmra.mxu0 %v531
    %v1518 = vpop.f32.mrf.mxu0
    %v1519 = vadd.f32 %v1422, %v1518
    %v1520 = vpop.f32.mrf.mxu0
    %v1521 = vpop.f32.mrf.mxu0
    %v1522 = vadd.f32 %v1425, %v1521
    %v1523 = vpop.f32.mrf.mxu0
    %1524 = vmatprep.mubr.bf16.mxu0 0
    %1525 = vmatmul.mubr.bf16.gmra.mxu0 %v540
    %v1526 = vpop.f32.mrf.mxu0
    %v1527 = vadd.f32 %v1430, %v1526
    %v1528 = vpop.f32.mrf.mxu0
    %v1529 = vpop.f32.mrf.mxu0
    %v1530 = vadd.f32 %v1433, %v1529
    %v1531 = vpop.f32.mrf.mxu0
    %1532 = vmatprep.mubr.bf16.mxu0 0
    %1533 = vmatmul.mubr.bf16.gmra.mxu0 %v549
    %v1534 = vpop.f32.mrf.mxu0
    %v1535 = vadd.f32 %v1438, %v1534
    %v1536 = vpop.f32.mrf.mxu0
    %v1537 = vpop.f32.mrf.mxu0
    %v1538 = vadd.f32 %v1441, %v1537
    %v1539 = vpop.f32.mrf.mxu0
    %1540 = vmatprep.mubr.bf16.mxu0 0
    %1541 = vmatmul.mubr.bf16.gmra.mxu0 %v558
    %v1542 = vpop.f32.mrf.mxu0
    %v1543 = vadd.f32 %v1446, %v1542
    %v1544 = vpop.f32.mrf.mxu0
    %v1545 = vpop.f32.mrf.mxu0
    %v1546 = vadd.f32 %v1449, %v1545
    %v1547 = vpop.f32.mrf.mxu0
    %1548 = vmatprep.mubr.bf16.mxu0 0
    %1549 = vmatmul.mubr.bf16.gmra.mxu0 %v567
    %v1550 = vpop.f32.mrf.mxu0
    %v1551 = vadd.f32 %v1454, %v1550
    %v1552 = vpop.f32.mrf.mxu0
    %v1553 = vpop.f32.mrf.mxu0
    %v1554 = vadd.f32 %v1457, %v1553
    %v1555 = vpop.f32.mrf.mxu0
    %1556 = vdwg.mxu0
    %v1557 = vmul.f32 %v1495, 0.2
    %v1558 = vmul.f32 %v1498, 0.2
    %v1559 = vmul.f32 %v1503, 0.2
    %v1560 = vmul.f32 %v1506, 0.2
    %v1561 = vmul.f32 %v1511, 0.2
    %v1562 = vmul.f32 %v1514, 0.2
    %v1563 = vmul.f32 %v1519, 0.2
    %v1564 = vmul.f32 %v1522, 0.2
    %v1565 = vmul.f32 %v1527, 0.2
    %v1566 = vmul.f32 %v1530, 0.2
    %v1567 = vmul.f32 %v1535, 0.2
    %v1568 = vmul.f32 %v1538, 0.2
    %v1569 = vmul.f32 %v1543, 0.2
    %v1570 = vmul.f32 %v1546, 0.2
    %v1571 = vmul.f32 %v1551, 0.2
    %v1572 = vmul.f32 %v1554, 0.2
    %v1573 = vmax.f32 %v1495, %v1557
    %v1574 = vmax.f32 %v1498, %v1558
    %v1575 = vmax.f32 %v1503, %v1559
    %v1576 = vmax.f32 %v1506, %v1560
    %v1577 = vmax.f32 %v1511, %v1561
    %v1578 = vmax.f32 %v1514, %v1562
    %v1579 = vmax.f32 %v1519, %v1563
    %v1580 = vmax.f32 %v1522, %v1564
    %v1581 = vmax.f32 %v1527, %v1565
    %v1582 = vmax.f32 %v1530, %v1566
    %v1583 = vmax.f32 %v1535, %v1567
    %v1584 = vmax.f32 %v1538, %v1568
    %v1585 = vmax.f32 %v1543, %v1569
    %v1586 = vmax.f32 %v1546, %v1570
    %v1587 = vmax.f32 %v1551, %v1571
    %v1588 = vmax.f32 %v1554, %v1572
    %v1589 = vpack.c.bf16 %v1574, %v1573
    %v1590 = vpack.c.bf16 %v1576, %v1575
    %v1591 = vpack.c.bf16 %v1578, %v1577
    %v1592 = vpack.c.bf16 %v1580, %v1579
    %v1593 = vpack.c.bf16 %v1582, %v1581
    %v1594 = vpack.c.bf16 %v1584, %v1583
    %v1595 = vpack.c.bf16 %v1586, %v1585
    %v1596 = vpack.c.bf16 %v1588, %v1587
    %v1605 = vunpack.c.l.b16 %v1589
    %v1606 = vunpack.c.h.b16 %v1589
    %v1607 = vunpack.c.l.b16 %v1590
    %v1608 = vunpack.c.h.b16 %v1590
    %v1609 = vunpack.c.l.b16 %v1591
    %v1610 = vunpack.c.h.b16 %v1591
    %v1611 = vunpack.c.l.b16 %v1592
    %v1612 = vunpack.c.h.b16 %v1592
    %v1613 = vunpack.c.l.b16 %v1593
    %v1614 = vunpack.c.h.b16 %v1593
    %v1615 = vunpack.c.l.b16 %v1594
    %v1616 = vunpack.c.h.b16 %v1594
    %v1617 = vunpack.c.l.b16 %v1595
    %v1618 = vunpack.c.h.b16 %v1595
    %v1619 = vunpack.c.l.b16 %v1596
    %v1620 = vunpack.c.h.b16 %v1596
    %v1621 = vpack.c.b16 %v1605, %v1605
    %v1622 = vpack.c.b16 %v1606, %v1606
    %v1623 = vpack.c.b16 %v1607, %v1607
    %v1624 = vpack.c.b16 %v1608, %v1608
    %v1625 = vpack.c.b16 %v1609, %v1609
    %v1626 = vpack.c.b16 %v1610, %v1610
    %v1627 = vpack.c.b16 %v1611, %v1611
    %v1628 = vpack.c.b16 %v1612, %v1612
    %v1629 = vpack.c.b16 %v1613, %v1613
    %v1630 = vpack.c.b16 %v1614, %v1614
    %v1631 = vpack.c.b16 %v1615, %v1615
    %v1632 = vpack.c.b16 %v1616, %v1616
    %v1633 = vpack.c.b16 %v1617, %v1617
    %v1634 = vpack.c.b16 %v1618, %v1618
    %v1635 = vpack.c.b16 %v1619, %v1619
    %v1636 = vpack.c.b16 %v1620, %v1620
    %1653 = vst [vmem:[%s3] sm:$0xf] %v1621
    %1654 = vst [vmem:[%s3 + $0x4] sm:$0xf] %v1622
    %1655 = vst [vmem:[%s3 + $0x8] sm:$0xf] %v1623
    %1656 = vst [vmem:[%s3 + $0xc] sm:$0xf] %v1624
    %1657 = vst [vmem:[%s3 + $0x10] sm:$0xf] %v1625
    %1658 = vst [vmem:[%s3 + $0x14] sm:$0xf] %v1626
    %1659 = vst [vmem:[%s3 + $0x18] sm:$0xf] %v1627
    %1660 = vst [vmem:[%s3 + $0x1c] sm:$0xf] %v1628
    %1661 = vst [vmem:[%s3 + $0x20] sm:$0xf] %v1629
    %1662 = vst [vmem:[%s3 + $0x24] sm:$0xf] %v1630
    %1663 = vst [vmem:[%s3 + $0x28] sm:$0xf] %v1631
    %1664 = vst [vmem:[%s3 + $0x2c] sm:$0xf] %v1632
    %1665 = vst [vmem:[%s3 + $0x30] sm:$0xf] %v1633
    %1666 = vst [vmem:[%s3 + $0x34] sm:$0xf] %v1634
    %1667 = vst [vmem:[%s3 + $0x38] sm:$0xf] %v1635
    %1668 = vst [vmem:[%s3 + $0x3c] sm:$0xf] %v1636
    // Predicated region
    $region22: #{simple_cnn_vib_forward.4} parent=1 // pred_check
      _
    $region23: #{simple_cnn_vib_forward.4} parent=1 // pred_check_branch
      %1670 = sbr.rel (0) target = $region25
    $region24: #{simple_cnn_vib_forward.4} parent=1 // pred_region
      _
    $region25: #{simple_cnn_vib_forward.4} parent=1 // pred_fallthru
      _
    // Predicated region
    $region26: #{simple_cnn_vib_forward.4} parent=1 // pred_check
      _
    $region27: #{simple_cnn_vib_forward.4} parent=1 // pred_check_branch
      %1672 = sbr.rel (0) target = $region29
    $region28: #{simple_cnn_vib_forward.4} parent=1 // pred_region
      _
    $region29: #{simple_cnn_vib_forward.4} parent=1 // pred_fallthru
      _
    %1673 = vsyncpa [#allocation3], 1
    %1674 = vsyncpa [#allocation5], 1

// kernel: simple_cnn_vib_forward.5
$region0: #{simple_cnn_vib_forward.5}
  #allocation0 [shape = 'u32[]', space=smem, size = 0x4, offset = 0x4, fixed_abs, tag = 'smem constant byte address 0x4 - core index']
  #allocation1 [shape = 'u32[144,128]{1,0:T(1,128)}', space=vmem, size = 0x12000, scoped, tag = 'internal scratch']
  #allocation2 [shape = 'f32[2,2048]{1,0:T(2,128)}', space=vmem, size = 0x4000, scoped, tag = 'scratch operand']
  %s0 = inlined_call_operand.vmem [shape: bf16[2,2048], index: 0, kind: input, shape index: {}]
  %s1 = inlined_call_operand.vmem [shape: bf16[2,2048], index: 1, kind: input, shape index: {}]
  %s2 = inlined_call_operand.vmem [shape: bf16[2,2048], index: 2, kind: input, shape index: {}]
  %s3 = inlined_call_operand.vmem [shape: bf16[2,2048], index: 3, kind: input, shape index: {}]
  %s4 = inlined_call_operand.hbm [shape: bf16[2048,2048], index: 4, kind: input, shape index: {}]
  %s5 = inlined_call_operand.hbm [shape: f32[1,2048], index: 5, kind: input, shape index: {}]
  %s6 = inlined_call_operand.hbm [shape: f32[2,1024], index: 6, kind: input, shape index: {}]
  %s7 = inlined_call_operand.hbm [shape: bf16[1024,128], index: 7, kind: input, shape index: {}]
  %s8 = inlined_call_operand.hbm [shape: f32[1,128], index: 8, kind: input, shape index: {}]
  %s9 = inlined_call_operand.hbm [shape: f32[2,128], index: 9, kind: output, shape index: {0}]
  %s10 = inlined_call_operand.hbm [shape: f32[2,1024], index: 10, kind: output, shape index: {1}]
  %s11 = inlined_call_operand.hbm [shape: f32[2,1024], index: 11, kind: output, shape index: {2}]
  %12 = xla_tuple %s9, %s10, %s11
  %s13 = sld [smem:[#allocation0]]
  $region113: #{simple_cnn_vib_forward.5} parent=0
    _
  %s15 = ssub.s32 1, %s13
  %s16 = scalar_select 0, %s15, %s13
  $region1: #{simple_cnn_vib_forward.5} parent=0
    #allocation3 [shape = 'u8[4194304]{0}', space=vmem, size = 0x400000, scoped, tag = 'input window, operand 4']
    #allocation4 [shape = 's32[2]{0}', space=sflag, size = 0x8, scoped, tag = 'scoped memory for simple_cnn_vib_forward.5']
    #allocation5 [shape = 's32[2]{0}', space=sflag, size = 0x8, scoped, tag = 'scoped memory for simple_cnn_vib_forward.5']
    #allocation6 [shape = 'u8[8192]{0}', space=vmem, size = 0x2000, scoped, tag = 'input window, operand 5, single buffered']
    #allocation7 [shape = 's32[1]{0}', space=sflag, size = 0x4, scoped, tag = 'scoped memory for simple_cnn_vib_forward.5']
    #allocation8 [shape = 'u8[8192]{0}', space=vmem, size = 0x2000, scoped, tag = 'input window, operand 6, single buffered']
    #allocation9 [shape = 'u8[262144]{0}', space=vmem, size = 0x40000, scoped, tag = 'input window, operand 7, single buffered']
    #allocation10 [shape = 's32[1]{0}', space=sflag, size = 0x4, scoped, tag = 'scoped memory for simple_cnn_vib_forward.5']
    #allocation11 [shape = 'u8[512]{0}', space=vmem, size = 0x400, scoped, tag = 'input window, operand 8, single buffered']
    #allocation12 [shape = 'u8[1024]{0}', space=vmem, size = 0x400, scoped, tag = 'output window, operand 0, single buffered']
    #allocation13 [shape = 'u8[8192]{0}', space=vmem, size = 0x2000, scoped, tag = 'output window, operand 1, single buffered']
    #allocation14 [shape = 's32[1]{0}', space=sflag, size = 0x4, scoped, tag = 'scoped memory for simple_cnn_vib_forward.5']
    #allocation15 [shape = 'u8[8192]{0}', space=vmem, size = 0x2000, scoped, tag = 'output window, operand 2, single buffered']
    %17 = vsyncpa [#allocation4], 0
    %s18 = scalar_lea.sflag [#allocation4], 1
    %19 = vsyncpa %s18, 0
    %20 = vsyncpa [#allocation7], 0
    %21 = vsyncpa [#allocation10], 0
    %22 = vsyncpa [#allocation5], 0
    %23 = vsyncpa [#allocation14], 0
    loop: start=0, step=1, limit=6
    $region2: #{simple_cnn_vib_forward.5} parent=1 // loop_pre_header
      _
    $region3: #{simple_cnn_vib_forward.5} parent=1 // loop_header
      %s25 = sphi 0, %s29
      %p26 = scmp.ge.s32.totalorder %s25, 6
      %s35 = sphi 0, %s37
      %s38 = sphi 0, %s35
      %s39 = sphi 0, %s38
      %s55 = sphi 0, %s39
      %s61 = sphi 0, %s63
      %s64 = sphi 0, %s61
      %s65 = sphi 0, %s64
      %s81 = sphi 0, %s65
      %s87 = sphi 0, %s89
      %s90 = sphi 0, %s87
      %s91 = sphi 0, %s90
      %s107 = sphi 0, %s91
      %s113 = sphi 0, %s115
      %s116 = sphi 0, %s113
      %s117 = sphi 0, %s116
      %s133 = sphi 0, %s117
      %s139 = sphi 0, %s141
      %s142 = sphi 0, %s139
      %s143 = sphi 0, %s142
      %s159 = sphi 0, %s143
      %s163 = sphi 0, %s163
      %s165 = sphi 0, %s163
      %s166 = sphi 0, %s165
      %s180 = sphi 0, %s166
      %s184 = sphi 0, %s184
      %s186 = sphi 0, %s184
      %s187 = sphi 0, %s186
      %s201 = sphi 0, %s187
      %s205 = sphi 0, %s205
      %s207 = sphi 0, %s205
      %s208 = sphi 0, %s207
      %s222 = sphi 0, %s208
      %s226 = sphi 0, %s226
      %s228 = sphi 0, %s226
      %s229 = sphi 0, %s228
      %s243 = sphi 0, %s229
      %s247 = sphi 0, %s247
      %s249 = sphi 0, %s247
      %s250 = sphi 0, %s249
      %s264 = sphi 0, %s250
      %s268 = sphi 0, %s268
      %s270 = sphi 0, %s268
      %s271 = sphi 0, %s270
      %s285 = sphi 0, %s271
      %s289 = sphi 0, %s289
      %s291 = sphi 0, %s289
      %s292 = sphi 0, %s291
      %s306 = sphi 0, %s292
    $region4: #{simple_cnn_vib_forward.5} parent=1 // loop_header_branch
      %28 = sbr.rel (%p26) target = $region8
    $region5: #{simple_cnn_vib_forward.5} parent=1 // loop_body
      %s30 = ssub.s32 %s25, 1
      %s31 = ssub.s32 %s25, 2
      %s32 = sadd.s32 %s25, 1
      %s33 = ssub.s32 %s25, %s32
      %p34 = scmp.eq.s32.totalorder %s33, 0
      %s36 = sadd.s32 %s35, 1
      %s37 = scalar_select %p34, %s35, %s36
      %p40 = pneg %p34
      %p41 = scmp.eq.s32.totalorder %s25, 3
      %p42 = por %p40, %p41
      %p43 = scmp.ne.s32.totalorder %s35, %s38
      %p44 = scmp.eq.s32.totalorder %s25, 0
      %p45 = por %p43, %p44
      %p46 = scmp.ne.s32.totalorder %s35, %s38
      %p47 = scmp.eq.s32.totalorder %s30, 3
      %p48 = por %p46, %p47
      %p49 = scmp.ne.s32.totalorder %s38, %s39
      %p50 = scmp.eq.s32.totalorder %s30, 0
      %p51 = por %p49, %p50
      %p52 = scmp.ne.s32.totalorder %s38, %s39
      %p53 = scmp.eq.s32.totalorder %s31, 3
      %p54 = por %p52, %p53
      %p56 = scmp.ne.s32.totalorder %s39, %s55
      %p57 = scmp.eq.s32.totalorder %s31, 0
      %p58 = por %p56, %p57
      %s59 = ssub.s32 %s25, %s32
      %p60 = scmp.eq.s32.totalorder %s59, 0
      %s62 = sadd.s32 %s61, 1
      %s63 = scalar_select %p60, %s61, %s62
      %p66 = pneg %p60
      %p67 = scmp.eq.s32.totalorder %s25, 3
      %p68 = por %p66, %p67
      %p69 = scmp.ne.s32.totalorder %s61, %s64
      %p70 = scmp.eq.s32.totalorder %s25, 0
      %p71 = por %p69, %p70
      %p72 = scmp.ne.s32.totalorder %s61, %s64
      %p73 = scmp.eq.s32.totalorder %s30, 3
      %p74 = por %p72, %p73
      %p75 = scmp.ne.s32.totalorder %s64, %s65
      %p76 = scmp.eq.s32.totalorder %s30, 0
      %p77 = por %p75, %p76
      %p78 = scmp.ne.s32.totalorder %s64, %s65
      %p79 = scmp.eq.s32.totalorder %s31, 3
      %p80 = por %p78, %p79
      %p82 = scmp.ne.s32.totalorder %s65, %s81
      %p83 = scmp.eq.s32.totalorder %s31, 0
      %p84 = por %p82, %p83
      %s85 = ssub.s32 %s25, %s32
      %p86 = scmp.eq.s32.totalorder %s85, 0
      %s88 = sadd.s32 %s87, 1
      %s89 = scalar_select %p86, %s87, %s88
      %p92 = pneg %p86
      %p93 = scmp.eq.s32.totalorder %s25, 3
      %p94 = por %p92, %p93
      %p95 = scmp.ne.s32.totalorder %s87, %s90
      %p96 = scmp.eq.s32.totalorder %s25, 0
      %p97 = por %p95, %p96
      %p98 = scmp.ne.s32.totalorder %s87, %s90
      %p99 = scmp.eq.s32.totalorder %s30, 3
      %p100 = por %p98, %p99
      %p101 = scmp.ne.s32.totalorder %s90, %s91
      %p102 = scmp.eq.s32.totalorder %s30, 0
      %p103 = por %p101, %p102
      %p104 = scmp.ne.s32.totalorder %s90, %s91
      %p105 = scmp.eq.s32.totalorder %s31, 3
      %p106 = por %p104, %p105
      %p108 = scmp.ne.s32.totalorder %s91, %s107
      %p109 = scmp.eq.s32.totalorder %s31, 0
      %p110 = por %p108, %p109
      %s111 = ssub.s32 %s25, %s32
      %p112 = scmp.eq.s32.totalorder %s111, 0
      %s114 = sadd.s32 %s113, 1
      %s115 = scalar_select %p112, %s113, %s114
      %p118 = pneg %p112
      %p119 = scmp.eq.s32.totalorder %s25, 3
      %p120 = por %p118, %p119
      %p121 = scmp.ne.s32.totalorder %s113, %s116
      %p122 = scmp.eq.s32.totalorder %s25, 0
      %p123 = por %p121, %p122
      %p124 = scmp.ne.s32.totalorder %s113, %s116
      %p125 = scmp.eq.s32.totalorder %s30, 3
      %p126 = por %p124, %p125
      %p127 = scmp.ne.s32.totalorder %s116, %s117
      %p128 = scmp.eq.s32.totalorder %s30, 0
      %p129 = por %p127, %p128
      %p130 = scmp.ne.s32.totalorder %s116, %s117
      %p131 = scmp.eq.s32.totalorder %s31, 3
      %p132 = por %p130, %p131
      %p134 = scmp.ne.s32.totalorder %s117, %s133
      %p135 = scmp.eq.s32.totalorder %s31, 0
      %p136 = por %p134, %p135
      %s137 = ssub.s32 %s25, %s32
      %p138 = scmp.eq.s32.totalorder %s137, 0
      %s140 = sadd.s32 %s139, 1
      %s141 = scalar_select %p138, %s139, %s140
      %p144 = pneg %p138
      %p145 = scmp.eq.s32.totalorder %s25, 3
      %p146 = por %p144, %p145
      %p147 = scmp.ne.s32.totalorder %s139, %s142
      %p148 = scmp.eq.s32.totalorder %s25, 0
      %p149 = por %p147, %p148
      %p150 = scmp.ne.s32.totalorder %s139, %s142
      %p151 = scmp.eq.s32.totalorder %s30, 3
      %p152 = por %p150, %p151
      %p153 = scmp.ne.s32.totalorder %s142, %s143
      %p154 = scmp.eq.s32.totalorder %s30, 0
      %p155 = por %p153, %p154
      %p156 = scmp.ne.s32.totalorder %s142, %s143
      %p157 = scmp.eq.s32.totalorder %s31, 3
      %p158 = por %p156, %p157
      %p160 = scmp.ne.s32.totalorder %s143, %s159
      %p161 = scmp.eq.s32.totalorder %s31, 0
      %p162 = por %p160, %p161
      %s164 = sadd.s32 %s163, 1
      %p167 = scmp.eq.s32.totalorder %s25, 3
      %p168 = scmp.ne.s32.totalorder %s163, %s165
      %p169 = scmp.eq.s32.totalorder %s25, 0
      %p170 = por %p168, %p169
      %p171 = scmp.ne.s32.totalorder %s163, %s165
      %p172 = scmp.eq.s32.totalorder %s30, 3
      %p173 = por %p171, %p172
      %p174 = scmp.ne.s32.totalorder %s165, %s166
      %p175 = scmp.eq.s32.totalorder %s30, 0
      %p176 = por %p174, %p175
      %p177 = scmp.ne.s32.totalorder %s165, %s166
      %p178 = scmp.eq.s32.totalorder %s31, 3
      %p179 = por %p177, %p178
      %p181 = scmp.ne.s32.totalorder %s166, %s180
      %p182 = scmp.eq.s32.totalorder %s31, 0
      %p183 = por %p181, %p182
      %s185 = sadd.s32 %s184, 1
      %p188 = scmp.eq.s32.totalorder %s25, 3
      %p189 = scmp.ne.s32.totalorder %s184, %s186
      %p190 = scmp.eq.s32.totalorder %s25, 0
      %p191 = por %p189, %p190
      %p192 = scmp.ne.s32.totalorder %s184, %s186
      %p193 = scmp.eq.s32.totalorder %s30, 3
      %p194 = por %p192, %p193
      %p195 = scmp.ne.s32.totalorder %s186, %s187
      %p196 = scmp.eq.s32.totalorder %s30, 0
      %p197 = por %p195, %p196
      %p198 = scmp.ne.s32.totalorder %s186, %s187
      %p199 = scmp.eq.s32.totalorder %s31, 3
      %p200 = por %p198, %p199
      %p202 = scmp.ne.s32.totalorder %s187, %s201
      %p203 = scmp.eq.s32.totalorder %s31, 0
      %p204 = por %p202, %p203
      %s206 = sadd.s32 %s205, 1
      %p209 = scmp.eq.s32.totalorder %s25, 3
      %p210 = scmp.ne.s32.totalorder %s205, %s207
      %p211 = scmp.eq.s32.totalorder %s25, 0
      %p212 = por %p210, %p211
      %p213 = scmp.ne.s32.totalorder %s205, %s207
      %p214 = scmp.eq.s32.totalorder %s30, 3
      %p215 = por %p213, %p214
      %p216 = scmp.ne.s32.totalorder %s207, %s208
      %p217 = scmp.eq.s32.totalorder %s30, 0
      %p218 = por %p216, %p217
      %p219 = scmp.ne.s32.totalorder %s207, %s208
      %p220 = scmp.eq.s32.totalorder %s31, 3
      %p221 = por %p219, %p220
      %p223 = scmp.ne.s32.totalorder %s208, %s222
      %p224 = scmp.eq.s32.totalorder %s31, 0
      %p225 = por %p223, %p224
      %s227 = sadd.s32 %s226, 1
      %p230 = scmp.eq.s32.totalorder %s25, 3
      %p231 = scmp.ne.s32.totalorder %s226, %s228
      %p232 = scmp.eq.s32.totalorder %s25, 0
      %p233 = por %p231, %p232
      %p234 = scmp.ne.s32.totalorder %s226, %s228
      %p235 = scmp.eq.s32.totalorder %s30, 3
      %p236 = por %p234, %p235
      %p237 = scmp.ne.s32.totalorder %s228, %s229
      %p238 = scmp.eq.s32.totalorder %s30, 0
      %p239 = por %p237, %p238
      %p240 = scmp.ne.s32.totalorder %s228, %s229
      %p241 = scmp.eq.s32.totalorder %s31, 3
      %p242 = por %p240, %p241
      %p244 = scmp.ne.s32.totalorder %s229, %s243
      %p245 = scmp.eq.s32.totalorder %s31, 0
      %p246 = por %p244, %p245
      %s248 = sadd.s32 %s247, 1
      %p251 = scmp.eq.s32.totalorder %s25, 3
      %p252 = scmp.ne.s32.totalorder %s247, %s249
      %p253 = scmp.eq.s32.totalorder %s25, 0
      %p254 = por %p252, %p253
      %p255 = scmp.ne.s32.totalorder %s247, %s249
      %p256 = scmp.eq.s32.totalorder %s30, 3
      %p257 = por %p255, %p256
      %p258 = scmp.ne.s32.totalorder %s249, %s250
      %p259 = scmp.eq.s32.totalorder %s30, 0
      %p260 = por %p258, %p259
      %p261 = scmp.ne.s32.totalorder %s249, %s250
      %p262 = scmp.eq.s32.totalorder %s31, 3
      %p263 = por %p261, %p262
      %p265 = scmp.ne.s32.totalorder %s250, %s264
      %p266 = scmp.eq.s32.totalorder %s31, 0
      %p267 = por %p265, %p266
      %s269 = sadd.s32 %s268, 1
      %p272 = scmp.eq.s32.totalorder %s25, 3
      %p273 = scmp.ne.s32.totalorder %s268, %s270
      %p274 = scmp.eq.s32.totalorder %s25, 0
      %p275 = por %p273, %p274
      %p276 = scmp.ne.s32.totalorder %s268, %s270
      %p277 = scmp.eq.s32.totalorder %s30, 3
      %p278 = por %p276, %p277
      %p279 = scmp.ne.s32.totalorder %s270, %s271
      %p280 = scmp.eq.s32.totalorder %s30, 0
      %p281 = por %p279, %p280
      %p282 = scmp.ne.s32.totalorder %s270, %s271
      %p283 = scmp.eq.s32.totalorder %s31, 3
      %p284 = por %p282, %p283
      %p286 = scmp.ne.s32.totalorder %s271, %s285
      %p287 = scmp.eq.s32.totalorder %s31, 0
      %p288 = por %p286, %p287
      %s290 = sadd.s32 %s289, 1
      %p293 = scmp.eq.s32.totalorder %s25, 3
      %p294 = scmp.ne.s32.totalorder %s289, %s291
      %p295 = scmp.eq.s32.totalorder %s25, 0
      %p296 = por %p294, %p295
      %p297 = scmp.ne.s32.totalorder %s289, %s291
      %p298 = scmp.eq.s32.totalorder %s30, 3
      %p299 = por %p297, %p298
      %p300 = scmp.ne.s32.totalorder %s291, %s292
      %p301 = scmp.eq.s32.totalorder %s30, 0
      %p302 = por %p300, %p301
      %p303 = scmp.ne.s32.totalorder %s291, %s292
      %p304 = scmp.eq.s32.totalorder %s31, 3
      %p305 = por %p303, %p304
      %p307 = scmp.ne.s32.totalorder %s292, %s306
      %p308 = scmp.eq.s32.totalorder %s31, 0
      %p309 = por %p307, %p308
      %p310 = scmp.le.s32.totalorder 1, %s25
      %p311 = scmp.lt.s32.totalorder %s25, 5
      %p312 = pnand %p310, %p311
      %p313 = pneg %p312
      // Predicated region
      $region9: #{simple_cnn_vib_forward.5} parent=5 // pred_check
        _
      $region10: #{simple_cnn_vib_forward.5} parent=5 // pred_check_branch
        %315 = sbr.rel (%p312) target = $region12
      $region11: #{simple_cnn_vib_forward.5} parent=5 // pred_region
        %s316 = ssub.s32 %s25, 1
        // Predicated region
        $region13: #{simple_cnn_vib_forward.5} parent=11 // pred_check
          %p317 = pneg %p176
        $region14: #{simple_cnn_vib_forward.5} parent=11 // pred_check_branch
          %319 = sbr.rel (%p317) target = $region16
        $region15: #{simple_cnn_vib_forward.5} parent=11 // pred_region
          %s321 = ssub.s32 256, 256
          %322 = vsyncadd [#allocation7], %s321
          %s324 = sshll.u32 [#allocation6], 4
          %s325 = int_to_ptr.vmem [resolvable:$true] %s324
          %327 = dma.hbm_to_vmem [thread:$0]  %s5, 256, %s325, [#allocation7]
        $region16: #{simple_cnn_vib_forward.5} parent=11 // pred_fallthru
          _
        // Predicated region
        $region17: #{simple_cnn_vib_forward.5} parent=11 // pred_check
          %p328 = pneg %p197
        $region18: #{simple_cnn_vib_forward.5} parent=11 // pred_check_branch
          %330 = sbr.rel (%p328) target = $region20
        $region19: #{simple_cnn_vib_forward.5} parent=11 // pred_region
          %s332 = ssub.s32 256, 256
          %333 = vsyncadd [#allocation7], %s332
          %s335 = sshll.u32 [#allocation8], 4
          %s336 = int_to_ptr.vmem [resolvable:$true] %s335
          %338 = dma.hbm_to_vmem [thread:$0]  %s6, 256, %s336, [#allocation7]
        $region20: #{simple_cnn_vib_forward.5} parent=11 // pred_fallthru
          _
        // Predicated region
        $region21: #{simple_cnn_vib_forward.5} parent=11 // pred_check
          %p339 = pneg %p218
        $region22: #{simple_cnn_vib_forward.5} parent=11 // pred_check_branch
          %341 = sbr.rel (%p339) target = $region24
        $region23: #{simple_cnn_vib_forward.5} parent=11 // pred_region
          %s343 = ssub.s32 8192, 8192
          %344 = vsyncadd [#allocation10], %s343
          %s345 = sshll.u32 [#allocation9], 4
          %s346 = int_to_ptr.vmem [resolvable:$true] %s345
          %351 = dma.hbm_to_vmem [thread:$0]  %s7, 8192, %s346, [#allocation10], 64, 64, 4
        $region24: #{simple_cnn_vib_forward.5} parent=11 // pred_fallthru
          _
        // Predicated region
        $region25: #{simple_cnn_vib_forward.5} parent=11 // pred_check
          %p352 = pneg %p239
        $region26: #{simple_cnn_vib_forward.5} parent=11 // pred_check_branch
          %354 = sbr.rel (%p352) target = $region28
        $region27: #{simple_cnn_vib_forward.5} parent=11 // pred_region
          %s356 = ssub.s32 16, 16
          %357 = vsyncadd [#allocation10], %s356
          %s359 = sshll.u32 [#allocation11], 4
          %s360 = int_to_ptr.vmem [resolvable:$true] %s359
          %362 = dma.hbm_to_vmem [thread:$0]  %s8, 16, %s360, [#allocation10]
        $region28: #{simple_cnn_vib_forward.5} parent=11 // pred_fallthru
          _
      $region12: #{simple_cnn_vib_forward.5} parent=5 // pred_fallthru
        _
      %p363 = scmp.lt.s32.totalorder %s25, 4
      // Predicated region
      $region29: #{simple_cnn_vib_forward.5} parent=5 // pred_check
        %p364 = pneg %p363
      $region30: #{simple_cnn_vib_forward.5} parent=5 // pred_check_branch
        %366 = sbr.rel (%p364) target = $region32
      $region31: #{simple_cnn_vib_forward.5} parent=5 // pred_region
        // Predicated region
        $region33: #{simple_cnn_vib_forward.5} parent=31 // pred_check
          %p367 = pneg %p45
        $region34: #{simple_cnn_vib_forward.5} parent=31 // pred_check_branch
          %369 = sbr.rel (%p367) target = $region36
        $region35: #{simple_cnn_vib_forward.5} parent=31 // pred_region
          %s370 = smul.u32 4, %s25
          %p371 = scmp.lt.s32.totalorder %s370, 15
          %s372 = scalar_select %p371, %s370, 15
          %s373 = scalar_lea.vmem %s0, %s372
          %s374 = smul.u32 4, %s25
        $region36: #{simple_cnn_vib_forward.5} parent=31 // pred_fallthru
          _
        // Predicated region
        $region37: #{simple_cnn_vib_forward.5} parent=31 // pred_check
          %p375 = pneg %p71
        $region38: #{simple_cnn_vib_forward.5} parent=31 // pred_check_branch
          %377 = sbr.rel (%p375) target = $region40
        $region39: #{simple_cnn_vib_forward.5} parent=31 // pred_region
          %s378 = smul.u32 4, %s25
          %p379 = scmp.lt.s32.totalorder %s378, 15
          %s380 = scalar_select %p379, %s378, 15
          %s381 = scalar_lea.vmem %s1, %s380
          %s382 = smul.u32 4, %s25
        $region40: #{simple_cnn_vib_forward.5} parent=31 // pred_fallthru
          _
        // Predicated region
        $region41: #{simple_cnn_vib_forward.5} parent=31 // pred_check
          %p383 = pneg %p97
        $region42: #{simple_cnn_vib_forward.5} parent=31 // pred_check_branch
          %385 = sbr.rel (%p383) target = $region44
        $region43: #{simple_cnn_vib_forward.5} parent=31 // pred_region
          %s386 = smul.u32 4, %s25
          %p387 = scmp.lt.s32.totalorder %s386, 15
          %s388 = scalar_select %p387, %s386, 15
          %s389 = scalar_lea.vmem %s2, %s388
          %s390 = smul.u32 4, %s25
        $region44: #{simple_cnn_vib_forward.5} parent=31 // pred_fallthru
          _
        // Predicated region
        $region45: #{simple_cnn_vib_forward.5} parent=31 // pred_check
          %p391 = pneg %p123
        $region46: #{simple_cnn_vib_forward.5} parent=31 // pred_check_branch
          %393 = sbr.rel (%p391) target = $region48
        $region47: #{simple_cnn_vib_forward.5} parent=31 // pred_region
          %s394 = smul.u32 4, %s25
          %p395 = scmp.lt.s32.totalorder %s394, 15
          %s396 = scalar_select %p395, %s394, 15
          %s397 = scalar_lea.vmem %s3, %s396
          %s398 = smul.u32 4, %s25
        $region48: #{simple_cnn_vib_forward.5} parent=31 // pred_fallthru
          _
        // Predicated region
        $region49: #{simple_cnn_vib_forward.5} parent=31 // pred_check
          %p399 = pneg %p149
        $region50: #{simple_cnn_vib_forward.5} parent=31 // pred_check_branch
          %401 = sbr.rel (%p399) target = $region52
        $region51: #{simple_cnn_vib_forward.5} parent=31 // pred_region
          %s402 = sand.u32 %s139, 1
          %s403 = scalar_lea.sflag [#allocation4], %s402
          %s404 = sand.u32 %s139, 1
          %s405 = smul.addr %s404, 4096
          %s406 = scalar_lea.vmem [#allocation3], %s405
          %s407 = smul.u32 64, %s25
          %s409 = ssub.s32 65536, 65536
          %410 = vsyncadd %s403, %s409
          %s411 = smul.addr %s407, 16
          %s412 = smul.addr %s411, 64
          %s413 = scalar_lea.hbm %s4, %s412
          %s414 = sshll.u32 %s406, 4
          %s415 = int_to_ptr.vmem [resolvable:$true] %s414
          %420 = dma.hbm_to_vmem [thread:$0]  %s413, 65536, %s415, %s403, 1024, 1024, 64
        $region52: #{simple_cnn_vib_forward.5} parent=31 // pred_fallthru
          _
      $region32: #{simple_cnn_vib_forward.5} parent=5 // pred_fallthru
        _
      %p421 = scmp.le.s32.totalorder 1, %s25
      %p422 = scmp.lt.s32.totalorder %s25, 5
      %p423 = pnand %p421, %p422
      %p424 = pneg %p423
      // Predicated region
      $region53: #{simple_cnn_vib_forward.5} parent=5 // pred_check
        _
      $region54: #{simple_cnn_vib_forward.5} parent=5 // pred_check_branch
        %426 = sbr.rel (%p423) target = $region56
      $region55: #{simple_cnn_vib_forward.5} parent=5 // pred_region
        %s427 = ssub.s32 %s25, 1
        %s428 = sand.u32 %s142, 1
        %s429 = scalar_lea.sflag [#allocation4], %s428
        %s430 = sand.u32 %s142, 1
        %s431 = smul.addr %s430, 4096
        %s432 = scalar_lea.vmem [#allocation3], %s431
        // Predicated region
        $region57: #{simple_cnn_vib_forward.5} parent=55 // pred_check
          %p433 = pneg %p155
        $region58: #{simple_cnn_vib_forward.5} parent=55 // pred_check_branch
          %435 = sbr.rel (%p433) target = $region60
        $region59: #{simple_cnn_vib_forward.5} parent=55 // pred_region
          %436 = dma.done %s429, 65536
        $region60: #{simple_cnn_vib_forward.5} parent=55 // pred_fallthru
          _
        // Predicated region
        $region61: #{simple_cnn_vib_forward.5} parent=55 // pred_check
          %p437 = pneg %p176
        $region62: #{simple_cnn_vib_forward.5} parent=55 // pred_check_branch
          %439 = sbr.rel (%p437) target = $region64
        $region63: #{simple_cnn_vib_forward.5} parent=55 // pred_region
          %440 = dma.done [#allocation7], 256
        $region64: #{simple_cnn_vib_forward.5} parent=55 // pred_fallthru
          _
        // Predicated region
        $region65: #{simple_cnn_vib_forward.5} parent=55 // pred_check
          %p441 = pneg %p197
        $region66: #{simple_cnn_vib_forward.5} parent=55 // pred_check_branch
          %443 = sbr.rel (%p441) target = $region68
        $region67: #{simple_cnn_vib_forward.5} parent=55 // pred_region
          %444 = dma.done [#allocation7], 256
        $region68: #{simple_cnn_vib_forward.5} parent=55 // pred_fallthru
          _
        // Predicated region
        $region69: #{simple_cnn_vib_forward.5} parent=55 // pred_check
          %p445 = pneg %p218
        $region70: #{simple_cnn_vib_forward.5} parent=55 // pred_check_branch
          %447 = sbr.rel (%p445) target = $region72
        $region71: #{simple_cnn_vib_forward.5} parent=55 // pred_region
          %448 = dma.done [#allocation10], 8192
        $region72: #{simple_cnn_vib_forward.5} parent=55 // pred_fallthru
          _
        // Predicated region
        $region73: #{simple_cnn_vib_forward.5} parent=55 // pred_check
          %p449 = pneg %p239
        $region74: #{simple_cnn_vib_forward.5} parent=55 // pred_check_branch
          %451 = sbr.rel (%p449) target = $region76
        $region75: #{simple_cnn_vib_forward.5} parent=55 // pred_region
          %452 = dma.done [#allocation10], 16
        $region76: #{simple_cnn_vib_forward.5} parent=55 // pred_fallthru
          _
        %s453 = smul.u32 4, %s30
        %p454 = scmp.lt.s32.totalorder %s453, 15
        %s455 = scalar_select %p454, %s453, 15
        %s456 = scalar_lea.vmem %s0, %s455
        %p457 = pneg %p51
        %p458 = pneg %p48
        %s459 = smul.u32 4, %s30
        %p460 = scmp.lt.s32.totalorder %s459, 15
        %s461 = scalar_select %p460, %s459, 15
        %s462 = scalar_lea.vmem %s1, %s461
        %p463 = pneg %p77
        %p464 = pneg %p74
        %s465 = smul.u32 4, %s30
        %p466 = scmp.lt.s32.totalorder %s465, 15
        %s467 = scalar_select %p466, %s465, 15
        %s468 = scalar_lea.vmem %s2, %s467
        %p469 = pneg %p103
        %p470 = pneg %p100
        %s471 = smul.u32 4, %s30
        %p472 = scmp.lt.s32.totalorder %s471, 15
        %s473 = scalar_select %p472, %s471, 15
        %s474 = scalar_lea.vmem %s3, %s473
        %p475 = pneg %p129
        %p476 = pneg %p126
        %s477 = sand.u32 %s142, 1
        %s478 = scalar_lea.sflag [#allocation4], %s477
        %s479 = sand.u32 %s142, 1
        %s480 = smul.addr %s479, 4096
        %s481 = scalar_lea.vmem [#allocation3], %s480
        %p482 = pneg %p155
        %p483 = pneg %p152
        %p484 = pneg %p176
        %p485 = pneg %p173
        %p486 = pneg %p197
        %p487 = pneg %p194
        %p488 = pneg %p218
        %p489 = pneg %p215
        %p490 = pneg %p239
        %p491 = pneg %p236
        %p492 = pneg %p260
        %p493 = pneg %p257
        %p494 = pneg %p281
        %p495 = pneg %p278
        %p496 = pneg %p302
        %p497 = pneg %p299
        %s498 = smul.u32 4, %s30
        %p499 = scmp.lt.s32.totalorder %s498, 15
        %s500 = scalar_select %p499, %s498, 15
        %s501 = scalar_lea.vmem %s0, %s500
        %s502 = smul.u32 4, %s30
        %s503 = smul.u32 4, %s30
        %p504 = scmp.lt.s32.totalorder %s503, 15
        %s505 = scalar_select %p504, %s503, 15
        %s506 = scalar_lea.vmem %s1, %s505
        %s507 = smul.u32 4, %s30
        %s508 = smul.u32 4, %s30
        %p509 = scmp.lt.s32.totalorder %s508, 15
        %s510 = scalar_select %p509, %s508, 15
        %s511 = scalar_lea.vmem %s2, %s510
        %s512 = smul.u32 4, %s30
        %s513 = smul.u32 4, %s30
        %p514 = scmp.lt.s32.totalorder %s513, 15
        %s515 = scalar_select %p514, %s513, 15
        %s516 = scalar_lea.vmem %s3, %s515
        %s517 = smul.u32 4, %s30
        %s518 = smul.u32 64, %s30
        %p520 = scmp.eq.s32.totalorder %s30, 0
        // Predicated region
        $region77: #{simple_cnn_vib_forward.5} parent=55 // pred_check
          %p521 = pneg %p520
        $region78: #{simple_cnn_vib_forward.5} parent=55 // pred_check_branch
          %523 = sbr.rel (%p521) target = $region80
        $region79: #{simple_cnn_vib_forward.5} parent=55 // pred_region
          %524 = vst [vmem:[#allocation2] sm:$0xff] 0.0
          %525 = vst [vmem:[#allocation2 + $0x8] sm:$0xff] 0.0
          %526 = vst [vmem:[#allocation2 + $0x10] sm:$0xff] 0.0
          %527 = vst [vmem:[#allocation2 + $0x18] sm:$0xff] 0.0
        $region80: #{simple_cnn_vib_forward.5} parent=55 // pred_fallthru
          _
        %v528 = vld [vmem:[%s501] sm:$0xf]
        %v529 = vld [vmem:[%s506] sm:$0xf]
        %v530 = vmax.bf16 %v528, %v529
        %v531 = vld [vmem:[%s511] sm:$0xf]
        %v532 = vld [vmem:[%s516] sm:$0xf]
        %v533 = vmax.bf16 %v531, %v532
        %v534 = vmax.bf16 %v530, %v533
        %v535 = vld [vmem:[#allocation2] sm:$0xff]
        %v536 = vld [vmem:[#allocation2 + $0x8] sm:$0xff]
        %v537 = vld [vmem:[#allocation2 + $0x10] sm:$0xff]
        %v538 = vld [vmem:[#allocation2 + $0x18] sm:$0xff]
        %v539 = vld [vmem:[%s432] sm:$0xff]
        %v540 = vld [vmem:[%s432 + $0x8] sm:$0xff]
        %v541 = vld [vmem:[%s432 + $0x10] sm:$0xff]
        %v542 = vld [vmem:[%s432 + $0x18] sm:$0xff]
        %v543 = vld [vmem:[%s432 + $0x20] sm:$0xff]
        %v544 = vld [vmem:[%s432 + $0x28] sm:$0xff]
        %v545 = vld [vmem:[%s432 + $0x30] sm:$0xff]
        %v546 = vld [vmem:[%s432 + $0x38] sm:$0xff]
        %v547 = vld [vmem:[%s432 + $0x40] sm:$0xff]
        %v548 = vld [vmem:[%s432 + $0x48] sm:$0xff]
        %v549 = vld [vmem:[%s432 + $0x50] sm:$0xff]
        %v550 = vld [vmem:[%s432 + $0x58] sm:$0xff]
        %v551 = vld [vmem:[%s432 + $0x60] sm:$0xff]
        %v552 = vld [vmem:[%s432 + $0x68] sm:$0xff]
        %v553 = vld [vmem:[%s432 + $0x70] sm:$0xff]
        %v554 = vld [vmem:[%s432 + $0x78] sm:$0xff]
        %v555 = vld [vmem:[%s432 + $0x80] sm:$0xff]
        %v556 = vld [vmem:[%s432 + $0x88] sm:$0xff]
        %v557 = vld [vmem:[%s432 + $0x90] sm:$0xff]
        %v558 = vld [vmem:[%s432 + $0x98] sm:$0xff]
        %v559 = vld [vmem:[%s432 + $0xa0] sm:$0xff]
        %v560 = vld [vmem:[%s432 + $0xa8] sm:$0xff]
        %v561 = vld [vmem:[%s432 + $0xb0] sm:$0xff]
        %v562 = vld [vmem:[%s432 + $0xb8] sm:$0xff]
        %v563 = vld [vmem:[%s432 + $0xc0] sm:$0xff]
        %v564 = vld [vmem:[%s432 + $0xc8] sm:$0xff]
        %v565 = vld [vmem:[%s432 + $0xd0] sm:$0xff]
        %v566 = vld [vmem:[%s432 + $0xd8] sm:$0xff]
        %v567 = vld [vmem:[%s432 + $0xe0] sm:$0xff]
        %v568 = vld [vmem:[%s432 + $0xe8] sm:$0xff]
        %v569 = vld [vmem:[%s432 + $0xf0] sm:$0xff]
        %v570 = vld [vmem:[%s432 + $0xf8] sm:$0xff]
        %v571 = vld [vmem:[%s432 + $0x100] sm:$0xff]
        %v572 = vld [vmem:[%s432 + $0x108] sm:$0xff]
        %v573 = vld [vmem:[%s432 + $0x110] sm:$0xff]
        %v574 = vld [vmem:[%s432 + $0x118] sm:$0xff]
        %v575 = vld [vmem:[%s432 + $0x120] sm:$0xff]
        %v576 = vld [vmem:[%s432 + $0x128] sm:$0xff]
        %v577 = vld [vmem:[%s432 + $0x130] sm:$0xff]
        %v578 = vld [vmem:[%s432 + $0x138] sm:$0xff]
        %v579 = vld [vmem:[%s432 + $0x140] sm:$0xff]
        %v580 = vld [vmem:[%s432 + $0x148] sm:$0xff]
        %v581 = vld [vmem:[%s432 + $0x150] sm:$0xff]
        %v582 = vld [vmem:[%s432 + $0x158] sm:$0xff]
        %v583 = vld [vmem:[%s432 + $0x160] sm:$0xff]
        %v584 = vld [vmem:[%s432 + $0x168] sm:$0xff]
        %v585 = vld [vmem:[%s432 + $0x170] sm:$0xff]
        %v586 = vld [vmem:[%s432 + $0x178] sm:$0xff]
        %v587 = vld [vmem:[%s432 + $0x180] sm:$0xff]
        %v588 = vld [vmem:[%s432 + $0x188] sm:$0xff]
        %v589 = vld [vmem:[%s432 + $0x190] sm:$0xff]
        %v590 = vld [vmem:[%s432 + $0x198] sm:$0xff]
        %v591 = vld [vmem:[%s432 + $0x1a0] sm:$0xff]
        %v592 = vld [vmem:[%s432 + $0x1a8] sm:$0xff]
        %v593 = vld [vmem:[%s432 + $0x1b0] sm:$0xff]
        %v594 = vld [vmem:[%s432 + $0x1b8] sm:$0xff]
        %v595 = vld [vmem:[%s432 + $0x1c0] sm:$0xff]
        %v596 = vld [vmem:[%s432 + $0x1c8] sm:$0xff]
        %v597 = vld [vmem:[%s432 + $0x1d0] sm:$0xff]
        %v598 = vld [vmem:[%s432 + $0x1d8] sm:$0xff]
        %v599 = vld [vmem:[%s432 + $0x1e0] sm:$0xff]
        %v600 = vld [vmem:[%s432 + $0x1e8] sm:$0xff]
        %v601 = vld [vmem:[%s432 + $0x1f0] sm:$0xff]
        %v602 = vld [vmem:[%s432 + $0x1f8] sm:$0xff]
        %v603 = vld [vmem:[%s432 + $0x200] sm:$0xff]
        %v604 = vld [vmem:[%s432 + $0x208] sm:$0xff]
        %v605 = vld [vmem:[%s432 + $0x210] sm:$0xff]
        %v606 = vld [vmem:[%s432 + $0x218] sm:$0xff]
        %v607 = vld [vmem:[%s432 + $0x220] sm:$0xff]
        %v608 = vld [vmem:[%s432 + $0x228] sm:$0xff]
        %v609 = vld [vmem:[%s432 + $0x230] sm:$0xff]
        %v610 = vld [vmem:[%s432 + $0x238] sm:$0xff]
        %v611 = vld [vmem:[%s432 + $0x240] sm:$0xff]
        %v612 = vld [vmem:[%s432 + $0x248] sm:$0xff]
        %v613 = vld [vmem:[%s432 + $0x250] sm:$0xff]
        %v614 = vld [vmem:[%s432 + $0x258] sm:$0xff]
        %v615 = vld [vmem:[%s432 + $0x260] sm:$0xff]
        %v616 = vld [vmem:[%s432 + $0x268] sm:$0xff]
        %v617 = vld [vmem:[%s432 + $0x270] sm:$0xff]
        %v618 = vld [vmem:[%s432 + $0x278] sm:$0xff]
        %v619 = vld [vmem:[%s432 + $0x280] sm:$0xff]
        %v620 = vld [vmem:[%s432 + $0x288] sm:$0xff]
        %v621 = vld [vmem:[%s432 + $0x290] sm:$0xff]
        %v622 = vld [vmem:[%s432 + $0x298] sm:$0xff]
        %v623 = vld [vmem:[%s432 + $0x2a0] sm:$0xff]
        %v624 = vld [vmem:[%s432 + $0x2a8] sm:$0xff]
        %v625 = vld [vmem:[%s432 + $0x2b0] sm:$0xff]
        %v626 = vld [vmem:[%s432 + $0x2b8] sm:$0xff]
        %v627 = vld [vmem:[%s432 + $0x2c0] sm:$0xff]
        %v628 = vld [vmem:[%s432 + $0x2c8] sm:$0xff]
        %v629 = vld [vmem:[%s432 + $0x2d0] sm:$0xff]
        %v630 = vld [vmem:[%s432 + $0x2d8] sm:$0xff]
        %v631 = vld [vmem:[%s432 + $0x2e0] sm:$0xff]
        %v632 = vld [vmem:[%s432 + $0x2e8] sm:$0xff]
        %v633 = vld [vmem:[%s432 + $0x2f0] sm:$0xff]
        %v634 = vld [vmem:[%s432 + $0x2f8] sm:$0xff]
        %v635 = vld [vmem:[%s432 + $0x300] sm:$0xff]
        %v636 = vld [vmem:[%s432 + $0x308] sm:$0xff]
        %v637 = vld [vmem:[%s432 + $0x310] sm:$0xff]
        %v638 = vld [vmem:[%s432 + $0x318] sm:$0xff]
        %v639 = vld [vmem:[%s432 + $0x320] sm:$0xff]
        %v640 = vld [vmem:[%s432 + $0x328] sm:$0xff]
        %v641 = vld [vmem:[%s432 + $0x330] sm:$0xff]
        %v642 = vld [vmem:[%s432 + $0x338] sm:$0xff]
        %v643 = vld [vmem:[%s432 + $0x340] sm:$0xff]
        %v644 = vld [vmem:[%s432 + $0x348] sm:$0xff]
        %v645 = vld [vmem:[%s432 + $0x350] sm:$0xff]
        %v646 = vld [vmem:[%s432 + $0x358] sm:$0xff]
        %v647 = vld [vmem:[%s432 + $0x360] sm:$0xff]
        %v648 = vld [vmem:[%s432 + $0x368] sm:$0xff]
        %v649 = vld [vmem:[%s432 + $0x370] sm:$0xff]
        %v650 = vld [vmem:[%s432 + $0x378] sm:$0xff]
        %v651 = vld [vmem:[%s432 + $0x380] sm:$0xff]
        %v652 = vld [vmem:[%s432 + $0x388] sm:$0xff]
        %v653 = vld [vmem:[%s432 + $0x390] sm:$0xff]
        %v654 = vld [vmem:[%s432 + $0x398] sm:$0xff]
        %v655 = vld [vmem:[%s432 + $0x3a0] sm:$0xff]
        %v656 = vld [vmem:[%s432 + $0x3a8] sm:$0xff]
        %v657 = vld [vmem:[%s432 + $0x3b0] sm:$0xff]
        %v658 = vld [vmem:[%s432 + $0x3b8] sm:$0xff]
        %v659 = vld [vmem:[%s432 + $0x3c0] sm:$0xff]
        %v660 = vld [vmem:[%s432 + $0x3c8] sm:$0xff]
        %v661 = vld [vmem:[%s432 + $0x3d0] sm:$0xff]
        %v662 = vld [vmem:[%s432 + $0x3d8] sm:$0xff]
        %v663 = vld [vmem:[%s432 + $0x3e0] sm:$0xff]
        %v664 = vld [vmem:[%s432 + $0x3e8] sm:$0xff]
        %v665 = vld [vmem:[%s432 + $0x3f0] sm:$0xff]
        %v666 = vld [vmem:[%s432 + $0x3f8] sm:$0xff]
        %v667 = vld [vmem:[%s432 + $0x400] sm:$0xff]
        %v668 = vld [vmem:[%s432 + $0x408] sm:$0xff]
        %v669 = vld [vmem:[%s432 + $0x410] sm:$0xff]
        %v670 = vld [vmem:[%s432 + $0x418] sm:$0xff]
        %v671 = vld [vmem:[%s432 + $0x420] sm:$0xff]
        %v672 = vld [vmem:[%s432 + $0x428] sm:$0xff]
        %v673 = vld [vmem:[%s432 + $0x430] sm:$0xff]
        %v674 = vld [vmem:[%s432 + $0x438] sm:$0xff]
        %v675 = vld [vmem:[%s432 + $0x440] sm:$0xff]
        %v676 = vld [vmem:[%s432 + $0x448] sm:$0xff]
        %v677 = vld [vmem:[%s432 + $0x450] sm:$0xff]
        %v678 = vld [vmem:[%s432 + $0x458] sm:$0xff]
        %v679 = vld [vmem:[%s432 + $0x460] sm:$0xff]
        %v680 = vld [vmem:[%s432 + $0x468] sm:$0xff]
        %v681 = vld [vmem:[%s432 + $0x470] sm:$0xff]
        %v682 = vld [vmem:[%s432 + $0x478] sm:$0xff]
        %v683 = vld [vmem:[%s432 + $0x480] sm:$0xff]
        %v684 = vld [vmem:[%s432 + $0x488] sm:$0xff]
        %v685 = vld [vmem:[%s432 + $0x490] sm:$0xff]
        %v686 = vld [vmem:[%s432 + $0x498] sm:$0xff]
        %v687 = vld [vmem:[%s432 + $0x4a0] sm:$0xff]
        %v688 = vld [vmem:[%s432 + $0x4a8] sm:$0xff]
        %v689 = vld [vmem:[%s432 + $0x4b0] sm:$0xff]
        %v690 = vld [vmem:[%s432 + $0x4b8] sm:$0xff]
        %v691 = vld [vmem:[%s432 + $0x4c0] sm:$0xff]
        %v692 = vld [vmem:[%s432 + $0x4c8] sm:$0xff]
        %v693 = vld [vmem:[%s432 + $0x4d0] sm:$0xff]
        %v694 = vld [vmem:[%s432 + $0x4d8] sm:$0xff]
        %v695 = vld [vmem:[%s432 + $0x4e0] sm:$0xff]
        %v696 = vld [vmem:[%s432 + $0x4e8] sm:$0xff]
        %v697 = vld [vmem:[%s432 + $0x4f0] sm:$0xff]
        %v698 = vld [vmem:[%s432 + $0x4f8] sm:$0xff]
        %v699 = vld [vmem:[%s432 + $0x500] sm:$0xff]
        %v700 = vld [vmem:[%s432 + $0x508] sm:$0xff]
        %v701 = vld [vmem:[%s432 + $0x510] sm:$0xff]
        %v702 = vld [vmem:[%s432 + $0x518] sm:$0xff]
        %v703 = vld [vmem:[%s432 + $0x520] sm:$0xff]
        %v704 = vld [vmem:[%s432 + $0x528] sm:$0xff]
        %v705 = vld [vmem:[%s432 + $0x530] sm:$0xff]
        %v706 = vld [vmem:[%s432 + $0x538] sm:$0xff]
        %v707 = vld [vmem:[%s432 + $0x540] sm:$0xff]
        %v708 = vld [vmem:[%s432 + $0x548] sm:$0xff]
        %v709 = vld [vmem:[%s432 + $0x550] sm:$0xff]
        %v710 = vld [vmem:[%s432 + $0x558] sm:$0xff]
        %v711 = vld [vmem:[%s432 + $0x560] sm:$0xff]
        %v712 = vld [vmem:[%s432 + $0x568] sm:$0xff]
        %v713 = vld [vmem:[%s432 + $0x570] sm:$0xff]
        %v714 = vld [vmem:[%s432 + $0x578] sm:$0xff]
        %v715 = vld [vmem:[%s432 + $0x580] sm:$0xff]
        %v716 = vld [vmem:[%s432 + $0x588] sm:$0xff]
        %v717 = vld [vmem:[%s432 + $0x590] sm:$0xff]
        %v718 = vld [vmem:[%s432 + $0x598] sm:$0xff]
        %v719 = vld [vmem:[%s432 + $0x5a0] sm:$0xff]
        %v720 = vld [vmem:[%s432 + $0x5a8] sm:$0xff]
        %v721 = vld [vmem:[%s432 + $0x5b0] sm:$0xff]
        %v722 = vld [vmem:[%s432 + $0x5b8] sm:$0xff]
        %v723 = vld [vmem:[%s432 + $0x5c0] sm:$0xff]
        %v724 = vld [vmem:[%s432 + $0x5c8] sm:$0xff]
        %v725 = vld [vmem:[%s432 + $0x5d0] sm:$0xff]
        %v726 = vld [vmem:[%s432 + $0x5d8] sm:$0xff]
        %v727 = vld [vmem:[%s432 + $0x5e0] sm:$0xff]
        %v728 = vld [vmem:[%s432 + $0x5e8] sm:$0xff]
        %v729 = vld [vmem:[%s432 + $0x5f0] sm:$0xff]
        %v730 = vld [vmem:[%s432 + $0x5f8] sm:$0xff]
        %v731 = vld [vmem:[%s432 + $0x600] sm:$0xff]
        %v732 = vld [vmem:[%s432 + $0x608] sm:$0xff]
        %v733 = vld [vmem:[%s432 + $0x610] sm:$0xff]
        %v734 = vld [vmem:[%s432 + $0x618] sm:$0xff]
        %v735 = vld [vmem:[%s432 + $0x620] sm:$0xff]
        %v736 = vld [vmem:[%s432 + $0x628] sm:$0xff]
        %v737 = vld [vmem:[%s432 + $0x630] sm:$0xff]
        %v738 = vld [vmem:[%s432 + $0x638] sm:$0xff]
        %v739 = vld [vmem:[%s432 + $0x640] sm:$0xff]
        %v740 = vld [vmem:[%s432 + $0x648] sm:$0xff]
        %v741 = vld [vmem:[%s432 + $0x650] sm:$0xff]
        %v742 = vld [vmem:[%s432 + $0x658] sm:$0xff]
        %v743 = vld [vmem:[%s432 + $0x660] sm:$0xff]
        %v744 = vld [vmem:[%s432 + $0x668] sm:$0xff]
        %v745 = vld [vmem:[%s432 + $0x670] sm:$0xff]
        %v746 = vld [vmem:[%s432 + $0x678] sm:$0xff]
        %v747 = vld [vmem:[%s432 + $0x680] sm:$0xff]
        %v748 = vld [vmem:[%s432 + $0x688] sm:$0xff]
        %v749 = vld [vmem:[%s432 + $0x690] sm:$0xff]
        %v750 = vld [vmem:[%s432 + $0x698] sm:$0xff]
        %v751 = vld [vmem:[%s432 + $0x6a0] sm:$0xff]
        %v752 = vld [vmem:[%s432 + $0x6a8] sm:$0xff]
        %v753 = vld [vmem:[%s432 + $0x6b0] sm:$0xff]
        %v754 = vld [vmem:[%s432 + $0x6b8] sm:$0xff]
        %v755 = vld [vmem:[%s432 + $0x6c0] sm:$0xff]
        %v756 = vld [vmem:[%s432 + $0x6c8] sm:$0xff]
        %v757 = vld [vmem:[%s432 + $0x6d0] sm:$0xff]
        %v758 = vld [vmem:[%s432 + $0x6d8] sm:$0xff]
        %v759 = vld [vmem:[%s432 + $0x6e0] sm:$0xff]
        %v760 = vld [vmem:[%s432 + $0x6e8] sm:$0xff]
        %v761 = vld [vmem:[%s432 + $0x6f0] sm:$0xff]
        %v762 = vld [vmem:[%s432 + $0x6f8] sm:$0xff]
        %v763 = vld [vmem:[%s432 + $0x700] sm:$0xff]
        %v764 = vld [vmem:[%s432 + $0x708] sm:$0xff]
        %v765 = vld [vmem:[%s432 + $0x710] sm:$0xff]
        %v766 = vld [vmem:[%s432 + $0x718] sm:$0xff]
        %v767 = vld [vmem:[%s432 + $0x720] sm:$0xff]
        %v768 = vld [vmem:[%s432 + $0x728] sm:$0xff]
        %v769 = vld [vmem:[%s432 + $0x730] sm:$0xff]
        %v770 = vld [vmem:[%s432 + $0x738] sm:$0xff]
        %v771 = vld [vmem:[%s432 + $0x740] sm:$0xff]
        %v772 = vld [vmem:[%s432 + $0x748] sm:$0xff]
        %v773 = vld [vmem:[%s432 + $0x750] sm:$0xff]
        %v774 = vld [vmem:[%s432 + $0x758] sm:$0xff]
        %v775 = vld [vmem:[%s432 + $0x760] sm:$0xff]
        %v776 = vld [vmem:[%s432 + $0x768] sm:$0xff]
        %v777 = vld [vmem:[%s432 + $0x770] sm:$0xff]
        %v778 = vld [vmem:[%s432 + $0x778] sm:$0xff]
        %v779 = vld [vmem:[%s432 + $0x780] sm:$0xff]
        %v780 = vld [vmem:[%s432 + $0x788] sm:$0xff]
        %v781 = vld [vmem:[%s432 + $0x790] sm:$0xff]
        %v782 = vld [vmem:[%s432 + $0x798] sm:$0xff]
        %v783 = vld [vmem:[%s432 + $0x7a0] sm:$0xff]
        %v784 = vld [vmem:[%s432 + $0x7a8] sm:$0xff]
        %v785 = vld [vmem:[%s432 + $0x7b0] sm:$0xff]
        %v786 = vld [vmem:[%s432 + $0x7b8] sm:$0xff]
        %v787 = vld [vmem:[%s432 + $0x7c0] sm:$0xff]
        %v788 = vld [vmem:[%s432 + $0x7c8] sm:$0xff]
        %v789 = vld [vmem:[%s432 + $0x7d0] sm:$0xff]
        %v790 = vld [vmem:[%s432 + $0x7d8] sm:$0xff]
        %v791 = vld [vmem:[%s432 + $0x7e0] sm:$0xff]
        %v792 = vld [vmem:[%s432 + $0x7e8] sm:$0xff]
        %v793 = vld [vmem:[%s432 + $0x7f0] sm:$0xff]
        %v794 = vld [vmem:[%s432 + $0x7f8] sm:$0xff]
        %v795 = vld [vmem:[%s432 + $0x800] sm:$0xff]
        %v796 = vld [vmem:[%s432 + $0x808] sm:$0xff]
        %v797 = vld [vmem:[%s432 + $0x810] sm:$0xff]
        %v798 = vld [vmem:[%s432 + $0x818] sm:$0xff]
        %v799 = vld [vmem:[%s432 + $0x820] sm:$0xff]
        %v800 = vld [vmem:[%s432 + $0x828] sm:$0xff]
        %v801 = vld [vmem:[%s432 + $0x830] sm:$0xff]
        %v802 = vld [vmem:[%s432 + $0x838] sm:$0xff]
        %v803 = vld [vmem:[%s432 + $0x840] sm:$0xff]
        %v804 = vld [vmem:[%s432 + $0x848] sm:$0xff]
        %v805 = vld [vmem:[%s432 + $0x850] sm:$0xff]
        %v806 = vld [vmem:[%s432 + $0x858] sm:$0xff]
        %v807 = vld [vmem:[%s432 + $0x860] sm:$0xff]
        %v808 = vld [vmem:[%s432 + $0x868] sm:$0xff]
        %v809 = vld [vmem:[%s432 + $0x870] sm:$0xff]
        %v810 = vld [vmem:[%s432 + $0x878] sm:$0xff]
        %v811 = vld [vmem:[%s432 + $0x880] sm:$0xff]
        %v812 = vld [vmem:[%s432 + $0x888] sm:$0xff]
        %v813 = vld [vmem:[%s432 + $0x890] sm:$0xff]
        %v814 = vld [vmem:[%s432 + $0x898] sm:$0xff]
        %v815 = vld [vmem:[%s432 + $0x8a0] sm:$0xff]
        %v816 = vld [vmem:[%s432 + $0x8a8] sm:$0xff]
        %v817 = vld [vmem:[%s432 + $0x8b0] sm:$0xff]
        %v818 = vld [vmem:[%s432 + $0x8b8] sm:$0xff]
        %v819 = vld [vmem:[%s432 + $0x8c0] sm:$0xff]
        %v820 = vld [vmem:[%s432 + $0x8c8] sm:$0xff]
        %v821 = vld [vmem:[%s432 + $0x8d0] sm:$0xff]
        %v822 = vld [vmem:[%s432 + $0x8d8] sm:$0xff]
        %v823 = vld [vmem:[%s432 + $0x8e0] sm:$0xff]
        %v824 = vld [vmem:[%s432 + $0x8e8] sm:$0xff]
        %v825 = vld [vmem:[%s432 + $0x8f0] sm:$0xff]
        %v826 = vld [vmem:[%s432 + $0x8f8] sm:$0xff]
        %v827 = vld [vmem:[%s432 + $0x900] sm:$0xff]
        %v828 = vld [vmem:[%s432 + $0x908] sm:$0xff]
        %v829 = vld [vmem:[%s432 + $0x910] sm:$0xff]
        %v830 = vld [vmem:[%s432 + $0x918] sm:$0xff]
        %v831 = vld [vmem:[%s432 + $0x920] sm:$0xff]
        %v832 = vld [vmem:[%s432 + $0x928] sm:$0xff]
        %v833 = vld [vmem:[%s432 + $0x930] sm:$0xff]
        %v834 = vld [vmem:[%s432 + $0x938] sm:$0xff]
        %v835 = vld [vmem:[%s432 + $0x940] sm:$0xff]
        %v836 = vld [vmem:[%s432 + $0x948] sm:$0xff]
        %v837 = vld [vmem:[%s432 + $0x950] sm:$0xff]
        %v838 = vld [vmem:[%s432 + $0x958] sm:$0xff]
        %v839 = vld [vmem:[%s432 + $0x960] sm:$0xff]
        %v840 = vld [vmem:[%s432 + $0x968] sm:$0xff]
        %v841 = vld [vmem:[%s432 + $0x970] sm:$0xff]
        %v842 = vld [vmem:[%s432 + $0x978] sm:$0xff]
        %v843 = vld [vmem:[%s432 + $0x980] sm:$0xff]
        %v844 = vld [vmem:[%s432 + $0x988] sm:$0xff]
        %v845 = vld [vmem:[%s432 + $0x990] sm:$0xff]
        %v846 = vld [vmem:[%s432 + $0x998] sm:$0xff]
        %v847 = vld [vmem:[%s432 + $0x9a0] sm:$0xff]
        %v848 = vld [vmem:[%s432 + $0x9a8] sm:$0xff]
        %v849 = vld [vmem:[%s432 + $0x9b0] sm:$0xff]
        %v850 = vld [vmem:[%s432 + $0x9b8] sm:$0xff]
        %v851 = vld [vmem:[%s432 + $0x9c0] sm:$0xff]
        %v852 = vld [vmem:[%s432 + $0x9c8] sm:$0xff]
        %v853 = vld [vmem:[%s432 + $0x9d0] sm:$0xff]
        %v854 = vld [vmem:[%s432 + $0x9d8] sm:$0xff]
        %v855 = vld [vmem:[%s432 + $0x9e0] sm:$0xff]
        %v856 = vld [vmem:[%s432 + $0x9e8] sm:$0xff]
        %v857 = vld [vmem:[%s432 + $0x9f0] sm:$0xff]
        %v858 = vld [vmem:[%s432 + $0x9f8] sm:$0xff]
        %v859 = vld [vmem:[%s432 + $0xa00] sm:$0xff]
        %v860 = vld [vmem:[%s432 + $0xa08] sm:$0xff]
        %v861 = vld [vmem:[%s432 + $0xa10] sm:$0xff]
        %v862 = vld [vmem:[%s432 + $0xa18] sm:$0xff]
        %v863 = vld [vmem:[%s432 + $0xa20] sm:$0xff]
        %v864 = vld [vmem:[%s432 + $0xa28] sm:$0xff]
        %v865 = vld [vmem:[%s432 + $0xa30] sm:$0xff]
        %v866 = vld [vmem:[%s432 + $0xa38] sm:$0xff]
        %v867 = vld [vmem:[%s432 + $0xa40] sm:$0xff]
        %v868 = vld [vmem:[%s432 + $0xa48] sm:$0xff]
        %v869 = vld [vmem:[%s432 + $0xa50] sm:$0xff]
        %v870 = vld [vmem:[%s432 + $0xa58] sm:$0xff]
        %v871 = vld [vmem:[%s432 + $0xa60] sm:$0xff]
        %v872 = vld [vmem:[%s432 + $0xa68] sm:$0xff]
        %v873 = vld [vmem:[%s432 + $0xa70] sm:$0xff]
        %v874 = vld [vmem:[%s432 + $0xa78] sm:$0xff]
        %v875 = vld [vmem:[%s432 + $0xa80] sm:$0xff]
        %v876 = vld [vmem:[%s432 + $0xa88] sm:$0xff]
        %v877 = vld [vmem:[%s432 + $0xa90] sm:$0xff]
        %v878 = vld [vmem:[%s432 + $0xa98] sm:$0xff]
        %v879 = vld [vmem:[%s432 + $0xaa0] sm:$0xff]
        %v880 = vld [vmem:[%s432 + $0xaa8] sm:$0xff]
        %v881 = vld [vmem:[%s432 + $0xab0] sm:$0xff]
        %v882 = vld [vmem:[%s432 + $0xab8] sm:$0xff]
        %v883 = vld [vmem:[%s432 + $0xac0] sm:$0xff]
        %v884 = vld [vmem:[%s432 + $0xac8] sm:$0xff]
        %v885 = vld [vmem:[%s432 + $0xad0] sm:$0xff]
        %v886 = vld [vmem:[%s432 + $0xad8] sm:$0xff]
        %v887 = vld [vmem:[%s432 + $0xae0] sm:$0xff]
        %v888 = vld [vmem:[%s432 + $0xae8] sm:$0xff]
        %v889 = vld [vmem:[%s432 + $0xaf0] sm:$0xff]
        %v890 = vld [vmem:[%s432 + $0xaf8] sm:$0xff]
        %v891 = vld [vmem:[%s432 + $0xb00] sm:$0xff]
        %v892 = vld [vmem:[%s432 + $0xb08] sm:$0xff]
        %v893 = vld [vmem:[%s432 + $0xb10] sm:$0xff]
        %v894 = vld [vmem:[%s432 + $0xb18] sm:$0xff]
        %v895 = vld [vmem:[%s432 + $0xb20] sm:$0xff]
        %v896 = vld [vmem:[%s432 + $0xb28] sm:$0xff]
        %v897 = vld [vmem:[%s432 + $0xb30] sm:$0xff]
        %v898 = vld [vmem:[%s432 + $0xb38] sm:$0xff]
        %v899 = vld [vmem:[%s432 + $0xb40] sm:$0xff]
        %v900 = vld [vmem:[%s432 + $0xb48] sm:$0xff]
        %v901 = vld [vmem:[%s432 + $0xb50] sm:$0xff]
        %v902 = vld [vmem:[%s432 + $0xb58] sm:$0xff]
        %v903 = vld [vmem:[%s432 + $0xb60] sm:$0xff]
        %v904 = vld [vmem:[%s432 + $0xb68] sm:$0xff]
        %v905 = vld [vmem:[%s432 + $0xb70] sm:$0xff]
        %v906 = vld [vmem:[%s432 + $0xb78] sm:$0xff]
        %v907 = vld [vmem:[%s432 + $0xb80] sm:$0xff]
        %v908 = vld [vmem:[%s432 + $0xb88] sm:$0xff]
        %v909 = vld [vmem:[%s432 + $0xb90] sm:$0xff]
        %v910 = vld [vmem:[%s432 + $0xb98] sm:$0xff]
        %v911 = vld [vmem:[%s432 + $0xba0] sm:$0xff]
        %v912 = vld [vmem:[%s432 + $0xba8] sm:$0xff]
        %v913 = vld [vmem:[%s432 + $0xbb0] sm:$0xff]
        %v914 = vld [vmem:[%s432 + $0xbb8] sm:$0xff]
        %v915 = vld [vmem:[%s432 + $0xbc0] sm:$0xff]
        %v916 = vld [vmem:[%s432 + $0xbc8] sm:$0xff]
        %v917 = vld [vmem:[%s432 + $0xbd0] sm:$0xff]
        %v918 = vld [vmem:[%s432 + $0xbd8] sm:$0xff]
        %v919 = vld [vmem:[%s432 + $0xbe0] sm:$0xff]
        %v920 = vld [vmem:[%s432 + $0xbe8] sm:$0xff]
        %v921 = vld [vmem:[%s432 + $0xbf0] sm:$0xff]
        %v922 = vld [vmem:[%s432 + $0xbf8] sm:$0xff]
        %v923 = vld [vmem:[%s432 + $0xc00] sm:$0xff]
        %v924 = vld [vmem:[%s432 + $0xc08] sm:$0xff]
        %v925 = vld [vmem:[%s432 + $0xc10] sm:$0xff]
        %v926 = vld [vmem:[%s432 + $0xc18] sm:$0xff]
        %v927 = vld [vmem:[%s432 + $0xc20] sm:$0xff]
        %v928 = vld [vmem:[%s432 + $0xc28] sm:$0xff]
        %v929 = vld [vmem:[%s432 + $0xc30] sm:$0xff]
        %v930 = vld [vmem:[%s432 + $0xc38] sm:$0xff]
        %v931 = vld [vmem:[%s432 + $0xc40] sm:$0xff]
        %v932 = vld [vmem:[%s432 + $0xc48] sm:$0xff]
        %v933 = vld [vmem:[%s432 + $0xc50] sm:$0xff]
        %v934 = vld [vmem:[%s432 + $0xc58] sm:$0xff]
        %v935 = vld [vmem:[%s432 + $0xc60] sm:$0xff]
        %v936 = vld [vmem:[%s432 + $0xc68] sm:$0xff]
        %v937 = vld [vmem:[%s432 + $0xc70] sm:$0xff]
        %v938 = vld [vmem:[%s432 + $0xc78] sm:$0xff]
        %v939 = vld [vmem:[%s432 + $0xc80] sm:$0xff]
        %v940 = vld [vmem:[%s432 + $0xc88] sm:$0xff]
        %v941 = vld [vmem:[%s432 + $0xc90] sm:$0xff]
        %v942 = vld [vmem:[%s432 + $0xc98] sm:$0xff]
        %v943 = vld [vmem:[%s432 + $0xca0] sm:$0xff]
        %v944 = vld [vmem:[%s432 + $0xca8] sm:$0xff]
        %v945 = vld [vmem:[%s432 + $0xcb0] sm:$0xff]
        %v946 = vld [vmem:[%s432 + $0xcb8] sm:$0xff]
        %v947 = vld [vmem:[%s432 + $0xcc0] sm:$0xff]
        %v948 = vld [vmem:[%s432 + $0xcc8] sm:$0xff]
        %v949 = vld [vmem:[%s432 + $0xcd0] sm:$0xff]
        %v950 = vld [vmem:[%s432 + $0xcd8] sm:$0xff]
        %v951 = vld [vmem:[%s432 + $0xce0] sm:$0xff]
        %v952 = vld [vmem:[%s432 + $0xce8] sm:$0xff]
        %v953 = vld [vmem:[%s432 + $0xcf0] sm:$0xff]
        %v954 = vld [vmem:[%s432 + $0xcf8] sm:$0xff]
        %v955 = vld [vmem:[%s432 + $0xd00] sm:$0xff]
        %v956 = vld [vmem:[%s432 + $0xd08] sm:$0xff]
        %v957 = vld [vmem:[%s432 + $0xd10] sm:$0xff]
        %v958 = vld [vmem:[%s432 + $0xd18] sm:$0xff]
        %v959 = vld [vmem:[%s432 + $0xd20] sm:$0xff]
        %v960 = vld [vmem:[%s432 + $0xd28] sm:$0xff]
        %v961 = vld [vmem:[%s432 + $0xd30] sm:$0xff]
        %v962 = vld [vmem:[%s432 + $0xd38] sm:$0xff]
        %v963 = vld [vmem:[%s432 + $0xd40] sm:$0xff]
        %v964 = vld [vmem:[%s432 + $0xd48] sm:$0xff]
        %v965 = vld [vmem:[%s432 + $0xd50] sm:$0xff]
        %v966 = vld [vmem:[%s432 + $0xd58] sm:$0xff]
        %v967 = vld [vmem:[%s432 + $0xd60] sm:$0xff]
        %v968 = vld [vmem:[%s432 + $0xd68] sm:$0xff]
        %v969 = vld [vmem:[%s432 + $0xd70] sm:$0xff]
        %v970 = vld [vmem:[%s432 + $0xd78] sm:$0xff]
        %v971 = vld [vmem:[%s432 + $0xd80] sm:$0xff]
        %v972 = vld [vmem:[%s432 + $0xd88] sm:$0xff]
        %v973 = vld [vmem:[%s432 + $0xd90] sm:$0xff]
        %v974 = vld [vmem:[%s432 + $0xd98] sm:$0xff]
        %v975 = vld [vmem:[%s432 + $0xda0] sm:$0xff]
        %v976 = vld [vmem:[%s432 + $0xda8] sm:$0xff]
        %v977 = vld [vmem:[%s432 + $0xdb0] sm:$0xff]
        %v978 = vld [vmem:[%s432 + $0xdb8] sm:$0xff]
        %v979 = vld [vmem:[%s432 + $0xdc0] sm:$0xff]
        %v980 = vld [vmem:[%s432 + $0xdc8] sm:$0xff]
        %v981 = vld [vmem:[%s432 + $0xdd0] sm:$0xff]
        %v982 = vld [vmem:[%s432 + $0xdd8] sm:$0xff]
        %v983 = vld [vmem:[%s432 + $0xde0] sm:$0xff]
        %v984 = vld [vmem:[%s432 + $0xde8] sm:$0xff]
        %v985 = vld [vmem:[%s432 + $0xdf0] sm:$0xff]
        %v986 = vld [vmem:[%s432 + $0xdf8] sm:$0xff]
        %v987 = vld [vmem:[%s432 + $0xe00] sm:$0xff]
        %v988 = vld [vmem:[%s432 + $0xe08] sm:$0xff]
        %v989 = vld [vmem:[%s432 + $0xe10] sm:$0xff]
        %v990 = vld [vmem:[%s432 + $0xe18] sm:$0xff]
        %v991 = vld [vmem:[%s432 + $0xe20] sm:$0xff]
        %v992 = vld [vmem:[%s432 + $0xe28] sm:$0xff]
        %v993 = vld [vmem:[%s432 + $0xe30] sm:$0xff]
        %v994 = vld [vmem:[%s432 + $0xe38] sm:$0xff]
        %v995 = vld [vmem:[%s432 + $0xe40] sm:$0xff]
        %v996 = vld [vmem:[%s432 + $0xe48] sm:$0xff]
        %v997 = vld [vmem:[%s432 + $0xe50] sm:$0xff]
        %v998 = vld [vmem:[%s432 + $0xe58] sm:$0xff]
        %v999 = vld [vmem:[%s432 + $0xe60] sm:$0xff]
        %v1000 = vld [vmem:[%s432 + $0xe68] sm:$0xff]
        %v1001 = vld [vmem:[%s432 + $0xe70] sm:$0xff]
        %v1002 = vld [vmem:[%s432 + $0xe78] sm:$0xff]
        %v1003 = vld [vmem:[%s432 + $0xe80] sm:$0xff]
        %v1004 = vld [vmem:[%s432 + $0xe88] sm:$0xff]
        %v1005 = vld [vmem:[%s432 + $0xe90] sm:$0xff]
        %v1006 = vld [vmem:[%s432 + $0xe98] sm:$0xff]
        %v1007 = vld [vmem:[%s432 + $0xea0] sm:$0xff]
        %v1008 = vld [vmem:[%s432 + $0xea8] sm:$0xff]
        %v1009 = vld [vmem:[%s432 + $0xeb0] sm:$0xff]
        %v1010 = vld [vmem:[%s432 + $0xeb8] sm:$0xff]
        %v1011 = vld [vmem:[%s432 + $0xec0] sm:$0xff]
        %v1012 = vld [vmem:[%s432 + $0xec8] sm:$0xff]
        %v1013 = vld [vmem:[%s432 + $0xed0] sm:$0xff]
        %v1014 = vld [vmem:[%s432 + $0xed8] sm:$0xff]
        %v1015 = vld [vmem:[%s432 + $0xee0] sm:$0xff]
        %v1016 = vld [vmem:[%s432 + $0xee8] sm:$0xff]
        %v1017 = vld [vmem:[%s432 + $0xef0] sm:$0xff]
        %v1018 = vld [vmem:[%s432 + $0xef8] sm:$0xff]
        %v1019 = vld [vmem:[%s432 + $0xf00] sm:$0xff]
        %v1020 = vld [vmem:[%s432 + $0xf08] sm:$0xff]
        %v1021 = vld [vmem:[%s432 + $0xf10] sm:$0xff]
        %v1022 = vld [vmem:[%s432 + $0xf18] sm:$0xff]
        %v1023 = vld [vmem:[%s432 + $0xf20] sm:$0xff]
        %v1024 = vld [vmem:[%s432 + $0xf28] sm:$0xff]
        %v1025 = vld [vmem:[%s432 + $0xf30] sm:$0xff]
        %v1026 = vld [vmem:[%s432 + $0xf38] sm:$0xff]
        %v1027 = vld [vmem:[%s432 + $0xf40] sm:$0xff]
        %v1028 = vld [vmem:[%s432 + $0xf48] sm:$0xff]
        %v1029 = vld [vmem:[%s432 + $0xf50] sm:$0xff]
        %v1030 = vld [vmem:[%s432 + $0xf58] sm:$0xff]
        %v1031 = vld [vmem:[%s432 + $0xf60] sm:$0xff]
        %v1032 = vld [vmem:[%s432 + $0xf68] sm:$0xff]
        %v1033 = vld [vmem:[%s432 + $0xf70] sm:$0xff]
        %v1034 = vld [vmem:[%s432 + $0xf78] sm:$0xff]
        %v1035 = vld [vmem:[%s432 + $0xf80] sm:$0xff]
        %v1036 = vld [vmem:[%s432 + $0xf88] sm:$0xff]
        %v1037 = vld [vmem:[%s432 + $0xf90] sm:$0xff]
        %v1038 = vld [vmem:[%s432 + $0xf98] sm:$0xff]
        %v1039 = vld [vmem:[%s432 + $0xfa0] sm:$0xff]
        %v1040 = vld [vmem:[%s432 + $0xfa8] sm:$0xff]
        %v1041 = vld [vmem:[%s432 + $0xfb0] sm:$0xff]
        %v1042 = vld [vmem:[%s432 + $0xfb8] sm:$0xff]
        %v1043 = vld [vmem:[%s432 + $0xfc0] sm:$0xff]
        %v1044 = vld [vmem:[%s432 + $0xfc8] sm:$0xff]
        %v1045 = vld [vmem:[%s432 + $0xfd0] sm:$0xff]
        %v1046 = vld [vmem:[%s432 + $0xfd8] sm:$0xff]
        %v1047 = vld [vmem:[%s432 + $0xfe0] sm:$0xff]
        %v1048 = vld [vmem:[%s432 + $0xfe8] sm:$0xff]
        %v1049 = vld [vmem:[%s432 + $0xff0] sm:$0xff]
        %v1050 = vld [vmem:[%s432 + $0xff8] sm:$0xff]
        %v1053 = vunpack.c.l.s4 1966171168
        %v1054 = vunpack.c.0.s8 %v1053
        %v1055 = vlaneseq
        %v1056 = vshrl.u32 %v1055, 7
        %v1057 = vsub.s32 %v1054, %v1056
        %v1058 = vrot.slane %v534, %v1057
        %v1059 = vcombine.high %v1058, %v1058
        %v1061 = vunpack.c.l.s4 1966171168
        %v1062 = vunpack.c.0.s8 %v1061
        %v1063 = vlaneseq
        %v1064 = vshrl.u32 %v1063, 7
        %v1065 = vsub.s32 %v1062, %v1064
        %v1066 = vrot.slane %v1058, %v1065
        %v1068 = vunpack.c.l.s4 1966171168
        %v1069 = vunpack.c.0.s8 %v1068
        %v1070 = vlaneseq
        %v1071 = vshrl.u32 %v1070, 7
        %v1072 = vsub.s32 %v1069, %v1071
        %v1073 = vrot.slane %v1059, %v1072
        %v1074 = vcombine.high %v1066, %v1066
        %v1075 = vcombine.high %v1073, %v1073
        %v1592 = vunpack.c.l.b16 %v539
        %v1593 = vunpack.c.h.b16 %v539
        %v1594 = vunpack.c.l.b16 %v540
        %v1595 = vunpack.c.h.b16 %v540
        %v1596 = vunpack.c.l.b16 %v541
        %v1597 = vunpack.c.h.b16 %v541
        %v1598 = vunpack.c.l.b16 %v542
        %v1599 = vunpack.c.h.b16 %v542
        %v1600 = vunpack.c.l.b16 %v543
        %v1601 = vunpack.c.h.b16 %v543
        %v1602 = vunpack.c.l.b16 %v544
        %v1603 = vunpack.c.h.b16 %v544
        %v1604 = vunpack.c.l.b16 %v545
        %v1605 = vunpack.c.h.b16 %v545
        %v1606 = vunpack.c.l.b16 %v546
        %v1607 = vunpack.c.h.b16 %v546
        %v1608 = vunpack.c.l.b16 %v547
        %v1609 = vunpack.c.h.b16 %v547
        %v1610 = vunpack.c.l.b16 %v548
        %v1611 = vunpack.c.h.b16 %v548
        %v1612 = vunpack.c.l.b16 %v549
        %v1613 = vunpack.c.h.b16 %v549
        %v1614 = vunpack.c.l.b16 %v550
        %v1615 = vunpack.c.h.b16 %v550
        %v1616 = vunpack.c.l.b16 %v551
        %v1617 = vunpack.c.h.b16 %v551
        %v1618 = vunpack.c.l.b16 %v552
        %v1619 = vunpack.c.h.b16 %v552
        %v1620 = vunpack.c.l.b16 %v553
        %v1621 = vunpack.c.h.b16 %v553
        %v1622 = vunpack.c.l.b16 %v554
        %v1623 = vunpack.c.h.b16 %v554
        %v1624 = vunpack.c.l.b16 %v555
        %v1625 = vunpack.c.h.b16 %v555
        %v1626 = vunpack.c.l.b16 %v556
        %v1627 = vunpack.c.h.b16 %v556
        %v1628 = vunpack.c.l.b16 %v557
        %v1629 = vunpack.c.h.b16 %v557
        %v1630 = vunpack.c.l.b16 %v558
        %v1631 = vunpack.c.h.b16 %v558
        %v1632 = vunpack.c.l.b16 %v559
        %v1633 = vunpack.c.h.b16 %v559
        %v1634 = vunpack.c.l.b16 %v560
        %v1635 = vunpack.c.h.b16 %v560
        %v1636 = vunpack.c.l.b16 %v561
        %v1637 = vunpack.c.h.b16 %v561
        %v1638 = vunpack.c.l.b16 %v562
        %v1639 = vunpack.c.h.b16 %v562
        %v1640 = vunpack.c.l.b16 %v563
        %v1641 = vunpack.c.h.b16 %v563
        %v1642 = vunpack.c.l.b16 %v564
        %v1643 = vunpack.c.h.b16 %v564
        %v1644 = vunpack.c.l.b16 %v565
        %v1645 = vunpack.c.h.b16 %v565
        %v1646 = vunpack.c.l.b16 %v566
        %v1647 = vunpack.c.h.b16 %v566
        %v1648 = vunpack.c.l.b16 %v567
        %v1649 = vunpack.c.h.b16 %v567
        %v1650 = vunpack.c.l.b16 %v568
        %v1651 = vunpack.c.h.b16 %v568
        %v1652 = vunpack.c.l.b16 %v569
        %v1653 = vunpack.c.h.b16 %v569
        %v1654 = vunpack.c.l.b16 %v570
        %v1655 = vunpack.c.h.b16 %v570
        %v1656 = vunpack.c.l.b16 %v571
        %v1657 = vunpack.c.h.b16 %v571
        %v1658 = vunpack.c.l.b16 %v572
        %v1659 = vunpack.c.h.b16 %v572
        %v1660 = vunpack.c.l.b16 %v573
        %v1661 = vunpack.c.h.b16 %v573
        %v1662 = vunpack.c.l.b16 %v574
        %v1663 = vunpack.c.h.b16 %v574
        %v1664 = vunpack.c.l.b16 %v575
        %v1665 = vunpack.c.h.b16 %v575
        %v1666 = vunpack.c.l.b16 %v576
        %v1667 = vunpack.c.h.b16 %v576
        %v1668 = vunpack.c.l.b16 %v577
        %v1669 = vunpack.c.h.b16 %v577
        %v1670 = vunpack.c.l.b16 %v578
        %v1671 = vunpack.c.h.b16 %v578
        %v1672 = vunpack.c.l.b16 %v579
        %v1673 = vunpack.c.h.b16 %v579
        %v1674 = vunpack.c.l.b16 %v580
        %v1675 = vunpack.c.h.b16 %v580
        %v1676 = vunpack.c.l.b16 %v581
        %v1677 = vunpack.c.h.b16 %v581
        %v1678 = vunpack.c.l.b16 %v582
        %v1679 = vunpack.c.h.b16 %v582
        %v1680 = vunpack.c.l.b16 %v583
        %v1681 = vunpack.c.h.b16 %v583
        %v1682 = vunpack.c.l.b16 %v584
        %v1683 = vunpack.c.h.b16 %v584
        %v1684 = vunpack.c.l.b16 %v585
        %v1685 = vunpack.c.h.b16 %v585
        %v1686 = vunpack.c.l.b16 %v586
        %v1687 = vunpack.c.h.b16 %v586
        %v1688 = vunpack.c.l.b16 %v587
        %v1689 = vunpack.c.h.b16 %v587
        %v1690 = vunpack.c.l.b16 %v588
        %v1691 = vunpack.c.h.b16 %v588
        %v1692 = vunpack.c.l.b16 %v589
        %v1693 = vunpack.c.h.b16 %v589
        %v1694 = vunpack.c.l.b16 %v590
        %v1695 = vunpack.c.h.b16 %v590
        %v1696 = vunpack.c.l.b16 %v591
        %v1697 = vunpack.c.h.b16 %v591
        %v1698 = vunpack.c.l.b16 %v592
        %v1699 = vunpack.c.h.b16 %v592
        %v1700 = vunpack.c.l.b16 %v593
        %v1701 = vunpack.c.h.b16 %v593
        %v1702 = vunpack.c.l.b16 %v594
        %v1703 = vunpack.c.h.b16 %v594
        %v1704 = vunpack.c.l.b16 %v595
        %v1705 = vunpack.c.h.b16 %v595
        %v1706 = vunpack.c.l.b16 %v596
        %v1707 = vunpack.c.h.b16 %v596
        %v1708 = vunpack.c.l.b16 %v597
        %v1709 = vunpack.c.h.b16 %v597
        %v1710 = vunpack.c.l.b16 %v598
        %v1711 = vunpack.c.h.b16 %v598
        %v1712 = vunpack.c.l.b16 %v599
        %v1713 = vunpack.c.h.b16 %v599
        %v1714 = vunpack.c.l.b16 %v600
        %v1715 = vunpack.c.h.b16 %v600
        %v1716 = vunpack.c.l.b16 %v601
        %v1717 = vunpack.c.h.b16 %v601
        %v1718 = vunpack.c.l.b16 %v602
        %v1719 = vunpack.c.h.b16 %v602
        %v1720 = vunpack.c.l.b16 %v603
        %v1721 = vunpack.c.h.b16 %v603
        %v1722 = vunpack.c.l.b16 %v604
        %v1723 = vunpack.c.h.b16 %v604
        %v1724 = vunpack.c.l.b16 %v605
        %v1725 = vunpack.c.h.b16 %v605
        %v1726 = vunpack.c.l.b16 %v606
        %v1727 = vunpack.c.h.b16 %v606
        %v1728 = vunpack.c.l.b16 %v607
        %v1729 = vunpack.c.h.b16 %v607
        %v1730 = vunpack.c.l.b16 %v608
        %v1731 = vunpack.c.h.b16 %v608
        %v1732 = vunpack.c.l.b16 %v609
        %v1733 = vunpack.c.h.b16 %v609
        %v1734 = vunpack.c.l.b16 %v610
        %v1735 = vunpack.c.h.b16 %v610
        %v1736 = vunpack.c.l.b16 %v611
        %v1737 = vunpack.c.h.b16 %v611
        %v1738 = vunpack.c.l.b16 %v612
        %v1739 = vunpack.c.h.b16 %v612
        %v1740 = vunpack.c.l.b16 %v613
        %v1741 = vunpack.c.h.b16 %v613
        %v1742 = vunpack.c.l.b16 %v614
        %v1743 = vunpack.c.h.b16 %v614
        %v1744 = vunpack.c.l.b16 %v615
        %v1745 = vunpack.c.h.b16 %v615
        %v1746 = vunpack.c.l.b16 %v616
        %v1747 = vunpack.c.h.b16 %v616
        %v1748 = vunpack.c.l.b16 %v617
        %v1749 = vunpack.c.h.b16 %v617
        %v1750 = vunpack.c.l.b16 %v618
        %v1751 = vunpack.c.h.b16 %v618
        %v1752 = vunpack.c.l.b16 %v619
        %v1753 = vunpack.c.h.b16 %v619
        %v1754 = vunpack.c.l.b16 %v620
        %v1755 = vunpack.c.h.b16 %v620
        %v1756 = vunpack.c.l.b16 %v621
        %v1757 = vunpack.c.h.b16 %v621
        %v1758 = vunpack.c.l.b16 %v622
        %v1759 = vunpack.c.h.b16 %v622
        %v1760 = vunpack.c.l.b16 %v623
        %v1761 = vunpack.c.h.b16 %v623
        %v1762 = vunpack.c.l.b16 %v624
        %v1763 = vunpack.c.h.b16 %v624
        %v1764 = vunpack.c.l.b16 %v625
        %v1765 = vunpack.c.h.b16 %v625
        %v1766 = vunpack.c.l.b16 %v626
        %v1767 = vunpack.c.h.b16 %v626
        %v1768 = vunpack.c.l.b16 %v627
        %v1769 = vunpack.c.h.b16 %v627
        %v1770 = vunpack.c.l.b16 %v628
        %v1771 = vunpack.c.h.b16 %v628
        %v1772 = vunpack.c.l.b16 %v629
        %v1773 = vunpack.c.h.b16 %v629
        %v1774 = vunpack.c.l.b16 %v630
        %v1775 = vunpack.c.h.b16 %v630
        %v1776 = vunpack.c.l.b16 %v631
        %v1777 = vunpack.c.h.b16 %v631
        %v1778 = vunpack.c.l.b16 %v632
        %v1779 = vunpack.c.h.b16 %v632
        %v1780 = vunpack.c.l.b16 %v633
        %v1781 = vunpack.c.h.b16 %v633
        %v1782 = vunpack.c.l.b16 %v634
        %v1783 = vunpack.c.h.b16 %v634
        %v1784 = vunpack.c.l.b16 %v635
        %v1785 = vunpack.c.h.b16 %v635
        %v1786 = vunpack.c.l.b16 %v636
        %v1787 = vunpack.c.h.b16 %v636
        %v1788 = vunpack.c.l.b16 %v637
        %v1789 = vunpack.c.h.b16 %v637
        %v1790 = vunpack.c.l.b16 %v638
        %v1791 = vunpack.c.h.b16 %v638
        %v1792 = vunpack.c.l.b16 %v639
        %v1793 = vunpack.c.h.b16 %v639
        %v1794 = vunpack.c.l.b16 %v640
        %v1795 = vunpack.c.h.b16 %v640
        %v1796 = vunpack.c.l.b16 %v641
        %v1797 = vunpack.c.h.b16 %v641
        %v1798 = vunpack.c.l.b16 %v642
        %v1799 = vunpack.c.h.b16 %v642
        %v1800 = vunpack.c.l.b16 %v643
        %v1801 = vunpack.c.h.b16 %v643
        %v1802 = vunpack.c.l.b16 %v644
        %v1803 = vunpack.c.h.b16 %v644
        %v1804 = vunpack.c.l.b16 %v645
        %v1805 = vunpack.c.h.b16 %v645
        %v1806 = vunpack.c.l.b16 %v646
        %v1807 = vunpack.c.h.b16 %v646
        %v1808 = vunpack.c.l.b16 %v647
        %v1809 = vunpack.c.h.b16 %v647
        %v1810 = vunpack.c.l.b16 %v648
        %v1811 = vunpack.c.h.b16 %v648
        %v1812 = vunpack.c.l.b16 %v649
        %v1813 = vunpack.c.h.b16 %v649
        %v1814 = vunpack.c.l.b16 %v650
        %v1815 = vunpack.c.h.b16 %v650
        %v1816 = vunpack.c.l.b16 %v651
        %v1817 = vunpack.c.h.b16 %v651
        %v1818 = vunpack.c.l.b16 %v652
        %v1819 = vunpack.c.h.b16 %v652
        %v1820 = vunpack.c.l.b16 %v653
        %v1821 = vunpack.c.h.b16 %v653
        %v1822 = vunpack.c.l.b16 %v654
        %v1823 = vunpack.c.h.b16 %v654
        %v1824 = vunpack.c.l.b16 %v655
        %v1825 = vunpack.c.h.b16 %v655
        %v1826 = vunpack.c.l.b16 %v656
        %v1827 = vunpack.c.h.b16 %v656
        %v1828 = vunpack.c.l.b16 %v657
        %v1829 = vunpack.c.h.b16 %v657
        %v1830 = vunpack.c.l.b16 %v658
        %v1831 = vunpack.c.h.b16 %v658
        %v1832 = vunpack.c.l.b16 %v659
        %v1833 = vunpack.c.h.b16 %v659
        %v1834 = vunpack.c.l.b16 %v660
        %v1835 = vunpack.c.h.b16 %v660
        %v1836 = vunpack.c.l.b16 %v661
        %v1837 = vunpack.c.h.b16 %v661
        %v1838 = vunpack.c.l.b16 %v662
        %v1839 = vunpack.c.h.b16 %v662
        %v1840 = vunpack.c.l.b16 %v663
        %v1841 = vunpack.c.h.b16 %v663
        %v1842 = vunpack.c.l.b16 %v664
        %v1843 = vunpack.c.h.b16 %v664
        %v1844 = vunpack.c.l.b16 %v665
        %v1845 = vunpack.c.h.b16 %v665
        %v1846 = vunpack.c.l.b16 %v666
        %v1847 = vunpack.c.h.b16 %v666
        %v1848 = vunpack.c.l.b16 %v667
        %v1849 = vunpack.c.h.b16 %v667
        %v1850 = vunpack.c.l.b16 %v668
        %v1851 = vunpack.c.h.b16 %v668
        %v1852 = vunpack.c.l.b16 %v669
        %v1853 = vunpack.c.h.b16 %v669
        %v1854 = vunpack.c.l.b16 %v670
        %v1855 = vunpack.c.h.b16 %v670
        %v1856 = vunpack.c.l.b16 %v671
        %v1857 = vunpack.c.h.b16 %v671
        %v1858 = vunpack.c.l.b16 %v672
        %v1859 = vunpack.c.h.b16 %v672
        %v1860 = vunpack.c.l.b16 %v673
        %v1861 = vunpack.c.h.b16 %v673
        %v1862 = vunpack.c.l.b16 %v674
        %v1863 = vunpack.c.h.b16 %v674
        %v1864 = vunpack.c.l.b16 %v675
        %v1865 = vunpack.c.h.b16 %v675
        %v1866 = vunpack.c.l.b16 %v676
        %v1867 = vunpack.c.h.b16 %v676
        %v1868 = vunpack.c.l.b16 %v677
        %v1869 = vunpack.c.h.b16 %v677
        %v1870 = vunpack.c.l.b16 %v678
        %v1871 = vunpack.c.h.b16 %v678
        %v1872 = vunpack.c.l.b16 %v679
        %v1873 = vunpack.c.h.b16 %v679
        %v1874 = vunpack.c.l.b16 %v680
        %v1875 = vunpack.c.h.b16 %v680
        %v1876 = vunpack.c.l.b16 %v681
        %v1877 = vunpack.c.h.b16 %v681
        %v1878 = vunpack.c.l.b16 %v682
        %v1879 = vunpack.c.h.b16 %v682
        %v1880 = vunpack.c.l.b16 %v683
        %v1881 = vunpack.c.h.b16 %v683
        %v1882 = vunpack.c.l.b16 %v684
        %v1883 = vunpack.c.h.b16 %v684
        %v1884 = vunpack.c.l.b16 %v685
        %v1885 = vunpack.c.h.b16 %v685
        %v1886 = vunpack.c.l.b16 %v686
        %v1887 = vunpack.c.h.b16 %v686
        %v1888 = vunpack.c.l.b16 %v687
        %v1889 = vunpack.c.h.b16 %v687
        %v1890 = vunpack.c.l.b16 %v688
        %v1891 = vunpack.c.h.b16 %v688
        %v1892 = vunpack.c.l.b16 %v689
        %v1893 = vunpack.c.h.b16 %v689
        %v1894 = vunpack.c.l.b16 %v690
        %v1895 = vunpack.c.h.b16 %v690
        %v1896 = vunpack.c.l.b16 %v691
        %v1897 = vunpack.c.h.b16 %v691
        %v1898 = vunpack.c.l.b16 %v692
        %v1899 = vunpack.c.h.b16 %v692
        %v1900 = vunpack.c.l.b16 %v693
        %v1901 = vunpack.c.h.b16 %v693
        %v1902 = vunpack.c.l.b16 %v694
        %v1903 = vunpack.c.h.b16 %v694
        %v1904 = vunpack.c.l.b16 %v695
        %v1905 = vunpack.c.h.b16 %v695
        %v1906 = vunpack.c.l.b16 %v696
        %v1907 = vunpack.c.h.b16 %v696
        %v1908 = vunpack.c.l.b16 %v697
        %v1909 = vunpack.c.h.b16 %v697
        %v1910 = vunpack.c.l.b16 %v698
        %v1911 = vunpack.c.h.b16 %v698
        %v1912 = vunpack.c.l.b16 %v699
        %v1913 = vunpack.c.h.b16 %v699
        %v1914 = vunpack.c.l.b16 %v700
        %v1915 = vunpack.c.h.b16 %v700
        %v1916 = vunpack.c.l.b16 %v701
        %v1917 = vunpack.c.h.b16 %v701
        %v1918 = vunpack.c.l.b16 %v702
        %v1919 = vunpack.c.h.b16 %v702
        %v1920 = vunpack.c.l.b16 %v703
        %v1921 = vunpack.c.h.b16 %v703
        %v1922 = vunpack.c.l.b16 %v704
        %v1923 = vunpack.c.h.b16 %v704
        %v1924 = vunpack.c.l.b16 %v705
        %v1925 = vunpack.c.h.b16 %v705
        %v1926 = vunpack.c.l.b16 %v706
        %v1927 = vunpack.c.h.b16 %v706
        %v1928 = vunpack.c.l.b16 %v707
        %v1929 = vunpack.c.h.b16 %v707
        %v1930 = vunpack.c.l.b16 %v708
        %v1931 = vunpack.c.h.b16 %v708
        %v1932 = vunpack.c.l.b16 %v709
        %v1933 = vunpack.c.h.b16 %v709
        %v1934 = vunpack.c.l.b16 %v710
        %v1935 = vunpack.c.h.b16 %v710
        %v1936 = vunpack.c.l.b16 %v711
        %v1937 = vunpack.c.h.b16 %v711
        %v1938 = vunpack.c.l.b16 %v712
        %v1939 = vunpack.c.h.b16 %v712
        %v1940 = vunpack.c.l.b16 %v713
        %v1941 = vunpack.c.h.b16 %v713
        %v1942 = vunpack.c.l.b16 %v714
        %v1943 = vunpack.c.h.b16 %v714
        %v1944 = vunpack.c.l.b16 %v715
        %v1945 = vunpack.c.h.b16 %v715
        %v1946 = vunpack.c.l.b16 %v716
        %v1947 = vunpack.c.h.b16 %v716
        %v1948 = vunpack.c.l.b16 %v717
        %v1949 = vunpack.c.h.b16 %v717
        %v1950 = vunpack.c.l.b16 %v718
        %v1951 = vunpack.c.h.b16 %v718
        %v1952 = vunpack.c.l.b16 %v719
        %v1953 = vunpack.c.h.b16 %v719
        %v1954 = vunpack.c.l.b16 %v720
        %v1955 = vunpack.c.h.b16 %v720
        %v1956 = vunpack.c.l.b16 %v721
        %v1957 = vunpack.c.h.b16 %v721
        %v1958 = vunpack.c.l.b16 %v722
        %v1959 = vunpack.c.h.b16 %v722
        %v1960 = vunpack.c.l.b16 %v723
        %v1961 = vunpack.c.h.b16 %v723
        %v1962 = vunpack.c.l.b16 %v724
        %v1963 = vunpack.c.h.b16 %v724
        %v1964 = vunpack.c.l.b16 %v725
        %v1965 = vunpack.c.h.b16 %v725
        %v1966 = vunpack.c.l.b16 %v726
        %v1967 = vunpack.c.h.b16 %v726
        %v1968 = vunpack.c.l.b16 %v727
        %v1969 = vunpack.c.h.b16 %v727
        %v1970 = vunpack.c.l.b16 %v728
        %v1971 = vunpack.c.h.b16 %v728
        %v1972 = vunpack.c.l.b16 %v729
        %v1973 = vunpack.c.h.b16 %v729
        %v1974 = vunpack.c.l.b16 %v730
        %v1975 = vunpack.c.h.b16 %v730
        %v1976 = vunpack.c.l.b16 %v731
        %v1977 = vunpack.c.h.b16 %v731
        %v1978 = vunpack.c.l.b16 %v732
        %v1979 = vunpack.c.h.b16 %v732
        %v1980 = vunpack.c.l.b16 %v733
        %v1981 = vunpack.c.h.b16 %v733
        %v1982 = vunpack.c.l.b16 %v734
        %v1983 = vunpack.c.h.b16 %v734
        %v1984 = vunpack.c.l.b16 %v735
        %v1985 = vunpack.c.h.b16 %v735
        %v1986 = vunpack.c.l.b16 %v736
        %v1987 = vunpack.c.h.b16 %v736
        %v1988 = vunpack.c.l.b16 %v737
        %v1989 = vunpack.c.h.b16 %v737
        %v1990 = vunpack.c.l.b16 %v738
        %v1991 = vunpack.c.h.b16 %v738
        %v1992 = vunpack.c.l.b16 %v739
        %v1993 = vunpack.c.h.b16 %v739
        %v1994 = vunpack.c.l.b16 %v740
        %v1995 = vunpack.c.h.b16 %v740
        %v1996 = vunpack.c.l.b16 %v741
        %v1997 = vunpack.c.h.b16 %v741
        %v1998 = vunpack.c.l.b16 %v742
        %v1999 = vunpack.c.h.b16 %v742
        %v2000 = vunpack.c.l.b16 %v743
        %v2001 = vunpack.c.h.b16 %v743
        %v2002 = vunpack.c.l.b16 %v744
        %v2003 = vunpack.c.h.b16 %v744
        %v2004 = vunpack.c.l.b16 %v745
        %v2005 = vunpack.c.h.b16 %v745
        %v2006 = vunpack.c.l.b16 %v746
        %v2007 = vunpack.c.h.b16 %v746
        %v2008 = vunpack.c.l.b16 %v747
        %v2009 = vunpack.c.h.b16 %v747
        %v2010 = vunpack.c.l.b16 %v748
        %v2011 = vunpack.c.h.b16 %v748
        %v2012 = vunpack.c.l.b16 %v749
        %v2013 = vunpack.c.h.b16 %v749
        %v2014 = vunpack.c.l.b16 %v750
        %v2015 = vunpack.c.h.b16 %v750
        %v2016 = vunpack.c.l.b16 %v751
        %v2017 = vunpack.c.h.b16 %v751
        %v2018 = vunpack.c.l.b16 %v752
        %v2019 = vunpack.c.h.b16 %v752
        %v2020 = vunpack.c.l.b16 %v753
        %v2021 = vunpack.c.h.b16 %v753
        %v2022 = vunpack.c.l.b16 %v754
        %v2023 = vunpack.c.h.b16 %v754
        %v2024 = vunpack.c.l.b16 %v755
        %v2025 = vunpack.c.h.b16 %v755
        %v2026 = vunpack.c.l.b16 %v756
        %v2027 = vunpack.c.h.b16 %v756
        %v2028 = vunpack.c.l.b16 %v757
        %v2029 = vunpack.c.h.b16 %v757
        %v2030 = vunpack.c.l.b16 %v758
        %v2031 = vunpack.c.h.b16 %v758
        %v2032 = vunpack.c.l.b16 %v759
        %v2033 = vunpack.c.h.b16 %v759
        %v2034 = vunpack.c.l.b16 %v760
        %v2035 = vunpack.c.h.b16 %v760
        %v2036 = vunpack.c.l.b16 %v761
        %v2037 = vunpack.c.h.b16 %v761
        %v2038 = vunpack.c.l.b16 %v762
        %v2039 = vunpack.c.h.b16 %v762
        %v2040 = vunpack.c.l.b16 %v763
        %v2041 = vunpack.c.h.b16 %v763
        %v2042 = vunpack.c.l.b16 %v764
        %v2043 = vunpack.c.h.b16 %v764
        %v2044 = vunpack.c.l.b16 %v765
        %v2045 = vunpack.c.h.b16 %v765
        %v2046 = vunpack.c.l.b16 %v766
        %v2047 = vunpack.c.h.b16 %v766
        %v2048 = vunpack.c.l.b16 %v767
        %v2049 = vunpack.c.h.b16 %v767
        %v2050 = vunpack.c.l.b16 %v768
        %v2051 = vunpack.c.h.b16 %v768
        %v2052 = vunpack.c.l.b16 %v769
        %v2053 = vunpack.c.h.b16 %v769
        %v2054 = vunpack.c.l.b16 %v770
        %v2055 = vunpack.c.h.b16 %v770
        %v2056 = vunpack.c.l.b16 %v771
        %v2057 = vunpack.c.h.b16 %v771
        %v2058 = vunpack.c.l.b16 %v772
        %v2059 = vunpack.c.h.b16 %v772
        %v2060 = vunpack.c.l.b16 %v773
        %v2061 = vunpack.c.h.b16 %v773
        %v2062 = vunpack.c.l.b16 %v774
        %v2063 = vunpack.c.h.b16 %v774
        %v2064 = vunpack.c.l.b16 %v775
        %v2065 = vunpack.c.h.b16 %v775
        %v2066 = vunpack.c.l.b16 %v776
        %v2067 = vunpack.c.h.b16 %v776
        %v2068 = vunpack.c.l.b16 %v777
        %v2069 = vunpack.c.h.b16 %v777
        %v2070 = vunpack.c.l.b16 %v778
        %v2071 = vunpack.c.h.b16 %v778
        %v2072 = vunpack.c.l.b16 %v779
        %v2073 = vunpack.c.h.b16 %v779
        %v2074 = vunpack.c.l.b16 %v780
        %v2075 = vunpack.c.h.b16 %v780
        %v2076 = vunpack.c.l.b16 %v781
        %v2077 = vunpack.c.h.b16 %v781
        %v2078 = vunpack.c.l.b16 %v782
        %v2079 = vunpack.c.h.b16 %v782
        %v2080 = vunpack.c.l.b16 %v783
        %v2081 = vunpack.c.h.b16 %v783
        %v2082 = vunpack.c.l.b16 %v784
        %v2083 = vunpack.c.h.b16 %v784
        %v2084 = vunpack.c.l.b16 %v785
        %v2085 = vunpack.c.h.b16 %v785
        %v2086 = vunpack.c.l.b16 %v786
        %v2087 = vunpack.c.h.b16 %v786
        %v2088 = vunpack.c.l.b16 %v787
        %v2089 = vunpack.c.h.b16 %v787
        %v2090 = vunpack.c.l.b16 %v788
        %v2091 = vunpack.c.h.b16 %v788
        %v2092 = vunpack.c.l.b16 %v789
        %v2093 = vunpack.c.h.b16 %v789
        %v2094 = vunpack.c.l.b16 %v790
        %v2095 = vunpack.c.h.b16 %v790
        %v2096 = vunpack.c.l.b16 %v791
        %v2097 = vunpack.c.h.b16 %v791
        %v2098 = vunpack.c.l.b16 %v792
        %v2099 = vunpack.c.h.b16 %v792
        %v2100 = vunpack.c.l.b16 %v793
        %v2101 = vunpack.c.h.b16 %v793
        %v2102 = vunpack.c.l.b16 %v794
        %v2103 = vunpack.c.h.b16 %v794
        %v2104 = vunpack.c.l.b16 %v795
        %v2105 = vunpack.c.h.b16 %v795
        %v2106 = vunpack.c.l.b16 %v796
        %v2107 = vunpack.c.h.b16 %v796
        %v2108 = vunpack.c.l.b16 %v797
        %v2109 = vunpack.c.h.b16 %v797
        %v2110 = vunpack.c.l.b16 %v798
        %v2111 = vunpack.c.h.b16 %v798
        %v2112 = vunpack.c.l.b16 %v799
        %v2113 = vunpack.c.h.b16 %v799
        %v2114 = vunpack.c.l.b16 %v800
        %v2115 = vunpack.c.h.b16 %v800
        %v2116 = vunpack.c.l.b16 %v801
        %v2117 = vunpack.c.h.b16 %v801
        %v2118 = vunpack.c.l.b16 %v802
        %v2119 = vunpack.c.h.b16 %v802
        %v2120 = vunpack.c.l.b16 %v803
        %v2121 = vunpack.c.h.b16 %v803
        %v2122 = vunpack.c.l.b16 %v804
        %v2123 = vunpack.c.h.b16 %v804
        %v2124 = vunpack.c.l.b16 %v805
        %v2125 = vunpack.c.h.b16 %v805
        %v2126 = vunpack.c.l.b16 %v806
        %v2127 = vunpack.c.h.b16 %v806
        %v2128 = vunpack.c.l.b16 %v807
        %v2129 = vunpack.c.h.b16 %v807
        %v2130 = vunpack.c.l.b16 %v808
        %v2131 = vunpack.c.h.b16 %v808
        %v2132 = vunpack.c.l.b16 %v809
        %v2133 = vunpack.c.h.b16 %v809
        %v2134 = vunpack.c.l.b16 %v810
        %v2135 = vunpack.c.h.b16 %v810
        %v2136 = vunpack.c.l.b16 %v811
        %v2137 = vunpack.c.h.b16 %v811
        %v2138 = vunpack.c.l.b16 %v812
        %v2139 = vunpack.c.h.b16 %v812
        %v2140 = vunpack.c.l.b16 %v813
        %v2141 = vunpack.c.h.b16 %v813
        %v2142 = vunpack.c.l.b16 %v814
        %v2143 = vunpack.c.h.b16 %v814
        %v2144 = vunpack.c.l.b16 %v815
        %v2145 = vunpack.c.h.b16 %v815
        %v2146 = vunpack.c.l.b16 %v816
        %v2147 = vunpack.c.h.b16 %v816
        %v2148 = vunpack.c.l.b16 %v817
        %v2149 = vunpack.c.h.b16 %v817
        %v2150 = vunpack.c.l.b16 %v818
        %v2151 = vunpack.c.h.b16 %v818
        %v2152 = vunpack.c.l.b16 %v819
        %v2153 = vunpack.c.h.b16 %v819
        %v2154 = vunpack.c.l.b16 %v820
        %v2155 = vunpack.c.h.b16 %v820
        %v2156 = vunpack.c.l.b16 %v821
        %v2157 = vunpack.c.h.b16 %v821
        %v2158 = vunpack.c.l.b16 %v822
        %v2159 = vunpack.c.h.b16 %v822
        %v2160 = vunpack.c.l.b16 %v823
        %v2161 = vunpack.c.h.b16 %v823
        %v2162 = vunpack.c.l.b16 %v824
        %v2163 = vunpack.c.h.b16 %v824
        %v2164 = vunpack.c.l.b16 %v825
        %v2165 = vunpack.c.h.b16 %v825
        %v2166 = vunpack.c.l.b16 %v826
        %v2167 = vunpack.c.h.b16 %v826
        %v2168 = vunpack.c.l.b16 %v827
        %v2169 = vunpack.c.h.b16 %v827
        %v2170 = vunpack.c.l.b16 %v828
        %v2171 = vunpack.c.h.b16 %v828
        %v2172 = vunpack.c.l.b16 %v829
        %v2173 = vunpack.c.h.b16 %v829
        %v2174 = vunpack.c.l.b16 %v830
        %v2175 = vunpack.c.h.b16 %v830
        %v2176 = vunpack.c.l.b16 %v831
        %v2177 = vunpack.c.h.b16 %v831
        %v2178 = vunpack.c.l.b16 %v832
        %v2179 = vunpack.c.h.b16 %v832
        %v2180 = vunpack.c.l.b16 %v833
        %v2181 = vunpack.c.h.b16 %v833
        %v2182 = vunpack.c.l.b16 %v834
        %v2183 = vunpack.c.h.b16 %v834
        %v2184 = vunpack.c.l.b16 %v835
        %v2185 = vunpack.c.h.b16 %v835
        %v2186 = vunpack.c.l.b16 %v836
        %v2187 = vunpack.c.h.b16 %v836
        %v2188 = vunpack.c.l.b16 %v837
        %v2189 = vunpack.c.h.b16 %v837
        %v2190 = vunpack.c.l.b16 %v838
        %v2191 = vunpack.c.h.b16 %v838
        %v2192 = vunpack.c.l.b16 %v839
        %v2193 = vunpack.c.h.b16 %v839
        %v2194 = vunpack.c.l.b16 %v840
        %v2195 = vunpack.c.h.b16 %v840
        %v2196 = vunpack.c.l.b16 %v841
        %v2197 = vunpack.c.h.b16 %v841
        %v2198 = vunpack.c.l.b16 %v842
        %v2199 = vunpack.c.h.b16 %v842
        %v2200 = vunpack.c.l.b16 %v843
        %v2201 = vunpack.c.h.b16 %v843
        %v2202 = vunpack.c.l.b16 %v844
        %v2203 = vunpack.c.h.b16 %v844
        %v2204 = vunpack.c.l.b16 %v845
        %v2205 = vunpack.c.h.b16 %v845
        %v2206 = vunpack.c.l.b16 %v846
        %v2207 = vunpack.c.h.b16 %v846
        %v2208 = vunpack.c.l.b16 %v847
        %v2209 = vunpack.c.h.b16 %v847
        %v2210 = vunpack.c.l.b16 %v848
        %v2211 = vunpack.c.h.b16 %v848
        %v2212 = vunpack.c.l.b16 %v849
        %v2213 = vunpack.c.h.b16 %v849
        %v2214 = vunpack.c.l.b16 %v850
        %v2215 = vunpack.c.h.b16 %v850
        %v2216 = vunpack.c.l.b16 %v851
        %v2217 = vunpack.c.h.b16 %v851
        %v2218 = vunpack.c.l.b16 %v852
        %v2219 = vunpack.c.h.b16 %v852
        %v2220 = vunpack.c.l.b16 %v853
        %v2221 = vunpack.c.h.b16 %v853
        %v2222 = vunpack.c.l.b16 %v854
        %v2223 = vunpack.c.h.b16 %v854
        %v2224 = vunpack.c.l.b16 %v855
        %v2225 = vunpack.c.h.b16 %v855
        %v2226 = vunpack.c.l.b16 %v856
        %v2227 = vunpack.c.h.b16 %v856
        %v2228 = vunpack.c.l.b16 %v857
        %v2229 = vunpack.c.h.b16 %v857
        %v2230 = vunpack.c.l.b16 %v858
        %v2231 = vunpack.c.h.b16 %v858
        %v2232 = vunpack.c.l.b16 %v859
        %v2233 = vunpack.c.h.b16 %v859
        %v2234 = vunpack.c.l.b16 %v860
        %v2235 = vunpack.c.h.b16 %v860
        %v2236 = vunpack.c.l.b16 %v861
        %v2237 = vunpack.c.h.b16 %v861
        %v2238 = vunpack.c.l.b16 %v862
        %v2239 = vunpack.c.h.b16 %v862
        %v2240 = vunpack.c.l.b16 %v863
        %v2241 = vunpack.c.h.b16 %v863
        %v2242 = vunpack.c.l.b16 %v864
        %v2243 = vunpack.c.h.b16 %v864
        %v2244 = vunpack.c.l.b16 %v865
        %v2245 = vunpack.c.h.b16 %v865
        %v2246 = vunpack.c.l.b16 %v866
        %v2247 = vunpack.c.h.b16 %v866
        %v2248 = vunpack.c.l.b16 %v867
        %v2249 = vunpack.c.h.b16 %v867
        %v2250 = vunpack.c.l.b16 %v868
        %v2251 = vunpack.c.h.b16 %v868
        %v2252 = vunpack.c.l.b16 %v869
        %v2253 = vunpack.c.h.b16 %v869
        %v2254 = vunpack.c.l.b16 %v870
        %v2255 = vunpack.c.h.b16 %v870
        %v2256 = vunpack.c.l.b16 %v871
        %v2257 = vunpack.c.h.b16 %v871
        %v2258 = vunpack.c.l.b16 %v872
        %v2259 = vunpack.c.h.b16 %v872
        %v2260 = vunpack.c.l.b16 %v873
        %v2261 = vunpack.c.h.b16 %v873
        %v2262 = vunpack.c.l.b16 %v874
        %v2263 = vunpack.c.h.b16 %v874
        %v2264 = vunpack.c.l.b16 %v875
        %v2265 = vunpack.c.h.b16 %v875
        %v2266 = vunpack.c.l.b16 %v876
        %v2267 = vunpack.c.h.b16 %v876
        %v2268 = vunpack.c.l.b16 %v877
        %v2269 = vunpack.c.h.b16 %v877
        %v2270 = vunpack.c.l.b16 %v878
        %v2271 = vunpack.c.h.b16 %v878
        %v2272 = vunpack.c.l.b16 %v879
        %v2273 = vunpack.c.h.b16 %v879
        %v2274 = vunpack.c.l.b16 %v880
        %v2275 = vunpack.c.h.b16 %v880
        %v2276 = vunpack.c.l.b16 %v881
        %v2277 = vunpack.c.h.b16 %v881
        %v2278 = vunpack.c.l.b16 %v882
        %v2279 = vunpack.c.h.b16 %v882
        %v2280 = vunpack.c.l.b16 %v883
        %v2281 = vunpack.c.h.b16 %v883
        %v2282 = vunpack.c.l.b16 %v884
        %v2283 = vunpack.c.h.b16 %v884
        %v2284 = vunpack.c.l.b16 %v885
        %v2285 = vunpack.c.h.b16 %v885
        %v2286 = vunpack.c.l.b16 %v886
        %v2287 = vunpack.c.h.b16 %v886
        %v2288 = vunpack.c.l.b16 %v887
        %v2289 = vunpack.c.h.b16 %v887
        %v2290 = vunpack.c.l.b16 %v888
        %v2291 = vunpack.c.h.b16 %v888
        %v2292 = vunpack.c.l.b16 %v889
        %v2293 = vunpack.c.h.b16 %v889
        %v2294 = vunpack.c.l.b16 %v890
        %v2295 = vunpack.c.h.b16 %v890
        %v2296 = vunpack.c.l.b16 %v891
        %v2297 = vunpack.c.h.b16 %v891
        %v2298 = vunpack.c.l.b16 %v892
        %v2299 = vunpack.c.h.b16 %v892
        %v2300 = vunpack.c.l.b16 %v893
        %v2301 = vunpack.c.h.b16 %v893
        %v2302 = vunpack.c.l.b16 %v894
        %v2303 = vunpack.c.h.b16 %v894
        %v2304 = vunpack.c.l.b16 %v895
        %v2305 = vunpack.c.h.b16 %v895
        %v2306 = vunpack.c.l.b16 %v896
        %v2307 = vunpack.c.h.b16 %v896
        %v2308 = vunpack.c.l.b16 %v897
        %v2309 = vunpack.c.h.b16 %v897
        %v2310 = vunpack.c.l.b16 %v898
        %v2311 = vunpack.c.h.b16 %v898
        %v2312 = vunpack.c.l.b16 %v899
        %v2313 = vunpack.c.h.b16 %v899
        %v2314 = vunpack.c.l.b16 %v900
        %v2315 = vunpack.c.h.b16 %v900
        %v2316 = vunpack.c.l.b16 %v901
        %v2317 = vunpack.c.h.b16 %v901
        %v2318 = vunpack.c.l.b16 %v902
        %v2319 = vunpack.c.h.b16 %v902
        %v2320 = vunpack.c.l.b16 %v903
        %v2321 = vunpack.c.h.b16 %v903
        %v2322 = vunpack.c.l.b16 %v904
        %v2323 = vunpack.c.h.b16 %v904
        %v2324 = vunpack.c.l.b16 %v905
        %v2325 = vunpack.c.h.b16 %v905
        %v2326 = vunpack.c.l.b16 %v906
        %v2327 = vunpack.c.h.b16 %v906
        %v2328 = vunpack.c.l.b16 %v907
        %v2329 = vunpack.c.h.b16 %v907
        %v2330 = vunpack.c.l.b16 %v908
        %v2331 = vunpack.c.h.b16 %v908
        %v2332 = vunpack.c.l.b16 %v909
        %v2333 = vunpack.c.h.b16 %v909
        %v2334 = vunpack.c.l.b16 %v910
        %v2335 = vunpack.c.h.b16 %v910
        %v2336 = vunpack.c.l.b16 %v911
        %v2337 = vunpack.c.h.b16 %v911
        %v2338 = vunpack.c.l.b16 %v912
        %v2339 = vunpack.c.h.b16 %v912
        %v2340 = vunpack.c.l.b16 %v913
        %v2341 = vunpack.c.h.b16 %v913
        %v2342 = vunpack.c.l.b16 %v914
        %v2343 = vunpack.c.h.b16 %v914
        %v2344 = vunpack.c.l.b16 %v915
        %v2345 = vunpack.c.h.b16 %v915
        %v2346 = vunpack.c.l.b16 %v916
        %v2347 = vunpack.c.h.b16 %v916
        %v2348 = vunpack.c.l.b16 %v917
        %v2349 = vunpack.c.h.b16 %v917
        %v2350 = vunpack.c.l.b16 %v918
        %v2351 = vunpack.c.h.b16 %v918
        %v2352 = vunpack.c.l.b16 %v919
        %v2353 = vunpack.c.h.b16 %v919
        %v2354 = vunpack.c.l.b16 %v920
        %v2355 = vunpack.c.h.b16 %v920
        %v2356 = vunpack.c.l.b16 %v921
        %v2357 = vunpack.c.h.b16 %v921
        %v2358 = vunpack.c.l.b16 %v922
        %v2359 = vunpack.c.h.b16 %v922
        %v2360 = vunpack.c.l.b16 %v923
        %v2361 = vunpack.c.h.b16 %v923
        %v2362 = vunpack.c.l.b16 %v924
        %v2363 = vunpack.c.h.b16 %v924
        %v2364 = vunpack.c.l.b16 %v925
        %v2365 = vunpack.c.h.b16 %v925
        %v2366 = vunpack.c.l.b16 %v926
        %v2367 = vunpack.c.h.b16 %v926
        %v2368 = vunpack.c.l.b16 %v927
        %v2369 = vunpack.c.h.b16 %v927
        %v2370 = vunpack.c.l.b16 %v928
        %v2371 = vunpack.c.h.b16 %v928
        %v2372 = vunpack.c.l.b16 %v929
        %v2373 = vunpack.c.h.b16 %v929
        %v2374 = vunpack.c.l.b16 %v930
        %v2375 = vunpack.c.h.b16 %v930
        %v2376 = vunpack.c.l.b16 %v931
        %v2377 = vunpack.c.h.b16 %v931
        %v2378 = vunpack.c.l.b16 %v932
        %v2379 = vunpack.c.h.b16 %v932
        %v2380 = vunpack.c.l.b16 %v933
        %v2381 = vunpack.c.h.b16 %v933
        %v2382 = vunpack.c.l.b16 %v934
        %v2383 = vunpack.c.h.b16 %v934
        %v2384 = vunpack.c.l.b16 %v935
        %v2385 = vunpack.c.h.b16 %v935
        %v2386 = vunpack.c.l.b16 %v936
        %v2387 = vunpack.c.h.b16 %v936
        %v2388 = vunpack.c.l.b16 %v937
        %v2389 = vunpack.c.h.b16 %v937
        %v2390 = vunpack.c.l.b16 %v938
        %v2391 = vunpack.c.h.b16 %v938
        %v2392 = vunpack.c.l.b16 %v939
        %v2393 = vunpack.c.h.b16 %v939
        %v2394 = vunpack.c.l.b16 %v940
        %v2395 = vunpack.c.h.b16 %v940
        %v2396 = vunpack.c.l.b16 %v941
        %v2397 = vunpack.c.h.b16 %v941
        %v2398 = vunpack.c.l.b16 %v942
        %v2399 = vunpack.c.h.b16 %v942
        %v2400 = vunpack.c.l.b16 %v943
        %v2401 = vunpack.c.h.b16 %v943
        %v2402 = vunpack.c.l.b16 %v944
        %v2403 = vunpack.c.h.b16 %v944
        %v2404 = vunpack.c.l.b16 %v945
        %v2405 = vunpack.c.h.b16 %v945
        %v2406 = vunpack.c.l.b16 %v946
        %v2407 = vunpack.c.h.b16 %v946
        %v2408 = vunpack.c.l.b16 %v947
        %v2409 = vunpack.c.h.b16 %v947
        %v2410 = vunpack.c.l.b16 %v948
        %v2411 = vunpack.c.h.b16 %v948
        %v2412 = vunpack.c.l.b16 %v949
        %v2413 = vunpack.c.h.b16 %v949
        %v2414 = vunpack.c.l.b16 %v950
        %v2415 = vunpack.c.h.b16 %v950
        %v2416 = vunpack.c.l.b16 %v951
        %v2417 = vunpack.c.h.b16 %v951
        %v2418 = vunpack.c.l.b16 %v952
        %v2419 = vunpack.c.h.b16 %v952
        %v2420 = vunpack.c.l.b16 %v953
        %v2421 = vunpack.c.h.b16 %v953
        %v2422 = vunpack.c.l.b16 %v954
        %v2423 = vunpack.c.h.b16 %v954
        %v2424 = vunpack.c.l.b16 %v955
        %v2425 = vunpack.c.h.b16 %v955
        %v2426 = vunpack.c.l.b16 %v956
        %v2427 = vunpack.c.h.b16 %v956
        %v2428 = vunpack.c.l.b16 %v957
        %v2429 = vunpack.c.h.b16 %v957
        %v2430 = vunpack.c.l.b16 %v958
        %v2431 = vunpack.c.h.b16 %v958
        %v2432 = vunpack.c.l.b16 %v959
        %v2433 = vunpack.c.h.b16 %v959
        %v2434 = vunpack.c.l.b16 %v960
        %v2435 = vunpack.c.h.b16 %v960
        %v2436 = vunpack.c.l.b16 %v961
        %v2437 = vunpack.c.h.b16 %v961
        %v2438 = vunpack.c.l.b16 %v962
        %v2439 = vunpack.c.h.b16 %v962
        %v2440 = vunpack.c.l.b16 %v963
        %v2441 = vunpack.c.h.b16 %v963
        %v2442 = vunpack.c.l.b16 %v964
        %v2443 = vunpack.c.h.b16 %v964
        %v2444 = vunpack.c.l.b16 %v965
        %v2445 = vunpack.c.h.b16 %v965
        %v2446 = vunpack.c.l.b16 %v966
        %v2447 = vunpack.c.h.b16 %v966
        %v2448 = vunpack.c.l.b16 %v967
        %v2449 = vunpack.c.h.b16 %v967
        %v2450 = vunpack.c.l.b16 %v968
        %v2451 = vunpack.c.h.b16 %v968
        %v2452 = vunpack.c.l.b16 %v969
        %v2453 = vunpack.c.h.b16 %v969
        %v2454 = vunpack.c.l.b16 %v970
        %v2455 = vunpack.c.h.b16 %v970
        %v2456 = vunpack.c.l.b16 %v971
        %v2457 = vunpack.c.h.b16 %v971
        %v2458 = vunpack.c.l.b16 %v972
        %v2459 = vunpack.c.h.b16 %v972
        %v2460 = vunpack.c.l.b16 %v973
        %v2461 = vunpack.c.h.b16 %v973
        %v2462 = vunpack.c.l.b16 %v974
        %v2463 = vunpack.c.h.b16 %v974
        %v2464 = vunpack.c.l.b16 %v975
        %v2465 = vunpack.c.h.b16 %v975
        %v2466 = vunpack.c.l.b16 %v976
        %v2467 = vunpack.c.h.b16 %v976
        %v2468 = vunpack.c.l.b16 %v977
        %v2469 = vunpack.c.h.b16 %v977
        %v2470 = vunpack.c.l.b16 %v978
        %v2471 = vunpack.c.h.b16 %v978
        %v2472 = vunpack.c.l.b16 %v979
        %v2473 = vunpack.c.h.b16 %v979
        %v2474 = vunpack.c.l.b16 %v980
        %v2475 = vunpack.c.h.b16 %v980
        %v2476 = vunpack.c.l.b16 %v981
        %v2477 = vunpack.c.h.b16 %v981
        %v2478 = vunpack.c.l.b16 %v982
        %v2479 = vunpack.c.h.b16 %v982
        %v2480 = vunpack.c.l.b16 %v983
        %v2481 = vunpack.c.h.b16 %v983
        %v2482 = vunpack.c.l.b16 %v984
        %v2483 = vunpack.c.h.b16 %v984
        %v2484 = vunpack.c.l.b16 %v985
        %v2485 = vunpack.c.h.b16 %v985
        %v2486 = vunpack.c.l.b16 %v986
        %v2487 = vunpack.c.h.b16 %v986
        %v2488 = vunpack.c.l.b16 %v987
        %v2489 = vunpack.c.h.b16 %v987
        %v2490 = vunpack.c.l.b16 %v988
        %v2491 = vunpack.c.h.b16 %v988
        %v2492 = vunpack.c.l.b16 %v989
        %v2493 = vunpack.c.h.b16 %v989
        %v2494 = vunpack.c.l.b16 %v990
        %v2495 = vunpack.c.h.b16 %v990
        %v2496 = vunpack.c.l.b16 %v991
        %v2497 = vunpack.c.h.b16 %v991
        %v2498 = vunpack.c.l.b16 %v992
        %v2499 = vunpack.c.h.b16 %v992
        %v2500 = vunpack.c.l.b16 %v993
        %v2501 = vunpack.c.h.b16 %v993
        %v2502 = vunpack.c.l.b16 %v994
        %v2503 = vunpack.c.h.b16 %v994
        %v2504 = vunpack.c.l.b16 %v995
        %v2505 = vunpack.c.h.b16 %v995
        %v2506 = vunpack.c.l.b16 %v996
        %v2507 = vunpack.c.h.b16 %v996
        %v2508 = vunpack.c.l.b16 %v997
        %v2509 = vunpack.c.h.b16 %v997
        %v2510 = vunpack.c.l.b16 %v998
        %v2511 = vunpack.c.h.b16 %v998
        %v2512 = vunpack.c.l.b16 %v999
        %v2513 = vunpack.c.h.b16 %v999
        %v2514 = vunpack.c.l.b16 %v1000
        %v2515 = vunpack.c.h.b16 %v1000
        %v2516 = vunpack.c.l.b16 %v1001
        %v2517 = vunpack.c.h.b16 %v1001
        %v2518 = vunpack.c.l.b16 %v1002
        %v2519 = vunpack.c.h.b16 %v1002
        %v2520 = vunpack.c.l.b16 %v1003
        %v2521 = vunpack.c.h.b16 %v1003
        %v2522 = vunpack.c.l.b16 %v1004
        %v2523 = vunpack.c.h.b16 %v1004
        %v2524 = vunpack.c.l.b16 %v1005
        %v2525 = vunpack.c.h.b16 %v1005
        %v2526 = vunpack.c.l.b16 %v1006
        %v2527 = vunpack.c.h.b16 %v1006
        %v2528 = vunpack.c.l.b16 %v1007
        %v2529 = vunpack.c.h.b16 %v1007
        %v2530 = vunpack.c.l.b16 %v1008
        %v2531 = vunpack.c.h.b16 %v1008
        %v2532 = vunpack.c.l.b16 %v1009
        %v2533 = vunpack.c.h.b16 %v1009
        %v2534 = vunpack.c.l.b16 %v1010
        %v2535 = vunpack.c.h.b16 %v1010
        %v2536 = vunpack.c.l.b16 %v1011
        %v2537 = vunpack.c.h.b16 %v1011
        %v2538 = vunpack.c.l.b16 %v1012
        %v2539 = vunpack.c.h.b16 %v1012
        %v2540 = vunpack.c.l.b16 %v1013
        %v2541 = vunpack.c.h.b16 %v1013
        %v2542 = vunpack.c.l.b16 %v1014
        %v2543 = vunpack.c.h.b16 %v1014
        %v2544 = vunpack.c.l.b16 %v1015
        %v2545 = vunpack.c.h.b16 %v1015
        %v2546 = vunpack.c.l.b16 %v1016
        %v2547 = vunpack.c.h.b16 %v1016
        %v2548 = vunpack.c.l.b16 %v1017
        %v2549 = vunpack.c.h.b16 %v1017
        %v2550 = vunpack.c.l.b16 %v1018
        %v2551 = vunpack.c.h.b16 %v1018
        %v2552 = vunpack.c.l.b16 %v1019
        %v2553 = vunpack.c.h.b16 %v1019
        %v2554 = vunpack.c.l.b16 %v1020
        %v2555 = vunpack.c.h.b16 %v1020
        %v2556 = vunpack.c.l.b16 %v1021
        %v2557 = vunpack.c.h.b16 %v1021
        %v2558 = vunpack.c.l.b16 %v1022
        %v2559 = vunpack.c.h.b16 %v1022
        %v2560 = vunpack.c.l.b16 %v1023
        %v2561 = vunpack.c.h.b16 %v1023
        %v2562 = vunpack.c.l.b16 %v1024
        %v2563 = vunpack.c.h.b16 %v1024
        %v2564 = vunpack.c.l.b16 %v1025
        %v2565 = vunpack.c.h.b16 %v1025
        %v2566 = vunpack.c.l.b16 %v1026
        %v2567 = vunpack.c.h.b16 %v1026
        %v2568 = vunpack.c.l.b16 %v1027
        %v2569 = vunpack.c.h.b16 %v1027
        %v2570 = vunpack.c.l.b16 %v1028
        %v2571 = vunpack.c.h.b16 %v1028
        %v2572 = vunpack.c.l.b16 %v1029
        %v2573 = vunpack.c.h.b16 %v1029
        %v2574 = vunpack.c.l.b16 %v1030
        %v2575 = vunpack.c.h.b16 %v1030
        %v2576 = vunpack.c.l.b16 %v1031
        %v2577 = vunpack.c.h.b16 %v1031
        %v2578 = vunpack.c.l.b16 %v1032
        %v2579 = vunpack.c.h.b16 %v1032
        %v2580 = vunpack.c.l.b16 %v1033
        %v2581 = vunpack.c.h.b16 %v1033
        %v2582 = vunpack.c.l.b16 %v1034
        %v2583 = vunpack.c.h.b16 %v1034
        %v2584 = vunpack.c.l.b16 %v1035
        %v2585 = vunpack.c.h.b16 %v1035
        %v2586 = vunpack.c.l.b16 %v1036
        %v2587 = vunpack.c.h.b16 %v1036
        %v2588 = vunpack.c.l.b16 %v1037
        %v2589 = vunpack.c.h.b16 %v1037
        %v2590 = vunpack.c.l.b16 %v1038
        %v2591 = vunpack.c.h.b16 %v1038
        %v2592 = vunpack.c.l.b16 %v1039
        %v2593 = vunpack.c.h.b16 %v1039
        %v2594 = vunpack.c.l.b16 %v1040
        %v2595 = vunpack.c.h.b16 %v1040
        %v2596 = vunpack.c.l.b16 %v1041
        %v2597 = vunpack.c.h.b16 %v1041
        %v2598 = vunpack.c.l.b16 %v1042
        %v2599 = vunpack.c.h.b16 %v1042
        %v2600 = vunpack.c.l.b16 %v1043
        %v2601 = vunpack.c.h.b16 %v1043
        %v2602 = vunpack.c.l.b16 %v1044
        %v2603 = vunpack.c.h.b16 %v1044
        %v2604 = vunpack.c.l.b16 %v1045
        %v2605 = vunpack.c.h.b16 %v1045
        %v2606 = vunpack.c.l.b16 %v1046
        %v2607 = vunpack.c.h.b16 %v1046
        %v2608 = vunpack.c.l.b16 %v1047
        %v2609 = vunpack.c.h.b16 %v1047
        %v2610 = vunpack.c.l.b16 %v1048
        %v2611 = vunpack.c.h.b16 %v1048
        %v2612 = vunpack.c.l.b16 %v1049
        %v2613 = vunpack.c.h.b16 %v1049
        %v2614 = vunpack.c.l.b16 %v1050
        %v2615 = vunpack.c.h.b16 %v1050
        %v2616 = vpack.c.b16 %v1608, %v1592
        %v2617 = vpack.c.b16 %v1609, %v1593
        %v2618 = vpack.c.b16 %v1610, %v1594
        %v2619 = vpack.c.b16 %v1611, %v1595
        %v2620 = vpack.c.b16 %v1612, %v1596
        %v2621 = vpack.c.b16 %v1613, %v1597
        %v2622 = vpack.c.b16 %v1614, %v1598
        %v2623 = vpack.c.b16 %v1615, %v1599
        %v2624 = vpack.c.b16 %v1616, %v1600
        %v2625 = vpack.c.b16 %v1617, %v1601
        %v2626 = vpack.c.b16 %v1618, %v1602
        %v2627 = vpack.c.b16 %v1619, %v1603
        %v2628 = vpack.c.b16 %v1620, %v1604
        %v2629 = vpack.c.b16 %v1621, %v1605
        %v2630 = vpack.c.b16 %v1622, %v1606
        %v2631 = vpack.c.b16 %v1623, %v1607
        %v2632 = vpack.c.b16 %v1640, %v1624
        %v2633 = vpack.c.b16 %v1641, %v1625
        %v2634 = vpack.c.b16 %v1642, %v1626
        %v2635 = vpack.c.b16 %v1643, %v1627
        %v2636 = vpack.c.b16 %v1644, %v1628
        %v2637 = vpack.c.b16 %v1645, %v1629
        %v2638 = vpack.c.b16 %v1646, %v1630
        %v2639 = vpack.c.b16 %v1647, %v1631
        %v2640 = vpack.c.b16 %v1648, %v1632
        %v2641 = vpack.c.b16 %v1649, %v1633
        %v2642 = vpack.c.b16 %v1650, %v1634
        %v2643 = vpack.c.b16 %v1651, %v1635
        %v2644 = vpack.c.b16 %v1652, %v1636
        %v2645 = vpack.c.b16 %v1653, %v1637
        %v2646 = vpack.c.b16 %v1654, %v1638
        %v2647 = vpack.c.b16 %v1655, %v1639
        %v2648 = vpack.c.b16 %v1672, %v1656
        %v2649 = vpack.c.b16 %v1673, %v1657
        %v2650 = vpack.c.b16 %v1674, %v1658
        %v2651 = vpack.c.b16 %v1675, %v1659
        %v2652 = vpack.c.b16 %v1676, %v1660
        %v2653 = vpack.c.b16 %v1677, %v1661
        %v2654 = vpack.c.b16 %v1678, %v1662
        %v2655 = vpack.c.b16 %v1679, %v1663
        %v2656 = vpack.c.b16 %v1680, %v1664
        %v2657 = vpack.c.b16 %v1681, %v1665
        %v2658 = vpack.c.b16 %v1682, %v1666
        %v2659 = vpack.c.b16 %v1683, %v1667
        %v2660 = vpack.c.b16 %v1684, %v1668
        %v2661 = vpack.c.b16 %v1685, %v1669
        %v2662 = vpack.c.b16 %v1686, %v1670
        %v2663 = vpack.c.b16 %v1687, %v1671
        %v2664 = vpack.c.b16 %v1704, %v1688
        %v2665 = vpack.c.b16 %v1705, %v1689
        %v2666 = vpack.c.b16 %v1706, %v1690
        %v2667 = vpack.c.b16 %v1707, %v1691
        %v2668 = vpack.c.b16 %v1708, %v1692
        %v2669 = vpack.c.b16 %v1709, %v1693
        %v2670 = vpack.c.b16 %v1710, %v1694
        %v2671 = vpack.c.b16 %v1711, %v1695
        %v2672 = vpack.c.b16 %v1712, %v1696
        %v2673 = vpack.c.b16 %v1713, %v1697
        %v2674 = vpack.c.b16 %v1714, %v1698
        %v2675 = vpack.c.b16 %v1715, %v1699
        %v2676 = vpack.c.b16 %v1716, %v1700
        %v2677 = vpack.c.b16 %v1717, %v1701
        %v2678 = vpack.c.b16 %v1718, %v1702
        %v2679 = vpack.c.b16 %v1719, %v1703
        %v2680 = vpack.c.b16 %v1736, %v1720
        %v2681 = vpack.c.b16 %v1737, %v1721
        %v2682 = vpack.c.b16 %v1738, %v1722
        %v2683 = vpack.c.b16 %v1739, %v1723
        %v2684 = vpack.c.b16 %v1740, %v1724
        %v2685 = vpack.c.b16 %v1741, %v1725
        %v2686 = vpack.c.b16 %v1742, %v1726
        %v2687 = vpack.c.b16 %v1743, %v1727
        %v2688 = vpack.c.b16 %v1744, %v1728
        %v2689 = vpack.c.b16 %v1745, %v1729
        %v2690 = vpack.c.b16 %v1746, %v1730
        %v2691 = vpack.c.b16 %v1747, %v1731
        %v2692 = vpack.c.b16 %v1748, %v1732
        %v2693 = vpack.c.b16 %v1749, %v1733
        %v2694 = vpack.c.b16 %v1750, %v1734
        %v2695 = vpack.c.b16 %v1751, %v1735
        %v2696 = vpack.c.b16 %v1768, %v1752
        %v2697 = vpack.c.b16 %v1769, %v1753
        %v2698 = vpack.c.b16 %v1770, %v1754
        %v2699 = vpack.c.b16 %v1771, %v1755
        %v2700 = vpack.c.b16 %v1772, %v1756
        %v2701 = vpack.c.b16 %v1773, %v1757
        %v2702 = vpack.c.b16 %v1774, %v1758
        %v2703 = vpack.c.b16 %v1775, %v1759
        %v2704 = vpack.c.b16 %v1776, %v1760
        %v2705 = vpack.c.b16 %v1777, %v1761
        %v2706 = vpack.c.b16 %v1778, %v1762
        %v2707 = vpack.c.b16 %v1779, %v1763
        %v2708 = vpack.c.b16 %v1780, %v1764
        %v2709 = vpack.c.b16 %v1781, %v1765
        %v2710 = vpack.c.b16 %v1782, %v1766
        %v2711 = vpack.c.b16 %v1783, %v1767
        %v2712 = vpack.c.b16 %v1800, %v1784
        %v2713 = vpack.c.b16 %v1801, %v1785
        %v2714 = vpack.c.b16 %v1802, %v1786
        %v2715 = vpack.c.b16 %v1803, %v1787
        %v2716 = vpack.c.b16 %v1804, %v1788
        %v2717 = vpack.c.b16 %v1805, %v1789
        %v2718 = vpack.c.b16 %v1806, %v1790
        %v2719 = vpack.c.b16 %v1807, %v1791
        %v2720 = vpack.c.b16 %v1808, %v1792
        %v2721 = vpack.c.b16 %v1809, %v1793
        %v2722 = vpack.c.b16 %v1810, %v1794
        %v2723 = vpack.c.b16 %v1811, %v1795
        %v2724 = vpack.c.b16 %v1812, %v1796
        %v2725 = vpack.c.b16 %v1813, %v1797
        %v2726 = vpack.c.b16 %v1814, %v1798
        %v2727 = vpack.c.b16 %v1815, %v1799
        %v2728 = vpack.c.b16 %v1832, %v1816
        %v2729 = vpack.c.b16 %v1833, %v1817
        %v2730 = vpack.c.b16 %v1834, %v1818
        %v2731 = vpack.c.b16 %v1835, %v1819
        %v2732 = vpack.c.b16 %v1836, %v1820
        %v2733 = vpack.c.b16 %v1837, %v1821
        %v2734 = vpack.c.b16 %v1838, %v1822
        %v2735 = vpack.c.b16 %v1839, %v1823
        %v2736 = vpack.c.b16 %v1840, %v1824
        %v2737 = vpack.c.b16 %v1841, %v1825
        %v2738 = vpack.c.b16 %v1842, %v1826
        %v2739 = vpack.c.b16 %v1843, %v1827
        %v2740 = vpack.c.b16 %v1844, %v1828
        %v2741 = vpack.c.b16 %v1845, %v1829
        %v2742 = vpack.c.b16 %v1846, %v1830
        %v2743 = vpack.c.b16 %v1847, %v1831
        %v2744 = vpack.c.b16 %v1864, %v1848
        %v2745 = vpack.c.b16 %v1865, %v1849
        %v2746 = vpack.c.b16 %v1866, %v1850
        %v2747 = vpack.c.b16 %v1867, %v1851
        %v2748 = vpack.c.b16 %v1868, %v1852
        %v2749 = vpack.c.b16 %v1869, %v1853
        %v2750 = vpack.c.b16 %v1870, %v1854
        %v2751 = vpack.c.b16 %v1871, %v1855
        %v2752 = vpack.c.b16 %v1872, %v1856
        %v2753 = vpack.c.b16 %v1873, %v1857
        %v2754 = vpack.c.b16 %v1874, %v1858
        %v2755 = vpack.c.b16 %v1875, %v1859
        %v2756 = vpack.c.b16 %v1876, %v1860
        %v2757 = vpack.c.b16 %v1877, %v1861
        %v2758 = vpack.c.b16 %v1878, %v1862
        %v2759 = vpack.c.b16 %v1879, %v1863
        %v2760 = vpack.c.b16 %v1896, %v1880
        %v2761 = vpack.c.b16 %v1897, %v1881
        %v2762 = vpack.c.b16 %v1898, %v1882
        %v2763 = vpack.c.b16 %v1899, %v1883
        %v2764 = vpack.c.b16 %v1900, %v1884
        %v2765 = vpack.c.b16 %v1901, %v1885
        %v2766 = vpack.c.b16 %v1902, %v1886
        %v2767 = vpack.c.b16 %v1903, %v1887
        %v2768 = vpack.c.b16 %v1904, %v1888
        %v2769 = vpack.c.b16 %v1905, %v1889
        %v2770 = vpack.c.b16 %v1906, %v1890
        %v2771 = vpack.c.b16 %v1907, %v1891
        %v2772 = vpack.c.b16 %v1908, %v1892
        %v2773 = vpack.c.b16 %v1909, %v1893
        %v2774 = vpack.c.b16 %v1910, %v1894
        %v2775 = vpack.c.b16 %v1911, %v1895
        %v2776 = vpack.c.b16 %v1928, %v1912
        %v2777 = vpack.c.b16 %v1929, %v1913
        %v2778 = vpack.c.b16 %v1930, %v1914
        %v2779 = vpack.c.b16 %v1931, %v1915
        %v2780 = vpack.c.b16 %v1932, %v1916
        %v2781 = vpack.c.b16 %v1933, %v1917
        %v2782 = vpack.c.b16 %v1934, %v1918
        %v2783 = vpack.c.b16 %v1935, %v1919
        %v2784 = vpack.c.b16 %v1936, %v1920
        %v2785 = vpack.c.b16 %v1937, %v1921
        %v2786 = vpack.c.b16 %v1938, %v1922
        %v2787 = vpack.c.b16 %v1939, %v1923
        %v2788 = vpack.c.b16 %v1940, %v1924
        %v2789 = vpack.c.b16 %v1941, %v1925
        %v2790 = vpack.c.b16 %v1942, %v1926
        %v2791 = vpack.c.b16 %v1943, %v1927
        %v2792 = vpack.c.b16 %v1960, %v1944
        %v2793 = vpack.c.b16 %v1961, %v1945
        %v2794 = vpack.c.b16 %v1962, %v1946
        %v2795 = vpack.c.b16 %v1963, %v1947
        %v2796 = vpack.c.b16 %v1964, %v1948
        %v2797 = vpack.c.b16 %v1965, %v1949
        %v2798 = vpack.c.b16 %v1966, %v1950
        %v2799 = vpack.c.b16 %v1967, %v1951
        %v2800 = vpack.c.b16 %v1968, %v1952
        %v2801 = vpack.c.b16 %v1969, %v1953
        %v2802 = vpack.c.b16 %v1970, %v1954
        %v2803 = vpack.c.b16 %v1971, %v1955
        %v2804 = vpack.c.b16 %v1972, %v1956
        %v2805 = vpack.c.b16 %v1973, %v1957
        %v2806 = vpack.c.b16 %v1974, %v1958
        %v2807 = vpack.c.b16 %v1975, %v1959
        %v2808 = vpack.c.b16 %v1992, %v1976
        %v2809 = vpack.c.b16 %v1993, %v1977
        %v2810 = vpack.c.b16 %v1994, %v1978
        %v2811 = vpack.c.b16 %v1995, %v1979
        %v2812 = vpack.c.b16 %v1996, %v1980
        %v2813 = vpack.c.b16 %v1997, %v1981
        %v2814 = vpack.c.b16 %v1998, %v1982
        %v2815 = vpack.c.b16 %v1999, %v1983
        %v2816 = vpack.c.b16 %v2000, %v1984
        %v2817 = vpack.c.b16 %v2001, %v1985
        %v2818 = vpack.c.b16 %v2002, %v1986
        %v2819 = vpack.c.b16 %v2003, %v1987
        %v2820 = vpack.c.b16 %v2004, %v1988
        %v2821 = vpack.c.b16 %v2005, %v1989
        %v2822 = vpack.c.b16 %v2006, %v1990
        %v2823 = vpack.c.b16 %v2007, %v1991
        %v2824 = vpack.c.b16 %v2024, %v2008
        %v2825 = vpack.c.b16 %v2025, %v2009
        %v2826 = vpack.c.b16 %v2026, %v2010
        %v2827 = vpack.c.b16 %v2027, %v2011
        %v2828 = vpack.c.b16 %v2028, %v2012
        %v2829 = vpack.c.b16 %v2029, %v2013
        %v2830 = vpack.c.b16 %v2030, %v2014
        %v2831 = vpack.c.b16 %v2031, %v2015
        %v2832 = vpack.c.b16 %v2032, %v2016
        %v2833 = vpack.c.b16 %v2033, %v2017
        %v2834 = vpack.c.b16 %v2034, %v2018
        %v2835 = vpack.c.b16 %v2035, %v2019
        %v2836 = vpack.c.b16 %v2036, %v2020
        %v2837 = vpack.c.b16 %v2037, %v2021
        %v2838 = vpack.c.b16 %v2038, %v2022
        %v2839 = vpack.c.b16 %v2039, %v2023
        %v2840 = vpack.c.b16 %v2056, %v2040
        %v2841 = vpack.c.b16 %v2057, %v2041
        %v2842 = vpack.c.b16 %v2058, %v2042
        %v2843 = vpack.c.b16 %v2059, %v2043
        %v2844 = vpack.c.b16 %v2060, %v2044
        %v2845 = vpack.c.b16 %v2061, %v2045
        %v2846 = vpack.c.b16 %v2062, %v2046
        %v2847 = vpack.c.b16 %v2063, %v2047
        %v2848 = vpack.c.b16 %v2064, %v2048
        %v2849 = vpack.c.b16 %v2065, %v2049
        %v2850 = vpack.c.b16 %v2066, %v2050
        %v2851 = vpack.c.b16 %v2067, %v2051
        %v2852 = vpack.c.b16 %v2068, %v2052
        %v2853 = vpack.c.b16 %v2069, %v2053
        %v2854 = vpack.c.b16 %v2070, %v2054
        %v2855 = vpack.c.b16 %v2071, %v2055
        %v2856 = vpack.c.b16 %v2088, %v2072
        %v2857 = vpack.c.b16 %v2089, %v2073
        %v2858 = vpack.c.b16 %v2090, %v2074
        %v2859 = vpack.c.b16 %v2091, %v2075
        %v2860 = vpack.c.b16 %v2092, %v2076
        %v2861 = vpack.c.b16 %v2093, %v2077
        %v2862 = vpack.c.b16 %v2094, %v2078
        %v2863 = vpack.c.b16 %v2095, %v2079
        %v2864 = vpack.c.b16 %v2096, %v2080
        %v2865 = vpack.c.b16 %v2097, %v2081
        %v2866 = vpack.c.b16 %v2098, %v2082
        %v2867 = vpack.c.b16 %v2099, %v2083
        %v2868 = vpack.c.b16 %v2100, %v2084
        %v2869 = vpack.c.b16 %v2101, %v2085
        %v2870 = vpack.c.b16 %v2102, %v2086
        %v2871 = vpack.c.b16 %v2103, %v2087
        %v2872 = vpack.c.b16 %v2120, %v2104
        %v2873 = vpack.c.b16 %v2121, %v2105
        %v2874 = vpack.c.b16 %v2122, %v2106
        %v2875 = vpack.c.b16 %v2123, %v2107
        %v2876 = vpack.c.b16 %v2124, %v2108
        %v2877 = vpack.c.b16 %v2125, %v2109
        %v2878 = vpack.c.b16 %v2126, %v2110
        %v2879 = vpack.c.b16 %v2127, %v2111
        %v2880 = vpack.c.b16 %v2128, %v2112
        %v2881 = vpack.c.b16 %v2129, %v2113
        %v2882 = vpack.c.b16 %v2130, %v2114
        %v2883 = vpack.c.b16 %v2131, %v2115
        %v2884 = vpack.c.b16 %v2132, %v2116
        %v2885 = vpack.c.b16 %v2133, %v2117
        %v2886 = vpack.c.b16 %v2134, %v2118
        %v2887 = vpack.c.b16 %v2135, %v2119
        %v2888 = vpack.c.b16 %v2152, %v2136
        %v2889 = vpack.c.b16 %v2153, %v2137
        %v2890 = vpack.c.b16 %v2154, %v2138
        %v2891 = vpack.c.b16 %v2155, %v2139
        %v2892 = vpack.c.b16 %v2156, %v2140
        %v2893 = vpack.c.b16 %v2157, %v2141
        %v2894 = vpack.c.b16 %v2158, %v2142
        %v2895 = vpack.c.b16 %v2159, %v2143
        %v2896 = vpack.c.b16 %v2160, %v2144
        %v2897 = vpack.c.b16 %v2161, %v2145
        %v2898 = vpack.c.b16 %v2162, %v2146
        %v2899 = vpack.c.b16 %v2163, %v2147
        %v2900 = vpack.c.b16 %v2164, %v2148
        %v2901 = vpack.c.b16 %v2165, %v2149
        %v2902 = vpack.c.b16 %v2166, %v2150
        %v2903 = vpack.c.b16 %v2167, %v2151
        %v2904 = vpack.c.b16 %v2184, %v2168
        %v2905 = vpack.c.b16 %v2185, %v2169
        %v2906 = vpack.c.b16 %v2186, %v2170
        %v2907 = vpack.c.b16 %v2187, %v2171
        %v2908 = vpack.c.b16 %v2188, %v2172
        %v2909 = vpack.c.b16 %v2189, %v2173
        %v2910 = vpack.c.b16 %v2190, %v2174
        %v2911 = vpack.c.b16 %v2191, %v2175
        %v2912 = vpack.c.b16 %v2192, %v2176
        %v2913 = vpack.c.b16 %v2193, %v2177
        %v2914 = vpack.c.b16 %v2194, %v2178
        %v2915 = vpack.c.b16 %v2195, %v2179
        %v2916 = vpack.c.b16 %v2196, %v2180
        %v2917 = vpack.c.b16 %v2197, %v2181
        %v2918 = vpack.c.b16 %v2198, %v2182
        %v2919 = vpack.c.b16 %v2199, %v2183
        %v2920 = vpack.c.b16 %v2216, %v2200
        %v2921 = vpack.c.b16 %v2217, %v2201
        %v2922 = vpack.c.b16 %v2218, %v2202
        %v2923 = vpack.c.b16 %v2219, %v2203
        %v2924 = vpack.c.b16 %v2220, %v2204
        %v2925 = vpack.c.b16 %v2221, %v2205
        %v2926 = vpack.c.b16 %v2222, %v2206
        %v2927 = vpack.c.b16 %v2223, %v2207
        %v2928 = vpack.c.b16 %v2224, %v2208
        %v2929 = vpack.c.b16 %v2225, %v2209
        %v2930 = vpack.c.b16 %v2226, %v2210
        %v2931 = vpack.c.b16 %v2227, %v2211
        %v2932 = vpack.c.b16 %v2228, %v2212
        %v2933 = vpack.c.b16 %v2229, %v2213
        %v2934 = vpack.c.b16 %v2230, %v2214
        %v2935 = vpack.c.b16 %v2231, %v2215
        %v2936 = vpack.c.b16 %v2248, %v2232
        %v2937 = vpack.c.b16 %v2249, %v2233
        %v2938 = vpack.c.b16 %v2250, %v2234
        %v2939 = vpack.c.b16 %v2251, %v2235
        %v2940 = vpack.c.b16 %v2252, %v2236
        %v2941 = vpack.c.b16 %v2253, %v2237
        %v2942 = vpack.c.b16 %v2254, %v2238
        %v2943 = vpack.c.b16 %v2255, %v2239
        %v2944 = vpack.c.b16 %v2256, %v2240
        %v2945 = vpack.c.b16 %v2257, %v2241
        %v2946 = vpack.c.b16 %v2258, %v2242
        %v2947 = vpack.c.b16 %v2259, %v2243
        %v2948 = vpack.c.b16 %v2260, %v2244
        %v2949 = vpack.c.b16 %v2261, %v2245
        %v2950 = vpack.c.b16 %v2262, %v2246
        %v2951 = vpack.c.b16 %v2263, %v2247
        %v2952 = vpack.c.b16 %v2280, %v2264
        %v2953 = vpack.c.b16 %v2281, %v2265
        %v2954 = vpack.c.b16 %v2282, %v2266
        %v2955 = vpack.c.b16 %v2283, %v2267
        %v2956 = vpack.c.b16 %v2284, %v2268
        %v2957 = vpack.c.b16 %v2285, %v2269
        %v2958 = vpack.c.b16 %v2286, %v2270
        %v2959 = vpack.c.b16 %v2287, %v2271
        %v2960 = vpack.c.b16 %v2288, %v2272
        %v2961 = vpack.c.b16 %v2289, %v2273
        %v2962 = vpack.c.b16 %v2290, %v2274
        %v2963 = vpack.c.b16 %v2291, %v2275
        %v2964 = vpack.c.b16 %v2292, %v2276
        %v2965 = vpack.c.b16 %v2293, %v2277
        %v2966 = vpack.c.b16 %v2294, %v2278
        %v2967 = vpack.c.b16 %v2295, %v2279
        %v2968 = vpack.c.b16 %v2312, %v2296
        %v2969 = vpack.c.b16 %v2313, %v2297
        %v2970 = vpack.c.b16 %v2314, %v2298
        %v2971 = vpack.c.b16 %v2315, %v2299
        %v2972 = vpack.c.b16 %v2316, %v2300
        %v2973 = vpack.c.b16 %v2317, %v2301
        %v2974 = vpack.c.b16 %v2318, %v2302
        %v2975 = vpack.c.b16 %v2319, %v2303
        %v2976 = vpack.c.b16 %v2320, %v2304
        %v2977 = vpack.c.b16 %v2321, %v2305
        %v2978 = vpack.c.b16 %v2322, %v2306
        %v2979 = vpack.c.b16 %v2323, %v2307
        %v2980 = vpack.c.b16 %v2324, %v2308
        %v2981 = vpack.c.b16 %v2325, %v2309
        %v2982 = vpack.c.b16 %v2326, %v2310
        %v2983 = vpack.c.b16 %v2327, %v2311
        %v2984 = vpack.c.b16 %v2344, %v2328
        %v2985 = vpack.c.b16 %v2345, %v2329
        %v2986 = vpack.c.b16 %v2346, %v2330
        %v2987 = vpack.c.b16 %v2347, %v2331
        %v2988 = vpack.c.b16 %v2348, %v2332
        %v2989 = vpack.c.b16 %v2349, %v2333
        %v2990 = vpack.c.b16 %v2350, %v2334
        %v2991 = vpack.c.b16 %v2351, %v2335
        %v2992 = vpack.c.b16 %v2352, %v2336
        %v2993 = vpack.c.b16 %v2353, %v2337
        %v2994 = vpack.c.b16 %v2354, %v2338
        %v2995 = vpack.c.b16 %v2355, %v2339
        %v2996 = vpack.c.b16 %v2356, %v2340
        %v2997 = vpack.c.b16 %v2357, %v2341
        %v2998 = vpack.c.b16 %v2358, %v2342
        %v2999 = vpack.c.b16 %v2359, %v2343
        %v3000 = vpack.c.b16 %v2376, %v2360
        %v3001 = vpack.c.b16 %v2377, %v2361
        %v3002 = vpack.c.b16 %v2378, %v2362
        %v3003 = vpack.c.b16 %v2379, %v2363
        %v3004 = vpack.c.b16 %v2380, %v2364
        %v3005 = vpack.c.b16 %v2381, %v2365
        %v3006 = vpack.c.b16 %v2382, %v2366
        %v3007 = vpack.c.b16 %v2383, %v2367
        %v3008 = vpack.c.b16 %v2384, %v2368
        %v3009 = vpack.c.b16 %v2385, %v2369
        %v3010 = vpack.c.b16 %v2386, %v2370
        %v3011 = vpack.c.b16 %v2387, %v2371
        %v3012 = vpack.c.b16 %v2388, %v2372
        %v3013 = vpack.c.b16 %v2389, %v2373
        %v3014 = vpack.c.b16 %v2390, %v2374
        %v3015 = vpack.c.b16 %v2391, %v2375
        %v3016 = vpack.c.b16 %v2408, %v2392
        %v3017 = vpack.c.b16 %v2409, %v2393
        %v3018 = vpack.c.b16 %v2410, %v2394
        %v3019 = vpack.c.b16 %v2411, %v2395
        %v3020 = vpack.c.b16 %v2412, %v2396
        %v3021 = vpack.c.b16 %v2413, %v2397
        %v3022 = vpack.c.b16 %v2414, %v2398
        %v3023 = vpack.c.b16 %v2415, %v2399
        %v3024 = vpack.c.b16 %v2416, %v2400
        %v3025 = vpack.c.b16 %v2417, %v2401
        %v3026 = vpack.c.b16 %v2418, %v2402
        %v3027 = vpack.c.b16 %v2419, %v2403
        %v3028 = vpack.c.b16 %v2420, %v2404
        %v3029 = vpack.c.b16 %v2421, %v2405
        %v3030 = vpack.c.b16 %v2422, %v2406
        %v3031 = vpack.c.b16 %v2423, %v2407
        %v3032 = vpack.c.b16 %v2440, %v2424
        %v3033 = vpack.c.b16 %v2441, %v2425
        %v3034 = vpack.c.b16 %v2442, %v2426
        %v3035 = vpack.c.b16 %v2443, %v2427
        %v3036 = vpack.c.b16 %v2444, %v2428
        %v3037 = vpack.c.b16 %v2445, %v2429
        %v3038 = vpack.c.b16 %v2446, %v2430
        %v3039 = vpack.c.b16 %v2447, %v2431
        %v3040 = vpack.c.b16 %v2448, %v2432
        %v3041 = vpack.c.b16 %v2449, %v2433
        %v3042 = vpack.c.b16 %v2450, %v2434
        %v3043 = vpack.c.b16 %v2451, %v2435
        %v3044 = vpack.c.b16 %v2452, %v2436
        %v3045 = vpack.c.b16 %v2453, %v2437
        %v3046 = vpack.c.b16 %v2454, %v2438
        %v3047 = vpack.c.b16 %v2455, %v2439
        %v3048 = vpack.c.b16 %v2472, %v2456
        %v3049 = vpack.c.b16 %v2473, %v2457
        %v3050 = vpack.c.b16 %v2474, %v2458
        %v3051 = vpack.c.b16 %v2475, %v2459
        %v3052 = vpack.c.b16 %v2476, %v2460
        %v3053 = vpack.c.b16 %v2477, %v2461
        %v3054 = vpack.c.b16 %v2478, %v2462
        %v3055 = vpack.c.b16 %v2479, %v2463
        %v3056 = vpack.c.b16 %v2480, %v2464
        %v3057 = vpack.c.b16 %v2481, %v2465
        %v3058 = vpack.c.b16 %v2482, %v2466
        %v3059 = vpack.c.b16 %v2483, %v2467
        %v3060 = vpack.c.b16 %v2484, %v2468
        %v3061 = vpack.c.b16 %v2485, %v2469
        %v3062 = vpack.c.b16 %v2486, %v2470
        %v3063 = vpack.c.b16 %v2487, %v2471
        %v3064 = vpack.c.b16 %v2504, %v2488
        %v3065 = vpack.c.b16 %v2505, %v2489
        %v3066 = vpack.c.b16 %v2506, %v2490
        %v3067 = vpack.c.b16 %v2507, %v2491
        %v3068 = vpack.c.b16 %v2508, %v2492
        %v3069 = vpack.c.b16 %v2509, %v2493
        %v3070 = vpack.c.b16 %v2510, %v2494
        %v3071 = vpack.c.b16 %v2511, %v2495
        %v3072 = vpack.c.b16 %v2512, %v2496
        %v3073 = vpack.c.b16 %v2513, %v2497
        %v3074 = vpack.c.b16 %v2514, %v2498
        %v3075 = vpack.c.b16 %v2515, %v2499
        %v3076 = vpack.c.b16 %v2516, %v2500
        %v3077 = vpack.c.b16 %v2517, %v2501
        %v3078 = vpack.c.b16 %v2518, %v2502
        %v3079 = vpack.c.b16 %v2519, %v2503
        %v3080 = vpack.c.b16 %v2536, %v2520
        %v3081 = vpack.c.b16 %v2537, %v2521
        %v3082 = vpack.c.b16 %v2538, %v2522
        %v3083 = vpack.c.b16 %v2539, %v2523
        %v3084 = vpack.c.b16 %v2540, %v2524
        %v3085 = vpack.c.b16 %v2541, %v2525
        %v3086 = vpack.c.b16 %v2542, %v2526
        %v3087 = vpack.c.b16 %v2543, %v2527
        %v3088 = vpack.c.b16 %v2544, %v2528
        %v3089 = vpack.c.b16 %v2545, %v2529
        %v3090 = vpack.c.b16 %v2546, %v2530
        %v3091 = vpack.c.b16 %v2547, %v2531
        %v3092 = vpack.c.b16 %v2548, %v2532
        %v3093 = vpack.c.b16 %v2549, %v2533
        %v3094 = vpack.c.b16 %v2550, %v2534
        %v3095 = vpack.c.b16 %v2551, %v2535
        %v3096 = vpack.c.b16 %v2568, %v2552
        %v3097 = vpack.c.b16 %v2569, %v2553
        %v3098 = vpack.c.b16 %v2570, %v2554
        %v3099 = vpack.c.b16 %v2571, %v2555
        %v3100 = vpack.c.b16 %v2572, %v2556
        %v3101 = vpack.c.b16 %v2573, %v2557
        %v3102 = vpack.c.b16 %v2574, %v2558
        %v3103 = vpack.c.b16 %v2575, %v2559
        %v3104 = vpack.c.b16 %v2576, %v2560
        %v3105 = vpack.c.b16 %v2577, %v2561
        %v3106 = vpack.c.b16 %v2578, %v2562
        %v3107 = vpack.c.b16 %v2579, %v2563
        %v3108 = vpack.c.b16 %v2580, %v2564
        %v3109 = vpack.c.b16 %v2581, %v2565
        %v3110 = vpack.c.b16 %v2582, %v2566
        %v3111 = vpack.c.b16 %v2583, %v2567
        %v3112 = vpack.c.b16 %v2600, %v2584
        %v3113 = vpack.c.b16 %v2601, %v2585
        %v3114 = vpack.c.b16 %v2602, %v2586
        %v3115 = vpack.c.b16 %v2603, %v2587
        %v3116 = vpack.c.b16 %v2604, %v2588
        %v3117 = vpack.c.b16 %v2605, %v2589
        %v3118 = vpack.c.b16 %v2606, %v2590
        %v3119 = vpack.c.b16 %v2607, %v2591
        %v3120 = vpack.c.b16 %v2608, %v2592
        %v3121 = vpack.c.b16 %v2609, %v2593
        %v3122 = vpack.c.b16 %v2610, %v2594
        %v3123 = vpack.c.b16 %v2611, %v2595
        %v3124 = vpack.c.b16 %v2612, %v2596
        %v3125 = vpack.c.b16 %v2613, %v2597
        %v3126 = vpack.c.b16 %v2614, %v2598
        %v3127 = vpack.c.b16 %v2615, %v2599
        %3640 = vmatprep.subr.bf16.mxu0 %v2729
        %3641 = vmatpush1.bf16.msra.mxu0 %v2728
        %3642 = vmatprep.subr.bf16.mxu0 %v2713
        %3643 = vmatpush1.bf16.msra.mxu0 %v2712
        %3644 = vmatprep.subr.bf16.mxu0 %v2697
        %3645 = vmatpush1.bf16.msra.mxu0 %v2696
        %3646 = vmatprep.subr.bf16.mxu0 %v2681
        %3647 = vmatpush1.bf16.msra.mxu0 %v2680
        %3648 = vmatprep.subr.bf16.mxu0 %v2665
        %3649 = vmatpush1.bf16.msra.mxu0 %v2664
        %3650 = vmatprep.subr.bf16.mxu0 %v2649
        %3651 = vmatpush1.bf16.msra.mxu0 %v2648
        %3652 = vmatprep.subr.bf16.mxu0 %v2633
        %3653 = vmatpush1.bf16.msra.mxu0 %v2632
        %3654 = vmatprep.subr.bf16.mxu0 %v2617
        %3655 = vmatpush1.bf16.msra.mxu0 %v2616
        %3656 = vmatprep.subr.bf16.mxu0 %v2857
        %3657 = vmatpush2.bf16.msra.mxu0 %v2856
        %3658 = vmatprep.subr.bf16.mxu0 %v2841
        %3659 = vmatpush2.bf16.msra.mxu0 %v2840
        %3660 = vmatprep.subr.bf16.mxu0 %v2825
        %3661 = vmatpush2.bf16.msra.mxu0 %v2824
        %3662 = vmatprep.subr.bf16.mxu0 %v2809
        %3663 = vmatpush2.bf16.msra.mxu0 %v2808
        %3664 = vmatprep.subr.bf16.mxu0 %v2793
        %3665 = vmatpush2.bf16.msra.mxu0 %v2792
        %3666 = vmatprep.subr.bf16.mxu0 %v2777
        %3667 = vmatpush2.bf16.msra.mxu0 %v2776
        %3668 = vmatprep.subr.bf16.mxu0 %v2761
        %3669 = vmatpush2.bf16.msra.mxu0 %v2760
        %3670 = vmatprep.subr.bf16.mxu0 %v2745
        %3671 = vmatpush2.bf16.msra.mxu0 %v2744
        %3672 = vmatprep.mubr.bf16.mxu0 %v1073
        %3673 = vmatmul.mubr.bf16.gmra.mxu0 %v1066
        %v3674 = vpop.f32.mrf.mxu0
        %v3675 = vadd.f32 0.0, %v3674
        %v3676 = vpop.f32.mrf.mxu0
        %v3677 = vadd.f32 0.0, %v3676
        %v3678 = vpop.f32.mrf.mxu0
        %v3679 = vpop.f32.mrf.mxu0
        %3680 = vdwg.mxu0
        %3681 = vmatprep.subr.bf16.mxu0 %v2985
        %3682 = vmatpush1.bf16.msra.mxu0 %v2984
        %3683 = vmatprep.subr.bf16.mxu0 %v2969
        %3684 = vmatpush1.bf16.msra.mxu0 %v2968
        %3685 = vmatprep.subr.bf16.mxu0 %v2953
        %3686 = vmatpush1.bf16.msra.mxu0 %v2952
        %3687 = vmatprep.subr.bf16.mxu0 %v2937
        %3688 = vmatpush1.bf16.msra.mxu0 %v2936
        %3689 = vmatprep.subr.bf16.mxu0 %v2921
        %3690 = vmatpush1.bf16.msra.mxu0 %v2920
        %3691 = vmatprep.subr.bf16.mxu0 %v2905
        %3692 = vmatpush1.bf16.msra.mxu0 %v2904
        %3693 = vmatprep.subr.bf16.mxu0 %v2889
        %3694 = vmatpush1.bf16.msra.mxu0 %v2888
        %3695 = vmatprep.subr.bf16.mxu0 %v2873
        %3696 = vmatpush1.bf16.msra.mxu0 %v2872
        %3697 = vmatprep.subr.bf16.mxu0 %v3113
        %3698 = vmatpush2.bf16.msra.mxu0 %v3112
        %3699 = vmatprep.subr.bf16.mxu0 %v3097
        %3700 = vmatpush2.bf16.msra.mxu0 %v3096
        %3701 = vmatprep.subr.bf16.mxu0 %v3081
        %3702 = vmatpush2.bf16.msra.mxu0 %v3080
        %3703 = vmatprep.subr.bf16.mxu0 %v3065
        %3704 = vmatpush2.bf16.msra.mxu0 %v3064
        %3705 = vmatprep.subr.bf16.mxu0 %v3049
        %3706 = vmatpush2.bf16.msra.mxu0 %v3048
        %3707 = vmatprep.subr.bf16.mxu0 %v3033
        %3708 = vmatpush2.bf16.msra.mxu0 %v3032
        %3709 = vmatprep.subr.bf16.mxu0 %v3017
        %3710 = vmatpush2.bf16.msra.mxu0 %v3016
        %3711 = vmatprep.subr.bf16.mxu0 %v3001
        %3712 = vmatpush2.bf16.msra.mxu0 %v3000
        %3713 = vmatprep.mubr.bf16.mxu0 %v1075
        %3714 = vmatmul.mubr.bf16.gmra.mxu0 %v1074
        %v3715 = vpop.f32.mrf.mxu0
        %v3716 = vadd.f32 %v3675, %v3715
        %v3717 = vpop.f32.mrf.mxu0
        %v3718 = vadd.f32 %v3677, %v3717
        %v3719 = vpop.f32.mrf.mxu0
        %v3720 = vpop.f32.mrf.mxu0
        %3721 = vdwg.mxu0
        %3722 = vmatprep.subr.bf16.mxu0 %v2731
        %3723 = vmatpush1.bf16.msra.mxu0 %v2730
        %3724 = vmatprep.subr.bf16.mxu0 %v2715
        %3725 = vmatpush1.bf16.msra.mxu0 %v2714
        %3726 = vmatprep.subr.bf16.mxu0 %v2699
        %3727 = vmatpush1.bf16.msra.mxu0 %v2698
        %3728 = vmatprep.subr.bf16.mxu0 %v2683
        %3729 = vmatpush1.bf16.msra.mxu0 %v2682
        %3730 = vmatprep.subr.bf16.mxu0 %v2667
        %3731 = vmatpush1.bf16.msra.mxu0 %v2666
        %3732 = vmatprep.subr.bf16.mxu0 %v2651
        %3733 = vmatpush1.bf16.msra.mxu0 %v2650
        %3734 = vmatprep.subr.bf16.mxu0 %v2635
        %3735 = vmatpush1.bf16.msra.mxu0 %v2634
        %3736 = vmatprep.subr.bf16.mxu0 %v2619
        %3737 = vmatpush1.bf16.msra.mxu0 %v2618
        %3738 = vmatprep.subr.bf16.mxu0 %v2859
        %3739 = vmatpush2.bf16.msra.mxu0 %v2858
        %3740 = vmatprep.subr.bf16.mxu0 %v2843
        %3741 = vmatpush2.bf16.msra.mxu0 %v2842
        %3742 = vmatprep.subr.bf16.mxu0 %v2827
        %3743 = vmatpush2.bf16.msra.mxu0 %v2826
        %3744 = vmatprep.subr.bf16.mxu0 %v2811
        %3745 = vmatpush2.bf16.msra.mxu0 %v2810
        %3746 = vmatprep.subr.bf16.mxu0 %v2795
        %3747 = vmatpush2.bf16.msra.mxu0 %v2794
        %3748 = vmatprep.subr.bf16.mxu0 %v2779
        %3749 = vmatpush2.bf16.msra.mxu0 %v2778
        %3750 = vmatprep.subr.bf16.mxu0 %v2763
        %3751 = vmatpush2.bf16.msra.mxu0 %v2762
        %3752 = vmatprep.subr.bf16.mxu0 %v2747
        %3753 = vmatpush2.bf16.msra.mxu0 %v2746
        %3754 = vmatprep.mubr.bf16.mxu0 %v1073
        %3755 = vmatmul.mubr.bf16.gmra.mxu0 %v1066
        %v3756 = vpop.f32.mrf.mxu0
        %v3757 = vadd.f32 0.0, %v3756
        %v3758 = vpop.f32.mrf.mxu0
        %v3759 = vadd.f32 0.0, %v3758
        %v3760 = vpop.f32.mrf.mxu0
        %v3761 = vpop.f32.mrf.mxu0
        %3762 = vdwg.mxu0
        %3763 = vmatprep.subr.bf16.mxu0 %v2987
        %3764 = vmatpush1.bf16.msra.mxu0 %v2986
        %3765 = vmatprep.subr.bf16.mxu0 %v2971
        %3766 = vmatpush1.bf16.msra.mxu0 %v2970
        %3767 = vmatprep.subr.bf16.mxu0 %v2955
        %3768 = vmatpush1.bf16.msra.mxu0 %v2954
        %3769 = vmatprep.subr.bf16.mxu0 %v2939
        %3770 = vmatpush1.bf16.msra.mxu0 %v2938
        %3771 = vmatprep.subr.bf16.mxu0 %v2923
        %3772 = vmatpush1.bf16.msra.mxu0 %v2922
        %3773 = vmatprep.subr.bf16.mxu0 %v2907
        %3774 = vmatpush1.bf16.msra.mxu0 %v2906
        %3775 = vmatprep.subr.bf16.mxu0 %v2891
        %3776 = vmatpush1.bf16.msra.mxu0 %v2890
        %3777 = vmatprep.subr.bf16.mxu0 %v2875
        %3778 = vmatpush1.bf16.msra.mxu0 %v2874
        %3779 = vmatprep.subr.bf16.mxu0 %v3115
        %3780 = vmatpush2.bf16.msra.mxu0 %v3114
        %3781 = vmatprep.subr.bf16.mxu0 %v3099
        %3782 = vmatpush2.bf16.msra.mxu0 %v3098
        %3783 = vmatprep.subr.bf16.mxu0 %v3083
        %3784 = vmatpush2.bf16.msra.mxu0 %v3082
        %3785 = vmatprep.subr.bf16.mxu0 %v3067
        %3786 = vmatpush2.bf16.msra.mxu0 %v3066
        %3787 = vmatprep.subr.bf16.mxu0 %v3051
        %3788 = vmatpush2.bf16.msra.mxu0 %v3050
        %3789 = vmatprep.subr.bf16.mxu0 %v3035
        %3790 = vmatpush2.bf16.msra.mxu0 %v3034
        %3791 = vmatprep.subr.bf16.mxu0 %v3019
        %3792 = vmatpush2.bf16.msra.mxu0 %v3018
        %3793 = vmatprep.subr.bf16.mxu0 %v3003
        %3794 = vmatpush2.bf16.msra.mxu0 %v3002
        %3795 = vmatprep.mubr.bf16.mxu0 %v1075
        %3796 = vmatmul.mubr.bf16.gmra.mxu0 %v1074
        %v3797 = vpop.f32.mrf.mxu0
        %v3798 = vadd.f32 %v3757, %v3797
        %v3799 = vpop.f32.mrf.mxu0
        %v3800 = vadd.f32 %v3759, %v3799
        %v3801 = vpop.f32.mrf.mxu0
        %v3802 = vpop.f32.mrf.mxu0
        %3803 = vdwg.mxu0
        %3804 = vmatprep.subr.bf16.mxu0 %v2733
        %3805 = vmatpush1.bf16.msra.mxu0 %v2732
        %3806 = vmatprep.subr.bf16.mxu0 %v2717
        %3807 = vmatpush1.bf16.msra.mxu0 %v2716
        %3808 = vmatprep.subr.bf16.mxu0 %v2701
        %3809 = vmatpush1.bf16.msra.mxu0 %v2700
        %3810 = vmatprep.subr.bf16.mxu0 %v2685
        %3811 = vmatpush1.bf16.msra.mxu0 %v2684
        %3812 = vmatprep.subr.bf16.mxu0 %v2669
        %3813 = vmatpush1.bf16.msra.mxu0 %v2668
        %3814 = vmatprep.subr.bf16.mxu0 %v2653
        %3815 = vmatpush1.bf16.msra.mxu0 %v2652
        %3816 = vmatprep.subr.bf16.mxu0 %v2637
        %3817 = vmatpush1.bf16.msra.mxu0 %v2636
        %3818 = vmatprep.subr.bf16.mxu0 %v2621
        %3819 = vmatpush1.bf16.msra.mxu0 %v2620
        %3820 = vmatprep.subr.bf16.mxu0 %v2861
        %3821 = vmatpush2.bf16.msra.mxu0 %v2860
        %3822 = vmatprep.subr.bf16.mxu0 %v2845
        %3823 = vmatpush2.bf16.msra.mxu0 %v2844
        %3824 = vmatprep.subr.bf16.mxu0 %v2829
        %3825 = vmatpush2.bf16.msra.mxu0 %v2828
        %3826 = vmatprep.subr.bf16.mxu0 %v2813
        %3827 = vmatpush2.bf16.msra.mxu0 %v2812
        %3828 = vmatprep.subr.bf16.mxu0 %v2797
        %3829 = vmatpush2.bf16.msra.mxu0 %v2796
        %3830 = vmatprep.subr.bf16.mxu0 %v2781
        %3831 = vmatpush2.bf16.msra.mxu0 %v2780
        %3832 = vmatprep.subr.bf16.mxu0 %v2765
        %3833 = vmatpush2.bf16.msra.mxu0 %v2764
        %3834 = vmatprep.subr.bf16.mxu0 %v2749
        %3835 = vmatpush2.bf16.msra.mxu0 %v2748
        %3836 = vmatprep.mubr.bf16.mxu0 %v1073
        %3837 = vmatmul.mubr.bf16.gmra.mxu0 %v1066
        %v3838 = vpop.f32.mrf.mxu0
        %v3839 = vadd.f32 0.0, %v3838
        %v3840 = vpop.f32.mrf.mxu0
        %v3841 = vadd.f32 0.0, %v3840
        %v3842 = vpop.f32.mrf.mxu0
        %v3843 = vpop.f32.mrf.mxu0
        %3844 = vdwg.mxu0
        %3845 = vmatprep.subr.bf16.mxu0 %v2989
        %3846 = vmatpush1.bf16.msra.mxu0 %v2988
        %3847 = vmatprep.subr.bf16.mxu0 %v2973
        %3848 = vmatpush1.bf16.msra.mxu0 %v2972
        %3849 = vmatprep.subr.bf16.mxu0 %v2957
        %3850 = vmatpush1.bf16.msra.mxu0 %v2956
        %3851 = vmatprep.subr.bf16.mxu0 %v2941
        %3852 = vmatpush1.bf16.msra.mxu0 %v2940
        %3853 = vmatprep.subr.bf16.mxu0 %v2925
        %3854 = vmatpush1.bf16.msra.mxu0 %v2924
        %3855 = vmatprep.subr.bf16.mxu0 %v2909
        %3856 = vmatpush1.bf16.msra.mxu0 %v2908
        %3857 = vmatprep.subr.bf16.mxu0 %v2893
        %3858 = vmatpush1.bf16.msra.mxu0 %v2892
        %3859 = vmatprep.subr.bf16.mxu0 %v2877
        %3860 = vmatpush1.bf16.msra.mxu0 %v2876
        %3861 = vmatprep.subr.bf16.mxu0 %v3117
        %3862 = vmatpush2.bf16.msra.mxu0 %v3116
        %3863 = vmatprep.subr.bf16.mxu0 %v3101
        %3864 = vmatpush2.bf16.msra.mxu0 %v3100
        %3865 = vmatprep.subr.bf16.mxu0 %v3085
        %3866 = vmatpush2.bf16.msra.mxu0 %v3084
        %3867 = vmatprep.subr.bf16.mxu0 %v3069
        %3868 = vmatpush2.bf16.msra.mxu0 %v3068
        %3869 = vmatprep.subr.bf16.mxu0 %v3053
        %3870 = vmatpush2.bf16.msra.mxu0 %v3052
        %3871 = vmatprep.subr.bf16.mxu0 %v3037
        %3872 = vmatpush2.bf16.msra.mxu0 %v3036
        %3873 = vmatprep.subr.bf16.mxu0 %v3021
        %3874 = vmatpush2.bf16.msra.mxu0 %v3020
        %3875 = vmatprep.subr.bf16.mxu0 %v3005
        %3876 = vmatpush2.bf16.msra.mxu0 %v3004
        %3877 = vmatprep.mubr.bf16.mxu0 %v1075
        %3878 = vmatmul.mubr.bf16.gmra.mxu0 %v1074
        %v3879 = vpop.f32.mrf.mxu0
        %v3880 = vadd.f32 %v3839, %v3879
        %v3881 = vpop.f32.mrf.mxu0
        %v3882 = vadd.f32 %v3841, %v3881
        %v3883 = vpop.f32.mrf.mxu0
        %v3884 = vpop.f32.mrf.mxu0
        %3885 = vdwg.mxu0
        %3886 = vmatprep.subr.bf16.mxu0 %v2735
        %3887 = vmatpush1.bf16.msra.mxu0 %v2734
        %3888 = vmatprep.subr.bf16.mxu0 %v2719
        %3889 = vmatpush1.bf16.msra.mxu0 %v2718
        %3890 = vmatprep.subr.bf16.mxu0 %v2703
        %3891 = vmatpush1.bf16.msra.mxu0 %v2702
        %3892 = vmatprep.subr.bf16.mxu0 %v2687
        %3893 = vmatpush1.bf16.msra.mxu0 %v2686
        %3894 = vmatprep.subr.bf16.mxu0 %v2671
        %3895 = vmatpush1.bf16.msra.mxu0 %v2670
        %3896 = vmatprep.subr.bf16.mxu0 %v2655
        %3897 = vmatpush1.bf16.msra.mxu0 %v2654
        %3898 = vmatprep.subr.bf16.mxu0 %v2639
        %3899 = vmatpush1.bf16.msra.mxu0 %v2638
        %3900 = vmatprep.subr.bf16.mxu0 %v2623
        %3901 = vmatpush1.bf16.msra.mxu0 %v2622
        %3902 = vmatprep.subr.bf16.mxu0 %v2863
        %3903 = vmatpush2.bf16.msra.mxu0 %v2862
        %3904 = vmatprep.subr.bf16.mxu0 %v2847
        %3905 = vmatpush2.bf16.msra.mxu0 %v2846
        %3906 = vmatprep.subr.bf16.mxu0 %v2831
        %3907 = vmatpush2.bf16.msra.mxu0 %v2830
        %3908 = vmatprep.subr.bf16.mxu0 %v2815
        %3909 = vmatpush2.bf16.msra.mxu0 %v2814
        %3910 = vmatprep.subr.bf16.mxu0 %v2799
        %3911 = vmatpush2.bf16.msra.mxu0 %v2798
        %3912 = vmatprep.subr.bf16.mxu0 %v2783
        %3913 = vmatpush2.bf16.msra.mxu0 %v2782
        %3914 = vmatprep.subr.bf16.mxu0 %v2767
        %3915 = vmatpush2.bf16.msra.mxu0 %v2766
        %3916 = vmatprep.subr.bf16.mxu0 %v2751
        %3917 = vmatpush2.bf16.msra.mxu0 %v2750
        %3918 = vmatprep.mubr.bf16.mxu0 %v1073
        %3919 = vmatmul.mubr.bf16.gmra.mxu0 %v1066
        %v3920 = vpop.f32.mrf.mxu0
        %v3921 = vadd.f32 0.0, %v3920
        %v3922 = vpop.f32.mrf.mxu0
        %v3923 = vadd.f32 0.0, %v3922
        %v3924 = vpop.f32.mrf.mxu0
        %v3925 = vpop.f32.mrf.mxu0
        %3926 = vdwg.mxu0
        %3927 = vmatprep.subr.bf16.mxu0 %v2991
        %3928 = vmatpush1.bf16.msra.mxu0 %v2990
        %3929 = vmatprep.subr.bf16.mxu0 %v2975
        %3930 = vmatpush1.bf16.msra.mxu0 %v2974
        %3931 = vmatprep.subr.bf16.mxu0 %v2959
        %3932 = vmatpush1.bf16.msra.mxu0 %v2958
        %3933 = vmatprep.subr.bf16.mxu0 %v2943
        %3934 = vmatpush1.bf16.msra.mxu0 %v2942
        %3935 = vmatprep.subr.bf16.mxu0 %v2927
        %3936 = vmatpush1.bf16.msra.mxu0 %v2926
        %3937 = vmatprep.subr.bf16.mxu0 %v2911
        %3938 = vmatpush1.bf16.msra.mxu0 %v2910
        %3939 = vmatprep.subr.bf16.mxu0 %v2895
        %3940 = vmatpush1.bf16.msra.mxu0 %v2894
        %3941 = vmatprep.subr.bf16.mxu0 %v2879
        %3942 = vmatpush1.bf16.msra.mxu0 %v2878
        %3943 = vmatprep.subr.bf16.mxu0 %v3119
        %3944 = vmatpush2.bf16.msra.mxu0 %v3118
        %3945 = vmatprep.subr.bf16.mxu0 %v3103
        %3946 = vmatpush2.bf16.msra.mxu0 %v3102
        %3947 = vmatprep.subr.bf16.mxu0 %v3087
        %3948 = vmatpush2.bf16.msra.mxu0 %v3086
        %3949 = vmatprep.subr.bf16.mxu0 %v3071
        %3950 = vmatpush2.bf16.msra.mxu0 %v3070
        %3951 = vmatprep.subr.bf16.mxu0 %v3055
        %3952 = vmatpush2.bf16.msra.mxu0 %v3054
        %3953 = vmatprep.subr.bf16.mxu0 %v3039
        %3954 = vmatpush2.bf16.msra.mxu0 %v3038
        %3955 = vmatprep.subr.bf16.mxu0 %v3023
        %3956 = vmatpush2.bf16.msra.mxu0 %v3022
        %3957 = vmatprep.subr.bf16.mxu0 %v3007
        %3958 = vmatpush2.bf16.msra.mxu0 %v3006
        %3959 = vmatprep.mubr.bf16.mxu0 %v1075
        %3960 = vmatmul.mubr.bf16.gmra.mxu0 %v1074
        %v3961 = vpop.f32.mrf.mxu0
        %v3962 = vadd.f32 %v3921, %v3961
        %v3963 = vpop.f32.mrf.mxu0
        %v3964 = vadd.f32 %v3923, %v3963
        %v3965 = vpop.f32.mrf.mxu0
        %v3966 = vpop.f32.mrf.mxu0
        %3967 = vdwg.mxu0
        %3968 = vmatprep.subr.bf16.mxu0 %v2737
        %3969 = vmatpush1.bf16.msra.mxu0 %v2736
        %3970 = vmatprep.subr.bf16.mxu0 %v2721
        %3971 = vmatpush1.bf16.msra.mxu0 %v2720
        %3972 = vmatprep.subr.bf16.mxu0 %v2705
        %3973 = vmatpush1.bf16.msra.mxu0 %v2704
        %3974 = vmatprep.subr.bf16.mxu0 %v2689
        %3975 = vmatpush1.bf16.msra.mxu0 %v2688
        %3976 = vmatprep.subr.bf16.mxu0 %v2673
        %3977 = vmatpush1.bf16.msra.mxu0 %v2672
        %3978 = vmatprep.subr.bf16.mxu0 %v2657
        %3979 = vmatpush1.bf16.msra.mxu0 %v2656
        %3980 = vmatprep.subr.bf16.mxu0 %v2641
        %3981 = vmatpush1.bf16.msra.mxu0 %v2640
        %3982 = vmatprep.subr.bf16.mxu0 %v2625
        %3983 = vmatpush1.bf16.msra.mxu0 %v2624
        %3984 = vmatprep.subr.bf16.mxu0 %v2865
        %3985 = vmatpush2.bf16.msra.mxu0 %v2864
        %3986 = vmatprep.subr.bf16.mxu0 %v2849
        %3987 = vmatpush2.bf16.msra.mxu0 %v2848
        %3988 = vmatprep.subr.bf16.mxu0 %v2833
        %3989 = vmatpush2.bf16.msra.mxu0 %v2832
        %3990 = vmatprep.subr.bf16.mxu0 %v2817
        %3991 = vmatpush2.bf16.msra.mxu0 %v2816
        %3992 = vmatprep.subr.bf16.mxu0 %v2801
        %3993 = vmatpush2.bf16.msra.mxu0 %v2800
        %3994 = vmatprep.subr.bf16.mxu0 %v2785
        %3995 = vmatpush2.bf16.msra.mxu0 %v2784
        %3996 = vmatprep.subr.bf16.mxu0 %v2769
        %3997 = vmatpush2.bf16.msra.mxu0 %v2768
        %3998 = vmatprep.subr.bf16.mxu0 %v2753
        %3999 = vmatpush2.bf16.msra.mxu0 %v2752
        %4000 = vmatprep.mubr.bf16.mxu0 %v1073
        %4001 = vmatmul.mubr.bf16.gmra.mxu0 %v1066
        %v4002 = vpop.f32.mrf.mxu0
        %v4003 = vadd.f32 0.0, %v4002
        %v4004 = vpop.f32.mrf.mxu0
        %v4005 = vadd.f32 0.0, %v4004
        %v4006 = vpop.f32.mrf.mxu0
        %v4007 = vpop.f32.mrf.mxu0
        %4008 = vdwg.mxu0
        %4009 = vmatprep.subr.bf16.mxu0 %v2993
        %4010 = vmatpush1.bf16.msra.mxu0 %v2992
        %4011 = vmatprep.subr.bf16.mxu0 %v2977
        %4012 = vmatpush1.bf16.msra.mxu0 %v2976
        %4013 = vmatprep.subr.bf16.mxu0 %v2961
        %4014 = vmatpush1.bf16.msra.mxu0 %v2960
        %4015 = vmatprep.subr.bf16.mxu0 %v2945
        %4016 = vmatpush1.bf16.msra.mxu0 %v2944
        %4017 = vmatprep.subr.bf16.mxu0 %v2929
        %4018 = vmatpush1.bf16.msra.mxu0 %v2928
        %4019 = vmatprep.subr.bf16.mxu0 %v2913
        %4020 = vmatpush1.bf16.msra.mxu0 %v2912
        %4021 = vmatprep.subr.bf16.mxu0 %v2897
        %4022 = vmatpush1.bf16.msra.mxu0 %v2896
        %4023 = vmatprep.subr.bf16.mxu0 %v2881
        %4024 = vmatpush1.bf16.msra.mxu0 %v2880
        %4025 = vmatprep.subr.bf16.mxu0 %v3121
        %4026 = vmatpush2.bf16.msra.mxu0 %v3120
        %4027 = vmatprep.subr.bf16.mxu0 %v3105
        %4028 = vmatpush2.bf16.msra.mxu0 %v3104
        %4029 = vmatprep.subr.bf16.mxu0 %v3089
        %4030 = vmatpush2.bf16.msra.mxu0 %v3088
        %4031 = vmatprep.subr.bf16.mxu0 %v3073
        %4032 = vmatpush2.bf16.msra.mxu0 %v3072
        %4033 = vmatprep.subr.bf16.mxu0 %v3057
        %4034 = vmatpush2.bf16.msra.mxu0 %v3056
        %4035 = vmatprep.subr.bf16.mxu0 %v3041
        %4036 = vmatpush2.bf16.msra.mxu0 %v3040
        %4037 = vmatprep.subr.bf16.mxu0 %v3025
        %4038 = vmatpush2.bf16.msra.mxu0 %v3024
        %4039 = vmatprep.subr.bf16.mxu0 %v3009
        %4040 = vmatpush2.bf16.msra.mxu0 %v3008
        %4041 = vmatprep.mubr.bf16.mxu0 %v1075
        %4042 = vmatmul.mubr.bf16.gmra.mxu0 %v1074
        %v4043 = vpop.f32.mrf.mxu0
        %v4044 = vadd.f32 %v4003, %v4043
        %v4045 = vpop.f32.mrf.mxu0
        %v4046 = vadd.f32 %v4005, %v4045
        %v4047 = vpop.f32.mrf.mxu0
        %v4048 = vpop.f32.mrf.mxu0
        %4049 = vdwg.mxu0
        %4050 = vmatprep.subr.bf16.mxu0 %v2739
        %4051 = vmatpush1.bf16.msra.mxu0 %v2738
        %4052 = vmatprep.subr.bf16.mxu0 %v2723
        %4053 = vmatpush1.bf16.msra.mxu0 %v2722
        %4054 = vmatprep.subr.bf16.mxu0 %v2707
        %4055 = vmatpush1.bf16.msra.mxu0 %v2706
        %4056 = vmatprep.subr.bf16.mxu0 %v2691
        %4057 = vmatpush1.bf16.msra.mxu0 %v2690
        %4058 = vmatprep.subr.bf16.mxu0 %v2675
        %4059 = vmatpush1.bf16.msra.mxu0 %v2674
        %4060 = vmatprep.subr.bf16.mxu0 %v2659
        %4061 = vmatpush1.bf16.msra.mxu0 %v2658
        %4062 = vmatprep.subr.bf16.mxu0 %v2643
        %4063 = vmatpush1.bf16.msra.mxu0 %v2642
        %4064 = vmatprep.subr.bf16.mxu0 %v2627
        %4065 = vmatpush1.bf16.msra.mxu0 %v2626
        %4066 = vmatprep.subr.bf16.mxu0 %v2867
        %4067 = vmatpush2.bf16.msra.mxu0 %v2866
        %4068 = vmatprep.subr.bf16.mxu0 %v2851
        %4069 = vmatpush2.bf16.msra.mxu0 %v2850
        %4070 = vmatprep.subr.bf16.mxu0 %v2835
        %4071 = vmatpush2.bf16.msra.mxu0 %v2834
        %4072 = vmatprep.subr.bf16.mxu0 %v2819
        %4073 = vmatpush2.bf16.msra.mxu0 %v2818
        %4074 = vmatprep.subr.bf16.mxu0 %v2803
        %4075 = vmatpush2.bf16.msra.mxu0 %v2802
        %4076 = vmatprep.subr.bf16.mxu0 %v2787
        %4077 = vmatpush2.bf16.msra.mxu0 %v2786
        %4078 = vmatprep.subr.bf16.mxu0 %v2771
        %4079 = vmatpush2.bf16.msra.mxu0 %v2770
        %4080 = vmatprep.subr.bf16.mxu0 %v2755
        %4081 = vmatpush2.bf16.msra.mxu0 %v2754
        %4082 = vmatprep.mubr.bf16.mxu0 %v1073
        %4083 = vmatmul.mubr.bf16.gmra.mxu0 %v1066
        %v4084 = vpop.f32.mrf.mxu0
        %v4085 = vadd.f32 0.0, %v4084
        %v4086 = vpop.f32.mrf.mxu0
        %v4087 = vadd.f32 0.0, %v4086
        %v4088 = vpop.f32.mrf.mxu0
        %v4089 = vpop.f32.mrf.mxu0
        %4090 = vdwg.mxu0
        %4091 = vmatprep.subr.bf16.mxu0 %v2995
        %4092 = vmatpush1.bf16.msra.mxu0 %v2994
        %4093 = vmatprep.subr.bf16.mxu0 %v2979
        %4094 = vmatpush1.bf16.msra.mxu0 %v2978
        %4095 = vmatprep.subr.bf16.mxu0 %v2963
        %4096 = vmatpush1.bf16.msra.mxu0 %v2962
        %4097 = vmatprep.subr.bf16.mxu0 %v2947
        %4098 = vmatpush1.bf16.msra.mxu0 %v2946
        %4099 = vmatprep.subr.bf16.mxu0 %v2931
        %4100 = vmatpush1.bf16.msra.mxu0 %v2930
        %4101 = vmatprep.subr.bf16.mxu0 %v2915
        %4102 = vmatpush1.bf16.msra.mxu0 %v2914
        %4103 = vmatprep.subr.bf16.mxu0 %v2899
        %4104 = vmatpush1.bf16.msra.mxu0 %v2898
        %4105 = vmatprep.subr.bf16.mxu0 %v2883
        %4106 = vmatpush1.bf16.msra.mxu0 %v2882
        %4107 = vmatprep.subr.bf16.mxu0 %v3123
        %4108 = vmatpush2.bf16.msra.mxu0 %v3122
        %4109 = vmatprep.subr.bf16.mxu0 %v3107
        %4110 = vmatpush2.bf16.msra.mxu0 %v3106
        %4111 = vmatprep.subr.bf16.mxu0 %v3091
        %4112 = vmatpush2.bf16.msra.mxu0 %v3090
        %4113 = vmatprep.subr.bf16.mxu0 %v3075
        %4114 = vmatpush2.bf16.msra.mxu0 %v3074
        %4115 = vmatprep.subr.bf16.mxu0 %v3059
        %4116 = vmatpush2.bf16.msra.mxu0 %v3058
        %4117 = vmatprep.subr.bf16.mxu0 %v3043
        %4118 = vmatpush2.bf16.msra.mxu0 %v3042
        %4119 = vmatprep.subr.bf16.mxu0 %v3027
        %4120 = vmatpush2.bf16.msra.mxu0 %v3026
        %4121 = vmatprep.subr.bf16.mxu0 %v3011
        %4122 = vmatpush2.bf16.msra.mxu0 %v3010
        %4123 = vmatprep.mubr.bf16.mxu0 %v1075
        %4124 = vmatmul.mubr.bf16.gmra.mxu0 %v1074
        %v4125 = vpop.f32.mrf.mxu0
        %v4126 = vadd.f32 %v4085, %v4125
        %v4127 = vpop.f32.mrf.mxu0
        %v4128 = vadd.f32 %v4087, %v4127
        %v4129 = vpop.f32.mrf.mxu0
        %v4130 = vpop.f32.mrf.mxu0
        %4131 = vdwg.mxu0
        %4132 = vmatprep.subr.bf16.mxu0 %v2741
        %4133 = vmatpush1.bf16.msra.mxu0 %v2740
        %4134 = vmatprep.subr.bf16.mxu0 %v2725
        %4135 = vmatpush1.bf16.msra.mxu0 %v2724
        %4136 = vmatprep.subr.bf16.mxu0 %v2709
        %4137 = vmatpush1.bf16.msra.mxu0 %v2708
        %4138 = vmatprep.subr.bf16.mxu0 %v2693
        %4139 = vmatpush1.bf16.msra.mxu0 %v2692
        %4140 = vmatprep.subr.bf16.mxu0 %v2677
        %4141 = vmatpush1.bf16.msra.mxu0 %v2676
        %4142 = vmatprep.subr.bf16.mxu0 %v2661
        %4143 = vmatpush1.bf16.msra.mxu0 %v2660
        %4144 = vmatprep.subr.bf16.mxu0 %v2645
        %4145 = vmatpush1.bf16.msra.mxu0 %v2644
        %4146 = vmatprep.subr.bf16.mxu0 %v2629
        %4147 = vmatpush1.bf16.msra.mxu0 %v2628
        %4148 = vmatprep.subr.bf16.mxu0 %v2869
        %4149 = vmatpush2.bf16.msra.mxu0 %v2868
        %4150 = vmatprep.subr.bf16.mxu0 %v2853
        %4151 = vmatpush2.bf16.msra.mxu0 %v2852
        %4152 = vmatprep.subr.bf16.mxu0 %v2837
        %4153 = vmatpush2.bf16.msra.mxu0 %v2836
        %4154 = vmatprep.subr.bf16.mxu0 %v2821
        %4155 = vmatpush2.bf16.msra.mxu0 %v2820
        %4156 = vmatprep.subr.bf16.mxu0 %v2805
        %4157 = vmatpush2.bf16.msra.mxu0 %v2804
        %4158 = vmatprep.subr.bf16.mxu0 %v2789
        %4159 = vmatpush2.bf16.msra.mxu0 %v2788
        %4160 = vmatprep.subr.bf16.mxu0 %v2773
        %4161 = vmatpush2.bf16.msra.mxu0 %v2772
        %4162 = vmatprep.subr.bf16.mxu0 %v2757
        %4163 = vmatpush2.bf16.msra.mxu0 %v2756
        %4164 = vmatprep.mubr.bf16.mxu0 %v1073
        %4165 = vmatmul.mubr.bf16.gmra.mxu0 %v1066
        %v4166 = vpop.f32.mrf.mxu0
        %v4167 = vadd.f32 0.0, %v4166
        %v4168 = vpop.f32.mrf.mxu0
        %v4169 = vadd.f32 0.0, %v4168
        %v4170 = vpop.f32.mrf.mxu0
        %v4171 = vpop.f32.mrf.mxu0
        %4172 = vdwg.mxu0
        %4173 = vmatprep.subr.bf16.mxu0 %v2997
        %4174 = vmatpush1.bf16.msra.mxu0 %v2996
        %4175 = vmatprep.subr.bf16.mxu0 %v2981
        %4176 = vmatpush1.bf16.msra.mxu0 %v2980
        %4177 = vmatprep.subr.bf16.mxu0 %v2965
        %4178 = vmatpush1.bf16.msra.mxu0 %v2964
        %4179 = vmatprep.subr.bf16.mxu0 %v2949
        %4180 = vmatpush1.bf16.msra.mxu0 %v2948
        %4181 = vmatprep.subr.bf16.mxu0 %v2933
        %4182 = vmatpush1.bf16.msra.mxu0 %v2932
        %4183 = vmatprep.subr.bf16.mxu0 %v2917
        %4184 = vmatpush1.bf16.msra.mxu0 %v2916
        %4185 = vmatprep.subr.bf16.mxu0 %v2901
        %4186 = vmatpush1.bf16.msra.mxu0 %v2900
        %4187 = vmatprep.subr.bf16.mxu0 %v2885
        %4188 = vmatpush1.bf16.msra.mxu0 %v2884
        %4189 = vmatprep.subr.bf16.mxu0 %v3125
        %4190 = vmatpush2.bf16.msra.mxu0 %v3124
        %4191 = vmatprep.subr.bf16.mxu0 %v3109
        %4192 = vmatpush2.bf16.msra.mxu0 %v3108
        %4193 = vmatprep.subr.bf16.mxu0 %v3093
        %4194 = vmatpush2.bf16.msra.mxu0 %v3092
        %4195 = vmatprep.subr.bf16.mxu0 %v3077
        %4196 = vmatpush2.bf16.msra.mxu0 %v3076
        %4197 = vmatprep.subr.bf16.mxu0 %v3061
        %4198 = vmatpush2.bf16.msra.mxu0 %v3060
        %4199 = vmatprep.subr.bf16.mxu0 %v3045
        %4200 = vmatpush2.bf16.msra.mxu0 %v3044
        %4201 = vmatprep.subr.bf16.mxu0 %v3029
        %4202 = vmatpush2.bf16.msra.mxu0 %v3028
        %4203 = vmatprep.subr.bf16.mxu0 %v3013
        %4204 = vmatpush2.bf16.msra.mxu0 %v3012
        %4205 = vmatprep.mubr.bf16.mxu0 %v1075
        %4206 = vmatmul.mubr.bf16.gmra.mxu0 %v1074
        %v4207 = vpop.f32.mrf.mxu0
        %v4208 = vadd.f32 %v4167, %v4207
        %v4209 = vpop.f32.mrf.mxu0
        %v4210 = vadd.f32 %v4169, %v4209
        %v4211 = vpop.f32.mrf.mxu0
        %v4212 = vpop.f32.mrf.mxu0
        %4213 = vdwg.mxu0
        %4214 = vmatprep.subr.bf16.mxu0 %v2743
        %4215 = vmatpush1.bf16.msra.mxu0 %v2742
        %4216 = vmatprep.subr.bf16.mxu0 %v2727
        %4217 = vmatpush1.bf16.msra.mxu0 %v2726
        %4218 = vmatprep.subr.bf16.mxu0 %v2711
        %4219 = vmatpush1.bf16.msra.mxu0 %v2710
        %4220 = vmatprep.subr.bf16.mxu0 %v2695
        %4221 = vmatpush1.bf16.msra.mxu0 %v2694
        %4222 = vmatprep.subr.bf16.mxu0 %v2679
        %4223 = vmatpush1.bf16.msra.mxu0 %v2678
        %4224 = vmatprep.subr.bf16.mxu0 %v2663
        %4225 = vmatpush1.bf16.msra.mxu0 %v2662
        %4226 = vmatprep.subr.bf16.mxu0 %v2647
        %4227 = vmatpush1.bf16.msra.mxu0 %v2646
        %4228 = vmatprep.subr.bf16.mxu0 %v2631
        %4229 = vmatpush1.bf16.msra.mxu0 %v2630
        %4230 = vmatprep.subr.bf16.mxu0 %v2871
        %4231 = vmatpush2.bf16.msra.mxu0 %v2870
        %4232 = vmatprep.subr.bf16.mxu0 %v2855
        %4233 = vmatpush2.bf16.msra.mxu0 %v2854
        %4234 = vmatprep.subr.bf16.mxu0 %v2839
        %4235 = vmatpush2.bf16.msra.mxu0 %v2838
        %4236 = vmatprep.subr.bf16.mxu0 %v2823
        %4237 = vmatpush2.bf16.msra.mxu0 %v2822
        %4238 = vmatprep.subr.bf16.mxu0 %v2807
        %4239 = vmatpush2.bf16.msra.mxu0 %v2806
        %4240 = vmatprep.subr.bf16.mxu0 %v2791
        %4241 = vmatpush2.bf16.msra.mxu0 %v2790
        %4242 = vmatprep.subr.bf16.mxu0 %v2775
        %4243 = vmatpush2.bf16.msra.mxu0 %v2774
        %4244 = vmatprep.subr.bf16.mxu0 %v2759
        %4245 = vmatpush2.bf16.msra.mxu0 %v2758
        %4246 = vmatprep.mubr.bf16.mxu0 %v1073
        %4247 = vmatmul.mubr.bf16.gmra.mxu0 %v1066
        %v4248 = vpop.f32.mrf.mxu0
        %v4249 = vadd.f32 0.0, %v4248
        %v4250 = vpop.f32.mrf.mxu0
        %v4251 = vadd.f32 0.0, %v4250
        %v4252 = vpop.f32.mrf.mxu0
        %v4253 = vpop.f32.mrf.mxu0
        %4254 = vdwg.mxu0
        %4255 = vmatprep.subr.bf16.mxu0 %v2999
        %4256 = vmatpush1.bf16.msra.mxu0 %v2998
        %4257 = vmatprep.subr.bf16.mxu0 %v2983
        %4258 = vmatpush1.bf16.msra.mxu0 %v2982
        %4259 = vmatprep.subr.bf16.mxu0 %v2967
        %4260 = vmatpush1.bf16.msra.mxu0 %v2966
        %4261 = vmatprep.subr.bf16.mxu0 %v2951
        %4262 = vmatpush1.bf16.msra.mxu0 %v2950
        %4263 = vmatprep.subr.bf16.mxu0 %v2935
        %4264 = vmatpush1.bf16.msra.mxu0 %v2934
        %4265 = vmatprep.subr.bf16.mxu0 %v2919
        %4266 = vmatpush1.bf16.msra.mxu0 %v2918
        %4267 = vmatprep.subr.bf16.mxu0 %v2903
        %4268 = vmatpush1.bf16.msra.mxu0 %v2902
        %4269 = vmatprep.subr.bf16.mxu0 %v2887
        %4270 = vmatpush1.bf16.msra.mxu0 %v2886
        %4271 = vmatprep.subr.bf16.mxu0 %v3127
        %4272 = vmatpush2.bf16.msra.mxu0 %v3126
        %4273 = vmatprep.subr.bf16.mxu0 %v3111
        %4274 = vmatpush2.bf16.msra.mxu0 %v3110
        %4275 = vmatprep.subr.bf16.mxu0 %v3095
        %4276 = vmatpush2.bf16.msra.mxu0 %v3094
        %4277 = vmatprep.subr.bf16.mxu0 %v3079
        %4278 = vmatpush2.bf16.msra.mxu0 %v3078
        %4279 = vmatprep.subr.bf16.mxu0 %v3063
        %4280 = vmatpush2.bf16.msra.mxu0 %v3062
        %4281 = vmatprep.subr.bf16.mxu0 %v3047
        %4282 = vmatpush2.bf16.msra.mxu0 %v3046
        %4283 = vmatprep.subr.bf16.mxu0 %v3031
        %4284 = vmatpush2.bf16.msra.mxu0 %v3030
        %4285 = vmatprep.subr.bf16.mxu0 %v3015
        %4286 = vmatpush2.bf16.msra.mxu0 %v3014
        %4287 = vmatprep.mubr.bf16.mxu0 %v1075
        %4288 = vmatmul.mubr.bf16.gmra.mxu0 %v1074
        %v4289 = vpop.f32.mrf.mxu0
        %v4290 = vadd.f32 %v4249, %v4289
        %v4291 = vpop.f32.mrf.mxu0
        %v4292 = vadd.f32 %v4251, %v4291
        %v4293 = vpop.f32.mrf.mxu0
        %v4294 = vpop.f32.mrf.mxu0
        %4295 = vdwg.mxu0
        %v4312 = vcombine.low %v3716, %v3718
        %v4313 = vcombine.low %v3798, %v3800
        %v4315 = vunpack.c.l.s4 1983009808
        %v4316 = vunpack.c.0.s8 %v4315
        %v4317 = vlaneseq
        %v4318 = vshrl.u32 %v4317, 7
        %v4319 = vsub.s32 %v4316, %v4318
        %v4320 = vrot.slane %v4312, %v4319
        %v4322 = vunpack.c.l.s4 1983009808
        %v4323 = vunpack.c.0.s8 %v4322
        %v4324 = vlaneseq
        %v4325 = vshrl.u32 %v4324, 7
        %v4326 = vsub.s32 %v4323, %v4325
        %v4327 = vrot.slane %v4313, %v4326
        %v4328 = vcombine.low %v4320, %v4327
        %v4329 = vcombine.low %v3880, %v3882
        %v4330 = vcombine.low %v3962, %v3964
        %v4332 = vunpack.c.l.s4 1983009808
        %v4333 = vunpack.c.0.s8 %v4332
        %v4334 = vlaneseq
        %v4335 = vshrl.u32 %v4334, 7
        %v4336 = vsub.s32 %v4333, %v4335
        %v4337 = vrot.slane %v4329, %v4336
        %v4339 = vunpack.c.l.s4 1983009808
        %v4340 = vunpack.c.0.s8 %v4339
        %v4341 = vlaneseq
        %v4342 = vshrl.u32 %v4341, 7
        %v4343 = vsub.s32 %v4340, %v4342
        %v4344 = vrot.slane %v4330, %v4343
        %v4345 = vcombine.low %v4337, %v4344
        %v4346 = vcombine.low %v4044, %v4046
        %v4347 = vcombine.low %v4126, %v4128
        %v4349 = vunpack.c.l.s4 1983009808
        %v4350 = vunpack.c.0.s8 %v4349
        %v4351 = vlaneseq
        %v4352 = vshrl.u32 %v4351, 7
        %v4353 = vsub.s32 %v4350, %v4352
        %v4354 = vrot.slane %v4346, %v4353
        %v4356 = vunpack.c.l.s4 1983009808
        %v4357 = vunpack.c.0.s8 %v4356
        %v4358 = vlaneseq
        %v4359 = vshrl.u32 %v4358, 7
        %v4360 = vsub.s32 %v4357, %v4359
        %v4361 = vrot.slane %v4347, %v4360
        %v4362 = vcombine.low %v4354, %v4361
        %v4363 = vcombine.low %v4208, %v4210
        %v4364 = vcombine.low %v4290, %v4292
        %v4366 = vunpack.c.l.s4 1983009808
        %v4367 = vunpack.c.0.s8 %v4366
        %v4368 = vlaneseq
        %v4369 = vshrl.u32 %v4368, 7
        %v4370 = vsub.s32 %v4367, %v4369
        %v4371 = vrot.slane %v4363, %v4370
        %v4373 = vunpack.c.l.s4 1983009808
        %v4374 = vunpack.c.0.s8 %v4373
        %v4375 = vlaneseq
        %v4376 = vshrl.u32 %v4375, 7
        %v4377 = vsub.s32 %v4374, %v4376
        %v4378 = vrot.slane %v4364, %v4377
        %v4379 = vcombine.low %v4371, %v4378
        %v4384 = vadd.f32 %v535, %v4328
        %v4385 = vadd.f32 %v536, %v4345
        %v4386 = vadd.f32 %v537, %v4362
        %v4387 = vadd.f32 %v538, %v4379
        %4388 = vst [vmem:[#allocation2] sm:$0xff] %v4384
        %4389 = vst [vmem:[#allocation2 + $0x8] sm:$0xff] %v4385
        %4390 = vst [vmem:[#allocation2 + $0x10] sm:$0xff] %v4386
        %4391 = vst [vmem:[#allocation2 + $0x18] sm:$0xff] %v4387
        %p4392 = scmp.eq.s32.totalorder %s30, 3
        // Predicated region
        $region81: #{simple_cnn_vib_forward.5} parent=55 // pred_check
          %p4393 = pneg %p4392
        $region82: #{simple_cnn_vib_forward.5} parent=55 // pred_check_branch
          %4395 = sbr.rel (%p4393) target = $region84
        $region83: #{simple_cnn_vib_forward.5} parent=55 // pred_region
          %v4396 = vld [vmem:[#allocation2] sm:$0xff]
          %v4397 = vld [vmem:[#allocation2 + $0x8] sm:$0xff]
          %v4398 = vld [vmem:[#allocation2 + $0x10] sm:$0xff]
          %v4399 = vld [vmem:[#allocation2 + $0x18] sm:$0xff]
          %v4400 = vld [vmem:[#allocation6] sm:$0xff]
          %v4401 = vld [vmem:[#allocation6 + $0x8] sm:$0xff]
          %v4404 = vlaneseq
          %v4405 = vshrl.u32 %v4404, 7
          %v4406 = vsub.s32 0, %v4405
          %v4407 = vrot.slane %v4400, %v4406
          %v4408 = vlaneseq
          %v4409 = vshrl.u32 %v4408, 7
          %v4410 = vsub.s32 1, %v4409
          %v4411 = vrot.slane %v4400, %v4410
          %v4412 = vlaneseq
          %v4413 = vshrl.u32 %v4412, 7
          %v4414 = vsub.s32 2, %v4413
          %v4415 = vrot.slane %v4400, %v4414
          %v4416 = vlaneseq
          %v4417 = vshrl.u32 %v4416, 7
          %v4418 = vsub.s32 3, %v4417
          %v4419 = vrot.slane %v4400, %v4418
          %v4420 = vlaneseq
          %v4421 = vshrl.u32 %v4420, 7
          %v4422 = vsub.s32 4, %v4421
          %v4423 = vrot.slane %v4400, %v4422
          %v4424 = vlaneseq
          %v4425 = vshrl.u32 %v4424, 7
          %v4426 = vsub.s32 5, %v4425
          %v4427 = vrot.slane %v4400, %v4426
          %v4428 = vlaneseq
          %v4429 = vshrl.u32 %v4428, 7
          %v4430 = vsub.s32 6, %v4429
          %v4431 = vrot.slane %v4400, %v4430
          %v4432 = vlaneseq
          %v4433 = vshrl.u32 %v4432, 7
          %v4434 = vsub.s32 7, %v4433
          %v4435 = vrot.slane %v4400, %v4434
          %v4436 = vlaneseq
          %v4437 = vshrl.u32 %v4436, 7
          %v4438 = vsub.s32 0, %v4437
          %v4439 = vrot.slane %v4401, %v4438
          %v4440 = vlaneseq
          %v4441 = vshrl.u32 %v4440, 7
          %v4442 = vsub.s32 1, %v4441
          %v4443 = vrot.slane %v4401, %v4442
          %v4444 = vlaneseq
          %v4445 = vshrl.u32 %v4444, 7
          %v4446 = vsub.s32 2, %v4445
          %v4447 = vrot.slane %v4401, %v4446
          %v4448 = vlaneseq
          %v4449 = vshrl.u32 %v4448, 7
          %v4450 = vsub.s32 3, %v4449
          %v4451 = vrot.slane %v4401, %v4450
          %v4452 = vlaneseq
          %v4453 = vshrl.u32 %v4452, 7
          %v4454 = vsub.s32 4, %v4453
          %v4455 = vrot.slane %v4401, %v4454
          %v4456 = vlaneseq
          %v4457 = vshrl.u32 %v4456, 7
          %v4458 = vsub.s32 5, %v4457
          %v4459 = vrot.slane %v4401, %v4458
          %v4460 = vlaneseq
          %v4461 = vshrl.u32 %v4460, 7
          %v4462 = vsub.s32 6, %v4461
          %v4463 = vrot.slane %v4401, %v4462
          %v4464 = vlaneseq
          %v4465 = vshrl.u32 %v4464, 7
          %v4466 = vsub.s32 7, %v4465
          %v4467 = vrot.slane %v4401, %v4466
          %v4468 = vcombine.low %v4407, %v4411
          %v4469 = vcombine.low %v4415, %v4419
          %v4471 = vunpack.c.l.s4 1983009808
          %v4472 = vunpack.c.0.s8 %v4471
          %v4473 = vlaneseq
          %v4474 = vshrl.u32 %v4473, 7
          %v4475 = vsub.s32 %v4472, %v4474
          %v4476 = vrot.slane %v4468, %v4475
          %v4478 = vunpack.c.l.s4 1983009808
          %v4479 = vunpack.c.0.s8 %v4478
          %v4480 = vlaneseq
          %v4481 = vshrl.u32 %v4480, 7
          %v4482 = vsub.s32 %v4479, %v4481
          %v4483 = vrot.slane %v4469, %v4482
          %v4484 = vcombine.low %v4476, %v4483
          %v4485 = vcombine.low %v4423, %v4427
          %v4486 = vcombine.low %v4431, %v4435
          %v4488 = vunpack.c.l.s4 1983009808
          %v4489 = vunpack.c.0.s8 %v4488
          %v4490 = vlaneseq
          %v4491 = vshrl.u32 %v4490, 7
          %v4492 = vsub.s32 %v4489, %v4491
          %v4493 = vrot.slane %v4485, %v4492
          %v4495 = vunpack.c.l.s4 1983009808
          %v4496 = vunpack.c.0.s8 %v4495
          %v4497 = vlaneseq
          %v4498 = vshrl.u32 %v4497, 7
          %v4499 = vsub.s32 %v4496, %v4498
          %v4500 = vrot.slane %v4486, %v4499
          %v4501 = vcombine.low %v4493, %v4500
          %v4502 = vcombine.low %v4439, %v4443
          %v4503 = vcombine.low %v4447, %v4451
          %v4505 = vunpack.c.l.s4 1983009808
          %v4506 = vunpack.c.0.s8 %v4505
          %v4507 = vlaneseq
          %v4508 = vshrl.u32 %v4507, 7
          %v4509 = vsub.s32 %v4506, %v4508
          %v4510 = vrot.slane %v4502, %v4509
          %v4512 = vunpack.c.l.s4 1983009808
          %v4513 = vunpack.c.0.s8 %v4512
          %v4514 = vlaneseq
          %v4515 = vshrl.u32 %v4514, 7
          %v4516 = vsub.s32 %v4513, %v4515
          %v4517 = vrot.slane %v4503, %v4516
          %v4518 = vcombine.low %v4510, %v4517
          %v4519 = vcombine.low %v4455, %v4459
          %v4520 = vcombine.low %v4463, %v4467
          %v4522 = vunpack.c.l.s4 1983009808
          %v4523 = vunpack.c.0.s8 %v4522
          %v4524 = vlaneseq
          %v4525 = vshrl.u32 %v4524, 7
          %v4526 = vsub.s32 %v4523, %v4525
          %v4527 = vrot.slane %v4519, %v4526
          %v4529 = vunpack.c.l.s4 1983009808
          %v4530 = vunpack.c.0.s8 %v4529
          %v4531 = vlaneseq
          %v4532 = vshrl.u32 %v4531, 7
          %v4533 = vsub.s32 %v4530, %v4532
          %v4534 = vrot.slane %v4520, %v4533
          %v4535 = vcombine.low %v4527, %v4534
          %v4540 = vadd.f32 %v4396, %v4484
          %v4541 = vadd.f32 %v4397, %v4501
          %v4542 = vadd.f32 %v4398, %v4518
          %v4543 = vadd.f32 %v4399, %v4535
          %v4544 = vsub.f32 %v4542, 5.0
          %v4545 = vsub.f32 %v4543, 5.0
          %v4546 = vmax.f32 %v4544, 0.0
          %v4547 = vmax.f32 %v4545, 0.0
          %v4548 = vand.u32 2147483647, %v4544
          %v4549 = vand.u32 2147483647, %v4545
          %v4550 = vsub.f32 0.0, %v4548
          %v4551 = vsub.f32 0.0, %v4549
          %v4552 = vmul.f32 %v4550, 1.442695
          %v4553 = vpow.pop %v4552
          %v4554 = vmul.f32 %v4551, 1.442695
          %v4555 = vpow.pop %v4554
          %v4556 = vadd.f32 %v4553, 1.0
          %v4557 = vadd.f32 %v4555, 1.0
          %v4558 = vlog2.pop %v4556
          %v4559 = vmul.f32 %v4558, 0.6931472
          %v4560 = vlog2.pop %v4557
          %v4561 = vmul.f32 %v4560, 0.6931472
          %v4562 = vadd.f32 %v4546, %v4559
          %v4563 = vadd.f32 %v4547, %v4561
          %v4564 = vld [vmem:[#allocation8] sm:$0xff]
          %v4565 = vld [vmem:[#allocation8 + $0x8] sm:$0xff]
          %v4566 = vmul.f32 %v4562, %v4564
          %v4567 = vmul.f32 %v4563, %v4565
          %v4568 = vadd.f32 %v4540, %v4566
          %v4569 = vadd.f32 %v4541, %v4567
          %v4572 = vcombine.high %v4568, %v4568
          %v4574 = vunpack.c.l.s4 1983009808
          %v4575 = vunpack.c.0.s8 %v4574
          %v4576 = vlaneseq
          %v4577 = vshrl.u32 %v4576, 7
          %v4578 = vsub.s32 %v4575, %v4577
          %v4579 = vrot.slane %v4568, %v4578
          %v4581 = vunpack.c.l.s4 1983009808
          %v4582 = vunpack.c.0.s8 %v4581
          %v4583 = vlaneseq
          %v4584 = vshrl.u32 %v4583, 7
          %v4585 = vsub.s32 %v4582, %v4584
          %v4586 = vrot.slane %v4572, %v4585
          %v4587 = vcombine.high %v4579, %v4579
          %v4588 = vcombine.high %v4586, %v4586
          %v4589 = vcombine.high %v4569, %v4569
          %v4591 = vunpack.c.l.s4 1983009808
          %v4592 = vunpack.c.0.s8 %v4591
          %v4593 = vlaneseq
          %v4594 = vshrl.u32 %v4593, 7
          %v4595 = vsub.s32 %v4592, %v4594
          %v4596 = vrot.slane %v4569, %v4595
          %v4598 = vunpack.c.l.s4 1983009808
          %v4599 = vunpack.c.0.s8 %v4598
          %v4600 = vlaneseq
          %v4601 = vshrl.u32 %v4600, 7
          %v4602 = vsub.s32 %v4599, %v4601
          %v4603 = vrot.slane %v4589, %v4602
          %v4604 = vcombine.high %v4596, %v4596
          %v4605 = vcombine.high %v4603, %v4603
          %v4614 = vpack.c.bf16 %v4579, %v4579
          %v4615 = vpack.c.bf16 %v4587, %v4587
          %v4616 = vpack.c.bf16 %v4586, %v4586
          %v4617 = vpack.c.bf16 %v4588, %v4588
          %v4618 = vpack.c.bf16 %v4596, %v4596
          %v4619 = vpack.c.bf16 %v4604, %v4604
          %v4620 = vpack.c.bf16 %v4603, %v4603
          %v4621 = vpack.c.bf16 %v4605, %v4605
          %v4622 = vld [vmem:[#allocation9] sm:$0xf]
          %v4623 = vld [vmem:[#allocation9 + $0x4] sm:$0xf]
          %v4624 = vld [vmem:[#allocation9 + $0x8] sm:$0xf]
          %v4625 = vld [vmem:[#allocation9 + $0xc] sm:$0xf]
          %v4626 = vld [vmem:[#allocation9 + $0x10] sm:$0xf]
          %v4627 = vld [vmem:[#allocation9 + $0x14] sm:$0xf]
          %v4628 = vld [vmem:[#allocation9 + $0x18] sm:$0xf]
          %v4629 = vld [vmem:[#allocation9 + $0x1c] sm:$0xf]
          %v4630 = vld [vmem:[#allocation9 + $0x20] sm:$0xf]
          %v4631 = vld [vmem:[#allocation9 + $0x24] sm:$0xf]
          %v4632 = vld [vmem:[#allocation9 + $0x28] sm:$0xf]
          %v4633 = vld [vmem:[#allocation9 + $0x2c] sm:$0xf]
          %v4634 = vld [vmem:[#allocation9 + $0x30] sm:$0xf]
          %v4635 = vld [vmem:[#allocation9 + $0x34] sm:$0xf]
          %v4636 = vld [vmem:[#allocation9 + $0x38] sm:$0xf]
          %v4637 = vld [vmem:[#allocation9 + $0x3c] sm:$0xf]
          %v4638 = vld [vmem:[#allocation9 + $0x40] sm:$0xf]
          %v4639 = vld [vmem:[#allocation9 + $0x44] sm:$0xf]
          %v4640 = vld [vmem:[#allocation9 + $0x48] sm:$0xf]
          %v4641 = vld [vmem:[#allocation9 + $0x4c] sm:$0xf]
          %v4642 = vld [vmem:[#allocation9 + $0x50] sm:$0xf]
          %v4643 = vld [vmem:[#allocation9 + $0x54] sm:$0xf]
          %v4644 = vld [vmem:[#allocation9 + $0x58] sm:$0xf]
          %v4645 = vld [vmem:[#allocation9 + $0x5c] sm:$0xf]
          %v4646 = vld [vmem:[#allocation9 + $0x60] sm:$0xf]
          %v4647 = vld [vmem:[#allocation9 + $0x64] sm:$0xf]
          %v4648 = vld [vmem:[#allocation9 + $0x68] sm:$0xf]
          %v4649 = vld [vmem:[#allocation9 + $0x6c] sm:$0xf]
          %v4650 = vld [vmem:[#allocation9 + $0x70] sm:$0xf]
          %v4651 = vld [vmem:[#allocation9 + $0x74] sm:$0xf]
          %v4652 = vld [vmem:[#allocation9 + $0x78] sm:$0xf]
          %v4653 = vld [vmem:[#allocation9 + $0x7c] sm:$0xf]
          %v4654 = vld [vmem:[#allocation9 + $0x80] sm:$0xf]
          %v4655 = vld [vmem:[#allocation9 + $0x84] sm:$0xf]
          %v4656 = vld [vmem:[#allocation9 + $0x88] sm:$0xf]
          %v4657 = vld [vmem:[#allocation9 + $0x8c] sm:$0xf]
          %v4658 = vld [vmem:[#allocation9 + $0x90] sm:$0xf]
          %v4659 = vld [vmem:[#allocation9 + $0x94] sm:$0xf]
          %v4660 = vld [vmem:[#allocation9 + $0x98] sm:$0xf]
          %v4661 = vld [vmem:[#allocation9 + $0x9c] sm:$0xf]
          %v4662 = vld [vmem:[#allocation9 + $0xa0] sm:$0xf]
          %v4663 = vld [vmem:[#allocation9 + $0xa4] sm:$0xf]
          %v4664 = vld [vmem:[#allocation9 + $0xa8] sm:$0xf]
          %v4665 = vld [vmem:[#allocation9 + $0xac] sm:$0xf]
          %v4666 = vld [vmem:[#allocation9 + $0xb0] sm:$0xf]
          %v4667 = vld [vmem:[#allocation9 + $0xb4] sm:$0xf]
          %v4668 = vld [vmem:[#allocation9 + $0xb8] sm:$0xf]
          %v4669 = vld [vmem:[#allocation9 + $0xbc] sm:$0xf]
          %v4670 = vld [vmem:[#allocation9 + $0xc0] sm:$0xf]
          %v4671 = vld [vmem:[#allocation9 + $0xc4] sm:$0xf]
          %v4672 = vld [vmem:[#allocation9 + $0xc8] sm:$0xf]
          %v4673 = vld [vmem:[#allocation9 + $0xcc] sm:$0xf]
          %v4674 = vld [vmem:[#allocation9 + $0xd0] sm:$0xf]
          %v4675 = vld [vmem:[#allocation9 + $0xd4] sm:$0xf]
          %v4676 = vld [vmem:[#allocation9 + $0xd8] sm:$0xf]
          %v4677 = vld [vmem:[#allocation9 + $0xdc] sm:$0xf]
          %v4678 = vld [vmem:[#allocation9 + $0xe0] sm:$0xf]
          %v4679 = vld [vmem:[#allocation9 + $0xe4] sm:$0xf]
          %v4680 = vld [vmem:[#allocation9 + $0xe8] sm:$0xf]
          %v4681 = vld [vmem:[#allocation9 + $0xec] sm:$0xf]
          %v4682 = vld [vmem:[#allocation9 + $0xf0] sm:$0xf]
          %v4683 = vld [vmem:[#allocation9 + $0xf4] sm:$0xf]
          %v4684 = vld [vmem:[#allocation9 + $0xf8] sm:$0xf]
          %v4685 = vld [vmem:[#allocation9 + $0xfc] sm:$0xf]
          %v4686 = vld [vmem:[#allocation9 + $0x100] sm:$0xf]
          %v4687 = vld [vmem:[#allocation9 + $0x104] sm:$0xf]
          %v4688 = vld [vmem:[#allocation9 + $0x108] sm:$0xf]
          %v4689 = vld [vmem:[#allocation9 + $0x10c] sm:$0xf]
          %v4690 = vld [vmem:[#allocation9 + $0x110] sm:$0xf]
          %v4691 = vld [vmem:[#allocation9 + $0x114] sm:$0xf]
          %v4692 = vld [vmem:[#allocation9 + $0x118] sm:$0xf]
          %v4693 = vld [vmem:[#allocation9 + $0x11c] sm:$0xf]
          %v4694 = vld [vmem:[#allocation9 + $0x120] sm:$0xf]
          %v4695 = vld [vmem:[#allocation9 + $0x124] sm:$0xf]
          %v4696 = vld [vmem:[#allocation9 + $0x128] sm:$0xf]
          %v4697 = vld [vmem:[#allocation9 + $0x12c] sm:$0xf]
          %v4698 = vld [vmem:[#allocation9 + $0x130] sm:$0xf]
          %v4699 = vld [vmem:[#allocation9 + $0x134] sm:$0xf]
          %v4700 = vld [vmem:[#allocation9 + $0x138] sm:$0xf]
          %v4701 = vld [vmem:[#allocation9 + $0x13c] sm:$0xf]
          %v4702 = vld [vmem:[#allocation9 + $0x140] sm:$0xf]
          %v4703 = vld [vmem:[#allocation9 + $0x144] sm:$0xf]
          %v4704 = vld [vmem:[#allocation9 + $0x148] sm:$0xf]
          %v4705 = vld [vmem:[#allocation9 + $0x14c] sm:$0xf]
          %v4706 = vld [vmem:[#allocation9 + $0x150] sm:$0xf]
          %v4707 = vld [vmem:[#allocation9 + $0x154] sm:$0xf]
          %v4708 = vld [vmem:[#allocation9 + $0x158] sm:$0xf]
          %v4709 = vld [vmem:[#allocation9 + $0x15c] sm:$0xf]
          %v4710 = vld [vmem:[#allocation9 + $0x160] sm:$0xf]
          %v4711 = vld [vmem:[#allocation9 + $0x164] sm:$0xf]
          %v4712 = vld [vmem:[#allocation9 + $0x168] sm:$0xf]
          %v4713 = vld [vmem:[#allocation9 + $0x16c] sm:$0xf]
          %v4714 = vld [vmem:[#allocation9 + $0x170] sm:$0xf]
          %v4715 = vld [vmem:[#allocation9 + $0x174] sm:$0xf]
          %v4716 = vld [vmem:[#allocation9 + $0x178] sm:$0xf]
          %v4717 = vld [vmem:[#allocation9 + $0x17c] sm:$0xf]
          %v4718 = vld [vmem:[#allocation9 + $0x180] sm:$0xf]
          %v4719 = vld [vmem:[#allocation9 + $0x184] sm:$0xf]
          %v4720 = vld [vmem:[#allocation9 + $0x188] sm:$0xf]
          %v4721 = vld [vmem:[#allocation9 + $0x18c] sm:$0xf]
          %v4722 = vld [vmem:[#allocation9 + $0x190] sm:$0xf]
          %v4723 = vld [vmem:[#allocation9 + $0x194] sm:$0xf]
          %v4724 = vld [vmem:[#allocation9 + $0x198] sm:$0xf]
          %v4725 = vld [vmem:[#allocation9 + $0x19c] sm:$0xf]
          %v4726 = vld [vmem:[#allocation9 + $0x1a0] sm:$0xf]
          %v4727 = vld [vmem:[#allocation9 + $0x1a4] sm:$0xf]
          %v4728 = vld [vmem:[#allocation9 + $0x1a8] sm:$0xf]
          %v4729 = vld [vmem:[#allocation9 + $0x1ac] sm:$0xf]
          %v4730 = vld [vmem:[#allocation9 + $0x1b0] sm:$0xf]
          %v4731 = vld [vmem:[#allocation9 + $0x1b4] sm:$0xf]
          %v4732 = vld [vmem:[#allocation9 + $0x1b8] sm:$0xf]
          %v4733 = vld [vmem:[#allocation9 + $0x1bc] sm:$0xf]
          %v4734 = vld [vmem:[#allocation9 + $0x1c0] sm:$0xf]
          %v4735 = vld [vmem:[#allocation9 + $0x1c4] sm:$0xf]
          %v4736 = vld [vmem:[#allocation9 + $0x1c8] sm:$0xf]
          %v4737 = vld [vmem:[#allocation9 + $0x1cc] sm:$0xf]
          %v4738 = vld [vmem:[#allocation9 + $0x1d0] sm:$0xf]
          %v4739 = vld [vmem:[#allocation9 + $0x1d4] sm:$0xf]
          %v4740 = vld [vmem:[#allocation9 + $0x1d8] sm:$0xf]
          %v4741 = vld [vmem:[#allocation9 + $0x1dc] sm:$0xf]
          %v4742 = vld [vmem:[#allocation9 + $0x1e0] sm:$0xf]
          %v4743 = vld [vmem:[#allocation9 + $0x1e4] sm:$0xf]
          %v4744 = vld [vmem:[#allocation9 + $0x1e8] sm:$0xf]
          %v4745 = vld [vmem:[#allocation9 + $0x1ec] sm:$0xf]
          %v4746 = vld [vmem:[#allocation9 + $0x1f0] sm:$0xf]
          %v4747 = vld [vmem:[#allocation9 + $0x1f4] sm:$0xf]
          %v4748 = vld [vmem:[#allocation9 + $0x1f8] sm:$0xf]
          %v4749 = vld [vmem:[#allocation9 + $0x1fc] sm:$0xf]
          %v4750 = vld [vmem:[#allocation11] sm:$0x1]
          %v4752 = vlaneseq
          %v4753 = vshrl.u32 %v4752, 7
          %v4754 = vsub.s32 0, %v4753
          %v4755 = vrot.slane %v4750, %v4754
          %v4885 = vunpack.c.l.b16 %v4622
          %v4886 = vunpack.c.l.b16 %v4623
          %v4887 = vunpack.c.l.b16 %v4624
          %v4888 = vunpack.c.l.b16 %v4625
          %v4889 = vunpack.c.l.b16 %v4626
          %v4890 = vunpack.c.l.b16 %v4627
          %v4891 = vunpack.c.l.b16 %v4628
          %v4892 = vunpack.c.l.b16 %v4629
          %v4893 = vunpack.c.l.b16 %v4630
          %v4894 = vunpack.c.l.b16 %v4631
          %v4895 = vunpack.c.l.b16 %v4632
          %v4896 = vunpack.c.l.b16 %v4633
          %v4897 = vunpack.c.l.b16 %v4634
          %v4898 = vunpack.c.l.b16 %v4635
          %v4899 = vunpack.c.l.b16 %v4636
          %v4900 = vunpack.c.l.b16 %v4637
          %v4901 = vunpack.c.l.b16 %v4638
          %v4902 = vunpack.c.l.b16 %v4639
          %v4903 = vunpack.c.l.b16 %v4640
          %v4904 = vunpack.c.l.b16 %v4641
          %v4905 = vunpack.c.l.b16 %v4642
          %v4906 = vunpack.c.l.b16 %v4643
          %v4907 = vunpack.c.l.b16 %v4644
          %v4908 = vunpack.c.l.b16 %v4645
          %v4909 = vunpack.c.l.b16 %v4646
          %v4910 = vunpack.c.l.b16 %v4647
          %v4911 = vunpack.c.l.b16 %v4648
          %v4912 = vunpack.c.l.b16 %v4649
          %v4913 = vunpack.c.l.b16 %v4650
          %v4914 = vunpack.c.l.b16 %v4651
          %v4915 = vunpack.c.l.b16 %v4652
          %v4916 = vunpack.c.l.b16 %v4653
          %v4917 = vunpack.c.l.b16 %v4654
          %v4918 = vunpack.c.l.b16 %v4655
          %v4919 = vunpack.c.l.b16 %v4656
          %v4920 = vunpack.c.l.b16 %v4657
          %v4921 = vunpack.c.l.b16 %v4658
          %v4922 = vunpack.c.l.b16 %v4659
          %v4923 = vunpack.c.l.b16 %v4660
          %v4924 = vunpack.c.l.b16 %v4661
          %v4925 = vunpack.c.l.b16 %v4662
          %v4926 = vunpack.c.l.b16 %v4663
          %v4927 = vunpack.c.l.b16 %v4664
          %v4928 = vunpack.c.l.b16 %v4665
          %v4929 = vunpack.c.l.b16 %v4666
          %v4930 = vunpack.c.l.b16 %v4667
          %v4931 = vunpack.c.l.b16 %v4668
          %v4932 = vunpack.c.l.b16 %v4669
          %v4933 = vunpack.c.l.b16 %v4670
          %v4934 = vunpack.c.l.b16 %v4671
          %v4935 = vunpack.c.l.b16 %v4672
          %v4936 = vunpack.c.l.b16 %v4673
          %v4937 = vunpack.c.l.b16 %v4674
          %v4938 = vunpack.c.l.b16 %v4675
          %v4939 = vunpack.c.l.b16 %v4676
          %v4940 = vunpack.c.l.b16 %v4677
          %v4941 = vunpack.c.l.b16 %v4678
          %v4942 = vunpack.c.l.b16 %v4679
          %v4943 = vunpack.c.l.b16 %v4680
          %v4944 = vunpack.c.l.b16 %v4681
          %v4945 = vunpack.c.l.b16 %v4682
          %v4946 = vunpack.c.l.b16 %v4683
          %v4947 = vunpack.c.l.b16 %v4684
          %v4948 = vunpack.c.l.b16 %v4685
          %v4949 = vunpack.c.l.b16 %v4686
          %v4950 = vunpack.c.l.b16 %v4687
          %v4951 = vunpack.c.l.b16 %v4688
          %v4952 = vunpack.c.l.b16 %v4689
          %v4953 = vunpack.c.l.b16 %v4690
          %v4954 = vunpack.c.l.b16 %v4691
          %v4955 = vunpack.c.l.b16 %v4692
          %v4956 = vunpack.c.l.b16 %v4693
          %v4957 = vunpack.c.l.b16 %v4694
          %v4958 = vunpack.c.l.b16 %v4695
          %v4959 = vunpack.c.l.b16 %v4696
          %v4960 = vunpack.c.l.b16 %v4697
          %v4961 = vunpack.c.l.b16 %v4698
          %v4962 = vunpack.c.l.b16 %v4699
          %v4963 = vunpack.c.l.b16 %v4700
          %v4964 = vunpack.c.l.b16 %v4701
          %v4965 = vunpack.c.l.b16 %v4702
          %v4966 = vunpack.c.l.b16 %v4703
          %v4967 = vunpack.c.l.b16 %v4704
          %v4968 = vunpack.c.l.b16 %v4705
          %v4969 = vunpack.c.l.b16 %v4706
          %v4970 = vunpack.c.l.b16 %v4707
          %v4971 = vunpack.c.l.b16 %v4708
          %v4972 = vunpack.c.l.b16 %v4709
          %v4973 = vunpack.c.l.b16 %v4710
          %v4974 = vunpack.c.l.b16 %v4711
          %v4975 = vunpack.c.l.b16 %v4712
          %v4976 = vunpack.c.l.b16 %v4713
          %v4977 = vunpack.c.l.b16 %v4714
          %v4978 = vunpack.c.l.b16 %v4715
          %v4979 = vunpack.c.l.b16 %v4716
          %v4980 = vunpack.c.l.b16 %v4717
          %v4981 = vunpack.c.l.b16 %v4718
          %v4982 = vunpack.c.l.b16 %v4719
          %v4983 = vunpack.c.l.b16 %v4720
          %v4984 = vunpack.c.l.b16 %v4721
          %v4985 = vunpack.c.l.b16 %v4722
          %v4986 = vunpack.c.l.b16 %v4723
          %v4987 = vunpack.c.l.b16 %v4724
          %v4988 = vunpack.c.l.b16 %v4725
          %v4989 = vunpack.c.l.b16 %v4726
          %v4990 = vunpack.c.l.b16 %v4727
          %v4991 = vunpack.c.l.b16 %v4728
          %v4992 = vunpack.c.l.b16 %v4729
          %v4993 = vunpack.c.l.b16 %v4730
          %v4994 = vunpack.c.l.b16 %v4731
          %v4995 = vunpack.c.l.b16 %v4732
          %v4996 = vunpack.c.l.b16 %v4733
          %v4997 = vunpack.c.l.b16 %v4734
          %v4998 = vunpack.c.l.b16 %v4735
          %v4999 = vunpack.c.l.b16 %v4736
          %v5000 = vunpack.c.l.b16 %v4737
          %v5001 = vunpack.c.l.b16 %v4738
          %v5002 = vunpack.c.l.b16 %v4739
          %v5003 = vunpack.c.l.b16 %v4740
          %v5004 = vunpack.c.l.b16 %v4741
          %v5005 = vunpack.c.l.b16 %v4742
          %v5006 = vunpack.c.l.b16 %v4743
          %v5007 = vunpack.c.l.b16 %v4744
          %v5008 = vunpack.c.l.b16 %v4745
          %v5009 = vunpack.c.l.b16 %v4746
          %v5010 = vunpack.c.l.b16 %v4747
          %v5011 = vunpack.c.l.b16 %v4748
          %v5012 = vunpack.c.l.b16 %v4749
          %v5013 = vpack.c.b16 %v4886, %v4885
          %v5014 = vpack.c.b16 %v4888, %v4887
          %v5015 = vpack.c.b16 %v4890, %v4889
          %v5016 = vpack.c.b16 %v4892, %v4891
          %v5017 = vpack.c.b16 %v4894, %v4893
          %v5018 = vpack.c.b16 %v4896, %v4895
          %v5019 = vpack.c.b16 %v4898, %v4897
          %v5020 = vpack.c.b16 %v4900, %v4899
          %v5021 = vpack.c.b16 %v4902, %v4901
          %v5022 = vpack.c.b16 %v4904, %v4903
          %v5023 = vpack.c.b16 %v4906, %v4905
          %v5024 = vpack.c.b16 %v4908, %v4907
          %v5025 = vpack.c.b16 %v4910, %v4909
          %v5026 = vpack.c.b16 %v4912, %v4911
          %v5027 = vpack.c.b16 %v4914, %v4913
          %v5028 = vpack.c.b16 %v4916, %v4915
          %v5029 = vpack.c.b16 %v4918, %v4917
          %v5030 = vpack.c.b16 %v4920, %v4919
          %v5031 = vpack.c.b16 %v4922, %v4921
          %v5032 = vpack.c.b16 %v4924, %v4923
          %v5033 = vpack.c.b16 %v4926, %v4925
          %v5034 = vpack.c.b16 %v4928, %v4927
          %v5035 = vpack.c.b16 %v4930, %v4929
          %v5036 = vpack.c.b16 %v4932, %v4931
          %v5037 = vpack.c.b16 %v4934, %v4933
          %v5038 = vpack.c.b16 %v4936, %v4935
          %v5039 = vpack.c.b16 %v4938, %v4937
          %v5040 = vpack.c.b16 %v4940, %v4939
          %v5041 = vpack.c.b16 %v4942, %v4941
          %v5042 = vpack.c.b16 %v4944, %v4943
          %v5043 = vpack.c.b16 %v4946, %v4945
          %v5044 = vpack.c.b16 %v4948, %v4947
          %v5045 = vpack.c.b16 %v4950, %v4949
          %v5046 = vpack.c.b16 %v4952, %v4951
          %v5047 = vpack.c.b16 %v4954, %v4953
          %v5048 = vpack.c.b16 %v4956, %v4955
          %v5049 = vpack.c.b16 %v4958, %v4957
          %v5050 = vpack.c.b16 %v4960, %v4959
          %v5051 = vpack.c.b16 %v4962, %v4961
          %v5052 = vpack.c.b16 %v4964, %v4963
          %v5053 = vpack.c.b16 %v4966, %v4965
          %v5054 = vpack.c.b16 %v4968, %v4967
          %v5055 = vpack.c.b16 %v4970, %v4969
          %v5056 = vpack.c.b16 %v4972, %v4971
          %v5057 = vpack.c.b16 %v4974, %v4973
          %v5058 = vpack.c.b16 %v4976, %v4975
          %v5059 = vpack.c.b16 %v4978, %v4977
          %v5060 = vpack.c.b16 %v4980, %v4979
          %v5061 = vpack.c.b16 %v4982, %v4981
          %v5062 = vpack.c.b16 %v4984, %v4983
          %v5063 = vpack.c.b16 %v4986, %v4985
          %v5064 = vpack.c.b16 %v4988, %v4987
          %v5065 = vpack.c.b16 %v4990, %v4989
          %v5066 = vpack.c.b16 %v4992, %v4991
          %v5067 = vpack.c.b16 %v4994, %v4993
          %v5068 = vpack.c.b16 %v4996, %v4995
          %v5069 = vpack.c.b16 %v4998, %v4997
          %v5070 = vpack.c.b16 %v5000, %v4999
          %v5071 = vpack.c.b16 %v5002, %v5001
          %v5072 = vpack.c.b16 %v5004, %v5003
          %v5073 = vpack.c.b16 %v5006, %v5005
          %v5074 = vpack.c.b16 %v5008, %v5007
          %v5075 = vpack.c.b16 %v5010, %v5009
          %v5076 = vpack.c.b16 %v5012, %v5011
          %5141 = vmatprep.subr.bf16.mxu0 0
          %5142 = vmatpush1.bf16.msra.mxu0 %v5020
          %5143 = vmatprep.subr.bf16.mxu0 0
          %5144 = vmatpush1.bf16.msra.mxu0 %v5019
          %5145 = vmatprep.subr.bf16.mxu0 0
          %5146 = vmatpush1.bf16.msra.mxu0 %v5018
          %5147 = vmatprep.subr.bf16.mxu0 0
          %5148 = vmatpush1.bf16.msra.mxu0 %v5017
          %5149 = vmatprep.subr.bf16.mxu0 0
          %5150 = vmatpush1.bf16.msra.mxu0 %v5016
          %5151 = vmatprep.subr.bf16.mxu0 0
          %5152 = vmatpush1.bf16.msra.mxu0 %v5015
          %5153 = vmatprep.subr.bf16.mxu0 0
          %5154 = vmatpush1.bf16.msra.mxu0 %v5014
          %5155 = vmatprep.subr.bf16.mxu0 0
          %5156 = vmatpush1.bf16.msra.mxu0 %v5013
          %5157 = vmatprep.subr.bf16.mxu0 0
          %5158 = vmatpush2.bf16.msra.mxu0 %v5028
          %5159 = vmatprep.subr.bf16.mxu0 0
          %5160 = vmatpush2.bf16.msra.mxu0 %v5027
          %5161 = vmatprep.subr.bf16.mxu0 0
          %5162 = vmatpush2.bf16.msra.mxu0 %v5026
          %5163 = vmatprep.subr.bf16.mxu0 0
          %5164 = vmatpush2.bf16.msra.mxu0 %v5025
          %5165 = vmatprep.subr.bf16.mxu0 0
          %5166 = vmatpush2.bf16.msra.mxu0 %v5024
          %5167 = vmatprep.subr.bf16.mxu0 0
          %5168 = vmatpush2.bf16.msra.mxu0 %v5023
          %5169 = vmatprep.subr.bf16.mxu0 0
          %5170 = vmatpush2.bf16.msra.mxu0 %v5022
          %5171 = vmatprep.subr.bf16.mxu0 0
          %5172 = vmatpush2.bf16.msra.mxu0 %v5021
          %5173 = vmatprep.mubr.bf16.mxu0 %v4615
          %5174 = vmatmul.mubr.bf16.gmra.mxu0 %v4614
          %v5175 = vpop.f32.mrf.mxu0
          %v5176 = vadd.f32 %v4755, %v5175
          %v5177 = vpop.f32.mrf.mxu0
          %v5178 = vpop.f32.mrf.mxu0
          %v5179 = vpop.f32.mrf.mxu0
          %5180 = vdwg.mxu0
          %5181 = vmatprep.subr.bf16.mxu0 0
          %5182 = vmatpush1.bf16.msra.mxu0 %v5036
          %5183 = vmatprep.subr.bf16.mxu0 0
          %5184 = vmatpush1.bf16.msra.mxu0 %v5035
          %5185 = vmatprep.subr.bf16.mxu0 0
          %5186 = vmatpush1.bf16.msra.mxu0 %v5034
          %5187 = vmatprep.subr.bf16.mxu0 0
          %5188 = vmatpush1.bf16.msra.mxu0 %v5033
          %5189 = vmatprep.subr.bf16.mxu0 0
          %5190 = vmatpush1.bf16.msra.mxu0 %v5032
          %5191 = vmatprep.subr.bf16.mxu0 0
          %5192 = vmatpush1.bf16.msra.mxu0 %v5031
          %5193 = vmatprep.subr.bf16.mxu0 0
          %5194 = vmatpush1.bf16.msra.mxu0 %v5030
          %5195 = vmatprep.subr.bf16.mxu0 0
          %5196 = vmatpush1.bf16.msra.mxu0 %v5029
          %5197 = vmatprep.subr.bf16.mxu0 0
          %5198 = vmatpush2.bf16.msra.mxu0 %v5044
          %5199 = vmatprep.subr.bf16.mxu0 0
          %5200 = vmatpush2.bf16.msra.mxu0 %v5043
          %5201 = vmatprep.subr.bf16.mxu0 0
          %5202 = vmatpush2.bf16.msra.mxu0 %v5042
          %5203 = vmatprep.subr.bf16.mxu0 0
          %5204 = vmatpush2.bf16.msra.mxu0 %v5041
          %5205 = vmatprep.subr.bf16.mxu0 0
          %5206 = vmatpush2.bf16.msra.mxu0 %v5040
          %5207 = vmatprep.subr.bf16.mxu0 0
          %5208 = vmatpush2.bf16.msra.mxu0 %v5039
          %5209 = vmatprep.subr.bf16.mxu0 0
          %5210 = vmatpush2.bf16.msra.mxu0 %v5038
          %5211 = vmatprep.subr.bf16.mxu0 0
          %5212 = vmatpush2.bf16.msra.mxu0 %v5037
          %5213 = vmatprep.mubr.bf16.mxu0 %v4617
          %5214 = vmatmul.mubr.bf16.gmra.mxu0 %v4616
          %v5215 = vpop.f32.mrf.mxu0
          %v5216 = vadd.f32 %v5176, %v5215
          %v5217 = vpop.f32.mrf.mxu0
          %v5218 = vpop.f32.mrf.mxu0
          %v5219 = vpop.f32.mrf.mxu0
          %5220 = vdwg.mxu0
          %5221 = vmatprep.subr.bf16.mxu0 0
          %5222 = vmatpush1.bf16.msra.mxu0 %v5052
          %5223 = vmatprep.subr.bf16.mxu0 0
          %5224 = vmatpush1.bf16.msra.mxu0 %v5051
          %5225 = vmatprep.subr.bf16.mxu0 0
          %5226 = vmatpush1.bf16.msra.mxu0 %v5050
          %5227 = vmatprep.subr.bf16.mxu0 0
          %5228 = vmatpush1.bf16.msra.mxu0 %v5049
          %5229 = vmatprep.subr.bf16.mxu0 0
          %5230 = vmatpush1.bf16.msra.mxu0 %v5048
          %5231 = vmatprep.subr.bf16.mxu0 0
          %5232 = vmatpush1.bf16.msra.mxu0 %v5047
          %5233 = vmatprep.subr.bf16.mxu0 0
          %5234 = vmatpush1.bf16.msra.mxu0 %v5046
          %5235 = vmatprep.subr.bf16.mxu0 0
          %5236 = vmatpush1.bf16.msra.mxu0 %v5045
          %5237 = vmatprep.subr.bf16.mxu0 0
          %5238 = vmatpush2.bf16.msra.mxu0 %v5060
          %5239 = vmatprep.subr.bf16.mxu0 0
          %5240 = vmatpush2.bf16.msra.mxu0 %v5059
          %5241 = vmatprep.subr.bf16.mxu0 0
          %5242 = vmatpush2.bf16.msra.mxu0 %v5058
          %5243 = vmatprep.subr.bf16.mxu0 0
          %5244 = vmatpush2.bf16.msra.mxu0 %v5057
          %5245 = vmatprep.subr.bf16.mxu0 0
          %5246 = vmatpush2.bf16.msra.mxu0 %v5056
          %5247 = vmatprep.subr.bf16.mxu0 0
          %5248 = vmatpush2.bf16.msra.mxu0 %v5055
          %5249 = vmatprep.subr.bf16.mxu0 0
          %5250 = vmatpush2.bf16.msra.mxu0 %v5054
          %5251 = vmatprep.subr.bf16.mxu0 0
          %5252 = vmatpush2.bf16.msra.mxu0 %v5053
          %5253 = vmatprep.mubr.bf16.mxu0 %v4619
          %5254 = vmatmul.mubr.bf16.gmra.mxu0 %v4618
          %v5255 = vpop.f32.mrf.mxu0
          %v5256 = vadd.f32 %v5216, %v5255
          %v5257 = vpop.f32.mrf.mxu0
          %v5258 = vpop.f32.mrf.mxu0
          %v5259 = vpop.f32.mrf.mxu0
          %5260 = vdwg.mxu0
          %5261 = vmatprep.subr.bf16.mxu0 0
          %5262 = vmatpush1.bf16.msra.mxu0 %v5068
          %5263 = vmatprep.subr.bf16.mxu0 0
          %5264 = vmatpush1.bf16.msra.mxu0 %v5067
          %5265 = vmatprep.subr.bf16.mxu0 0
          %5266 = vmatpush1.bf16.msra.mxu0 %v5066
          %5267 = vmatprep.subr.bf16.mxu0 0
          %5268 = vmatpush1.bf16.msra.mxu0 %v5065
          %5269 = vmatprep.subr.bf16.mxu0 0
          %5270 = vmatpush1.bf16.msra.mxu0 %v5064
          %5271 = vmatprep.subr.bf16.mxu0 0
          %5272 = vmatpush1.bf16.msra.mxu0 %v5063
          %5273 = vmatprep.subr.bf16.mxu0 0
          %5274 = vmatpush1.bf16.msra.mxu0 %v5062
          %5275 = vmatprep.subr.bf16.mxu0 0
          %5276 = vmatpush1.bf16.msra.mxu0 %v5061
          %5277 = vmatprep.subr.bf16.mxu0 0
          %5278 = vmatpush2.bf16.msra.mxu0 %v5076
          %5279 = vmatprep.subr.bf16.mxu0 0
          %5280 = vmatpush2.bf16.msra.mxu0 %v5075
          %5281 = vmatprep.subr.bf16.mxu0 0
          %5282 = vmatpush2.bf16.msra.mxu0 %v5074
          %5283 = vmatprep.subr.bf16.mxu0 0
          %5284 = vmatpush2.bf16.msra.mxu0 %v5073
          %5285 = vmatprep.subr.bf16.mxu0 0
          %5286 = vmatpush2.bf16.msra.mxu0 %v5072
          %5287 = vmatprep.subr.bf16.mxu0 0
          %5288 = vmatpush2.bf16.msra.mxu0 %v5071
          %5289 = vmatprep.subr.bf16.mxu0 0
          %5290 = vmatpush2.bf16.msra.mxu0 %v5070
          %5291 = vmatprep.subr.bf16.mxu0 0
          %5292 = vmatpush2.bf16.msra.mxu0 %v5069
          %5293 = vmatprep.mubr.bf16.mxu0 %v4621
          %5294 = vmatmul.mubr.bf16.gmra.mxu0 %v4620
          %v5295 = vpop.f32.mrf.mxu0
          %v5296 = vadd.f32 %v5256, %v5295
          %v5297 = vpop.f32.mrf.mxu0
          %v5298 = vpop.f32.mrf.mxu0
          %v5299 = vpop.f32.mrf.mxu0
          %5300 = vdwg.mxu0
          %5301 = vst [vmem:[#allocation12] sm:$0x3] %v5296
          %5302 = vst [vmem:[#allocation13] sm:$0xff] %v4540
          %5303 = vst [vmem:[#allocation13 + $0x8] sm:$0xff] %v4541
          %5304 = vst [vmem:[#allocation15] sm:$0xff] %v4562
          %5305 = vst [vmem:[#allocation15 + $0x8] sm:$0xff] %v4563
        $region84: #{simple_cnn_vib_forward.5} parent=55 // pred_fallthru
          _
        // Predicated region
        $region85: #{simple_cnn_vib_forward.5} parent=55 // pred_check
          %p5306 = pneg %p257
        $region86: #{simple_cnn_vib_forward.5} parent=55 // pred_check_branch
          %5308 = sbr.rel (%p5306) target = $region88
        $region87: #{simple_cnn_vib_forward.5} parent=55 // pred_region
          %s5310 = ssub.s32 32, 32
          %5311 = vsyncadd [#allocation5], %s5310
          %s5313 = sshll.u32 [#allocation12], 4
          %s5314 = int_to_ptr.vmem [resolvable:$true] %s5313
          %5316 = dma.vmem_to_hbm [thread:$0]  %s5314, 32, %s9, [#allocation5]
        $region88: #{simple_cnn_vib_forward.5} parent=55 // pred_fallthru
          _
        // Predicated region
        $region89: #{simple_cnn_vib_forward.5} parent=55 // pred_check
          %p5317 = pneg %p278
        $region90: #{simple_cnn_vib_forward.5} parent=55 // pred_check_branch
          %5319 = sbr.rel (%p5317) target = $region92
        $region91: #{simple_cnn_vib_forward.5} parent=55 // pred_region
          %s5321 = ssub.s32 256, 256
          %5322 = vsyncadd [#allocation14], %s5321
          %s5324 = sshll.u32 [#allocation13], 4
          %s5325 = int_to_ptr.vmem [resolvable:$true] %s5324
          %5327 = dma.vmem_to_hbm [thread:$0]  %s5325, 256, %s10, [#allocation14]
        $region92: #{simple_cnn_vib_forward.5} parent=55 // pred_fallthru
          _
        // Predicated region
        $region93: #{simple_cnn_vib_forward.5} parent=55 // pred_check
          %p5328 = pneg %p299
        $region94: #{simple_cnn_vib_forward.5} parent=55 // pred_check_branch
          %5330 = sbr.rel (%p5328) target = $region96
        $region95: #{simple_cnn_vib_forward.5} parent=55 // pred_region
          %s5332 = ssub.s32 256, 256
          %5333 = vsyncadd [#allocation14], %s5332
          %s5335 = sshll.u32 [#allocation15], 4
          %s5336 = int_to_ptr.vmem [resolvable:$true] %s5335
          %5338 = dma.vmem_to_hbm [thread:$0]  %s5336, 256, %s11, [#allocation14]
        $region96: #{simple_cnn_vib_forward.5} parent=55 // pred_fallthru
          _
        // Predicated region
        $region97: #{simple_cnn_vib_forward.5} parent=55 // pred_check
          %p5339 = pneg %p257
        $region98: #{simple_cnn_vib_forward.5} parent=55 // pred_check_branch
          %5341 = sbr.rel (%p5339) target = $region100
        $region99: #{simple_cnn_vib_forward.5} parent=55 // pred_region
          %5342 = dma.done [#allocation5], 32
        $region100: #{simple_cnn_vib_forward.5} parent=55 // pred_fallthru
          _
        // Predicated region
        $region101: #{simple_cnn_vib_forward.5} parent=55 // pred_check
          %p5343 = pneg %p278
        $region102: #{simple_cnn_vib_forward.5} parent=55 // pred_check_branch
          %5345 = sbr.rel (%p5343) target = $region104
        $region103: #{simple_cnn_vib_forward.5} parent=55 // pred_region
          %5346 = dma.done [#allocation14], 256
        $region104: #{simple_cnn_vib_forward.5} parent=55 // pred_fallthru
          _
        // Predicated region
        $region105: #{simple_cnn_vib_forward.5} parent=55 // pred_check
          %p5347 = pneg %p299
        $region106: #{simple_cnn_vib_forward.5} parent=55 // pred_check_branch
          %5349 = sbr.rel (%p5347) target = $region108
        $region107: #{simple_cnn_vib_forward.5} parent=55 // pred_region
          %5350 = dma.done [#allocation14], 256
        $region108: #{simple_cnn_vib_forward.5} parent=55 // pred_fallthru
          _
      $region56: #{simple_cnn_vib_forward.5} parent=5 // pred_fallthru
        _
      %p5351 = scmp.le.s32.totalorder 2, %s25
      // Predicated region
      $region109: #{simple_cnn_vib_forward.5} parent=5 // pred_check
        %p5352 = pneg %p5351
      $region110: #{simple_cnn_vib_forward.5} parent=5 // pred_check_branch
        %5354 = sbr.rel (%p5352) target = $region112
      $region111: #{simple_cnn_vib_forward.5} parent=5 // pred_region
        %s5355 = ssub.s32 %s25, 2
      $region112: #{simple_cnn_vib_forward.5} parent=5 // pred_fallthru
        _
    $region6: #{simple_cnn_vib_forward.5} parent=1 // loop_footer
      %s29 = sadd.s32 1, %s25
    $region7: #{simple_cnn_vib_forward.5} parent=1 // loop_footer_branch
      %24 = sbr.rel target = $region3
    $region8: #{simple_cnn_vib_forward.5} parent=1 // loop_exit
      _
    %5356 = vsyncpa [#allocation4], 1
    %s5357 = scalar_lea.sflag [#allocation4], 1
    %5358 = vsyncpa %s5357, 1
    %5359 = vsyncpa [#allocation7], 1
    %5360 = vsyncpa [#allocation10], 1
    %5361 = vsyncpa [#allocation5], 1
    %s5362 = scalar_lea.sflag [#allocation5], 1
    %5363 = vsyncpa %s5362, 1
    %5364 = vsyncpa [#allocation14], 1

</llo_original>
